<compile_context>
chip_gen: v6e
topology: v6e:2x2x1
jax: 0.10.0
libtpu: 0.0.40
codegen_flags: <defaults>
</compile_context>

<pallas_src>
import jax
import jax.numpy as jnp
import numpy as np
from jax import lax
from jax.experimental import pallas as pl
from jax.experimental.pallas import tpu as pltpu


# ---------------------------------------------------------------------------
# Kernels
# ---------------------------------------------------------------------------
def _conv_pool_kernel(p1_ref, w1_ref, b1_ref, w2_ref, b2_ref, o_ref, xp_ref):
    # p1_ref: (1, 512, 36)   conv1 im2col patch, rows (y, x_hi), cols (dy, dxp, cin)
    # w1_ref: (36, 32)       parity-doubled conv1 weight, cols (x_lo, cout)
    # b1_ref: (1, 32)        [b1 | b1]
    # w2_ref: (192, 64)      parity-doubled conv2 weight, cols (x_lo, cout)
    # b2_ref: (1, 64)        [b2 | b2]
    # o_ref:  (1, 256, 32)   pooled feature map, rows (y', x'), lanes c  (HWC order)
    # xp_ref: (34, 17, 32)   scratch: padded conv1 activation, x-parity folded:
    #                        xp[yp, xhp, xlp*16 + c] = A1[yp, 2*xhp + xlp, c]

    # ---- conv1 + relu: one MXU matmul (both x parities at once) -------------
    a1 = jnp.dot(p1_ref[0], w1_ref[...], preferred_element_type=jnp.float32)
    a1 = jnp.maximum(a1 + b1_ref[...], 0.0)        # (512, 32): rows (y, x_hi), lanes (x_lo, c)

    # ---- scatter into zero-padded, parity-folded scratch --------------------
    # conv1 pixel (y, x=2*x_hi+x_lo) lives at padded column x+1:
    #   x_lo=0 -> (xhp=x_hi,   xlp=1);   x_lo=1 -> (xhp=x_hi+1, xlp=0)
    xp_ref[...] = jnp.zeros_like(xp_ref)
    xp_ref[1:33, 0:16, 16:32] = a1[:, 0:16].reshape(32, 16, 16)   # even x
    xp_ref[1:33, 1:17, 0:16] = a1[:, 16:32].reshape(32, 16, 16)   # odd  x

    # ---- conv2 im2col: 12 taps (dy, dxp) x 16 cin -> K = 192 ----------------
    # patch2[(y,x_hi), (dy,dxp,c)] = A1[y+dy, 2*x_hi + dxp, c]
    chunks = []
    for dy in range(3):
        for dxp in range(4):
            q, p = dxp // 2, dxp % 2
            chunks.append(xp_ref[dy:dy + 32, q:q + 16, p * 16:(p + 1) * 16])
    patch2 = jnp.concatenate(chunks, axis=-1).reshape(512, 192)

    a2 = jnp.dot(patch2, w2_ref[...], preferred_element_type=jnp.float32)
    a2 = jnp.maximum(a2 + b2_ref[...], 0.0)        # (512, 64): lanes (x_lo, cout)

    # ---- 2x2 max pool: x-pairs are lane halves, y-pairs are row halves ------
    xpool = jnp.maximum(a2[:, 0:32], a2[:, 32:64])   # (512, 32): rows (y, x_hi)
    v4 = xpool.reshape(16, 2, 16, 32)                # (y_hi, y_lo, x_hi, c)
    pooled = jnp.maximum(v4[:, 0], v4[:, 1])         # (16, 16, 32) = (y', x', c)
    o_ref[...] = pooled.reshape(1, 256, 32)


def _mlp_kernel(x_ref, w1_ref, b1_ref, w2_ref, b2_ref, o_ref):
    # x: (B, 8192)  w1: (8192, 64)  b1: (1, 64)  w2: (64, 10)  b2: (1, 10)
    h = jnp.dot(x_ref[...], w1_ref[...], preferred_element_type=jnp.float32)
    h = jnp.maximum(h + b1_ref[...], 0.0)
    o_ref[...] = jnp.dot(h, w2_ref[...],
                         preferred_element_type=jnp.float32) + b2_ref[...]


# ---------------------------------------------------------------------------
# Wrappers
# ---------------------------------------------------------------------------
def conv_pool(x_nhwc, w1b, b1b, w2b, b2b):
    """Fused conv1+relu+conv2+relu+pool.  Returns (B, 256, 32) HWC-ordered."""
    B = x_nhwc.shape[0]
    xp = jnp.pad(x_nhwc, ((0, 0), (1, 1), (1, 1), (0, 0)))        # (B, 34, 34, 3)
    # conv1 im2col patch (built by XLA, cheap): rows (y, x_hi), cols (dy, dxp, cin)
    chunks = []
    for dy in range(3):
        for dxp in range(4):
            chunks.append(xp[:, dy:dy + 32, dxp:dxp + 32:2, :])   # (B, 32, 16, 3)
    patch1 = jnp.concatenate(chunks, axis=-1).reshape(B, 512, 36)

    return pl.pallas_call(
        _conv_pool_kernel,
        out_shape=jax.ShapeDtypeStruct((B, 256, 32), jnp.float32),
        grid_spec=pltpu.PrefetchScalarGridSpec(
            num_scalar_prefetch=0,
            grid=(B,),  # one image per grid step
            in_specs=[
                pl.BlockSpec((1, 512, 36), lambda n: (n, 0, 0)),
                pl.BlockSpec((36, 32), lambda n: (0, 0)),
                pl.BlockSpec((1, 32), lambda n: (0, 0)),
                pl.BlockSpec((192, 64), lambda n: (0, 0)),
                pl.BlockSpec((1, 64), lambda n: (0, 0)),
            ],
            out_specs=pl.BlockSpec((1, 256, 32), lambda n: (n, 0, 0)),
            scratch_shapes=[pltpu.VMEM((34, 17, 32), jnp.float32)],
        ),
        compiler_params=pltpu.CompilerParams(
            dimension_semantics=("parallel",)),
    )(patch1, w1b, b1b, w2b, b2b)


def mlp(x, w1, b1, w2, b2):
    B, Din = x.shape
    Dh, Dout = w1.shape[1], w2.shape[1]
    return pl.pallas_call(
        _mlp_kernel,
        out_shape=jax.ShapeDtypeStruct((B, Dout), jnp.float32),
        grid_spec=pltpu.PrefetchScalarGridSpec(
            num_scalar_prefetch=0,
            grid=(1,),
            in_specs=[
                pl.BlockSpec((B, Din), lambda i: (0, 0)),
                pl.BlockSpec((Din, Dh), lambda i: (0, 0)),
                pl.BlockSpec((1, Dh), lambda i: (0, 0)),
                pl.BlockSpec((Dh, Dout), lambda i: (0, 0)),
                pl.BlockSpec((1, Dout), lambda i: (0, 0)),
            ],
            out_specs=pl.BlockSpec((B, Dout), lambda i: (0, 0)),
        ),
    )(x, w1, b1.reshape(1, Dh), w2, b2.reshape(1, Dout))


def smallnet_forward(x_nchw, kp):
    x = jnp.transpose(x_nchw, (0, 2, 3, 1))                       # NCHW -> NHWC
    pooled = conv_pool(x, kp["w1b"], kp["b1b"], kp["w2b"], kp["b2b"])
    feats = pooled.reshape(pooled.shape[0], 32 * 16 * 16)         # HWC flatten (free)
    return mlp(feats, kp["wf1"], kp["bf1"], kp["wf2"], kp["bf2"])


# ---------------------------------------------------------------------------
# Host-side parameter preparation (one-time layout plumbing)
# ---------------------------------------------------------------------------
def prepare_params(p):
    def doubled_conv_weight(w_hwio):
        # (3, 3, cin, cout) -> (12*cin, 2*cout); rows (dy, dxp, cin), cols (x_lo, cout)
        w = np.asarray(w_hwio)
        _, _, cin, cout = w.shape
        wb = np.zeros((3, 4, cin, 2, cout), np.float32)
        for dxp in range(4):
            for xlo in range(2):
                dx = dxp - xlo
                if 0 <= dx < 3:
                    wb[:, dxp, :, xlo, :] = w[:, dx, :, :]
        return jnp.asarray(wb.reshape(12 * cin, 2 * cout))

    w1b = doubled_conv_weight(p["w_conv1"])                        # (36, 32)
    b1b = jnp.concatenate([p["b_conv1"], p["b_conv1"]]).reshape(1, 32)
    w2b = doubled_conv_weight(p["w_conv2"])                        # (192, 64)
    b2b = jnp.concatenate([p["b_conv2"], p["b_conv2"]]).reshape(1, 64)
    # fc1 rows: torch flattens CHW; the kernel produces HWC-ordered features.
    wf1 = p["w_fc1"].reshape(32, 16, 16, 64).transpose(1, 2, 0, 3).reshape(8192, 64)
    return dict(w1b=w1b, b1b=b1b, w2b=w2b, b2b=b2b,
                wf1=wf1, bf1=p["b_fc1"], wf2=p["w_fc2"], bf2=p["b_fc2"])


# ---------------------------------------------------------------------------
# Pure-JAX reference (torch semantics, torch-layout params)
# ---------------------------------------------------------------------------
def smallnet_reference(x_nchw, p):
    dn = ("NHWC", "HWIO", "NHWC")
    x = jnp.transpose(x_nchw, (0, 2, 3, 1))
    x = lax.conv_general_dilated(x, p["w_conv1"], (1, 1), ((1, 1), (1, 1)),
                                 dimension_numbers=dn,
                                 precision=lax.Precision.HIGHEST)
    x = jnp.maximum(x + p["b_conv1"], 0.0)
    x = lax.conv_general_dilated(x, p["w_conv2"], (1, 1), ((1, 1), (1, 1)),
                                 dimension_numbers=dn,
                                 precision=lax.Precision.HIGHEST)
    x = jnp.maximum(x + p["b_conv2"], 0.0)
    x = lax.reduce_window(x, -jnp.inf, lax.max,
                          (1, 2, 2, 1), (1, 2, 2, 1), "VALID")
    x = jnp.transpose(x, (0, 3, 1, 2)).reshape(x.shape[0], -1)     # CHW flatten
    x = jnp.maximum(jnp.dot(x, p["w_fc1"], precision=lax.Precision.HIGHEST)
                    + p["b_fc1"], 0.0)
    return jnp.dot(x, p["w_fc2"], precision=lax.Precision.HIGHEST) + p["b_fc2"]


# ---------------------------------------------------------------------------
if __name__ == "__main__":
    key = jax.random.PRNGKey(0)
    kx, k1, k2, k3, k4, k5, k6, k7, k8 = jax.random.split(key, 9)

    B = 2
    x = jax.random.normal(kx, (B, 3, 32, 32), jnp.float32)

    params = {
        # conv weights in HWIO layout (kh, kw, Cin, Cout)
        "w_conv1": jax.random.normal(k1, (3, 3, 3, 16), jnp.float32) * 0.1,
        "b_conv1": jax.random.normal(k2, (16,), jnp.float32) * 0.1,
        "w_conv2": jax.random.normal(k3, (3, 3, 16, 32), jnp.float32) * 0.05,
        "b_conv2": jax.random.normal(k4, (32,), jnp.float32) * 0.05,
        # fc weights stored as (in, out); fc1 rows in torch's CHW flatten order
        "w_fc1": jax.random.normal(k5, (32 * 16 * 16, 64), jnp.float32) * 0.02,
        "b_fc1": jax.random.normal(k6, (64,), jnp.float32) * 0.02,
        "w_fc2": jax.random.normal(k7, (64, 10), jnp.float32) * 0.05,
        "b_fc2": jax.random.normal(k8, (10,), jnp.float32) * 0.05,
    }

    kp = prepare_params(params)
    out = jax.jit(smallnet_forward)(x, kp)
    out = jax.block_until_ready(out)
    assert out.shape == (B, 10) and out.dtype == jnp.float32

    ref = jax.block_until_ready(smallnet_reference(x, params))
    np.testing.assert_allclose(np.asarray(out), np.asarray(ref),
                               rtol=2e-2, atol=2e-2)

    print("KERNEL_OK")
</pallas_src>

<mosaic_0001>
module attributes {stable_mosaic.version = 11 : i64} {
  func.func @_conv_pool_kernel(%arg0: i32, %arg1: memref<1x512x36xf32, #tpu.memory_space<vmem>>, %arg2: memref<36x32xf32, #tpu.memory_space<vmem>>, %arg3: memref<1x32xf32, #tpu.memory_space<vmem>>, %arg4: memref<192x64xf32, #tpu.memory_space<vmem>>, %arg5: memref<1x64xf32, #tpu.memory_space<vmem>>, %arg6: memref<1x256x32xf32, #tpu.memory_space<vmem>>, %arg7: memref<34x17x32xf32, #tpu.memory_space<vmem>>) attributes {dimension_semantics = [#tpu.dimension_semantics<parallel>], iteration_bounds = array<i64: 2>, scalar_prefetch = 0 : i64, scratch_operands = 1 : i64, tpu.core_type = #tpu.core_type<tc>, window_params = [{transform_indices = @transform_0, window_bounds = array<i64: 1, 512, 36>}, {pipeline_mode = #tpu.pipeline_mode<synchronous>, transform_indices = @transform_1, window_bounds = array<i64: 36, 32>}, {pipeline_mode = #tpu.pipeline_mode<synchronous>, transform_indices = @transform_2, window_bounds = array<i64: 1, 32>}, {pipeline_mode = #tpu.pipeline_mode<synchronous>, transform_indices = @transform_3, window_bounds = array<i64: 192, 64>}, {pipeline_mode = #tpu.pipeline_mode<synchronous>, transform_indices = @transform_4, window_bounds = array<i64: 1, 64>}, {transform_indices = @transform_5, window_bounds = array<i64: 1, 256, 32>}]} {
    %c0 = arith.constant 0 : index
    %c0_0 = arith.constant 0 : index
    %c0_1 = arith.constant 0 : index
    %0 = vector.load %arg1[%c0, %c0_0, %c0_1] : memref<1x512x36xf32, #tpu.memory_space<vmem>>, vector<1x512x36xf32>
    %1 = vector.shape_cast %0 : vector<1x512x36xf32> to vector<512x36xf32>
    %c0_2 = arith.constant 0 : index
    %c0_3 = arith.constant 0 : index
    %2 = vector.load %arg2[%c0_2, %c0_3] : memref<36x32xf32, #tpu.memory_space<vmem>>, vector<36x32xf32>
    %cst = arith.constant dense<0.000000e+00> : vector<512x32xf32>
    %3 = tpu.matmul %1, %2, %cst {dimension_numbers = #tpu.dot_dimension_numbers<[1], [0], [0], [1], [0, 0, 1, 1], [], []>} : vector<512x36xf32>, vector<36x32xf32>, vector<512x32xf32> -> vector<512x32xf32>
    %c0_4 = arith.constant 0 : index
    %c0_5 = arith.constant 0 : index
    %4 = vector.load %arg3[%c0_4, %c0_5] : memref<1x32xf32, #tpu.memory_space<vmem>>, vector<1x32xf32>
    %5 = vector.broadcast %4 : vector<1x32xf32> to vector<512x32xf32>
    %6 = arith.addf %3, %5 : vector<512x32xf32>
    %cst_6 = arith.constant 0.000000e+00 : f32
    %7 = vector.broadcast %cst_6 : f32 to vector<512x32xf32>
    %8 = arith.maximumf %6, %7 : vector<512x32xf32>
    %cst_7 = arith.constant 0.000000e+00 : f32
    %9 = vector.broadcast %cst_7 : f32 to vector<34x17x32xf32>
    %c0_8 = arith.constant 0 : index
    %c0_9 = arith.constant 0 : index
    %c0_10 = arith.constant 0 : index
    %10 = vector.load %arg7[%c0_8, %c0_9, %c0_10] : memref<34x17x32xf32, #tpu.memory_space<vmem>>, vector<34x17x32xf32>
    tpu.vector_store %arg7[%c0_8, %c0_9, %c0_10], %9 {strides = array<i32>} : memref<34x17x32xf32, #tpu.memory_space<vmem>>, vector<34x17x32xf32>,
    %11 = vector.extract_strided_slice %8 {offsets = [0, 0], sizes = [512, 16], strides = [1, 1]} : vector<512x32xf32> to vector<512x16xf32>
    %12 = vector.shape_cast %11 : vector<512x16xf32> to vector<32x16x16xf32>
    %c1 = arith.constant 1 : index
    %c0_11 = arith.constant 0 : index
    %c16 = arith.constant 16 : index
    %13 = vector.load %arg7[%c1, %c0_11, %c16] : memref<34x17x32xf32, #tpu.memory_space<vmem>>, vector<32x16x16xf32>
    tpu.vector_store %arg7[%c1, %c0_11, %c16], %12 {strides = array<i32>} : memref<34x17x32xf32, #tpu.memory_space<vmem>>, vector<32x16x16xf32>,
    %14 = vector.extract_strided_slice %8 {offsets = [0, 16], sizes = [512, 16], strides = [1, 1]} : vector<512x32xf32> to vector<512x16xf32>
    %15 = vector.shape_cast %14 : vector<512x16xf32> to vector<32x16x16xf32>
    %c1_12 = arith.constant 1 : index
    %c1_13 = arith.constant 1 : index
    %c0_14 = arith.constant 0 : index
    %16 = vector.load %arg7[%c1_12, %c1_13, %c0_14] : memref<34x17x32xf32, #tpu.memory_space<vmem>>, vector<32x16x16xf32>
    tpu.vector_store %arg7[%c1_12, %c1_13, %c0_14], %15 {strides = array<i32>} : memref<34x17x32xf32, #tpu.memory_space<vmem>>, vector<32x16x16xf32>,
    %c0_15 = arith.constant 0 : index
    %c0_16 = arith.constant 0 : index
    %c0_17 = arith.constant 0 : index
    %17 = vector.load %arg7[%c0_15, %c0_16, %c0_17] : memref<34x17x32xf32, #tpu.memory_space<vmem>>, vector<32x16x16xf32>
    %c0_18 = arith.constant 0 : index
    %c0_19 = arith.constant 0 : index
    %c16_20 = arith.constant 16 : index
    %18 = vector.load %arg7[%c0_18, %c0_19, %c16_20] : memref<34x17x32xf32, #tpu.memory_space<vmem>>, vector<32x16x16xf32>
    %c0_21 = arith.constant 0 : index
    %c1_22 = arith.constant 1 : index
    %c0_23 = arith.constant 0 : index
    %19 = vector.load %arg7[%c0_21, %c1_22, %c0_23] : memref<34x17x32xf32, #tpu.memory_space<vmem>>, vector<32x16x16xf32>
    %c0_24 = arith.constant 0 : index
    %c1_25 = arith.constant 1 : index
    %c16_26 = arith.constant 16 : index
    %20 = vector.load %arg7[%c0_24, %c1_25, %c16_26] : memref<34x17x32xf32, #tpu.memory_space<vmem>>, vector<32x16x16xf32>
    %c1_27 = arith.constant 1 : index
    %c0_28 = arith.constant 0 : index
    %c0_29 = arith.constant 0 : index
    %21 = vector.load %arg7[%c1_27, %c0_28, %c0_29] : memref<34x17x32xf32, #tpu.memory_space<vmem>>, vector<32x16x16xf32>
    %c1_30 = arith.constant 1 : index
    %c0_31 = arith.constant 0 : index
    %c16_32 = arith.constant 16 : index
    %22 = vector.load %arg7[%c1_30, %c0_31, %c16_32] : memref<34x17x32xf32, #tpu.memory_space<vmem>>, vector<32x16x16xf32>
    %c1_33 = arith.constant 1 : index
    %c1_34 = arith.constant 1 : index
    %c0_35 = arith.constant 0 : index
    %23 = vector.load %arg7[%c1_33, %c1_34, %c0_35] : memref<34x17x32xf32, #tpu.memory_space<vmem>>, vector<32x16x16xf32>
    %c1_36 = arith.constant 1 : index
    %c1_37 = arith.constant 1 : index
    %c16_38 = arith.constant 16 : index
    %24 = vector.load %arg7[%c1_36, %c1_37, %c16_38] : memref<34x17x32xf32, #tpu.memory_space<vmem>>, vector<32x16x16xf32>
    %c2 = arith.constant 2 : index
    %c0_39 = arith.constant 0 : index
    %c0_40 = arith.constant 0 : index
    %25 = vector.load %arg7[%c2, %c0_39, %c0_40] : memref<34x17x32xf32, #tpu.memory_space<vmem>>, vector<32x16x16xf32>
    %c2_41 = arith.constant 2 : index
    %c0_42 = arith.constant 0 : index
    %c16_43 = arith.constant 16 : index
    %26 = vector.load %arg7[%c2_41, %c0_42, %c16_43] : memref<34x17x32xf32, #tpu.memory_space<vmem>>, vector<32x16x16xf32>
    %c2_44 = arith.constant 2 : index
    %c1_45 = arith.constant 1 : index
    %c0_46 = arith.constant 0 : index
    %27 = vector.load %arg7[%c2_44, %c1_45, %c0_46] : memref<34x17x32xf32, #tpu.memory_space<vmem>>, vector<32x16x16xf32>
    %c2_47 = arith.constant 2 : index
    %c1_48 = arith.constant 1 : index
    %c16_49 = arith.constant 16 : index
    %28 = vector.load %arg7[%c2_47, %c1_48, %c16_49] : memref<34x17x32xf32, #tpu.memory_space<vmem>>, vector<32x16x16xf32>
    %29 = tpu.concatenate %17, %18, %19, %20, %21, %22, %23, %24, %25, %26, %27, %28 in 2 : vector<32x16x16xf32>, vector<32x16x16xf32>, vector<32x16x16xf32>, vector<32x16x16xf32>, vector<32x16x16xf32>, vector<32x16x16xf32>, vector<32x16x16xf32>, vector<32x16x16xf32>, vector<32x16x16xf32>, vector<32x16x16xf32>, vector<32x16x16xf32>, vector<32x16x16xf32> -> vector<32x16x192xf32>
    %30 = vector.shape_cast %29 : vector<32x16x192xf32> to vector<512x192xf32>
    %c0_50 = arith.constant 0 : index
    %c0_51 = arith.constant 0 : index
    %31 = vector.load %arg4[%c0_50, %c0_51] : memref<192x64xf32, #tpu.memory_space<vmem>>, vector<192x64xf32>
    %cst_52 = arith.constant dense<0.000000e+00> : vector<512x64xf32>
    %32 = tpu.matmul %30, %31, %cst_52 {dimension_numbers = #tpu.dot_dimension_numbers<[1], [0], [0], [1], [0, 0, 1, 1], [], []>} : vector<512x192xf32>, vector<192x64xf32>, vector<512x64xf32> -> vector<512x64xf32>
    %c0_53 = arith.constant 0 : index
    %c0_54 = arith.constant 0 : index
    %33 = vector.load %arg5[%c0_53, %c0_54] : memref<1x64xf32, #tpu.memory_space<vmem>>, vector<1x64xf32>
    %34 = vector.broadcast %33 : vector<1x64xf32> to vector<512x64xf32>
    %35 = arith.addf %32, %34 : vector<512x64xf32>
    %cst_55 = arith.constant 0.000000e+00 : f32
    %36 = vector.broadcast %cst_55 : f32 to vector<512x64xf32>
    %37 = arith.maximumf %35, %36 : vector<512x64xf32>
    %38 = vector.extract_strided_slice %37 {offsets = [0, 0], sizes = [512, 32], strides = [1, 1]} : vector<512x64xf32> to vector<512x32xf32>
    %39 = vector.extract_strided_slice %37 {offsets = [0, 32], sizes = [512, 32], strides = [1, 1]} : vector<512x64xf32> to vector<512x32xf32>
    %40 = arith.maximumf %38, %39 : vector<512x32xf32>
    %41 = vector.shape_cast %40 : vector<512x32xf32> to vector<16x2x16x32xf32>
    %42 = vector.extract_strided_slice %41 {offsets = [0, 0, 0, 0], sizes = [16, 1, 16, 32], strides = [1, 1, 1, 1]} : vector<16x2x16x32xf32> to vector<16x1x16x32xf32>
    %43 = vector.shape_cast %42 : vector<16x1x16x32xf32> to vector<16x16x32xf32>
    %44 = vector.extract_strided_slice %41 {offsets = [0, 1, 0, 0], sizes = [16, 1, 16, 32], strides = [1, 1, 1, 1]} : vector<16x2x16x32xf32> to vector<16x1x16x32xf32>
    %45 = vector.shape_cast %44 : vector<16x1x16x32xf32> to vector<16x16x32xf32>
    %46 = arith.maximumf %43, %45 : vector<16x16x32xf32>
    %47 = vector.shape_cast %46 : vector<16x16x32xf32> to vector<1x256x32xf32>
    %c0_56 = arith.constant 0 : index
    %c0_57 = arith.constant 0 : index
    %c0_58 = arith.constant 0 : index
    %48 = vector.load %arg6[%c0_56, %c0_57, %c0_58] : memref<1x256x32xf32, #tpu.memory_space<vmem>>, vector<1x256x32xf32>
    tpu.vector_store %arg6[%c0_56, %c0_57, %c0_58], %47 {strides = array<i32>} : memref<1x256x32xf32, #tpu.memory_space<vmem>>, vector<1x256x32xf32>,
    return
  }
  func.func @transform_0(%arg0: i32) -> (i32, i32, i32) {
    %c0_i32 = arith.constant 0 : i32
    %c0_i32_0 = arith.constant 0 : i32
    %c0_i32_1 = arith.constant 0 : i32
    return %arg0, %c0_i32, %c0_i32_0 : i32, i32, i32
  }
  func.func @transform_1(%arg0: i32) -> (i32, i32) {
    %c0_i32 = arith.constant 0 : i32
    %c0_i32_0 = arith.constant 0 : i32
    %c0_i32_1 = arith.constant 0 : i32
    return %c0_i32, %c0_i32_0 : i32, i32
  }
  func.func @transform_2(%arg0: i32) -> (i32, i32) {
    %c0_i32 = arith.constant 0 : i32
    %c0_i32_0 = arith.constant 0 : i32
    %c0_i32_1 = arith.constant 0 : i32
    return %c0_i32, %c0_i32_0 : i32, i32
  }
  func.func @transform_3(%arg0: i32) -> (i32, i32) {
    %c0_i32 = arith.constant 0 : i32
    %c0_i32_0 = arith.constant 0 : i32
    %c0_i32_1 = arith.constant 0 : i32
    return %c0_i32, %c0_i32_0 : i32, i32
  }
  func.func @transform_4(%arg0: i32) -> (i32, i32) {
    %c0_i32 = arith.constant 0 : i32
    %c0_i32_0 = arith.constant 0 : i32
    %c0_i32_1 = arith.constant 0 : i32
    return %c0_i32, %c0_i32_0 : i32, i32
  }
  func.func @transform_5(%arg0: i32) -> (i32, i32, i32) {
    %c0_i32 = arith.constant 0 : i32
    %c0_i32_0 = arith.constant 0 : i32
    %c0_i32_1 = arith.constant 0 : i32
    return %arg0, %c0_i32, %c0_i32_0 : i32, i32, i32
  }
}

module attributes {stable_mosaic.version = 11 : i64} {
  func.func @_mlp_kernel(%arg0: i32, %arg1: memref<2x8192xf32, #tpu.memory_space<vmem>>, %arg2: memref<8192x64xf32, #tpu.memory_space<vmem>>, %arg3: memref<1x64xf32, #tpu.memory_space<vmem>>, %arg4: memref<64x10xf32, #tpu.memory_space<vmem>>, %arg5: memref<1x10xf32, #tpu.memory_space<vmem>>, %arg6: memref<2x10xf32, #tpu.memory_space<vmem>>) attributes {dimension_semantics = [#tpu.dimension_semantics<arbitrary>], iteration_bounds = array<i64: 1>, scalar_prefetch = 0 : i64, scratch_operands = 0 : i64, tpu.core_type = #tpu.core_type<tc>, window_params = [{pipeline_mode = #tpu.pipeline_mode<synchronous>, transform_indices = @transform_0, window_bounds = array<i64: 2, 8192>}, {pipeline_mode = #tpu.pipeline_mode<synchronous>, transform_indices = @transform_1, window_bounds = array<i64: 8192, 64>}, {pipeline_mode = #tpu.pipeline_mode<synchronous>, transform_indices = @transform_2, window_bounds = array<i64: 1, 64>}, {pipeline_mode = #tpu.pipeline_mode<synchronous>, transform_indices = @transform_3, window_bounds = array<i64: 64, 10>}, {pipeline_mode = #tpu.pipeline_mode<synchronous>, transform_indices = @transform_4, window_bounds = array<i64: 1, 10>}, {pipeline_mode = #tpu.pipeline_mode<synchronous>, transform_indices = @transform_5, window_bounds = array<i64: 2, 10>}]} {
    %c0 = arith.constant 0 : index
    %c0_0 = arith.constant 0 : index
    %0 = vector.load %arg1[%c0, %c0_0] : memref<2x8192xf32, #tpu.memory_space<vmem>>, vector<2x8192xf32>
    %c0_1 = arith.constant 0 : index
    %c0_2 = arith.constant 0 : index
    %1 = vector.load %arg2[%c0_1, %c0_2] : memref<8192x64xf32, #tpu.memory_space<vmem>>, vector<8192x64xf32>
    %cst = arith.constant dense<0.000000e+00> : vector<2x64xf32>
    %2 = tpu.matmul %0, %1, %cst {dimension_numbers = #tpu.dot_dimension_numbers<[1], [0], [0], [1], [0, 0, 1, 1], [], []>} : vector<2x8192xf32>, vector<8192x64xf32>, vector<2x64xf32> -> vector<2x64xf32>
    %c0_3 = arith.constant 0 : index
    %c0_4 = arith.constant 0 : index
    %3 = vector.load %arg3[%c0_3, %c0_4] : memref<1x64xf32, #tpu.memory_space<vmem>>, vector<1x64xf32>
    %4 = vector.broadcast %3 : vector<1x64xf32> to vector<2x64xf32>
    %5 = arith.addf %2, %4 : vector<2x64xf32>
    %cst_5 = arith.constant 0.000000e+00 : f32
    %6 = vector.broadcast %cst_5 : f32 to vector<2x64xf32>
    %7 = arith.maximumf %5, %6 : vector<2x64xf32>
    %c0_6 = arith.constant 0 : index
    %c0_7 = arith.constant 0 : index
    %8 = vector.load %arg4[%c0_6, %c0_7] : memref<64x10xf32, #tpu.memory_space<vmem>>, vector<64x10xf32>
    %cst_8 = arith.constant dense<0.000000e+00> : vector<2x10xf32>
    %9 = tpu.matmul %7, %8, %cst_8 {dimension_numbers = #tpu.dot_dimension_numbers<[1], [0], [0], [1], [0, 0, 1, 1], [], []>} : vector<2x64xf32>, vector<64x10xf32>, vector<2x10xf32> -> vector<2x10xf32>
    %c0_9 = arith.constant 0 : index
    %c0_10 = arith.constant 0 : index
    %10 = vector.load %arg5[%c0_9, %c0_10] : memref<1x10xf32, #tpu.memory_space<vmem>>, vector<1x10xf32>
    %11 = vector.broadcast %10 : vector<1x10xf32> to vector<2x10xf32>
    %12 = arith.addf %9, %11 : vector<2x10xf32>
    %c0_11 = arith.constant 0 : index
    %c0_12 = arith.constant 0 : index
    %13 = vector.load %arg6[%c0_11, %c0_12] : memref<2x10xf32, #tpu.memory_space<vmem>>, vector<2x10xf32>
    tpu.vector_store %arg6[%c0_11, %c0_12], %12 {strides = array<i32>} : memref<2x10xf32, #tpu.memory_space<vmem>>, vector<2x10xf32>,
    return
  }
  func.func @transform_0(%arg0: i32) -> (i32, i32) {
    %c0_i32 = arith.constant 0 : i32
    %c0_i32_0 = arith.constant 0 : i32
    %c0_i32_1 = arith.constant 0 : i32
    return %c0_i32, %c0_i32_0 : i32, i32
  }
  func.func @transform_1(%arg0: i32) -> (i32, i32) {
    %c0_i32 = arith.constant 0 : i32
    %c0_i32_0 = arith.constant 0 : i32
    %c0_i32_1 = arith.constant 0 : i32
    return %c0_i32, %c0_i32_0 : i32, i32
  }
  func.func @transform_2(%arg0: i32) -> (i32, i32) {
    %c0_i32 = arith.constant 0 : i32
    %c0_i32_0 = arith.constant 0 : i32
    %c0_i32_1 = arith.constant 0 : i32
    return %c0_i32, %c0_i32_0 : i32, i32
  }
  func.func @transform_3(%arg0: i32) -> (i32, i32) {
    %c0_i32 = arith.constant 0 : i32
    %c0_i32_0 = arith.constant 0 : i32
    %c0_i32_1 = arith.constant 0 : i32
    return %c0_i32, %c0_i32_0 : i32, i32
  }
  func.func @transform_4(%arg0: i32) -> (i32, i32) {
    %c0_i32 = arith.constant 0 : i32
    %c0_i32_0 = arith.constant 0 : i32
    %c0_i32_1 = arith.constant 0 : i32
    return %c0_i32, %c0_i32_0 : i32, i32
  }
  func.func @transform_5(%arg0: i32) -> (i32, i32) {
    %c0_i32 = arith.constant 0 : i32
    %c0_i32_0 = arith.constant 0 : i32
    %c0_i32_1 = arith.constant 0 : i32
    return %c0_i32, %c0_i32_0 : i32, i32
  }
}

</mosaic_0001>

<llo_original>
// kernel: smallnet_forward.2
$region0: #{smallnet_forward.2}
  #allocation0 [shape = 'u32[]', space=smem, size = 0x4, offset = 0x4, fixed_abs, tag = 'smem constant byte address 0x4 - core index']
  #allocation1 [shape = 'u32[144,128]{1,0:T(1,128)}', space=vmem, size = 0x12000, scoped, tag = 'internal scratch']
  #allocation2 [shape = 'f32[34,17,32]{2,1,0:T(8,128)}', space=vmem, size = 0x66000, scoped, tag = 'scratch operand']
  %s0 = inlined_call_operand.vmem [shape: f32[2,512,36], index: 0, kind: input, shape index: {}]
  %s1 = inlined_call_operand.vmem [shape: f32[36,32], index: 1, kind: input, shape index: {}]
  %s2 = inlined_call_operand.vmem [shape: f32[1,32], index: 2, kind: input, shape index: {}]
  %s3 = inlined_call_operand.vmem [shape: f32[192,64], index: 3, kind: input, shape index: {}]
  %s4 = inlined_call_operand.vmem [shape: f32[1,64], index: 4, kind: input, shape index: {}]
  %s5 = inlined_call_operand.vmem [shape: f32[2,256,32], index: 5, kind: output, shape index: {}]
  %s6 = sld [smem:[#allocation0]]
  $region53: #{smallnet_forward.2} parent=0
    _
  %s8 = ssub.s32 1, %s6
  %s9 = scalar_select 0, %s8, %s6
  loop: start=0, step=1, limit=4
  $region2: #{smallnet_forward.2} parent=0 // loop_pre_header
    _
  $region3: #{smallnet_forward.2} parent=0 // loop_header
    %s11 = sphi 0, %s15
    %p12 = scmp.ge.s32.totalorder %s11, 4
    %s21 = sphi 0, %s23
    %s24 = sphi 0, %s21
    %s25 = sphi 0, %s24
    %s41 = sphi 0, %s25
    %s45 = sphi 0, %s45
    %s47 = sphi 0, %s45
    %s48 = sphi 0, %s47
    %s62 = sphi 0, %s48
    %s66 = sphi 0, %s66
    %s68 = sphi 0, %s66
    %s69 = sphi 0, %s68
    %s83 = sphi 0, %s69
    %s87 = sphi 0, %s87
    %s89 = sphi 0, %s87
    %s90 = sphi 0, %s89
    %s104 = sphi 0, %s90
    %s108 = sphi 0, %s108
    %s110 = sphi 0, %s108
    %s111 = sphi 0, %s110
    %s125 = sphi 0, %s111
    %s131 = sphi 0, %s133
    %s134 = sphi 0, %s131
    %s135 = sphi 0, %s134
    %s151 = sphi 0, %s135
  $region4: #{smallnet_forward.2} parent=0 // loop_header_branch
    %14 = sbr.rel (%p12) target = $region8
  $region5: #{smallnet_forward.2} parent=0 // loop_body
    %s16 = ssub.s32 %s11, 1
    %s17 = ssub.s32 %s11, 2
    %s18 = sadd.s32 %s11, 1
    %s19 = ssub.s32 %s11, %s18
    %p20 = scmp.eq.s32.totalorder %s19, 0
    %s22 = sadd.s32 %s21, 1
    %s23 = scalar_select %p20, %s21, %s22
    %p26 = pneg %p20
    %p27 = scmp.eq.s32.totalorder %s11, 1
    %p28 = por %p26, %p27
    %p29 = scmp.ne.s32.totalorder %s21, %s24
    %p30 = scmp.eq.s32.totalorder %s11, 0
    %p31 = por %p29, %p30
    %p32 = scmp.ne.s32.totalorder %s21, %s24
    %p33 = scmp.eq.s32.totalorder %s16, 1
    %p34 = por %p32, %p33
    %p35 = scmp.ne.s32.totalorder %s24, %s25
    %p36 = scmp.eq.s32.totalorder %s16, 0
    %p37 = por %p35, %p36
    %p38 = scmp.ne.s32.totalorder %s24, %s25
    %p39 = scmp.eq.s32.totalorder %s17, 1
    %p40 = por %p38, %p39
    %p42 = scmp.ne.s32.totalorder %s25, %s41
    %p43 = scmp.eq.s32.totalorder %s17, 0
    %p44 = por %p42, %p43
    %s46 = sadd.s32 %s45, 1
    %p49 = scmp.eq.s32.totalorder %s11, 1
    %p50 = scmp.ne.s32.totalorder %s45, %s47
    %p51 = scmp.eq.s32.totalorder %s11, 0
    %p52 = por %p50, %p51
    %p53 = scmp.ne.s32.totalorder %s45, %s47
    %p54 = scmp.eq.s32.totalorder %s16, 1
    %p55 = por %p53, %p54
    %p56 = scmp.ne.s32.totalorder %s47, %s48
    %p57 = scmp.eq.s32.totalorder %s16, 0
    %p58 = por %p56, %p57
    %p59 = scmp.ne.s32.totalorder %s47, %s48
    %p60 = scmp.eq.s32.totalorder %s17, 1
    %p61 = por %p59, %p60
    %p63 = scmp.ne.s32.totalorder %s48, %s62
    %p64 = scmp.eq.s32.totalorder %s17, 0
    %p65 = por %p63, %p64
    %s67 = sadd.s32 %s66, 1
    %p70 = scmp.eq.s32.totalorder %s11, 1
    %p71 = scmp.ne.s32.totalorder %s66, %s68
    %p72 = scmp.eq.s32.totalorder %s11, 0
    %p73 = por %p71, %p72
    %p74 = scmp.ne.s32.totalorder %s66, %s68
    %p75 = scmp.eq.s32.totalorder %s16, 1
    %p76 = por %p74, %p75
    %p77 = scmp.ne.s32.totalorder %s68, %s69
    %p78 = scmp.eq.s32.totalorder %s16, 0
    %p79 = por %p77, %p78
    %p80 = scmp.ne.s32.totalorder %s68, %s69
    %p81 = scmp.eq.s32.totalorder %s17, 1
    %p82 = por %p80, %p81
    %p84 = scmp.ne.s32.totalorder %s69, %s83
    %p85 = scmp.eq.s32.totalorder %s17, 0
    %p86 = por %p84, %p85
    %s88 = sadd.s32 %s87, 1
    %p91 = scmp.eq.s32.totalorder %s11, 1
    %p92 = scmp.ne.s32.totalorder %s87, %s89
    %p93 = scmp.eq.s32.totalorder %s11, 0
    %p94 = por %p92, %p93
    %p95 = scmp.ne.s32.totalorder %s87, %s89
    %p96 = scmp.eq.s32.totalorder %s16, 1
    %p97 = por %p95, %p96
    %p98 = scmp.ne.s32.totalorder %s89, %s90
    %p99 = scmp.eq.s32.totalorder %s16, 0
    %p100 = por %p98, %p99
    %p101 = scmp.ne.s32.totalorder %s89, %s90
    %p102 = scmp.eq.s32.totalorder %s17, 1
    %p103 = por %p101, %p102
    %p105 = scmp.ne.s32.totalorder %s90, %s104
    %p106 = scmp.eq.s32.totalorder %s17, 0
    %p107 = por %p105, %p106
    %s109 = sadd.s32 %s108, 1
    %p112 = scmp.eq.s32.totalorder %s11, 1
    %p113 = scmp.ne.s32.totalorder %s108, %s110
    %p114 = scmp.eq.s32.totalorder %s11, 0
    %p115 = por %p113, %p114
    %p116 = scmp.ne.s32.totalorder %s108, %s110
    %p117 = scmp.eq.s32.totalorder %s16, 1
    %p118 = por %p116, %p117
    %p119 = scmp.ne.s32.totalorder %s110, %s111
    %p120 = scmp.eq.s32.totalorder %s16, 0
    %p121 = por %p119, %p120
    %p122 = scmp.ne.s32.totalorder %s110, %s111
    %p123 = scmp.eq.s32.totalorder %s17, 1
    %p124 = por %p122, %p123
    %p126 = scmp.ne.s32.totalorder %s111, %s125
    %p127 = scmp.eq.s32.totalorder %s17, 0
    %p128 = por %p126, %p127
    %s129 = ssub.s32 %s11, %s18
    %p130 = scmp.eq.s32.totalorder %s129, 0
    %s132 = sadd.s32 %s131, 1
    %s133 = scalar_select %p130, %s131, %s132
    %p136 = pneg %p130
    %p137 = scmp.eq.s32.totalorder %s11, 1
    %p138 = por %p136, %p137
    %p139 = scmp.ne.s32.totalorder %s131, %s134
    %p140 = scmp.eq.s32.totalorder %s11, 0
    %p141 = por %p139, %p140
    %p142 = scmp.ne.s32.totalorder %s131, %s134
    %p143 = scmp.eq.s32.totalorder %s16, 1
    %p144 = por %p142, %p143
    %p145 = scmp.ne.s32.totalorder %s134, %s135
    %p146 = scmp.eq.s32.totalorder %s16, 0
    %p147 = por %p145, %p146
    %p148 = scmp.ne.s32.totalorder %s134, %s135
    %p149 = scmp.eq.s32.totalorder %s17, 1
    %p150 = por %p148, %p149
    %p152 = scmp.ne.s32.totalorder %s135, %s151
    %p153 = scmp.eq.s32.totalorder %s17, 0
    %p154 = por %p152, %p153
    %p155 = scmp.le.s32.totalorder 1, %s11
    %p156 = scmp.lt.s32.totalorder %s11, 3
    %p157 = pnand %p155, %p156
    %p158 = pneg %p157
    // Predicated region
    $region9: #{smallnet_forward.2} parent=5 // pred_check
      _
    $region10: #{smallnet_forward.2} parent=5 // pred_check_branch
      %160 = sbr.rel (%p157) target = $region12
    $region11: #{smallnet_forward.2} parent=5 // pred_region
      %s161 = ssub.s32 %s11, 1
      // Predicated region
      $region13: #{smallnet_forward.2} parent=11 // pred_check
        %p162 = pneg %p58
      $region14: #{smallnet_forward.2} parent=11 // pred_check_branch
        %164 = sbr.rel (%p162) target = $region16
      $region15: #{smallnet_forward.2} parent=11 // pred_region
        _
      $region16: #{smallnet_forward.2} parent=11 // pred_fallthru
        _
      // Predicated region
      $region17: #{smallnet_forward.2} parent=11 // pred_check
        %p165 = pneg %p79
      $region18: #{smallnet_forward.2} parent=11 // pred_check_branch
        %167 = sbr.rel (%p165) target = $region20
      $region19: #{smallnet_forward.2} parent=11 // pred_region
        _
      $region20: #{smallnet_forward.2} parent=11 // pred_fallthru
        _
      // Predicated region
      $region21: #{smallnet_forward.2} parent=11 // pred_check
        %p168 = pneg %p100
      $region22: #{smallnet_forward.2} parent=11 // pred_check_branch
        %170 = sbr.rel (%p168) target = $region24
      $region23: #{smallnet_forward.2} parent=11 // pred_region
        _
      $region24: #{smallnet_forward.2} parent=11 // pred_fallthru
        _
      // Predicated region
      $region25: #{smallnet_forward.2} parent=11 // pred_check
        %p171 = pneg %p121
      $region26: #{smallnet_forward.2} parent=11 // pred_check_branch
        %173 = sbr.rel (%p171) target = $region28
      $region27: #{smallnet_forward.2} parent=11 // pred_region
        _
      $region28: #{smallnet_forward.2} parent=11 // pred_fallthru
        _
    $region12: #{smallnet_forward.2} parent=5 // pred_fallthru
      _
    %p174 = scmp.lt.s32.totalorder %s11, 2
    // Predicated region
    $region29: #{smallnet_forward.2} parent=5 // pred_check
      %p175 = pneg %p174
    $region30: #{smallnet_forward.2} parent=5 // pred_check_branch
      %177 = sbr.rel (%p175) target = $region32
    $region31: #{smallnet_forward.2} parent=5 // pred_region
      // Predicated region
      $region33: #{smallnet_forward.2} parent=31 // pred_check
        %p178 = pneg %p31
      $region34: #{smallnet_forward.2} parent=31 // pred_check_branch
        %180 = sbr.rel (%p178) target = $region36
      $region35: #{smallnet_forward.2} parent=31 // pred_region
        %p181 = scmp.lt.s32.totalorder %s11, 1
        %s182 = scalar_select %p181, %s11, 1
        %s183 = smul.addr %s182, 64
        %s184 = smul.addr %s183, 8
        %s185 = scalar_lea.vmem %s0, %s184
      $region36: #{smallnet_forward.2} parent=31 // pred_fallthru
        _
    $region32: #{smallnet_forward.2} parent=5 // pred_fallthru
      _
    %p186 = scmp.le.s32.totalorder 1, %s11
    %p187 = scmp.lt.s32.totalorder %s11, 3
    %p188 = pnand %p186, %p187
    %p189 = pneg %p188
    // Predicated region
    $region37: #{smallnet_forward.2} parent=5 // pred_check
      _
    $region38: #{smallnet_forward.2} parent=5 // pred_check_branch
      %191 = sbr.rel (%p188) target = $region40
    $region39: #{smallnet_forward.2} parent=5 // pred_region
      %s192 = ssub.s32 %s11, 1
      %p193 = scmp.lt.s32.totalorder %s16, 1
      %s194 = scalar_select %p193, %s16, 1
      %s195 = smul.addr %s194, 64
      %s196 = smul.addr %s195, 8
      %s197 = scalar_lea.vmem %s0, %s196
      %p198 = pneg %p37
      %p199 = pneg %p34
      %p200 = pneg %p58
      %p201 = pneg %p55
      %p202 = pneg %p79
      %p203 = pneg %p76
      %p204 = pneg %p100
      %p205 = pneg %p97
      %p206 = pneg %p121
      %p207 = pneg %p118
      %p208 = pneg %p147
      %p209 = pneg %p144
      %p210 = scmp.lt.s32.totalorder %s16, 1
      %s211 = scalar_select %p210, %s16, 1
      %s212 = smul.addr %s211, 32
      %s213 = smul.addr %s212, 8
      %s214 = scalar_lea.vmem %s5, %s213
      %p215 = scmp.lt.s32.totalorder %s16, 1
      %s216 = scalar_select %p215, %s16, 1
      %s217 = smul.addr %s216, 64
      %s218 = smul.addr %s217, 8
      %s219 = scalar_lea.vmem %s0, %s218
      %p220 = scmp.lt.s32.totalorder %s16, 1
      %s221 = scalar_select %p220, %s16, 1
      %s222 = smul.addr %s221, 32
      %s223 = smul.addr %s222, 8
      %s224 = scalar_lea.vmem %s5, %s223
      %v225 = vld [vmem:[%s219] sm:$0xff]
      %v226 = vld [vmem:[%s219 + $0x8] sm:$0xff]
      %v227 = vld [vmem:[%s219 + $0x10] sm:$0xff]
      %v228 = vld [vmem:[%s219 + $0x18] sm:$0xff]
      %v229 = vld [vmem:[%s219 + $0x20] sm:$0xff]
      %v230 = vld [vmem:[%s219 + $0x28] sm:$0xff]
      %v231 = vld [vmem:[%s219 + $0x30] sm:$0xff]
      %v232 = vld [vmem:[%s219 + $0x38] sm:$0xff]
      %v233 = vld [vmem:[%s219 + $0x40] sm:$0xff]
      %v234 = vld [vmem:[%s219 + $0x48] sm:$0xff]
      %v235 = vld [vmem:[%s219 + $0x50] sm:$0xff]
      %v236 = vld [vmem:[%s219 + $0x58] sm:$0xff]
      %v237 = vld [vmem:[%s219 + $0x60] sm:$0xff]
      %v238 = vld [vmem:[%s219 + $0x68] sm:$0xff]
      %v239 = vld [vmem:[%s219 + $0x70] sm:$0xff]
      %v240 = vld [vmem:[%s219 + $0x78] sm:$0xff]
      %v241 = vld [vmem:[%s219 + $0x80] sm:$0xff]
      %v242 = vld [vmem:[%s219 + $0x88] sm:$0xff]
      %v243 = vld [vmem:[%s219 + $0x90] sm:$0xff]
      %v244 = vld [vmem:[%s219 + $0x98] sm:$0xff]
      %v245 = vld [vmem:[%s219 + $0xa0] sm:$0xff]
      %v246 = vld [vmem:[%s219 + $0xa8] sm:$0xff]
      %v247 = vld [vmem:[%s219 + $0xb0] sm:$0xff]
      %v248 = vld [vmem:[%s219 + $0xb8] sm:$0xff]
      %v249 = vld [vmem:[%s219 + $0xc0] sm:$0xff]
      %v250 = vld [vmem:[%s219 + $0xc8] sm:$0xff]
      %v251 = vld [vmem:[%s219 + $0xd0] sm:$0xff]
      %v252 = vld [vmem:[%s219 + $0xd8] sm:$0xff]
      %v253 = vld [vmem:[%s219 + $0xe0] sm:$0xff]
      %v254 = vld [vmem:[%s219 + $0xe8] sm:$0xff]
      %v255 = vld [vmem:[%s219 + $0xf0] sm:$0xff]
      %v256 = vld [vmem:[%s219 + $0xf8] sm:$0xff]
      %v257 = vld [vmem:[%s219 + $0x100] sm:$0xff]
      %v258 = vld [vmem:[%s219 + $0x108] sm:$0xff]
      %v259 = vld [vmem:[%s219 + $0x110] sm:$0xff]
      %v260 = vld [vmem:[%s219 + $0x118] sm:$0xff]
      %v261 = vld [vmem:[%s219 + $0x120] sm:$0xff]
      %v262 = vld [vmem:[%s219 + $0x128] sm:$0xff]
      %v263 = vld [vmem:[%s219 + $0x130] sm:$0xff]
      %v264 = vld [vmem:[%s219 + $0x138] sm:$0xff]
      %v265 = vld [vmem:[%s219 + $0x140] sm:$0xff]
      %v266 = vld [vmem:[%s219 + $0x148] sm:$0xff]
      %v267 = vld [vmem:[%s219 + $0x150] sm:$0xff]
      %v268 = vld [vmem:[%s219 + $0x158] sm:$0xff]
      %v269 = vld [vmem:[%s219 + $0x160] sm:$0xff]
      %v270 = vld [vmem:[%s219 + $0x168] sm:$0xff]
      %v271 = vld [vmem:[%s219 + $0x170] sm:$0xff]
      %v272 = vld [vmem:[%s219 + $0x178] sm:$0xff]
      %v273 = vld [vmem:[%s219 + $0x180] sm:$0xff]
      %v274 = vld [vmem:[%s219 + $0x188] sm:$0xff]
      %v275 = vld [vmem:[%s219 + $0x190] sm:$0xff]
      %v276 = vld [vmem:[%s219 + $0x198] sm:$0xff]
      %v277 = vld [vmem:[%s219 + $0x1a0] sm:$0xff]
      %v278 = vld [vmem:[%s219 + $0x1a8] sm:$0xff]
      %v279 = vld [vmem:[%s219 + $0x1b0] sm:$0xff]
      %v280 = vld [vmem:[%s219 + $0x1b8] sm:$0xff]
      %v281 = vld [vmem:[%s219 + $0x1c0] sm:$0xff]
      %v282 = vld [vmem:[%s219 + $0x1c8] sm:$0xff]
      %v283 = vld [vmem:[%s219 + $0x1d0] sm:$0xff]
      %v284 = vld [vmem:[%s219 + $0x1d8] sm:$0xff]
      %v285 = vld [vmem:[%s219 + $0x1e0] sm:$0xff]
      %v286 = vld [vmem:[%s219 + $0x1e8] sm:$0xff]
      %v287 = vld [vmem:[%s219 + $0x1f0] sm:$0xff]
      %v288 = vld [vmem:[%s219 + $0x1f8] sm:$0xff]
      %v289 = vld [vmem:[%s1] sm:$0xff]
      %v290 = vld [vmem:[%s1 + $0x8] sm:$0xff]
      %v291 = vld [vmem:[%s1 + $0x10] sm:$0xff]
      %v292 = vld [vmem:[%s1 + $0x18] sm:$0xff]
      %v293 = vld [vmem:[%s1 + $0x20] sm:$0xf]
      %v294 = vld [vmem:[%s2] sm:$0x1]
      %v296 = vlaneseq
      %v297 = vshrl.u32 %v296, 7
      %v298 = vsub.s32 0, %v297
      %v299 = vrot.slane %v294, %v298
      %vm301 = vcmask 293888
      %v303 = vsel %vm301, %v225, 0
      %v306 = vsel %vm301, %v226, 0
      %v309 = vsel %vm301, %v227, 0
      %v312 = vsel %vm301, %v228, 0
      %v315 = vsel %vm301, %v229, 0
      %v318 = vsel %vm301, %v230, 0
      %v321 = vsel %vm301, %v231, 0
      %v324 = vsel %vm301, %v232, 0
      %v327 = vsel %vm301, %v233, 0
      %v330 = vsel %vm301, %v234, 0
      %v333 = vsel %vm301, %v235, 0
      %v336 = vsel %vm301, %v236, 0
      %v339 = vsel %vm301, %v237, 0
      %v342 = vsel %vm301, %v238, 0
      %v345 = vsel %vm301, %v239, 0
      %v348 = vsel %vm301, %v240, 0
      %v351 = vsel %vm301, %v241, 0
      %v354 = vsel %vm301, %v242, 0
      %v357 = vsel %vm301, %v243, 0
      %v360 = vsel %vm301, %v244, 0
      %v363 = vsel %vm301, %v245, 0
      %v366 = vsel %vm301, %v246, 0
      %v369 = vsel %vm301, %v247, 0
      %v372 = vsel %vm301, %v248, 0
      %v375 = vsel %vm301, %v249, 0
      %v378 = vsel %vm301, %v250, 0
      %v381 = vsel %vm301, %v251, 0
      %v384 = vsel %vm301, %v252, 0
      %v387 = vsel %vm301, %v253, 0
      %v390 = vsel %vm301, %v254, 0
      %v393 = vsel %vm301, %v255, 0
      %v396 = vsel %vm301, %v256, 0
      %v399 = vsel %vm301, %v257, 0
      %v402 = vsel %vm301, %v258, 0
      %v405 = vsel %vm301, %v259, 0
      %v408 = vsel %vm301, %v260, 0
      %v411 = vsel %vm301, %v261, 0
      %v414 = vsel %vm301, %v262, 0
      %v417 = vsel %vm301, %v263, 0
      %v420 = vsel %vm301, %v264, 0
      %v423 = vsel %vm301, %v265, 0
      %v426 = vsel %vm301, %v266, 0
      %v429 = vsel %vm301, %v267, 0
      %v432 = vsel %vm301, %v268, 0
      %v435 = vsel %vm301, %v269, 0
      %v438 = vsel %vm301, %v270, 0
      %v441 = vsel %vm301, %v271, 0
      %v444 = vsel %vm301, %v272, 0
      %v447 = vsel %vm301, %v273, 0
      %v450 = vsel %vm301, %v274, 0
      %v453 = vsel %vm301, %v275, 0
      %v456 = vsel %vm301, %v276, 0
      %v459 = vsel %vm301, %v277, 0
      %v462 = vsel %vm301, %v278, 0
      %v465 = vsel %vm301, %v279, 0
      %v468 = vsel %vm301, %v280, 0
      %v471 = vsel %vm301, %v281, 0
      %v474 = vsel %vm301, %v282, 0
      %v477 = vsel %vm301, %v283, 0
      %v480 = vsel %vm301, %v284, 0
      %v483 = vsel %vm301, %v285, 0
      %v486 = vsel %vm301, %v286, 0
      %v489 = vsel %vm301, %v287, 0
      %v492 = vsel %vm301, %v288, 0
      %vm494 = vcmask 1043456
      %v496 = vsel %vm494, %v293, 0
      %498 = vmatprep.subr.mxu0 0.0
      %499 = vmatpush1.msra.mxu0 0.0
      %500 = vmatprep.subr.mxu0 0.0
      %501 = vmatpush1.msra.mxu0 0.0
      %502 = vmatprep.subr.mxu0 0.0
      %503 = vmatpush1.msra.mxu0 0.0
      %504 = vmatprep.subr.mxu0 0.0
      %505 = vmatpush1.msra.mxu0 0.0
      %506 = vmatprep.subr.mxu0 0.0
      %507 = vmatpush1.msra.mxu0 0.0
      %508 = vmatprep.subr.mxu0 0.0
      %509 = vmatpush1.msra.mxu0 0.0
      %510 = vmatprep.subr.mxu0 0.0
      %511 = vmatpush1.msra.mxu0 0.0
      %512 = vmatprep.subr.mxu0 0.0
      %513 = vmatpush1.msra.mxu0 0.0
      %514 = vmatprep.subr.mxu0 0.0
      %515 = vmatpush1.msra.mxu0 0.0
      %516 = vmatprep.subr.mxu0 0.0
      %517 = vmatpush1.msra.mxu0 0.0
      %518 = vmatprep.subr.mxu0 0.0
      %519 = vmatpush1.msra.mxu0 0.0
      %520 = vmatprep.subr.mxu0 0.0
      %521 = vmatpush1.msra.mxu0 %v496
      %522 = vmatprep.subr.mxu0 0.0
      %523 = vmatpush1.msra.mxu0 %v292
      %524 = vmatprep.subr.mxu0 0.0
      %525 = vmatpush1.msra.mxu0 %v291
      %526 = vmatprep.subr.mxu0 0.0
      %527 = vmatpush1.msra.mxu0 %v290
      %528 = vmatprep.subr.mxu0 0.0
      %529 = vmatpush1.msra.mxu0 %v289
      %530 = vmatprep.subr.mxu0 0.0
      %531 = vmatpush2.msra.mxu0 0.0
      %532 = vmatprep.subr.mxu0 0.0
      %533 = vmatpush2.msra.mxu0 0.0
      %534 = vmatprep.subr.mxu0 0.0
      %535 = vmatpush2.msra.mxu0 0.0
      %536 = vmatprep.subr.mxu0 0.0
      %537 = vmatpush2.msra.mxu0 0.0
      %538 = vmatprep.subr.mxu0 0.0
      %539 = vmatpush2.msra.mxu0 0.0
      %540 = vmatprep.subr.mxu0 0.0
      %541 = vmatpush2.msra.mxu0 0.0
      %542 = vmatprep.subr.mxu0 0.0
      %543 = vmatpush2.msra.mxu0 0.0
      %544 = vmatprep.subr.mxu0 0.0
      %545 = vmatpush2.msra.mxu0 0.0
      %546 = vmatprep.subr.mxu0 0.0
      %547 = vmatpush2.msra.mxu0 0.0
      %548 = vmatprep.subr.mxu0 0.0
      %549 = vmatpush2.msra.mxu0 0.0
      %550 = vmatprep.subr.mxu0 0.0
      %551 = vmatpush2.msra.mxu0 0.0
      %552 = vmatprep.subr.mxu0 0.0
      %553 = vmatpush2.msra.mxu0 0.0
      %554 = vmatprep.subr.mxu0 0.0
      %555 = vmatpush2.msra.mxu0 0.0
      %556 = vmatprep.subr.mxu0 0.0
      %557 = vmatpush2.msra.mxu0 0.0
      %558 = vmatprep.subr.mxu0 0.0
      %559 = vmatpush2.msra.mxu0 0.0
      %560 = vmatprep.subr.mxu0 0.0
      %561 = vmatpush2.msra.mxu0 0.0
      %562 = vmatprep.mubr.f32.mxu0 0.0
      %563 = vmatmul.mubr.f32.gmra.mxu0 %v303
      %v564 = vpop.f32.mrf.mxu0
      %v565 = vadd.f32 %v299, %v564
      %v566 = vpop.f32.mrf.mxu0
      %567 = vmatprep.mubr.f32.mxu0 0.0
      %568 = vmatmul.mubr.f32.gmra.mxu0 %v306
      %v569 = vpop.f32.mrf.mxu0
      %v570 = vadd.f32 %v299, %v569
      %v571 = vpop.f32.mrf.mxu0
      %572 = vmatprep.mubr.f32.mxu0 0.0
      %573 = vmatmul.mubr.f32.gmra.mxu0 %v309
      %v574 = vpop.f32.mrf.mxu0
      %v575 = vadd.f32 %v299, %v574
      %v576 = vpop.f32.mrf.mxu0
      %577 = vmatprep.mubr.f32.mxu0 0.0
      %578 = vmatmul.mubr.f32.gmra.mxu0 %v312
      %v579 = vpop.f32.mrf.mxu0
      %v580 = vadd.f32 %v299, %v579
      %v581 = vpop.f32.mrf.mxu0
      %582 = vmatprep.mubr.f32.mxu0 0.0
      %583 = vmatmul.mubr.f32.gmra.mxu0 %v315
      %v584 = vpop.f32.mrf.mxu0
      %v585 = vadd.f32 %v299, %v584
      %v586 = vpop.f32.mrf.mxu0
      %587 = vmatprep.mubr.f32.mxu0 0.0
      %588 = vmatmul.mubr.f32.gmra.mxu0 %v318
      %v589 = vpop.f32.mrf.mxu0
      %v590 = vadd.f32 %v299, %v589
      %v591 = vpop.f32.mrf.mxu0
      %592 = vmatprep.mubr.f32.mxu0 0.0
      %593 = vmatmul.mubr.f32.gmra.mxu0 %v321
      %v594 = vpop.f32.mrf.mxu0
      %v595 = vadd.f32 %v299, %v594
      %v596 = vpop.f32.mrf.mxu0
      %597 = vmatprep.mubr.f32.mxu0 0.0
      %598 = vmatmul.mubr.f32.gmra.mxu0 %v324
      %v599 = vpop.f32.mrf.mxu0
      %v600 = vadd.f32 %v299, %v599
      %v601 = vpop.f32.mrf.mxu0
      %602 = vmatprep.mubr.f32.mxu0 0.0
      %603 = vmatmul.mubr.f32.gmra.mxu0 %v327
      %v604 = vpop.f32.mrf.mxu0
      %v605 = vadd.f32 %v299, %v604
      %v606 = vpop.f32.mrf.mxu0
      %607 = vmatprep.mubr.f32.mxu0 0.0
      %608 = vmatmul.mubr.f32.gmra.mxu0 %v330
      %v609 = vpop.f32.mrf.mxu0
      %v610 = vadd.f32 %v299, %v609
      %v611 = vpop.f32.mrf.mxu0
      %612 = vmatprep.mubr.f32.mxu0 0.0
      %613 = vmatmul.mubr.f32.gmra.mxu0 %v333
      %v614 = vpop.f32.mrf.mxu0
      %v615 = vadd.f32 %v299, %v614
      %v616 = vpop.f32.mrf.mxu0
      %617 = vmatprep.mubr.f32.mxu0 0.0
      %618 = vmatmul.mubr.f32.gmra.mxu0 %v336
      %v619 = vpop.f32.mrf.mxu0
      %v620 = vadd.f32 %v299, %v619
      %v621 = vpop.f32.mrf.mxu0
      %622 = vmatprep.mubr.f32.mxu0 0.0
      %623 = vmatmul.mubr.f32.gmra.mxu0 %v339
      %v624 = vpop.f32.mrf.mxu0
      %v625 = vadd.f32 %v299, %v624
      %v626 = vpop.f32.mrf.mxu0
      %627 = vmatprep.mubr.f32.mxu0 0.0
      %628 = vmatmul.mubr.f32.gmra.mxu0 %v342
      %v629 = vpop.f32.mrf.mxu0
      %v630 = vadd.f32 %v299, %v629
      %v631 = vpop.f32.mrf.mxu0
      %632 = vmatprep.mubr.f32.mxu0 0.0
      %633 = vmatmul.mubr.f32.gmra.mxu0 %v345
      %v634 = vpop.f32.mrf.mxu0
      %v635 = vadd.f32 %v299, %v634
      %v636 = vpop.f32.mrf.mxu0
      %637 = vmatprep.mubr.f32.mxu0 0.0
      %638 = vmatmul.mubr.f32.gmra.mxu0 %v348
      %v639 = vpop.f32.mrf.mxu0
      %v640 = vadd.f32 %v299, %v639
      %v641 = vpop.f32.mrf.mxu0
      %642 = vmatprep.mubr.f32.mxu0 0.0
      %643 = vmatmul.mubr.f32.gmra.mxu0 %v351
      %v644 = vpop.f32.mrf.mxu0
      %v645 = vadd.f32 %v299, %v644
      %v646 = vpop.f32.mrf.mxu0
      %647 = vmatprep.mubr.f32.mxu0 0.0
      %648 = vmatmul.mubr.f32.gmra.mxu0 %v354
      %v649 = vpop.f32.mrf.mxu0
      %v650 = vadd.f32 %v299, %v649
      %v651 = vpop.f32.mrf.mxu0
      %652 = vmatprep.mubr.f32.mxu0 0.0
      %653 = vmatmul.mubr.f32.gmra.mxu0 %v357
      %v654 = vpop.f32.mrf.mxu0
      %v655 = vadd.f32 %v299, %v654
      %v656 = vpop.f32.mrf.mxu0
      %657 = vmatprep.mubr.f32.mxu0 0.0
      %658 = vmatmul.mubr.f32.gmra.mxu0 %v360
      %v659 = vpop.f32.mrf.mxu0
      %v660 = vadd.f32 %v299, %v659
      %v661 = vpop.f32.mrf.mxu0
      %662 = vmatprep.mubr.f32.mxu0 0.0
      %663 = vmatmul.mubr.f32.gmra.mxu0 %v363
      %v664 = vpop.f32.mrf.mxu0
      %v665 = vadd.f32 %v299, %v664
      %v666 = vpop.f32.mrf.mxu0
      %667 = vmatprep.mubr.f32.mxu0 0.0
      %668 = vmatmul.mubr.f32.gmra.mxu0 %v366
      %v669 = vpop.f32.mrf.mxu0
      %v670 = vadd.f32 %v299, %v669
      %v671 = vpop.f32.mrf.mxu0
      %672 = vmatprep.mubr.f32.mxu0 0.0
      %673 = vmatmul.mubr.f32.gmra.mxu0 %v369
      %v674 = vpop.f32.mrf.mxu0
      %v675 = vadd.f32 %v299, %v674
      %v676 = vpop.f32.mrf.mxu0
      %677 = vmatprep.mubr.f32.mxu0 0.0
      %678 = vmatmul.mubr.f32.gmra.mxu0 %v372
      %v679 = vpop.f32.mrf.mxu0
      %v680 = vadd.f32 %v299, %v679
      %v681 = vpop.f32.mrf.mxu0
      %682 = vmatprep.mubr.f32.mxu0 0.0
      %683 = vmatmul.mubr.f32.gmra.mxu0 %v375
      %v684 = vpop.f32.mrf.mxu0
      %v685 = vadd.f32 %v299, %v684
      %v686 = vpop.f32.mrf.mxu0
      %687 = vmatprep.mubr.f32.mxu0 0.0
      %688 = vmatmul.mubr.f32.gmra.mxu0 %v378
      %v689 = vpop.f32.mrf.mxu0
      %v690 = vadd.f32 %v299, %v689
      %v691 = vpop.f32.mrf.mxu0
      %692 = vmatprep.mubr.f32.mxu0 0.0
      %693 = vmatmul.mubr.f32.gmra.mxu0 %v381
      %v694 = vpop.f32.mrf.mxu0
      %v695 = vadd.f32 %v299, %v694
      %v696 = vpop.f32.mrf.mxu0
      %697 = vmatprep.mubr.f32.mxu0 0.0
      %698 = vmatmul.mubr.f32.gmra.mxu0 %v384
      %v699 = vpop.f32.mrf.mxu0
      %v700 = vadd.f32 %v299, %v699
      %v701 = vpop.f32.mrf.mxu0
      %702 = vmatprep.mubr.f32.mxu0 0.0
      %703 = vmatmul.mubr.f32.gmra.mxu0 %v387
      %v704 = vpop.f32.mrf.mxu0
      %v705 = vadd.f32 %v299, %v704
      %v706 = vpop.f32.mrf.mxu0
      %707 = vmatprep.mubr.f32.mxu0 0.0
      %708 = vmatmul.mubr.f32.gmra.mxu0 %v390
      %v709 = vpop.f32.mrf.mxu0
      %v710 = vadd.f32 %v299, %v709
      %v711 = vpop.f32.mrf.mxu0
      %712 = vmatprep.mubr.f32.mxu0 0.0
      %713 = vmatmul.mubr.f32.gmra.mxu0 %v393
      %v714 = vpop.f32.mrf.mxu0
      %v715 = vadd.f32 %v299, %v714
      %v716 = vpop.f32.mrf.mxu0
      %717 = vmatprep.mubr.f32.mxu0 0.0
      %718 = vmatmul.mubr.f32.gmra.mxu0 %v396
      %v719 = vpop.f32.mrf.mxu0
      %v720 = vadd.f32 %v299, %v719
      %v721 = vpop.f32.mrf.mxu0
      %722 = vmatprep.mubr.f32.mxu0 0.0
      %723 = vmatmul.mubr.f32.gmra.mxu0 %v399
      %v724 = vpop.f32.mrf.mxu0
      %v725 = vadd.f32 %v299, %v724
      %v726 = vpop.f32.mrf.mxu0
      %727 = vmatprep.mubr.f32.mxu0 0.0
      %728 = vmatmul.mubr.f32.gmra.mxu0 %v402
      %v729 = vpop.f32.mrf.mxu0
      %v730 = vadd.f32 %v299, %v729
      %v731 = vpop.f32.mrf.mxu0
      %732 = vmatprep.mubr.f32.mxu0 0.0
      %733 = vmatmul.mubr.f32.gmra.mxu0 %v405
      %v734 = vpop.f32.mrf.mxu0
      %v735 = vadd.f32 %v299, %v734
      %v736 = vpop.f32.mrf.mxu0
      %737 = vmatprep.mubr.f32.mxu0 0.0
      %738 = vmatmul.mubr.f32.gmra.mxu0 %v408
      %v739 = vpop.f32.mrf.mxu0
      %v740 = vadd.f32 %v299, %v739
      %v741 = vpop.f32.mrf.mxu0
      %742 = vmatprep.mubr.f32.mxu0 0.0
      %743 = vmatmul.mubr.f32.gmra.mxu0 %v411
      %v744 = vpop.f32.mrf.mxu0
      %v745 = vadd.f32 %v299, %v744
      %v746 = vpop.f32.mrf.mxu0
      %747 = vmatprep.mubr.f32.mxu0 0.0
      %748 = vmatmul.mubr.f32.gmra.mxu0 %v414
      %v749 = vpop.f32.mrf.mxu0
      %v750 = vadd.f32 %v299, %v749
      %v751 = vpop.f32.mrf.mxu0
      %752 = vmatprep.mubr.f32.mxu0 0.0
      %753 = vmatmul.mubr.f32.gmra.mxu0 %v417
      %v754 = vpop.f32.mrf.mxu0
      %v755 = vadd.f32 %v299, %v754
      %v756 = vpop.f32.mrf.mxu0
      %757 = vmatprep.mubr.f32.mxu0 0.0
      %758 = vmatmul.mubr.f32.gmra.mxu0 %v420
      %v759 = vpop.f32.mrf.mxu0
      %v760 = vadd.f32 %v299, %v759
      %v761 = vpop.f32.mrf.mxu0
      %762 = vmatprep.mubr.f32.mxu0 0.0
      %763 = vmatmul.mubr.f32.gmra.mxu0 %v423
      %v764 = vpop.f32.mrf.mxu0
      %v765 = vadd.f32 %v299, %v764
      %v766 = vpop.f32.mrf.mxu0
      %767 = vmatprep.mubr.f32.mxu0 0.0
      %768 = vmatmul.mubr.f32.gmra.mxu0 %v426
      %v769 = vpop.f32.mrf.mxu0
      %v770 = vadd.f32 %v299, %v769
      %v771 = vpop.f32.mrf.mxu0
      %772 = vmatprep.mubr.f32.mxu0 0.0
      %773 = vmatmul.mubr.f32.gmra.mxu0 %v429
      %v774 = vpop.f32.mrf.mxu0
      %v775 = vadd.f32 %v299, %v774
      %v776 = vpop.f32.mrf.mxu0
      %777 = vmatprep.mubr.f32.mxu0 0.0
      %778 = vmatmul.mubr.f32.gmra.mxu0 %v432
      %v779 = vpop.f32.mrf.mxu0
      %v780 = vadd.f32 %v299, %v779
      %v781 = vpop.f32.mrf.mxu0
      %782 = vmatprep.mubr.f32.mxu0 0.0
      %783 = vmatmul.mubr.f32.gmra.mxu0 %v435
      %v784 = vpop.f32.mrf.mxu0
      %v785 = vadd.f32 %v299, %v784
      %v786 = vpop.f32.mrf.mxu0
      %787 = vmatprep.mubr.f32.mxu0 0.0
      %788 = vmatmul.mubr.f32.gmra.mxu0 %v438
      %v789 = vpop.f32.mrf.mxu0
      %v790 = vadd.f32 %v299, %v789
      %v791 = vpop.f32.mrf.mxu0
      %792 = vmatprep.mubr.f32.mxu0 0.0
      %793 = vmatmul.mubr.f32.gmra.mxu0 %v441
      %v794 = vpop.f32.mrf.mxu0
      %v795 = vadd.f32 %v299, %v794
      %v796 = vpop.f32.mrf.mxu0
      %797 = vmatprep.mubr.f32.mxu0 0.0
      %798 = vmatmul.mubr.f32.gmra.mxu0 %v444
      %v799 = vpop.f32.mrf.mxu0
      %v800 = vadd.f32 %v299, %v799
      %v801 = vpop.f32.mrf.mxu0
      %802 = vmatprep.mubr.f32.mxu0 0.0
      %803 = vmatmul.mubr.f32.gmra.mxu0 %v447
      %v804 = vpop.f32.mrf.mxu0
      %v805 = vadd.f32 %v299, %v804
      %v806 = vpop.f32.mrf.mxu0
      %807 = vmatprep.mubr.f32.mxu0 0.0
      %808 = vmatmul.mubr.f32.gmra.mxu0 %v450
      %v809 = vpop.f32.mrf.mxu0
      %v810 = vadd.f32 %v299, %v809
      %v811 = vpop.f32.mrf.mxu0
      %812 = vmatprep.mubr.f32.mxu0 0.0
      %813 = vmatmul.mubr.f32.gmra.mxu0 %v453
      %v814 = vpop.f32.mrf.mxu0
      %v815 = vadd.f32 %v299, %v814
      %v816 = vpop.f32.mrf.mxu0
      %817 = vmatprep.mubr.f32.mxu0 0.0
      %818 = vmatmul.mubr.f32.gmra.mxu0 %v456
      %v819 = vpop.f32.mrf.mxu0
      %v820 = vadd.f32 %v299, %v819
      %v821 = vpop.f32.mrf.mxu0
      %822 = vmatprep.mubr.f32.mxu0 0.0
      %823 = vmatmul.mubr.f32.gmra.mxu0 %v459
      %v824 = vpop.f32.mrf.mxu0
      %v825 = vadd.f32 %v299, %v824
      %v826 = vpop.f32.mrf.mxu0
      %827 = vmatprep.mubr.f32.mxu0 0.0
      %828 = vmatmul.mubr.f32.gmra.mxu0 %v462
      %v829 = vpop.f32.mrf.mxu0
      %v830 = vadd.f32 %v299, %v829
      %v831 = vpop.f32.mrf.mxu0
      %832 = vmatprep.mubr.f32.mxu0 0.0
      %833 = vmatmul.mubr.f32.gmra.mxu0 %v465
      %v834 = vpop.f32.mrf.mxu0
      %v835 = vadd.f32 %v299, %v834
      %v836 = vpop.f32.mrf.mxu0
      %837 = vmatprep.mubr.f32.mxu0 0.0
      %838 = vmatmul.mubr.f32.gmra.mxu0 %v468
      %v839 = vpop.f32.mrf.mxu0
      %v840 = vadd.f32 %v299, %v839
      %v841 = vpop.f32.mrf.mxu0
      %842 = vmatprep.mubr.f32.mxu0 0.0
      %843 = vmatmul.mubr.f32.gmra.mxu0 %v471
      %v844 = vpop.f32.mrf.mxu0
      %v845 = vadd.f32 %v299, %v844
      %v846 = vpop.f32.mrf.mxu0
      %847 = vmatprep.mubr.f32.mxu0 0.0
      %848 = vmatmul.mubr.f32.gmra.mxu0 %v474
      %v849 = vpop.f32.mrf.mxu0
      %v850 = vadd.f32 %v299, %v849
      %v851 = vpop.f32.mrf.mxu0
      %852 = vmatprep.mubr.f32.mxu0 0.0
      %853 = vmatmul.mubr.f32.gmra.mxu0 %v477
      %v854 = vpop.f32.mrf.mxu0
      %v855 = vadd.f32 %v299, %v854
      %v856 = vpop.f32.mrf.mxu0
      %857 = vmatprep.mubr.f32.mxu0 0.0
      %858 = vmatmul.mubr.f32.gmra.mxu0 %v480
      %v859 = vpop.f32.mrf.mxu0
      %v860 = vadd.f32 %v299, %v859
      %v861 = vpop.f32.mrf.mxu0
      %862 = vmatprep.mubr.f32.mxu0 0.0
      %863 = vmatmul.mubr.f32.gmra.mxu0 %v483
      %v864 = vpop.f32.mrf.mxu0
      %v865 = vadd.f32 %v299, %v864
      %v866 = vpop.f32.mrf.mxu0
      %867 = vmatprep.mubr.f32.mxu0 0.0
      %868 = vmatmul.mubr.f32.gmra.mxu0 %v486
      %v869 = vpop.f32.mrf.mxu0
      %v870 = vadd.f32 %v299, %v869
      %v871 = vpop.f32.mrf.mxu0
      %872 = vmatprep.mubr.f32.mxu0 0.0
      %873 = vmatmul.mubr.f32.gmra.mxu0 %v489
      %v874 = vpop.f32.mrf.mxu0
      %v875 = vadd.f32 %v299, %v874
      %v876 = vpop.f32.mrf.mxu0
      %877 = vmatprep.mubr.f32.mxu0 0.0
      %878 = vmatmul.mubr.f32.gmra.mxu0 %v492
      %v879 = vpop.f32.mrf.mxu0
      %v880 = vadd.f32 %v299, %v879
      %v881 = vpop.f32.mrf.mxu0
      %882 = vdwg.mxu0
      %v883 = vmax.f32 %v565, 0.0
      %v884 = vmax.f32 %v570, 0.0
      %v885 = vmax.f32 %v575, 0.0
      %v886 = vmax.f32 %v580, 0.0
      %v887 = vmax.f32 %v585, 0.0
      %v888 = vmax.f32 %v590, 0.0
      %v889 = vmax.f32 %v595, 0.0
      %v890 = vmax.f32 %v600, 0.0
      %v891 = vmax.f32 %v605, 0.0
      %v892 = vmax.f32 %v610, 0.0
      %v893 = vmax.f32 %v615, 0.0
      %v894 = vmax.f32 %v620, 0.0
      %v895 = vmax.f32 %v625, 0.0
      %v896 = vmax.f32 %v630, 0.0
      %v897 = vmax.f32 %v635, 0.0
      %v898 = vmax.f32 %v640, 0.0
      %v899 = vmax.f32 %v645, 0.0
      %v900 = vmax.f32 %v650, 0.0
      %v901 = vmax.f32 %v655, 0.0
      %v902 = vmax.f32 %v660, 0.0
      %v903 = vmax.f32 %v665, 0.0
      %v904 = vmax.f32 %v670, 0.0
      %v905 = vmax.f32 %v675, 0.0
      %v906 = vmax.f32 %v680, 0.0
      %v907 = vmax.f32 %v685, 0.0
      %v908 = vmax.f32 %v690, 0.0
      %v909 = vmax.f32 %v695, 0.0
      %v910 = vmax.f32 %v700, 0.0
      %v911 = vmax.f32 %v705, 0.0
      %v912 = vmax.f32 %v710, 0.0
      %v913 = vmax.f32 %v715, 0.0
      %v914 = vmax.f32 %v720, 0.0
      %v915 = vmax.f32 %v725, 0.0
      %v916 = vmax.f32 %v730, 0.0
      %v917 = vmax.f32 %v735, 0.0
      %v918 = vmax.f32 %v740, 0.0
      %v919 = vmax.f32 %v745, 0.0
      %v920 = vmax.f32 %v750, 0.0
      %v921 = vmax.f32 %v755, 0.0
      %v922 = vmax.f32 %v760, 0.0
      %v923 = vmax.f32 %v765, 0.0
      %v924 = vmax.f32 %v770, 0.0
      %v925 = vmax.f32 %v775, 0.0
      %v926 = vmax.f32 %v780, 0.0
      %v927 = vmax.f32 %v785, 0.0
      %v928 = vmax.f32 %v790, 0.0
      %v929 = vmax.f32 %v795, 0.0
      %v930 = vmax.f32 %v800, 0.0
      %v931 = vmax.f32 %v805, 0.0
      %v932 = vmax.f32 %v810, 0.0
      %v933 = vmax.f32 %v815, 0.0
      %v934 = vmax.f32 %v820, 0.0
      %v935 = vmax.f32 %v825, 0.0
      %v936 = vmax.f32 %v830, 0.0
      %v937 = vmax.f32 %v835, 0.0
      %v938 = vmax.f32 %v840, 0.0
      %v939 = vmax.f32 %v845, 0.0
      %v940 = vmax.f32 %v850, 0.0
      %v941 = vmax.f32 %v855, 0.0
      %v942 = vmax.f32 %v860, 0.0
      %v943 = vmax.f32 %v865, 0.0
      %v944 = vmax.f32 %v870, 0.0
      %v945 = vmax.f32 %v875, 0.0
      %v946 = vmax.f32 %v880, 0.0
      %vm947 = vcmask 261120
      %948 = vst.msk [vmem:[#allocation2] sm:$0xff] %vm947, 0.0
      %949 = vst.msk [vmem:[#allocation2 + $0x8] sm:$0xff] %vm947, 0.0
      %vm950 = vcmask 253952
      %951 = vst.msk [vmem:[#allocation2 + $0x10] sm:$0x1] %vm950, 0.0
      %952 = vst.msk [vmem:[#allocation2 + $0x18] sm:$0xff] %vm947, 0.0
      %953 = vst.msk [vmem:[#allocation2 + $0x20] sm:$0xff] %vm947, 0.0
      %954 = vst.msk [vmem:[#allocation2 + $0x28] sm:$0x1] %vm950, 0.0
      %955 = vst.msk [vmem:[#allocation2 + $0x30] sm:$0xff] %vm947, 0.0
      %956 = vst.msk [vmem:[#allocation2 + $0x38] sm:$0xff] %vm947, 0.0
      %957 = vst.msk [vmem:[#allocation2 + $0x40] sm:$0x1] %vm950, 0.0
      %958 = vst.msk [vmem:[#allocation2 + $0x48] sm:$0xff] %vm947, 0.0
      %959 = vst.msk [vmem:[#allocation2 + $0x50] sm:$0xff] %vm947, 0.0
      %960 = vst.msk [vmem:[#allocation2 + $0x58] sm:$0x1] %vm950, 0.0
      %961 = vst.msk [vmem:[#allocation2 + $0x60] sm:$0xff] %vm947, 0.0
      %962 = vst.msk [vmem:[#allocation2 + $0x68] sm:$0xff] %vm947, 0.0
      %963 = vst.msk [vmem:[#allocation2 + $0x70] sm:$0x1] %vm950, 0.0
      %964 = vst.msk [vmem:[#allocation2 + $0x78] sm:$0xff] %vm947, 0.0
      %965 = vst.msk [vmem:[#allocation2 + $0x80] sm:$0xff] %vm947, 0.0
      %966 = vst.msk [vmem:[#allocation2 + $0x88] sm:$0x1] %vm950, 0.0
      %967 = vst.msk [vmem:[#allocation2 + $0x90] sm:$0xff] %vm947, 0.0
      %968 = vst.msk [vmem:[#allocation2 + $0x98] sm:$0xff] %vm947, 0.0
      %969 = vst.msk [vmem:[#allocation2 + $0xa0] sm:$0x1] %vm950, 0.0
      %970 = vst.msk [vmem:[#allocation2 + $0xa8] sm:$0xff] %vm947, 0.0
      %971 = vst.msk [vmem:[#allocation2 + $0xb0] sm:$0xff] %vm947, 0.0
      %972 = vst.msk [vmem:[#allocation2 + $0xb8] sm:$0x1] %vm950, 0.0
      %973 = vst.msk [vmem:[#allocation2 + $0xc0] sm:$0xff] %vm947, 0.0
      %974 = vst.msk [vmem:[#allocation2 + $0xc8] sm:$0xff] %vm947, 0.0
      %975 = vst.msk [vmem:[#allocation2 + $0xd0] sm:$0x1] %vm950, 0.0
      %976 = vst.msk [vmem:[#allocation2 + $0xd8] sm:$0xff] %vm947, 0.0
      %977 = vst.msk [vmem:[#allocation2 + $0xe0] sm:$0xff] %vm947, 0.0
      %978 = vst.msk [vmem:[#allocation2 + $0xe8] sm:$0x1] %vm950, 0.0
      %979 = vst.msk [vmem:[#allocation2 + $0xf0] sm:$0xff] %vm947, 0.0
      %980 = vst.msk [vmem:[#allocation2 + $0xf8] sm:$0xff] %vm947, 0.0
      %981 = vst.msk [vmem:[#allocation2 + $0x100] sm:$0x1] %vm950, 0.0
      %982 = vst.msk [vmem:[#allocation2 + $0x108] sm:$0xff] %vm947, 0.0
      %983 = vst.msk [vmem:[#allocation2 + $0x110] sm:$0xff] %vm947, 0.0
      %984 = vst.msk [vmem:[#allocation2 + $0x118] sm:$0x1] %vm950, 0.0
      %985 = vst.msk [vmem:[#allocation2 + $0x120] sm:$0xff] %vm947, 0.0
      %986 = vst.msk [vmem:[#allocation2 + $0x128] sm:$0xff] %vm947, 0.0
      %987 = vst.msk [vmem:[#allocation2 + $0x130] sm:$0x1] %vm950, 0.0
      %988 = vst.msk [vmem:[#allocation2 + $0x138] sm:$0xff] %vm947, 0.0
      %989 = vst.msk [vmem:[#allocation2 + $0x140] sm:$0xff] %vm947, 0.0
      %990 = vst.msk [vmem:[#allocation2 + $0x148] sm:$0x1] %vm950, 0.0
      %991 = vst.msk [vmem:[#allocation2 + $0x150] sm:$0xff] %vm947, 0.0
      %992 = vst.msk [vmem:[#allocation2 + $0x158] sm:$0xff] %vm947, 0.0
      %993 = vst.msk [vmem:[#allocation2 + $0x160] sm:$0x1] %vm950, 0.0
      %994 = vst.msk [vmem:[#allocation2 + $0x168] sm:$0xff] %vm947, 0.0
      %995 = vst.msk [vmem:[#allocation2 + $0x170] sm:$0xff] %vm947, 0.0
      %996 = vst.msk [vmem:[#allocation2 + $0x178] sm:$0x1] %vm950, 0.0
      %997 = vst.msk [vmem:[#allocation2 + $0x180] sm:$0xff] %vm947, 0.0
      %998 = vst.msk [vmem:[#allocation2 + $0x188] sm:$0xff] %vm947, 0.0
      %999 = vst.msk [vmem:[#allocation2 + $0x190] sm:$0x1] %vm950, 0.0
      %1000 = vst.msk [vmem:[#allocation2 + $0x198] sm:$0xff] %vm947, 0.0
      %1001 = vst.msk [vmem:[#allocation2 + $0x1a0] sm:$0xff] %vm947, 0.0
      %1002 = vst.msk [vmem:[#allocation2 + $0x1a8] sm:$0x1] %vm950, 0.0
      %1003 = vst.msk [vmem:[#allocation2 + $0x1b0] sm:$0xff] %vm947, 0.0
      %1004 = vst.msk [vmem:[#allocation2 + $0x1b8] sm:$0xff] %vm947, 0.0
      %1005 = vst.msk [vmem:[#allocation2 + $0x1c0] sm:$0x1] %vm950, 0.0
      %1006 = vst.msk [vmem:[#allocation2 + $0x1c8] sm:$0xff] %vm947, 0.0
      %1007 = vst.msk [vmem:[#allocation2 + $0x1d0] sm:$0xff] %vm947, 0.0
      %1008 = vst.msk [vmem:[#allocation2 + $0x1d8] sm:$0x1] %vm950, 0.0
      %1009 = vst.msk [vmem:[#allocation2 + $0x1e0] sm:$0xff] %vm947, 0.0
      %1010 = vst.msk [vmem:[#allocation2 + $0x1e8] sm:$0xff] %vm947, 0.0
      %1011 = vst.msk [vmem:[#allocation2 + $0x1f0] sm:$0x1] %vm950, 0.0
      %1012 = vst.msk [vmem:[#allocation2 + $0x1f8] sm:$0xff] %vm947, 0.0
      %1013 = vst.msk [vmem:[#allocation2 + $0x200] sm:$0xff] %vm947, 0.0
      %1014 = vst.msk [vmem:[#allocation2 + $0x208] sm:$0x1] %vm950, 0.0
      %1015 = vst.msk [vmem:[#allocation2 + $0x210] sm:$0xff] %vm947, 0.0
      %1016 = vst.msk [vmem:[#allocation2 + $0x218] sm:$0xff] %vm947, 0.0
      %1017 = vst.msk [vmem:[#allocation2 + $0x220] sm:$0x1] %vm950, 0.0
      %1018 = vst.msk [vmem:[#allocation2 + $0x228] sm:$0xff] %vm947, 0.0
      %1019 = vst.msk [vmem:[#allocation2 + $0x230] sm:$0xff] %vm947, 0.0
      %1020 = vst.msk [vmem:[#allocation2 + $0x238] sm:$0x1] %vm950, 0.0
      %1021 = vst.msk [vmem:[#allocation2 + $0x240] sm:$0xff] %vm947, 0.0
      %1022 = vst.msk [vmem:[#allocation2 + $0x248] sm:$0xff] %vm947, 0.0
      %1023 = vst.msk [vmem:[#allocation2 + $0x250] sm:$0x1] %vm950, 0.0
      %1024 = vst.msk [vmem:[#allocation2 + $0x258] sm:$0xff] %vm947, 0.0
      %1025 = vst.msk [vmem:[#allocation2 + $0x260] sm:$0xff] %vm947, 0.0
      %1026 = vst.msk [vmem:[#allocation2 + $0x268] sm:$0x1] %vm950, 0.0
      %1027 = vst.msk [vmem:[#allocation2 + $0x270] sm:$0xff] %vm947, 0.0
      %1028 = vst.msk [vmem:[#allocation2 + $0x278] sm:$0xff] %vm947, 0.0
      %1029 = vst.msk [vmem:[#allocation2 + $0x280] sm:$0x1] %vm950, 0.0
      %1030 = vst.msk [vmem:[#allocation2 + $0x288] sm:$0xff] %vm947, 0.0
      %1031 = vst.msk [vmem:[#allocation2 + $0x290] sm:$0xff] %vm947, 0.0
      %1032 = vst.msk [vmem:[#allocation2 + $0x298] sm:$0x1] %vm950, 0.0
      %1033 = vst.msk [vmem:[#allocation2 + $0x2a0] sm:$0xff] %vm947, 0.0
      %1034 = vst.msk [vmem:[#allocation2 + $0x2a8] sm:$0xff] %vm947, 0.0
      %1035 = vst.msk [vmem:[#allocation2 + $0x2b0] sm:$0x1] %vm950, 0.0
      %1036 = vst.msk [vmem:[#allocation2 + $0x2b8] sm:$0xff] %vm947, 0.0
      %1037 = vst.msk [vmem:[#allocation2 + $0x2c0] sm:$0xff] %vm947, 0.0
      %1038 = vst.msk [vmem:[#allocation2 + $0x2c8] sm:$0x1] %vm950, 0.0
      %1039 = vst.msk [vmem:[#allocation2 + $0x2d0] sm:$0xff] %vm947, 0.0
      %1040 = vst.msk [vmem:[#allocation2 + $0x2d8] sm:$0xff] %vm947, 0.0
      %1041 = vst.msk [vmem:[#allocation2 + $0x2e0] sm:$0x1] %vm950, 0.0
      %1042 = vst.msk [vmem:[#allocation2 + $0x2e8] sm:$0xff] %vm947, 0.0
      %1043 = vst.msk [vmem:[#allocation2 + $0x2f0] sm:$0xff] %vm947, 0.0
      %1044 = vst.msk [vmem:[#allocation2 + $0x2f8] sm:$0x1] %vm950, 0.0
      %1045 = vst.msk [vmem:[#allocation2 + $0x300] sm:$0xff] %vm947, 0.0
      %1046 = vst.msk [vmem:[#allocation2 + $0x308] sm:$0xff] %vm947, 0.0
      %1047 = vst.msk [vmem:[#allocation2 + $0x310] sm:$0x1] %vm950, 0.0
      %1048 = vst.msk [vmem:[#allocation2 + $0x318] sm:$0xff] %vm947, 0.0
      %1049 = vst.msk [vmem:[#allocation2 + $0x320] sm:$0xff] %vm947, 0.0
      %1050 = vst.msk [vmem:[#allocation2 + $0x328] sm:$0x1] %vm950, 0.0
      %1115 = vrot.lane.b32.xlu0 %v883, 16
      %v1116 = vpop.permute.xlu0 %1115
      %1117 = vrot.lane.b32.xlu0 %v884, 16
      %v1118 = vpop.permute.xlu0 %1117
      %1119 = vrot.lane.b32.xlu0 %v885, 16
      %v1120 = vpop.permute.xlu0 %1119
      %1121 = vrot.lane.b32.xlu0 %v886, 16
      %v1122 = vpop.permute.xlu0 %1121
      %1123 = vrot.lane.b32.xlu0 %v887, 16
      %v1124 = vpop.permute.xlu0 %1123
      %1125 = vrot.lane.b32.xlu0 %v888, 16
      %v1126 = vpop.permute.xlu0 %1125
      %1127 = vrot.lane.b32.xlu0 %v889, 16
      %v1128 = vpop.permute.xlu0 %1127
      %1129 = vrot.lane.b32.xlu0 %v890, 16
      %v1130 = vpop.permute.xlu0 %1129
      %1131 = vrot.lane.b32.xlu0 %v891, 16
      %v1132 = vpop.permute.xlu0 %1131
      %1133 = vrot.lane.b32.xlu0 %v892, 16
      %v1134 = vpop.permute.xlu0 %1133
      %1135 = vrot.lane.b32.xlu0 %v893, 16
      %v1136 = vpop.permute.xlu0 %1135
      %1137 = vrot.lane.b32.xlu0 %v894, 16
      %v1138 = vpop.permute.xlu0 %1137
      %1139 = vrot.lane.b32.xlu0 %v895, 16
      %v1140 = vpop.permute.xlu0 %1139
      %1141 = vrot.lane.b32.xlu0 %v896, 16
      %v1142 = vpop.permute.xlu0 %1141
      %1143 = vrot.lane.b32.xlu0 %v897, 16
      %v1144 = vpop.permute.xlu0 %1143
      %1145 = vrot.lane.b32.xlu0 %v898, 16
      %v1146 = vpop.permute.xlu0 %1145
      %1147 = vrot.lane.b32.xlu0 %v899, 16
      %v1148 = vpop.permute.xlu0 %1147
      %1149 = vrot.lane.b32.xlu0 %v900, 16
      %v1150 = vpop.permute.xlu0 %1149
      %1151 = vrot.lane.b32.xlu0 %v901, 16
      %v1152 = vpop.permute.xlu0 %1151
      %1153 = vrot.lane.b32.xlu0 %v902, 16
      %v1154 = vpop.permute.xlu0 %1153
      %1155 = vrot.lane.b32.xlu0 %v903, 16
      %v1156 = vpop.permute.xlu0 %1155
      %1157 = vrot.lane.b32.xlu0 %v904, 16
      %v1158 = vpop.permute.xlu0 %1157
      %1159 = vrot.lane.b32.xlu0 %v905, 16
      %v1160 = vpop.permute.xlu0 %1159
      %1161 = vrot.lane.b32.xlu0 %v906, 16
      %v1162 = vpop.permute.xlu0 %1161
      %1163 = vrot.lane.b32.xlu0 %v907, 16
      %v1164 = vpop.permute.xlu0 %1163
      %1165 = vrot.lane.b32.xlu0 %v908, 16
      %v1166 = vpop.permute.xlu0 %1165
      %1167 = vrot.lane.b32.xlu0 %v909, 16
      %v1168 = vpop.permute.xlu0 %1167
      %1169 = vrot.lane.b32.xlu0 %v910, 16
      %v1170 = vpop.permute.xlu0 %1169
      %1171 = vrot.lane.b32.xlu0 %v911, 16
      %v1172 = vpop.permute.xlu0 %1171
      %1173 = vrot.lane.b32.xlu0 %v912, 16
      %v1174 = vpop.permute.xlu0 %1173
      %1175 = vrot.lane.b32.xlu0 %v913, 16
      %v1176 = vpop.permute.xlu0 %1175
      %1177 = vrot.lane.b32.xlu0 %v914, 16
      %v1178 = vpop.permute.xlu0 %1177
      %1179 = vrot.lane.b32.xlu0 %v915, 16
      %v1180 = vpop.permute.xlu0 %1179
      %1181 = vrot.lane.b32.xlu0 %v916, 16
      %v1182 = vpop.permute.xlu0 %1181
      %1183 = vrot.lane.b32.xlu0 %v917, 16
      %v1184 = vpop.permute.xlu0 %1183
      %1185 = vrot.lane.b32.xlu0 %v918, 16
      %v1186 = vpop.permute.xlu0 %1185
      %1187 = vrot.lane.b32.xlu0 %v919, 16
      %v1188 = vpop.permute.xlu0 %1187
      %1189 = vrot.lane.b32.xlu0 %v920, 16
      %v1190 = vpop.permute.xlu0 %1189
      %1191 = vrot.lane.b32.xlu0 %v921, 16
      %v1192 = vpop.permute.xlu0 %1191
      %1193 = vrot.lane.b32.xlu0 %v922, 16
      %v1194 = vpop.permute.xlu0 %1193
      %1195 = vrot.lane.b32.xlu0 %v923, 16
      %v1196 = vpop.permute.xlu0 %1195
      %1197 = vrot.lane.b32.xlu0 %v924, 16
      %v1198 = vpop.permute.xlu0 %1197
      %1199 = vrot.lane.b32.xlu0 %v925, 16
      %v1200 = vpop.permute.xlu0 %1199
      %1201 = vrot.lane.b32.xlu0 %v926, 16
      %v1202 = vpop.permute.xlu0 %1201
      %1203 = vrot.lane.b32.xlu0 %v927, 16
      %v1204 = vpop.permute.xlu0 %1203
      %1205 = vrot.lane.b32.xlu0 %v928, 16
      %v1206 = vpop.permute.xlu0 %1205
      %1207 = vrot.lane.b32.xlu0 %v929, 16
      %v1208 = vpop.permute.xlu0 %1207
      %1209 = vrot.lane.b32.xlu0 %v930, 16
      %v1210 = vpop.permute.xlu0 %1209
      %1211 = vrot.lane.b32.xlu0 %v931, 16
      %v1212 = vpop.permute.xlu0 %1211
      %1213 = vrot.lane.b32.xlu0 %v932, 16
      %v1214 = vpop.permute.xlu0 %1213
      %1215 = vrot.lane.b32.xlu0 %v933, 16
      %v1216 = vpop.permute.xlu0 %1215
      %1217 = vrot.lane.b32.xlu0 %v934, 16
      %v1218 = vpop.permute.xlu0 %1217
      %1219 = vrot.lane.b32.xlu0 %v935, 16
      %v1220 = vpop.permute.xlu0 %1219
      %1221 = vrot.lane.b32.xlu0 %v936, 16
      %v1222 = vpop.permute.xlu0 %1221
      %1223 = vrot.lane.b32.xlu0 %v937, 16
      %v1224 = vpop.permute.xlu0 %1223
      %1225 = vrot.lane.b32.xlu0 %v938, 16
      %v1226 = vpop.permute.xlu0 %1225
      %1227 = vrot.lane.b32.xlu0 %v939, 16
      %v1228 = vpop.permute.xlu0 %1227
      %1229 = vrot.lane.b32.xlu0 %v940, 16
      %v1230 = vpop.permute.xlu0 %1229
      %1231 = vrot.lane.b32.xlu0 %v941, 16
      %v1232 = vpop.permute.xlu0 %1231
      %1233 = vrot.lane.b32.xlu0 %v942, 16
      %v1234 = vpop.permute.xlu0 %1233
      %1235 = vrot.lane.b32.xlu0 %v943, 16
      %v1236 = vpop.permute.xlu0 %1235
      %1237 = vrot.lane.b32.xlu0 %v944, 16
      %v1238 = vpop.permute.xlu0 %1237
      %1239 = vrot.lane.b32.xlu0 %v945, 16
      %v1240 = vpop.permute.xlu0 %1239
      %1241 = vrot.lane.b32.xlu0 %v946, 16
      %v1242 = vpop.permute.xlu0 %1241
      %s1307 = scalar_lea.vmem [#allocation2], 24
      %vm1308 = vcmask 261248
      %1309 = vst.msk [vmem:[%s1307] sm:$0xff] %vm1308, %v1116
      %1310 = vst.msk [vmem:[%s1307 + $0x8] sm:$0xff] %vm1308, %v1118
      %1311 = vst.msk [vmem:[%s1307 + $0x18] sm:$0xff] %vm1308, %v1120
      %1312 = vst.msk [vmem:[%s1307 + $0x20] sm:$0xff] %vm1308, %v1122
      %1313 = vst.msk [vmem:[%s1307 + $0x30] sm:$0xff] %vm1308, %v1124
      %1314 = vst.msk [vmem:[%s1307 + $0x38] sm:$0xff] %vm1308, %v1126
      %1315 = vst.msk [vmem:[%s1307 + $0x48] sm:$0xff] %vm1308, %v1128
      %1316 = vst.msk [vmem:[%s1307 + $0x50] sm:$0xff] %vm1308, %v1130
      %1317 = vst.msk [vmem:[%s1307 + $0x60] sm:$0xff] %vm1308, %v1132
      %1318 = vst.msk [vmem:[%s1307 + $0x68] sm:$0xff] %vm1308, %v1134
      %1319 = vst.msk [vmem:[%s1307 + $0x78] sm:$0xff] %vm1308, %v1136
      %1320 = vst.msk [vmem:[%s1307 + $0x80] sm:$0xff] %vm1308, %v1138
      %1321 = vst.msk [vmem:[%s1307 + $0x90] sm:$0xff] %vm1308, %v1140
      %1322 = vst.msk [vmem:[%s1307 + $0x98] sm:$0xff] %vm1308, %v1142
      %1323 = vst.msk [vmem:[%s1307 + $0xa8] sm:$0xff] %vm1308, %v1144
      %1324 = vst.msk [vmem:[%s1307 + $0xb0] sm:$0xff] %vm1308, %v1146
      %1325 = vst.msk [vmem:[%s1307 + $0xc0] sm:$0xff] %vm1308, %v1148
      %1326 = vst.msk [vmem:[%s1307 + $0xc8] sm:$0xff] %vm1308, %v1150
      %1327 = vst.msk [vmem:[%s1307 + $0xd8] sm:$0xff] %vm1308, %v1152
      %1328 = vst.msk [vmem:[%s1307 + $0xe0] sm:$0xff] %vm1308, %v1154
      %1329 = vst.msk [vmem:[%s1307 + $0xf0] sm:$0xff] %vm1308, %v1156
      %1330 = vst.msk [vmem:[%s1307 + $0xf8] sm:$0xff] %vm1308, %v1158
      %1331 = vst.msk [vmem:[%s1307 + $0x108] sm:$0xff] %vm1308, %v1160
      %1332 = vst.msk [vmem:[%s1307 + $0x110] sm:$0xff] %vm1308, %v1162
      %1333 = vst.msk [vmem:[%s1307 + $0x120] sm:$0xff] %vm1308, %v1164
      %1334 = vst.msk [vmem:[%s1307 + $0x128] sm:$0xff] %vm1308, %v1166
      %1335 = vst.msk [vmem:[%s1307 + $0x138] sm:$0xff] %vm1308, %v1168
      %1336 = vst.msk [vmem:[%s1307 + $0x140] sm:$0xff] %vm1308, %v1170
      %1337 = vst.msk [vmem:[%s1307 + $0x150] sm:$0xff] %vm1308, %v1172
      %1338 = vst.msk [vmem:[%s1307 + $0x158] sm:$0xff] %vm1308, %v1174
      %1339 = vst.msk [vmem:[%s1307 + $0x168] sm:$0xff] %vm1308, %v1176
      %1340 = vst.msk [vmem:[%s1307 + $0x170] sm:$0xff] %vm1308, %v1178
      %1341 = vst.msk [vmem:[%s1307 + $0x180] sm:$0xff] %vm1308, %v1180
      %1342 = vst.msk [vmem:[%s1307 + $0x188] sm:$0xff] %vm1308, %v1182
      %1343 = vst.msk [vmem:[%s1307 + $0x198] sm:$0xff] %vm1308, %v1184
      %1344 = vst.msk [vmem:[%s1307 + $0x1a0] sm:$0xff] %vm1308, %v1186
      %1345 = vst.msk [vmem:[%s1307 + $0x1b0] sm:$0xff] %vm1308, %v1188
      %1346 = vst.msk [vmem:[%s1307 + $0x1b8] sm:$0xff] %vm1308, %v1190
      %1347 = vst.msk [vmem:[%s1307 + $0x1c8] sm:$0xff] %vm1308, %v1192
      %1348 = vst.msk [vmem:[%s1307 + $0x1d0] sm:$0xff] %vm1308, %v1194
      %1349 = vst.msk [vmem:[%s1307 + $0x1e0] sm:$0xff] %vm1308, %v1196
      %1350 = vst.msk [vmem:[%s1307 + $0x1e8] sm:$0xff] %vm1308, %v1198
      %1351 = vst.msk [vmem:[%s1307 + $0x1f8] sm:$0xff] %vm1308, %v1200
      %1352 = vst.msk [vmem:[%s1307 + $0x200] sm:$0xff] %vm1308, %v1202
      %1353 = vst.msk [vmem:[%s1307 + $0x210] sm:$0xff] %vm1308, %v1204
      %1354 = vst.msk [vmem:[%s1307 + $0x218] sm:$0xff] %vm1308, %v1206
      %1355 = vst.msk [vmem:[%s1307 + $0x228] sm:$0xff] %vm1308, %v1208
      %1356 = vst.msk [vmem:[%s1307 + $0x230] sm:$0xff] %vm1308, %v1210
      %1357 = vst.msk [vmem:[%s1307 + $0x240] sm:$0xff] %vm1308, %v1212
      %1358 = vst.msk [vmem:[%s1307 + $0x248] sm:$0xff] %vm1308, %v1214
      %1359 = vst.msk [vmem:[%s1307 + $0x258] sm:$0xff] %vm1308, %v1216
      %1360 = vst.msk [vmem:[%s1307 + $0x260] sm:$0xff] %vm1308, %v1218
      %1361 = vst.msk [vmem:[%s1307 + $0x270] sm:$0xff] %vm1308, %v1220
      %1362 = vst.msk [vmem:[%s1307 + $0x278] sm:$0xff] %vm1308, %v1222
      %1363 = vst.msk [vmem:[%s1307 + $0x288] sm:$0xff] %vm1308, %v1224
      %1364 = vst.msk [vmem:[%s1307 + $0x290] sm:$0xff] %vm1308, %v1226
      %1365 = vst.msk [vmem:[%s1307 + $0x2a0] sm:$0xff] %vm1308, %v1228
      %1366 = vst.msk [vmem:[%s1307 + $0x2a8] sm:$0xff] %vm1308, %v1230
      %1367 = vst.msk [vmem:[%s1307 + $0x2b8] sm:$0xff] %vm1308, %v1232
      %1368 = vst.msk [vmem:[%s1307 + $0x2c0] sm:$0xff] %vm1308, %v1234
      %1369 = vst.msk [vmem:[%s1307 + $0x2d0] sm:$0xff] %vm1308, %v1236
      %1370 = vst.msk [vmem:[%s1307 + $0x2d8] sm:$0xff] %vm1308, %v1238
      %1371 = vst.msk [vmem:[%s1307 + $0x2e8] sm:$0xff] %vm1308, %v1240
      %1372 = vst.msk [vmem:[%s1307 + $0x2f0] sm:$0xff] %vm1308, %v1242
      %1373 = vrot.lane.b32.xlu0 %v883, 112
      %v1374 = vpop.permute.xlu0 %1373
      %1375 = vrot.lane.b32.xlu0 %v884, 112
      %v1376 = vpop.permute.xlu0 %1375
      %1377 = vrot.lane.b32.xlu0 %v885, 112
      %v1378 = vpop.permute.xlu0 %1377
      %1379 = vrot.lane.b32.xlu0 %v886, 112
      %v1380 = vpop.permute.xlu0 %1379
      %1381 = vrot.lane.b32.xlu0 %v887, 112
      %v1382 = vpop.permute.xlu0 %1381
      %1383 = vrot.lane.b32.xlu0 %v888, 112
      %v1384 = vpop.permute.xlu0 %1383
      %1385 = vrot.lane.b32.xlu0 %v889, 112
      %v1386 = vpop.permute.xlu0 %1385
      %1387 = vrot.lane.b32.xlu0 %v890, 112
      %v1388 = vpop.permute.xlu0 %1387
      %1389 = vrot.lane.b32.xlu0 %v891, 112
      %v1390 = vpop.permute.xlu0 %1389
      %1391 = vrot.lane.b32.xlu0 %v892, 112
      %v1392 = vpop.permute.xlu0 %1391
      %1393 = vrot.lane.b32.xlu0 %v893, 112
      %v1394 = vpop.permute.xlu0 %1393
      %1395 = vrot.lane.b32.xlu0 %v894, 112
      %v1396 = vpop.permute.xlu0 %1395
      %1397 = vrot.lane.b32.xlu0 %v895, 112
      %v1398 = vpop.permute.xlu0 %1397
      %1399 = vrot.lane.b32.xlu0 %v896, 112
      %v1400 = vpop.permute.xlu0 %1399
      %1401 = vrot.lane.b32.xlu0 %v897, 112
      %v1402 = vpop.permute.xlu0 %1401
      %1403 = vrot.lane.b32.xlu0 %v898, 112
      %v1404 = vpop.permute.xlu0 %1403
      %1405 = vrot.lane.b32.xlu0 %v899, 112
      %v1406 = vpop.permute.xlu0 %1405
      %1407 = vrot.lane.b32.xlu0 %v900, 112
      %v1408 = vpop.permute.xlu0 %1407
      %1409 = vrot.lane.b32.xlu0 %v901, 112
      %v1410 = vpop.permute.xlu0 %1409
      %1411 = vrot.lane.b32.xlu0 %v902, 112
      %v1412 = vpop.permute.xlu0 %1411
      %1413 = vrot.lane.b32.xlu0 %v903, 112
      %v1414 = vpop.permute.xlu0 %1413
      %1415 = vrot.lane.b32.xlu0 %v904, 112
      %v1416 = vpop.permute.xlu0 %1415
      %1417 = vrot.lane.b32.xlu0 %v905, 112
      %v1418 = vpop.permute.xlu0 %1417
      %1419 = vrot.lane.b32.xlu0 %v906, 112
      %v1420 = vpop.permute.xlu0 %1419
      %1421 = vrot.lane.b32.xlu0 %v907, 112
      %v1422 = vpop.permute.xlu0 %1421
      %1423 = vrot.lane.b32.xlu0 %v908, 112
      %v1424 = vpop.permute.xlu0 %1423
      %1425 = vrot.lane.b32.xlu0 %v909, 112
      %v1426 = vpop.permute.xlu0 %1425
      %1427 = vrot.lane.b32.xlu0 %v910, 112
      %v1428 = vpop.permute.xlu0 %1427
      %1429 = vrot.lane.b32.xlu0 %v911, 112
      %v1430 = vpop.permute.xlu0 %1429
      %1431 = vrot.lane.b32.xlu0 %v912, 112
      %v1432 = vpop.permute.xlu0 %1431
      %1433 = vrot.lane.b32.xlu0 %v913, 112
      %v1434 = vpop.permute.xlu0 %1433
      %1435 = vrot.lane.b32.xlu0 %v914, 112
      %v1436 = vpop.permute.xlu0 %1435
      %1437 = vrot.lane.b32.xlu0 %v915, 112
      %v1438 = vpop.permute.xlu0 %1437
      %1439 = vrot.lane.b32.xlu0 %v916, 112
      %v1440 = vpop.permute.xlu0 %1439
      %1441 = vrot.lane.b32.xlu0 %v917, 112
      %v1442 = vpop.permute.xlu0 %1441
      %1443 = vrot.lane.b32.xlu0 %v918, 112
      %v1444 = vpop.permute.xlu0 %1443
      %1445 = vrot.lane.b32.xlu0 %v919, 112
      %v1446 = vpop.permute.xlu0 %1445
      %1447 = vrot.lane.b32.xlu0 %v920, 112
      %v1448 = vpop.permute.xlu0 %1447
      %1449 = vrot.lane.b32.xlu0 %v921, 112
      %v1450 = vpop.permute.xlu0 %1449
      %1451 = vrot.lane.b32.xlu0 %v922, 112
      %v1452 = vpop.permute.xlu0 %1451
      %1453 = vrot.lane.b32.xlu0 %v923, 112
      %v1454 = vpop.permute.xlu0 %1453
      %1455 = vrot.lane.b32.xlu0 %v924, 112
      %v1456 = vpop.permute.xlu0 %1455
      %1457 = vrot.lane.b32.xlu0 %v925, 112
      %v1458 = vpop.permute.xlu0 %1457
      %1459 = vrot.lane.b32.xlu0 %v926, 112
      %v1460 = vpop.permute.xlu0 %1459
      %1461 = vrot.lane.b32.xlu0 %v927, 112
      %v1462 = vpop.permute.xlu0 %1461
      %1463 = vrot.lane.b32.xlu0 %v928, 112
      %v1464 = vpop.permute.xlu0 %1463
      %1465 = vrot.lane.b32.xlu0 %v929, 112
      %v1466 = vpop.permute.xlu0 %1465
      %1467 = vrot.lane.b32.xlu0 %v930, 112
      %v1468 = vpop.permute.xlu0 %1467
      %1469 = vrot.lane.b32.xlu0 %v931, 112
      %v1470 = vpop.permute.xlu0 %1469
      %1471 = vrot.lane.b32.xlu0 %v932, 112
      %v1472 = vpop.permute.xlu0 %1471
      %1473 = vrot.lane.b32.xlu0 %v933, 112
      %v1474 = vpop.permute.xlu0 %1473
      %1475 = vrot.lane.b32.xlu0 %v934, 112
      %v1476 = vpop.permute.xlu0 %1475
      %1477 = vrot.lane.b32.xlu0 %v935, 112
      %v1478 = vpop.permute.xlu0 %1477
      %1479 = vrot.lane.b32.xlu0 %v936, 112
      %v1480 = vpop.permute.xlu0 %1479
      %1481 = vrot.lane.b32.xlu0 %v937, 112
      %v1482 = vpop.permute.xlu0 %1481
      %1483 = vrot.lane.b32.xlu0 %v938, 112
      %v1484 = vpop.permute.xlu0 %1483
      %1485 = vrot.lane.b32.xlu0 %v939, 112
      %v1486 = vpop.permute.xlu0 %1485
      %1487 = vrot.lane.b32.xlu0 %v940, 112
      %v1488 = vpop.permute.xlu0 %1487
      %1489 = vrot.lane.b32.xlu0 %v941, 112
      %v1490 = vpop.permute.xlu0 %1489
      %1491 = vrot.lane.b32.xlu0 %v942, 112
      %v1492 = vpop.permute.xlu0 %1491
      %1493 = vrot.lane.b32.xlu0 %v943, 112
      %v1494 = vpop.permute.xlu0 %1493
      %1495 = vrot.lane.b32.xlu0 %v944, 112
      %v1496 = vpop.permute.xlu0 %1495
      %1497 = vrot.lane.b32.xlu0 %v945, 112
      %v1498 = vpop.permute.xlu0 %1497
      %1499 = vrot.lane.b32.xlu0 %v946, 112
      %v1500 = vpop.permute.xlu0 %1499
      %vm1565 = vcmask 130048
      %1566 = vst.msk [vmem:[%s1307 + $0x1] sm:$0xff] %vm1565, %v1374
      %1567 = vst.msk [vmem:[%s1307 + $0x9] sm:$0xff] %vm1565, %v1376
      %1568 = vst.msk [vmem:[%s1307 + $0x19] sm:$0xff] %vm1565, %v1378
      %1569 = vst.msk [vmem:[%s1307 + $0x21] sm:$0xff] %vm1565, %v1380
      %1570 = vst.msk [vmem:[%s1307 + $0x31] sm:$0xff] %vm1565, %v1382
      %1571 = vst.msk [vmem:[%s1307 + $0x39] sm:$0xff] %vm1565, %v1384
      %1572 = vst.msk [vmem:[%s1307 + $0x49] sm:$0xff] %vm1565, %v1386
      %1573 = vst.msk [vmem:[%s1307 + $0x51] sm:$0xff] %vm1565, %v1388
      %1574 = vst.msk [vmem:[%s1307 + $0x61] sm:$0xff] %vm1565, %v1390
      %1575 = vst.msk [vmem:[%s1307 + $0x69] sm:$0xff] %vm1565, %v1392
      %1576 = vst.msk [vmem:[%s1307 + $0x79] sm:$0xff] %vm1565, %v1394
      %1577 = vst.msk [vmem:[%s1307 + $0x81] sm:$0xff] %vm1565, %v1396
      %1578 = vst.msk [vmem:[%s1307 + $0x91] sm:$0xff] %vm1565, %v1398
      %1579 = vst.msk [vmem:[%s1307 + $0x99] sm:$0xff] %vm1565, %v1400
      %1580 = vst.msk [vmem:[%s1307 + $0xa9] sm:$0xff] %vm1565, %v1402
      %1581 = vst.msk [vmem:[%s1307 + $0xb1] sm:$0xff] %vm1565, %v1404
      %1582 = vst.msk [vmem:[%s1307 + $0xc1] sm:$0xff] %vm1565, %v1406
      %1583 = vst.msk [vmem:[%s1307 + $0xc9] sm:$0xff] %vm1565, %v1408
      %1584 = vst.msk [vmem:[%s1307 + $0xd9] sm:$0xff] %vm1565, %v1410
      %1585 = vst.msk [vmem:[%s1307 + $0xe1] sm:$0xff] %vm1565, %v1412
      %1586 = vst.msk [vmem:[%s1307 + $0xf1] sm:$0xff] %vm1565, %v1414
      %1587 = vst.msk [vmem:[%s1307 + $0xf9] sm:$0xff] %vm1565, %v1416
      %1588 = vst.msk [vmem:[%s1307 + $0x109] sm:$0xff] %vm1565, %v1418
      %1589 = vst.msk [vmem:[%s1307 + $0x111] sm:$0xff] %vm1565, %v1420
      %1590 = vst.msk [vmem:[%s1307 + $0x121] sm:$0xff] %vm1565, %v1422
      %1591 = vst.msk [vmem:[%s1307 + $0x129] sm:$0xff] %vm1565, %v1424
      %1592 = vst.msk [vmem:[%s1307 + $0x139] sm:$0xff] %vm1565, %v1426
      %1593 = vst.msk [vmem:[%s1307 + $0x141] sm:$0xff] %vm1565, %v1428
      %1594 = vst.msk [vmem:[%s1307 + $0x151] sm:$0xff] %vm1565, %v1430
      %1595 = vst.msk [vmem:[%s1307 + $0x159] sm:$0xff] %vm1565, %v1432
      %1596 = vst.msk [vmem:[%s1307 + $0x169] sm:$0xff] %vm1565, %v1434
      %1597 = vst.msk [vmem:[%s1307 + $0x171] sm:$0xff] %vm1565, %v1436
      %1598 = vst.msk [vmem:[%s1307 + $0x181] sm:$0xff] %vm1565, %v1438
      %1599 = vst.msk [vmem:[%s1307 + $0x189] sm:$0xff] %vm1565, %v1440
      %1600 = vst.msk [vmem:[%s1307 + $0x199] sm:$0xff] %vm1565, %v1442
      %1601 = vst.msk [vmem:[%s1307 + $0x1a1] sm:$0xff] %vm1565, %v1444
      %1602 = vst.msk [vmem:[%s1307 + $0x1b1] sm:$0xff] %vm1565, %v1446
      %1603 = vst.msk [vmem:[%s1307 + $0x1b9] sm:$0xff] %vm1565, %v1448
      %1604 = vst.msk [vmem:[%s1307 + $0x1c9] sm:$0xff] %vm1565, %v1450
      %1605 = vst.msk [vmem:[%s1307 + $0x1d1] sm:$0xff] %vm1565, %v1452
      %1606 = vst.msk [vmem:[%s1307 + $0x1e1] sm:$0xff] %vm1565, %v1454
      %1607 = vst.msk [vmem:[%s1307 + $0x1e9] sm:$0xff] %vm1565, %v1456
      %1608 = vst.msk [vmem:[%s1307 + $0x1f9] sm:$0xff] %vm1565, %v1458
      %1609 = vst.msk [vmem:[%s1307 + $0x201] sm:$0xff] %vm1565, %v1460
      %1610 = vst.msk [vmem:[%s1307 + $0x211] sm:$0xff] %vm1565, %v1462
      %1611 = vst.msk [vmem:[%s1307 + $0x219] sm:$0xff] %vm1565, %v1464
      %1612 = vst.msk [vmem:[%s1307 + $0x229] sm:$0xff] %vm1565, %v1466
      %1613 = vst.msk [vmem:[%s1307 + $0x231] sm:$0xff] %vm1565, %v1468
      %1614 = vst.msk [vmem:[%s1307 + $0x241] sm:$0xff] %vm1565, %v1470
      %1615 = vst.msk [vmem:[%s1307 + $0x249] sm:$0xff] %vm1565, %v1472
      %1616 = vst.msk [vmem:[%s1307 + $0x259] sm:$0xff] %vm1565, %v1474
      %1617 = vst.msk [vmem:[%s1307 + $0x261] sm:$0xff] %vm1565, %v1476
      %1618 = vst.msk [vmem:[%s1307 + $0x271] sm:$0xff] %vm1565, %v1478
      %1619 = vst.msk [vmem:[%s1307 + $0x279] sm:$0xff] %vm1565, %v1480
      %1620 = vst.msk [vmem:[%s1307 + $0x289] sm:$0xff] %vm1565, %v1482
      %1621 = vst.msk [vmem:[%s1307 + $0x291] sm:$0xff] %vm1565, %v1484
      %1622 = vst.msk [vmem:[%s1307 + $0x2a1] sm:$0xff] %vm1565, %v1486
      %1623 = vst.msk [vmem:[%s1307 + $0x2a9] sm:$0xff] %vm1565, %v1488
      %1624 = vst.msk [vmem:[%s1307 + $0x2b9] sm:$0xff] %vm1565, %v1490
      %1625 = vst.msk [vmem:[%s1307 + $0x2c1] sm:$0xff] %vm1565, %v1492
      %1626 = vst.msk [vmem:[%s1307 + $0x2d1] sm:$0xff] %vm1565, %v1494
      %1627 = vst.msk [vmem:[%s1307 + $0x2d9] sm:$0xff] %vm1565, %v1496
      %1628 = vst.msk [vmem:[%s1307 + $0x2e9] sm:$0xff] %vm1565, %v1498
      %1629 = vst.msk [vmem:[%s1307 + $0x2f1] sm:$0xff] %vm1565, %v1500
      %v1630 = vld [vmem:[#allocation2] sm:$0xff]
      %v1631 = vld [vmem:[#allocation2 + $0x8] sm:$0xff]
      %v1632 = vld [vmem:[#allocation2 + $0x18] sm:$0xff]
      %v1633 = vld [vmem:[#allocation2 + $0x20] sm:$0xff]
      %v1634 = vld [vmem:[#allocation2 + $0x30] sm:$0xff]
      %v1635 = vld [vmem:[#allocation2 + $0x38] sm:$0xff]
      %v1636 = vld [vmem:[#allocation2 + $0x48] sm:$0xff]
      %v1637 = vld [vmem:[#allocation2 + $0x50] sm:$0xff]
      %v1638 = vld [vmem:[#allocation2 + $0x60] sm:$0xff]
      %v1639 = vld [vmem:[#allocation2 + $0x68] sm:$0xff]
      %v1640 = vld [vmem:[#allocation2 + $0x78] sm:$0xff]
      %v1641 = vld [vmem:[#allocation2 + $0x80] sm:$0xff]
      %v1642 = vld [vmem:[#allocation2 + $0x90] sm:$0xff]
      %v1643 = vld [vmem:[#allocation2 + $0x98] sm:$0xff]
      %v1644 = vld [vmem:[#allocation2 + $0xa8] sm:$0xff]
      %v1645 = vld [vmem:[#allocation2 + $0xb0] sm:$0xff]
      %v1646 = vld [vmem:[#allocation2 + $0xc0] sm:$0xff]
      %v1647 = vld [vmem:[#allocation2 + $0xc8] sm:$0xff]
      %v1648 = vld [vmem:[#allocation2 + $0xd8] sm:$0xff]
      %v1649 = vld [vmem:[#allocation2 + $0xe0] sm:$0xff]
      %v1650 = vld [vmem:[#allocation2 + $0xf0] sm:$0xff]
      %v1651 = vld [vmem:[#allocation2 + $0xf8] sm:$0xff]
      %v1652 = vld [vmem:[#allocation2 + $0x108] sm:$0xff]
      %v1653 = vld [vmem:[#allocation2 + $0x110] sm:$0xff]
      %v1654 = vld [vmem:[#allocation2 + $0x120] sm:$0xff]
      %v1655 = vld [vmem:[#allocation2 + $0x128] sm:$0xff]
      %v1656 = vld [vmem:[#allocation2 + $0x138] sm:$0xff]
      %v1657 = vld [vmem:[#allocation2 + $0x140] sm:$0xff]
      %v1658 = vld [vmem:[#allocation2 + $0x150] sm:$0xff]
      %v1659 = vld [vmem:[#allocation2 + $0x158] sm:$0xff]
      %v1660 = vld [vmem:[#allocation2 + $0x168] sm:$0xff]
      %v1661 = vld [vmem:[#allocation2 + $0x170] sm:$0xff]
      %v1662 = vld [vmem:[#allocation2 + $0x180] sm:$0xff]
      %v1663 = vld [vmem:[#allocation2 + $0x188] sm:$0xff]
      %v1664 = vld [vmem:[#allocation2 + $0x198] sm:$0xff]
      %v1665 = vld [vmem:[#allocation2 + $0x1a0] sm:$0xff]
      %v1666 = vld [vmem:[#allocation2 + $0x1b0] sm:$0xff]
      %v1667 = vld [vmem:[#allocation2 + $0x1b8] sm:$0xff]
      %v1668 = vld [vmem:[#allocation2 + $0x1c8] sm:$0xff]
      %v1669 = vld [vmem:[#allocation2 + $0x1d0] sm:$0xff]
      %v1670 = vld [vmem:[#allocation2 + $0x1e0] sm:$0xff]
      %v1671 = vld [vmem:[#allocation2 + $0x1e8] sm:$0xff]
      %v1672 = vld [vmem:[#allocation2 + $0x1f8] sm:$0xff]
      %v1673 = vld [vmem:[#allocation2 + $0x200] sm:$0xff]
      %v1674 = vld [vmem:[#allocation2 + $0x210] sm:$0xff]
      %v1675 = vld [vmem:[#allocation2 + $0x218] sm:$0xff]
      %v1676 = vld [vmem:[#allocation2 + $0x228] sm:$0xff]
      %v1677 = vld [vmem:[#allocation2 + $0x230] sm:$0xff]
      %v1678 = vld [vmem:[#allocation2 + $0x240] sm:$0xff]
      %v1679 = vld [vmem:[#allocation2 + $0x248] sm:$0xff]
      %v1680 = vld [vmem:[#allocation2 + $0x258] sm:$0xff]
      %v1681 = vld [vmem:[#allocation2 + $0x260] sm:$0xff]
      %v1682 = vld [vmem:[#allocation2 + $0x270] sm:$0xff]
      %v1683 = vld [vmem:[#allocation2 + $0x278] sm:$0xff]
      %v1684 = vld [vmem:[#allocation2 + $0x288] sm:$0xff]
      %v1685 = vld [vmem:[#allocation2 + $0x290] sm:$0xff]
      %v1686 = vld [vmem:[#allocation2 + $0x2a0] sm:$0xff]
      %v1687 = vld [vmem:[#allocation2 + $0x2a8] sm:$0xff]
      %v1688 = vld [vmem:[#allocation2 + $0x2b8] sm:$0xff]
      %v1689 = vld [vmem:[#allocation2 + $0x2c0] sm:$0xff]
      %v1690 = vld [vmem:[#allocation2 + $0x2d0] sm:$0xff]
      %v1691 = vld [vmem:[#allocation2 + $0x2d8] sm:$0xff]
      %v1692 = vld [vmem:[#allocation2 + $0x2e8] sm:$0xff]
      %v1693 = vld [vmem:[#allocation2 + $0x2f0] sm:$0xff]
      %v1694 = vld [vmem:[#allocation2 + $0x1] sm:$0xff]
      %v1695 = vld [vmem:[#allocation2 + $0x9] sm:$0xff]
      %v1696 = vld [vmem:[#allocation2 + $0x19] sm:$0xff]
      %v1697 = vld [vmem:[#allocation2 + $0x21] sm:$0xff]
      %v1698 = vld [vmem:[#allocation2 + $0x31] sm:$0xff]
      %v1699 = vld [vmem:[#allocation2 + $0x39] sm:$0xff]
      %v1700 = vld [vmem:[#allocation2 + $0x49] sm:$0xff]
      %v1701 = vld [vmem:[#allocation2 + $0x51] sm:$0xff]
      %v1702 = vld [vmem:[#allocation2 + $0x61] sm:$0xff]
      %v1703 = vld [vmem:[#allocation2 + $0x69] sm:$0xff]
      %v1704 = vld [vmem:[#allocation2 + $0x79] sm:$0xff]
      %v1705 = vld [vmem:[#allocation2 + $0x81] sm:$0xff]
      %v1706 = vld [vmem:[#allocation2 + $0x91] sm:$0xff]
      %v1707 = vld [vmem:[#allocation2 + $0x99] sm:$0xff]
      %v1708 = vld [vmem:[#allocation2 + $0xa9] sm:$0xff]
      %v1709 = vld [vmem:[#allocation2 + $0xb1] sm:$0xff]
      %v1710 = vld [vmem:[#allocation2 + $0xc1] sm:$0xff]
      %v1711 = vld [vmem:[#allocation2 + $0xc9] sm:$0xff]
      %v1712 = vld [vmem:[#allocation2 + $0xd9] sm:$0xff]
      %v1713 = vld [vmem:[#allocation2 + $0xe1] sm:$0xff]
      %v1714 = vld [vmem:[#allocation2 + $0xf1] sm:$0xff]
      %v1715 = vld [vmem:[#allocation2 + $0xf9] sm:$0xff]
      %v1716 = vld [vmem:[#allocation2 + $0x109] sm:$0xff]
      %v1717 = vld [vmem:[#allocation2 + $0x111] sm:$0xff]
      %v1718 = vld [vmem:[#allocation2 + $0x121] sm:$0xff]
      %v1719 = vld [vmem:[#allocation2 + $0x129] sm:$0xff]
      %v1720 = vld [vmem:[#allocation2 + $0x139] sm:$0xff]
      %v1721 = vld [vmem:[#allocation2 + $0x141] sm:$0xff]
      %v1722 = vld [vmem:[#allocation2 + $0x151] sm:$0xff]
      %v1723 = vld [vmem:[#allocation2 + $0x159] sm:$0xff]
      %v1724 = vld [vmem:[#allocation2 + $0x169] sm:$0xff]
      %v1725 = vld [vmem:[#allocation2 + $0x171] sm:$0xff]
      %v1726 = vld [vmem:[#allocation2 + $0x181] sm:$0xff]
      %v1727 = vld [vmem:[#allocation2 + $0x189] sm:$0xff]
      %v1728 = vld [vmem:[#allocation2 + $0x199] sm:$0xff]
      %v1729 = vld [vmem:[#allocation2 + $0x1a1] sm:$0xff]
      %v1730 = vld [vmem:[#allocation2 + $0x1b1] sm:$0xff]
      %v1731 = vld [vmem:[#allocation2 + $0x1b9] sm:$0xff]
      %v1732 = vld [vmem:[#allocation2 + $0x1c9] sm:$0xff]
      %v1733 = vld [vmem:[#allocation2 + $0x1d1] sm:$0xff]
      %v1734 = vld [vmem:[#allocation2 + $0x1e1] sm:$0xff]
      %v1735 = vld [vmem:[#allocation2 + $0x1e9] sm:$0xff]
      %v1736 = vld [vmem:[#allocation2 + $0x1f9] sm:$0xff]
      %v1737 = vld [vmem:[#allocation2 + $0x201] sm:$0xff]
      %v1738 = vld [vmem:[#allocation2 + $0x211] sm:$0xff]
      %v1739 = vld [vmem:[#allocation2 + $0x219] sm:$0xff]
      %v1740 = vld [vmem:[#allocation2 + $0x229] sm:$0xff]
      %v1741 = vld [vmem:[#allocation2 + $0x231] sm:$0xff]
      %v1742 = vld [vmem:[#allocation2 + $0x241] sm:$0xff]
      %v1743 = vld [vmem:[#allocation2 + $0x249] sm:$0xff]
      %v1744 = vld [vmem:[#allocation2 + $0x259] sm:$0xff]
      %v1745 = vld [vmem:[#allocation2 + $0x261] sm:$0xff]
      %v1746 = vld [vmem:[#allocation2 + $0x271] sm:$0xff]
      %v1747 = vld [vmem:[#allocation2 + $0x279] sm:$0xff]
      %v1748 = vld [vmem:[#allocation2 + $0x289] sm:$0xff]
      %v1749 = vld [vmem:[#allocation2 + $0x291] sm:$0xff]
      %v1750 = vld [vmem:[#allocation2 + $0x2a1] sm:$0xff]
      %v1751 = vld [vmem:[#allocation2 + $0x2a9] sm:$0xff]
      %v1752 = vld [vmem:[#allocation2 + $0x2b9] sm:$0xff]
      %v1753 = vld [vmem:[#allocation2 + $0x2c1] sm:$0xff]
      %v1754 = vld [vmem:[#allocation2 + $0x2d1] sm:$0xff]
      %v1755 = vld [vmem:[#allocation2 + $0x2d9] sm:$0xff]
      %v1756 = vld [vmem:[#allocation2 + $0x2e9] sm:$0xff]
      %v1757 = vld [vmem:[#allocation2 + $0x2f1] sm:$0xff]
      %v1758 = vld [vmem:[%s1307] sm:$0xff]
      %v1759 = vld [vmem:[%s1307 + $0x8] sm:$0xff]
      %v1760 = vld [vmem:[%s1307 + $0x18] sm:$0xff]
      %v1761 = vld [vmem:[%s1307 + $0x20] sm:$0xff]
      %v1762 = vld [vmem:[%s1307 + $0x30] sm:$0xff]
      %v1763 = vld [vmem:[%s1307 + $0x38] sm:$0xff]
      %v1764 = vld [vmem:[%s1307 + $0x48] sm:$0xff]
      %v1765 = vld [vmem:[%s1307 + $0x50] sm:$0xff]
      %v1766 = vld [vmem:[%s1307 + $0x60] sm:$0xff]
      %v1767 = vld [vmem:[%s1307 + $0x68] sm:$0xff]
      %v1768 = vld [vmem:[%s1307 + $0x78] sm:$0xff]
      %v1769 = vld [vmem:[%s1307 + $0x80] sm:$0xff]
      %v1770 = vld [vmem:[%s1307 + $0x90] sm:$0xff]
      %v1771 = vld [vmem:[%s1307 + $0x98] sm:$0xff]
      %v1772 = vld [vmem:[%s1307 + $0xa8] sm:$0xff]
      %v1773 = vld [vmem:[%s1307 + $0xb0] sm:$0xff]
      %v1774 = vld [vmem:[%s1307 + $0xc0] sm:$0xff]
      %v1775 = vld [vmem:[%s1307 + $0xc8] sm:$0xff]
      %v1776 = vld [vmem:[%s1307 + $0xd8] sm:$0xff]
      %v1777 = vld [vmem:[%s1307 + $0xe0] sm:$0xff]
      %v1778 = vld [vmem:[%s1307 + $0xf0] sm:$0xff]
      %v1779 = vld [vmem:[%s1307 + $0xf8] sm:$0xff]
      %v1780 = vld [vmem:[%s1307 + $0x108] sm:$0xff]
      %v1781 = vld [vmem:[%s1307 + $0x110] sm:$0xff]
      %v1782 = vld [vmem:[%s1307 + $0x120] sm:$0xff]
      %v1783 = vld [vmem:[%s1307 + $0x128] sm:$0xff]
      %v1784 = vld [vmem:[%s1307 + $0x138] sm:$0xff]
      %v1785 = vld [vmem:[%s1307 + $0x140] sm:$0xff]
      %v1786 = vld [vmem:[%s1307 + $0x150] sm:$0xff]
      %v1787 = vld [vmem:[%s1307 + $0x158] sm:$0xff]
      %v1788 = vld [vmem:[%s1307 + $0x168] sm:$0xff]
      %v1789 = vld [vmem:[%s1307 + $0x170] sm:$0xff]
      %v1790 = vld [vmem:[%s1307 + $0x180] sm:$0xff]
      %v1791 = vld [vmem:[%s1307 + $0x188] sm:$0xff]
      %v1792 = vld [vmem:[%s1307 + $0x198] sm:$0xff]
      %v1793 = vld [vmem:[%s1307 + $0x1a0] sm:$0xff]
      %v1794 = vld [vmem:[%s1307 + $0x1b0] sm:$0xff]
      %v1795 = vld [vmem:[%s1307 + $0x1b8] sm:$0xff]
      %v1796 = vld [vmem:[%s1307 + $0x1c8] sm:$0xff]
      %v1797 = vld [vmem:[%s1307 + $0x1d0] sm:$0xff]
      %v1798 = vld [vmem:[%s1307 + $0x1e0] sm:$0xff]
      %v1799 = vld [vmem:[%s1307 + $0x1e8] sm:$0xff]
      %v1800 = vld [vmem:[%s1307 + $0x1f8] sm:$0xff]
      %v1801 = vld [vmem:[%s1307 + $0x200] sm:$0xff]
      %v1802 = vld [vmem:[%s1307 + $0x210] sm:$0xff]
      %v1803 = vld [vmem:[%s1307 + $0x218] sm:$0xff]
      %v1804 = vld [vmem:[%s1307 + $0x228] sm:$0xff]
      %v1805 = vld [vmem:[%s1307 + $0x230] sm:$0xff]
      %v1806 = vld [vmem:[%s1307 + $0x240] sm:$0xff]
      %v1807 = vld [vmem:[%s1307 + $0x248] sm:$0xff]
      %v1808 = vld [vmem:[%s1307 + $0x258] sm:$0xff]
      %v1809 = vld [vmem:[%s1307 + $0x260] sm:$0xff]
      %v1810 = vld [vmem:[%s1307 + $0x270] sm:$0xff]
      %v1811 = vld [vmem:[%s1307 + $0x278] sm:$0xff]
      %v1812 = vld [vmem:[%s1307 + $0x288] sm:$0xff]
      %v1813 = vld [vmem:[%s1307 + $0x290] sm:$0xff]
      %v1814 = vld [vmem:[%s1307 + $0x2a0] sm:$0xff]
      %v1815 = vld [vmem:[%s1307 + $0x2a8] sm:$0xff]
      %v1816 = vld [vmem:[%s1307 + $0x2b8] sm:$0xff]
      %v1817 = vld [vmem:[%s1307 + $0x2c0] sm:$0xff]
      %v1818 = vld [vmem:[%s1307 + $0x2d0] sm:$0xff]
      %v1819 = vld [vmem:[%s1307 + $0x2d8] sm:$0xff]
      %v1820 = vld [vmem:[%s1307 + $0x2e8] sm:$0xff]
      %v1821 = vld [vmem:[%s1307 + $0x2f0] sm:$0xff]
      %v1822 = vld [vmem:[%s1307 + $0x1] sm:$0xff]
      %v1823 = vld [vmem:[%s1307 + $0x9] sm:$0xff]
      %v1824 = vld [vmem:[%s1307 + $0x19] sm:$0xff]
      %v1825 = vld [vmem:[%s1307 + $0x21] sm:$0xff]
      %v1826 = vld [vmem:[%s1307 + $0x31] sm:$0xff]
      %v1827 = vld [vmem:[%s1307 + $0x39] sm:$0xff]
      %v1828 = vld [vmem:[%s1307 + $0x49] sm:$0xff]
      %v1829 = vld [vmem:[%s1307 + $0x51] sm:$0xff]
      %v1830 = vld [vmem:[%s1307 + $0x61] sm:$0xff]
      %v1831 = vld [vmem:[%s1307 + $0x69] sm:$0xff]
      %v1832 = vld [vmem:[%s1307 + $0x79] sm:$0xff]
      %v1833 = vld [vmem:[%s1307 + $0x81] sm:$0xff]
      %v1834 = vld [vmem:[%s1307 + $0x91] sm:$0xff]
      %v1835 = vld [vmem:[%s1307 + $0x99] sm:$0xff]
      %v1836 = vld [vmem:[%s1307 + $0xa9] sm:$0xff]
      %v1837 = vld [vmem:[%s1307 + $0xb1] sm:$0xff]
      %v1838 = vld [vmem:[%s1307 + $0xc1] sm:$0xff]
      %v1839 = vld [vmem:[%s1307 + $0xc9] sm:$0xff]
      %v1840 = vld [vmem:[%s1307 + $0xd9] sm:$0xff]
      %v1841 = vld [vmem:[%s1307 + $0xe1] sm:$0xff]
      %v1842 = vld [vmem:[%s1307 + $0xf1] sm:$0xff]
      %v1843 = vld [vmem:[%s1307 + $0xf9] sm:$0xff]
      %v1844 = vld [vmem:[%s1307 + $0x109] sm:$0xff]
      %v1845 = vld [vmem:[%s1307 + $0x111] sm:$0xff]
      %v1846 = vld [vmem:[%s1307 + $0x121] sm:$0xff]
      %v1847 = vld [vmem:[%s1307 + $0x129] sm:$0xff]
      %v1848 = vld [vmem:[%s1307 + $0x139] sm:$0xff]
      %v1849 = vld [vmem:[%s1307 + $0x141] sm:$0xff]
      %v1850 = vld [vmem:[%s1307 + $0x151] sm:$0xff]
      %v1851 = vld [vmem:[%s1307 + $0x159] sm:$0xff]
      %v1852 = vld [vmem:[%s1307 + $0x169] sm:$0xff]
      %v1853 = vld [vmem:[%s1307 + $0x171] sm:$0xff]
      %v1854 = vld [vmem:[%s1307 + $0x181] sm:$0xff]
      %v1855 = vld [vmem:[%s1307 + $0x189] sm:$0xff]
      %v1856 = vld [vmem:[%s1307 + $0x199] sm:$0xff]
      %v1857 = vld [vmem:[%s1307 + $0x1a1] sm:$0xff]
      %v1858 = vld [vmem:[%s1307 + $0x1b1] sm:$0xff]
      %v1859 = vld [vmem:[%s1307 + $0x1b9] sm:$0xff]
      %v1860 = vld [vmem:[%s1307 + $0x1c9] sm:$0xff]
      %v1861 = vld [vmem:[%s1307 + $0x1d1] sm:$0xff]
      %v1862 = vld [vmem:[%s1307 + $0x1e1] sm:$0xff]
      %v1863 = vld [vmem:[%s1307 + $0x1e9] sm:$0xff]
      %v1864 = vld [vmem:[%s1307 + $0x1f9] sm:$0xff]
      %v1865 = vld [vmem:[%s1307 + $0x201] sm:$0xff]
      %v1866 = vld [vmem:[%s1307 + $0x211] sm:$0xff]
      %v1867 = vld [vmem:[%s1307 + $0x219] sm:$0xff]
      %v1868 = vld [vmem:[%s1307 + $0x229] sm:$0xff]
      %v1869 = vld [vmem:[%s1307 + $0x231] sm:$0xff]
      %v1870 = vld [vmem:[%s1307 + $0x241] sm:$0xff]
      %v1871 = vld [vmem:[%s1307 + $0x249] sm:$0xff]
      %v1872 = vld [vmem:[%s1307 + $0x259] sm:$0xff]
      %v1873 = vld [vmem:[%s1307 + $0x261] sm:$0xff]
      %v1874 = vld [vmem:[%s1307 + $0x271] sm:$0xff]
      %v1875 = vld [vmem:[%s1307 + $0x279] sm:$0xff]
      %v1876 = vld [vmem:[%s1307 + $0x289] sm:$0xff]
      %v1877 = vld [vmem:[%s1307 + $0x291] sm:$0xff]
      %v1878 = vld [vmem:[%s1307 + $0x2a1] sm:$0xff]
      %v1879 = vld [vmem:[%s1307 + $0x2a9] sm:$0xff]
      %v1880 = vld [vmem:[%s1307 + $0x2b9] sm:$0xff]
      %v1881 = vld [vmem:[%s1307 + $0x2c1] sm:$0xff]
      %v1882 = vld [vmem:[%s1307 + $0x2d1] sm:$0xff]
      %v1883 = vld [vmem:[%s1307 + $0x2d9] sm:$0xff]
      %v1884 = vld [vmem:[%s1307 + $0x2e9] sm:$0xff]
      %v1885 = vld [vmem:[%s1307 + $0x2f1] sm:$0xff]
      %s1886 = scalar_lea.vmem [#allocation2], 48
      %v1887 = vld [vmem:[%s1886] sm:$0xff]
      %v1888 = vld [vmem:[%s1886 + $0x8] sm:$0xff]
      %v1889 = vld [vmem:[%s1886 + $0x18] sm:$0xff]
      %v1890 = vld [vmem:[%s1886 + $0x20] sm:$0xff]
      %v1891 = vld [vmem:[%s1886 + $0x30] sm:$0xff]
      %v1892 = vld [vmem:[%s1886 + $0x38] sm:$0xff]
      %v1893 = vld [vmem:[%s1886 + $0x48] sm:$0xff]
      %v1894 = vld [vmem:[%s1886 + $0x50] sm:$0xff]
      %v1895 = vld [vmem:[%s1886 + $0x60] sm:$0xff]
      %v1896 = vld [vmem:[%s1886 + $0x68] sm:$0xff]
      %v1897 = vld [vmem:[%s1886 + $0x78] sm:$0xff]
      %v1898 = vld [vmem:[%s1886 + $0x80] sm:$0xff]
      %v1899 = vld [vmem:[%s1886 + $0x90] sm:$0xff]
      %v1900 = vld [vmem:[%s1886 + $0x98] sm:$0xff]
      %v1901 = vld [vmem:[%s1886 + $0xa8] sm:$0xff]
      %v1902 = vld [vmem:[%s1886 + $0xb0] sm:$0xff]
      %v1903 = vld [vmem:[%s1886 + $0xc0] sm:$0xff]
      %v1904 = vld [vmem:[%s1886 + $0xc8] sm:$0xff]
      %v1905 = vld [vmem:[%s1886 + $0xd8] sm:$0xff]
      %v1906 = vld [vmem:[%s1886 + $0xe0] sm:$0xff]
      %v1907 = vld [vmem:[%s1886 + $0xf0] sm:$0xff]
      %v1908 = vld [vmem:[%s1886 + $0xf8] sm:$0xff]
      %v1909 = vld [vmem:[%s1886 + $0x108] sm:$0xff]
      %v1910 = vld [vmem:[%s1886 + $0x110] sm:$0xff]
      %v1911 = vld [vmem:[%s1886 + $0x120] sm:$0xff]
      %v1912 = vld [vmem:[%s1886 + $0x128] sm:$0xff]
      %v1913 = vld [vmem:[%s1886 + $0x138] sm:$0xff]
      %v1914 = vld [vmem:[%s1886 + $0x140] sm:$0xff]
      %v1915 = vld [vmem:[%s1886 + $0x150] sm:$0xff]
      %v1916 = vld [vmem:[%s1886 + $0x158] sm:$0xff]
      %v1917 = vld [vmem:[%s1886 + $0x168] sm:$0xff]
      %v1918 = vld [vmem:[%s1886 + $0x170] sm:$0xff]
      %v1919 = vld [vmem:[%s1886 + $0x180] sm:$0xff]
      %v1920 = vld [vmem:[%s1886 + $0x188] sm:$0xff]
      %v1921 = vld [vmem:[%s1886 + $0x198] sm:$0xff]
      %v1922 = vld [vmem:[%s1886 + $0x1a0] sm:$0xff]
      %v1923 = vld [vmem:[%s1886 + $0x1b0] sm:$0xff]
      %v1924 = vld [vmem:[%s1886 + $0x1b8] sm:$0xff]
      %v1925 = vld [vmem:[%s1886 + $0x1c8] sm:$0xff]
      %v1926 = vld [vmem:[%s1886 + $0x1d0] sm:$0xff]
      %v1927 = vld [vmem:[%s1886 + $0x1e0] sm:$0xff]
      %v1928 = vld [vmem:[%s1886 + $0x1e8] sm:$0xff]
      %v1929 = vld [vmem:[%s1886 + $0x1f8] sm:$0xff]
      %v1930 = vld [vmem:[%s1886 + $0x200] sm:$0xff]
      %v1931 = vld [vmem:[%s1886 + $0x210] sm:$0xff]
      %v1932 = vld [vmem:[%s1886 + $0x218] sm:$0xff]
      %v1933 = vld [vmem:[%s1886 + $0x228] sm:$0xff]
      %v1934 = vld [vmem:[%s1886 + $0x230] sm:$0xff]
      %v1935 = vld [vmem:[%s1886 + $0x240] sm:$0xff]
      %v1936 = vld [vmem:[%s1886 + $0x248] sm:$0xff]
      %v1937 = vld [vmem:[%s1886 + $0x258] sm:$0xff]
      %v1938 = vld [vmem:[%s1886 + $0x260] sm:$0xff]
      %v1939 = vld [vmem:[%s1886 + $0x270] sm:$0xff]
      %v1940 = vld [vmem:[%s1886 + $0x278] sm:$0xff]
      %v1941 = vld [vmem:[%s1886 + $0x288] sm:$0xff]
      %v1942 = vld [vmem:[%s1886 + $0x290] sm:$0xff]
      %v1943 = vld [vmem:[%s1886 + $0x2a0] sm:$0xff]
      %v1944 = vld [vmem:[%s1886 + $0x2a8] sm:$0xff]
      %v1945 = vld [vmem:[%s1886 + $0x2b8] sm:$0xff]
      %v1946 = vld [vmem:[%s1886 + $0x2c0] sm:$0xff]
      %v1947 = vld [vmem:[%s1886 + $0x2d0] sm:$0xff]
      %v1948 = vld [vmem:[%s1886 + $0x2d8] sm:$0xff]
      %v1949 = vld [vmem:[%s1886 + $0x2e8] sm:$0xff]
      %v1950 = vld [vmem:[%s1886 + $0x2f0] sm:$0xff]
      %v1951 = vld [vmem:[%s1886 + $0x1] sm:$0xff]
      %v1952 = vld [vmem:[%s1886 + $0x9] sm:$0xff]
      %v1953 = vld [vmem:[%s1886 + $0x19] sm:$0xff]
      %v1954 = vld [vmem:[%s1886 + $0x21] sm:$0xff]
      %v1955 = vld [vmem:[%s1886 + $0x31] sm:$0xff]
      %v1956 = vld [vmem:[%s1886 + $0x39] sm:$0xff]
      %v1957 = vld [vmem:[%s1886 + $0x49] sm:$0xff]
      %v1958 = vld [vmem:[%s1886 + $0x51] sm:$0xff]
      %v1959 = vld [vmem:[%s1886 + $0x61] sm:$0xff]
      %v1960 = vld [vmem:[%s1886 + $0x69] sm:$0xff]
      %v1961 = vld [vmem:[%s1886 + $0x79] sm:$0xff]
      %v1962 = vld [vmem:[%s1886 + $0x81] sm:$0xff]
      %v1963 = vld [vmem:[%s1886 + $0x91] sm:$0xff]
      %v1964 = vld [vmem:[%s1886 + $0x99] sm:$0xff]
      %v1965 = vld [vmem:[%s1886 + $0xa9] sm:$0xff]
      %v1966 = vld [vmem:[%s1886 + $0xb1] sm:$0xff]
      %v1967 = vld [vmem:[%s1886 + $0xc1] sm:$0xff]
      %v1968 = vld [vmem:[%s1886 + $0xc9] sm:$0xff]
      %v1969 = vld [vmem:[%s1886 + $0xd9] sm:$0xff]
      %v1970 = vld [vmem:[%s1886 + $0xe1] sm:$0xff]
      %v1971 = vld [vmem:[%s1886 + $0xf1] sm:$0xff]
      %v1972 = vld [vmem:[%s1886 + $0xf9] sm:$0xff]
      %v1973 = vld [vmem:[%s1886 + $0x109] sm:$0xff]
      %v1974 = vld [vmem:[%s1886 + $0x111] sm:$0xff]
      %v1975 = vld [vmem:[%s1886 + $0x121] sm:$0xff]
      %v1976 = vld [vmem:[%s1886 + $0x129] sm:$0xff]
      %v1977 = vld [vmem:[%s1886 + $0x139] sm:$0xff]
      %v1978 = vld [vmem:[%s1886 + $0x141] sm:$0xff]
      %v1979 = vld [vmem:[%s1886 + $0x151] sm:$0xff]
      %v1980 = vld [vmem:[%s1886 + $0x159] sm:$0xff]
      %v1981 = vld [vmem:[%s1886 + $0x169] sm:$0xff]
      %v1982 = vld [vmem:[%s1886 + $0x171] sm:$0xff]
      %v1983 = vld [vmem:[%s1886 + $0x181] sm:$0xff]
      %v1984 = vld [vmem:[%s1886 + $0x189] sm:$0xff]
      %v1985 = vld [vmem:[%s1886 + $0x199] sm:$0xff]
      %v1986 = vld [vmem:[%s1886 + $0x1a1] sm:$0xff]
      %v1987 = vld [vmem:[%s1886 + $0x1b1] sm:$0xff]
      %v1988 = vld [vmem:[%s1886 + $0x1b9] sm:$0xff]
      %v1989 = vld [vmem:[%s1886 + $0x1c9] sm:$0xff]
      %v1990 = vld [vmem:[%s1886 + $0x1d1] sm:$0xff]
      %v1991 = vld [vmem:[%s1886 + $0x1e1] sm:$0xff]
      %v1992 = vld [vmem:[%s1886 + $0x1e9] sm:$0xff]
      %v1993 = vld [vmem:[%s1886 + $0x1f9] sm:$0xff]
      %v1994 = vld [vmem:[%s1886 + $0x201] sm:$0xff]
      %v1995 = vld [vmem:[%s1886 + $0x211] sm:$0xff]
      %v1996 = vld [vmem:[%s1886 + $0x219] sm:$0xff]
      %v1997 = vld [vmem:[%s1886 + $0x229] sm:$0xff]
      %v1998 = vld [vmem:[%s1886 + $0x231] sm:$0xff]
      %v1999 = vld [vmem:[%s1886 + $0x241] sm:$0xff]
      %v2000 = vld [vmem:[%s1886 + $0x249] sm:$0xff]
      %v2001 = vld [vmem:[%s1886 + $0x259] sm:$0xff]
      %v2002 = vld [vmem:[%s1886 + $0x261] sm:$0xff]
      %v2003 = vld [vmem:[%s1886 + $0x271] sm:$0xff]
      %v2004 = vld [vmem:[%s1886 + $0x279] sm:$0xff]
      %v2005 = vld [vmem:[%s1886 + $0x289] sm:$0xff]
      %v2006 = vld [vmem:[%s1886 + $0x291] sm:$0xff]
      %v2007 = vld [vmem:[%s1886 + $0x2a1] sm:$0xff]
      %v2008 = vld [vmem:[%s1886 + $0x2a9] sm:$0xff]
      %v2009 = vld [vmem:[%s1886 + $0x2b9] sm:$0xff]
      %v2010 = vld [vmem:[%s1886 + $0x2c1] sm:$0xff]
      %v2011 = vld [vmem:[%s1886 + $0x2d1] sm:$0xff]
      %v2012 = vld [vmem:[%s1886 + $0x2d9] sm:$0xff]
      %v2013 = vld [vmem:[%s1886 + $0x2e9] sm:$0xff]
      %v2014 = vld [vmem:[%s1886 + $0x2f1] sm:$0xff]
      %2079 = vrot.lane.b32.xlu0 %v1694, 32
      %v2080 = vpop.permute.xlu0 %2079
      %2081 = vrot.lane.b32.xlu0 %v1695, 32
      %v2082 = vpop.permute.xlu0 %2081
      %2083 = vrot.lane.b32.xlu0 %v1696, 32
      %v2084 = vpop.permute.xlu0 %2083
      %2085 = vrot.lane.b32.xlu0 %v1697, 32
      %v2086 = vpop.permute.xlu0 %2085
      %2087 = vrot.lane.b32.xlu0 %v1698, 32
      %v2088 = vpop.permute.xlu0 %2087
      %2089 = vrot.lane.b32.xlu0 %v1699, 32
      %v2090 = vpop.permute.xlu0 %2089
      %2091 = vrot.lane.b32.xlu0 %v1700, 32
      %v2092 = vpop.permute.xlu0 %2091
      %2093 = vrot.lane.b32.xlu0 %v1701, 32
      %v2094 = vpop.permute.xlu0 %2093
      %2095 = vrot.lane.b32.xlu0 %v1702, 32
      %v2096 = vpop.permute.xlu0 %2095
      %2097 = vrot.lane.b32.xlu0 %v1703, 32
      %v2098 = vpop.permute.xlu0 %2097
      %2099 = vrot.lane.b32.xlu0 %v1704, 32
      %v2100 = vpop.permute.xlu0 %2099
      %2101 = vrot.lane.b32.xlu0 %v1705, 32
      %v2102 = vpop.permute.xlu0 %2101
      %2103 = vrot.lane.b32.xlu0 %v1706, 32
      %v2104 = vpop.permute.xlu0 %2103
      %2105 = vrot.lane.b32.xlu0 %v1707, 32
      %v2106 = vpop.permute.xlu0 %2105
      %2107 = vrot.lane.b32.xlu0 %v1708, 32
      %v2108 = vpop.permute.xlu0 %2107
      %2109 = vrot.lane.b32.xlu0 %v1709, 32
      %v2110 = vpop.permute.xlu0 %2109
      %2111 = vrot.lane.b32.xlu0 %v1710, 32
      %v2112 = vpop.permute.xlu0 %2111
      %2113 = vrot.lane.b32.xlu0 %v1711, 32
      %v2114 = vpop.permute.xlu0 %2113
      %2115 = vrot.lane.b32.xlu0 %v1712, 32
      %v2116 = vpop.permute.xlu0 %2115
      %2117 = vrot.lane.b32.xlu0 %v1713, 32
      %v2118 = vpop.permute.xlu0 %2117
      %2119 = vrot.lane.b32.xlu0 %v1714, 32
      %v2120 = vpop.permute.xlu0 %2119
      %2121 = vrot.lane.b32.xlu0 %v1715, 32
      %v2122 = vpop.permute.xlu0 %2121
      %2123 = vrot.lane.b32.xlu0 %v1716, 32
      %v2124 = vpop.permute.xlu0 %2123
      %2125 = vrot.lane.b32.xlu0 %v1717, 32
      %v2126 = vpop.permute.xlu0 %2125
      %2127 = vrot.lane.b32.xlu0 %v1718, 32
      %v2128 = vpop.permute.xlu0 %2127
      %2129 = vrot.lane.b32.xlu0 %v1719, 32
      %v2130 = vpop.permute.xlu0 %2129
      %2131 = vrot.lane.b32.xlu0 %v1720, 32
      %v2132 = vpop.permute.xlu0 %2131
      %2133 = vrot.lane.b32.xlu0 %v1721, 32
      %v2134 = vpop.permute.xlu0 %2133
      %2135 = vrot.lane.b32.xlu0 %v1722, 32
      %v2136 = vpop.permute.xlu0 %2135
      %2137 = vrot.lane.b32.xlu0 %v1723, 32
      %v2138 = vpop.permute.xlu0 %2137
      %2139 = vrot.lane.b32.xlu0 %v1724, 32
      %v2140 = vpop.permute.xlu0 %2139
      %2141 = vrot.lane.b32.xlu0 %v1725, 32
      %v2142 = vpop.permute.xlu0 %2141
      %2143 = vrot.lane.b32.xlu0 %v1726, 32
      %v2144 = vpop.permute.xlu0 %2143
      %2145 = vrot.lane.b32.xlu0 %v1727, 32
      %v2146 = vpop.permute.xlu0 %2145
      %2147 = vrot.lane.b32.xlu0 %v1728, 32
      %v2148 = vpop.permute.xlu0 %2147
      %2149 = vrot.lane.b32.xlu0 %v1729, 32
      %v2150 = vpop.permute.xlu0 %2149
      %2151 = vrot.lane.b32.xlu0 %v1730, 32
      %v2152 = vpop.permute.xlu0 %2151
      %2153 = vrot.lane.b32.xlu0 %v1731, 32
      %v2154 = vpop.permute.xlu0 %2153
      %2155 = vrot.lane.b32.xlu0 %v1732, 32
      %v2156 = vpop.permute.xlu0 %2155
      %2157 = vrot.lane.b32.xlu0 %v1733, 32
      %v2158 = vpop.permute.xlu0 %2157
      %2159 = vrot.lane.b32.xlu0 %v1734, 32
      %v2160 = vpop.permute.xlu0 %2159
      %2161 = vrot.lane.b32.xlu0 %v1735, 32
      %v2162 = vpop.permute.xlu0 %2161
      %2163 = vrot.lane.b32.xlu0 %v1736, 32
      %v2164 = vpop.permute.xlu0 %2163
      %2165 = vrot.lane.b32.xlu0 %v1737, 32
      %v2166 = vpop.permute.xlu0 %2165
      %2167 = vrot.lane.b32.xlu0 %v1738, 32
      %v2168 = vpop.permute.xlu0 %2167
      %2169 = vrot.lane.b32.xlu0 %v1739, 32
      %v2170 = vpop.permute.xlu0 %2169
      %2171 = vrot.lane.b32.xlu0 %v1740, 32
      %v2172 = vpop.permute.xlu0 %2171
      %2173 = vrot.lane.b32.xlu0 %v1741, 32
      %v2174 = vpop.permute.xlu0 %2173
      %2175 = vrot.lane.b32.xlu0 %v1742, 32
      %v2176 = vpop.permute.xlu0 %2175
      %2177 = vrot.lane.b32.xlu0 %v1743, 32
      %v2178 = vpop.permute.xlu0 %2177
      %2179 = vrot.lane.b32.xlu0 %v1744, 32
      %v2180 = vpop.permute.xlu0 %2179
      %2181 = vrot.lane.b32.xlu0 %v1745, 32
      %v2182 = vpop.permute.xlu0 %2181
      %2183 = vrot.lane.b32.xlu0 %v1746, 32
      %v2184 = vpop.permute.xlu0 %2183
      %2185 = vrot.lane.b32.xlu0 %v1747, 32
      %v2186 = vpop.permute.xlu0 %2185
      %2187 = vrot.lane.b32.xlu0 %v1748, 32
      %v2188 = vpop.permute.xlu0 %2187
      %2189 = vrot.lane.b32.xlu0 %v1749, 32
      %v2190 = vpop.permute.xlu0 %2189
      %2191 = vrot.lane.b32.xlu0 %v1750, 32
      %v2192 = vpop.permute.xlu0 %2191
      %2193 = vrot.lane.b32.xlu0 %v1751, 32
      %v2194 = vpop.permute.xlu0 %2193
      %2195 = vrot.lane.b32.xlu0 %v1752, 32
      %v2196 = vpop.permute.xlu0 %2195
      %2197 = vrot.lane.b32.xlu0 %v1753, 32
      %v2198 = vpop.permute.xlu0 %2197
      %2199 = vrot.lane.b32.xlu0 %v1754, 32
      %v2200 = vpop.permute.xlu0 %2199
      %2201 = vrot.lane.b32.xlu0 %v1755, 32
      %v2202 = vpop.permute.xlu0 %2201
      %2203 = vrot.lane.b32.xlu0 %v1756, 32
      %v2204 = vpop.permute.xlu0 %2203
      %2205 = vrot.lane.b32.xlu0 %v1757, 32
      %v2206 = vpop.permute.xlu0 %2205
      %2335 = vrot.lane.b32.xlu0 %v1758, 64
      %v2336 = vpop.permute.xlu0 %2335
      %2337 = vrot.lane.b32.xlu0 %v1759, 64
      %v2338 = vpop.permute.xlu0 %2337
      %2339 = vrot.lane.b32.xlu0 %v1760, 64
      %v2340 = vpop.permute.xlu0 %2339
      %2341 = vrot.lane.b32.xlu0 %v1761, 64
      %v2342 = vpop.permute.xlu0 %2341
      %2343 = vrot.lane.b32.xlu0 %v1762, 64
      %v2344 = vpop.permute.xlu0 %2343
      %2345 = vrot.lane.b32.xlu0 %v1763, 64
      %v2346 = vpop.permute.xlu0 %2345
      %2347 = vrot.lane.b32.xlu0 %v1764, 64
      %v2348 = vpop.permute.xlu0 %2347
      %2349 = vrot.lane.b32.xlu0 %v1765, 64
      %v2350 = vpop.permute.xlu0 %2349
      %2351 = vrot.lane.b32.xlu0 %v1766, 64
      %v2352 = vpop.permute.xlu0 %2351
      %2353 = vrot.lane.b32.xlu0 %v1767, 64
      %v2354 = vpop.permute.xlu0 %2353
      %2355 = vrot.lane.b32.xlu0 %v1768, 64
      %v2356 = vpop.permute.xlu0 %2355
      %2357 = vrot.lane.b32.xlu0 %v1769, 64
      %v2358 = vpop.permute.xlu0 %2357
      %2359 = vrot.lane.b32.xlu0 %v1770, 64
      %v2360 = vpop.permute.xlu0 %2359
      %2361 = vrot.lane.b32.xlu0 %v1771, 64
      %v2362 = vpop.permute.xlu0 %2361
      %2363 = vrot.lane.b32.xlu0 %v1772, 64
      %v2364 = vpop.permute.xlu0 %2363
      %2365 = vrot.lane.b32.xlu0 %v1773, 64
      %v2366 = vpop.permute.xlu0 %2365
      %2367 = vrot.lane.b32.xlu0 %v1774, 64
      %v2368 = vpop.permute.xlu0 %2367
      %2369 = vrot.lane.b32.xlu0 %v1775, 64
      %v2370 = vpop.permute.xlu0 %2369
      %2371 = vrot.lane.b32.xlu0 %v1776, 64
      %v2372 = vpop.permute.xlu0 %2371
      %2373 = vrot.lane.b32.xlu0 %v1777, 64
      %v2374 = vpop.permute.xlu0 %2373
      %2375 = vrot.lane.b32.xlu0 %v1778, 64
      %v2376 = vpop.permute.xlu0 %2375
      %2377 = vrot.lane.b32.xlu0 %v1779, 64
      %v2378 = vpop.permute.xlu0 %2377
      %2379 = vrot.lane.b32.xlu0 %v1780, 64
      %v2380 = vpop.permute.xlu0 %2379
      %2381 = vrot.lane.b32.xlu0 %v1781, 64
      %v2382 = vpop.permute.xlu0 %2381
      %2383 = vrot.lane.b32.xlu0 %v1782, 64
      %v2384 = vpop.permute.xlu0 %2383
      %2385 = vrot.lane.b32.xlu0 %v1783, 64
      %v2386 = vpop.permute.xlu0 %2385
      %2387 = vrot.lane.b32.xlu0 %v1784, 64
      %v2388 = vpop.permute.xlu0 %2387
      %2389 = vrot.lane.b32.xlu0 %v1785, 64
      %v2390 = vpop.permute.xlu0 %2389
      %2391 = vrot.lane.b32.xlu0 %v1786, 64
      %v2392 = vpop.permute.xlu0 %2391
      %2393 = vrot.lane.b32.xlu0 %v1787, 64
      %v2394 = vpop.permute.xlu0 %2393
      %2395 = vrot.lane.b32.xlu0 %v1788, 64
      %v2396 = vpop.permute.xlu0 %2395
      %2397 = vrot.lane.b32.xlu0 %v1789, 64
      %v2398 = vpop.permute.xlu0 %2397
      %2399 = vrot.lane.b32.xlu0 %v1790, 64
      %v2400 = vpop.permute.xlu0 %2399
      %2401 = vrot.lane.b32.xlu0 %v1791, 64
      %v2402 = vpop.permute.xlu0 %2401
      %2403 = vrot.lane.b32.xlu0 %v1792, 64
      %v2404 = vpop.permute.xlu0 %2403
      %2405 = vrot.lane.b32.xlu0 %v1793, 64
      %v2406 = vpop.permute.xlu0 %2405
      %2407 = vrot.lane.b32.xlu0 %v1794, 64
      %v2408 = vpop.permute.xlu0 %2407
      %2409 = vrot.lane.b32.xlu0 %v1795, 64
      %v2410 = vpop.permute.xlu0 %2409
      %2411 = vrot.lane.b32.xlu0 %v1796, 64
      %v2412 = vpop.permute.xlu0 %2411
      %2413 = vrot.lane.b32.xlu0 %v1797, 64
      %v2414 = vpop.permute.xlu0 %2413
      %2415 = vrot.lane.b32.xlu0 %v1798, 64
      %v2416 = vpop.permute.xlu0 %2415
      %2417 = vrot.lane.b32.xlu0 %v1799, 64
      %v2418 = vpop.permute.xlu0 %2417
      %2419 = vrot.lane.b32.xlu0 %v1800, 64
      %v2420 = vpop.permute.xlu0 %2419
      %2421 = vrot.lane.b32.xlu0 %v1801, 64
      %v2422 = vpop.permute.xlu0 %2421
      %2423 = vrot.lane.b32.xlu0 %v1802, 64
      %v2424 = vpop.permute.xlu0 %2423
      %2425 = vrot.lane.b32.xlu0 %v1803, 64
      %v2426 = vpop.permute.xlu0 %2425
      %2427 = vrot.lane.b32.xlu0 %v1804, 64
      %v2428 = vpop.permute.xlu0 %2427
      %2429 = vrot.lane.b32.xlu0 %v1805, 64
      %v2430 = vpop.permute.xlu0 %2429
      %2431 = vrot.lane.b32.xlu0 %v1806, 64
      %v2432 = vpop.permute.xlu0 %2431
      %2433 = vrot.lane.b32.xlu0 %v1807, 64
      %v2434 = vpop.permute.xlu0 %2433
      %2435 = vrot.lane.b32.xlu0 %v1808, 64
      %v2436 = vpop.permute.xlu0 %2435
      %2437 = vrot.lane.b32.xlu0 %v1809, 64
      %v2438 = vpop.permute.xlu0 %2437
      %2439 = vrot.lane.b32.xlu0 %v1810, 64
      %v2440 = vpop.permute.xlu0 %2439
      %2441 = vrot.lane.b32.xlu0 %v1811, 64
      %v2442 = vpop.permute.xlu0 %2441
      %2443 = vrot.lane.b32.xlu0 %v1812, 64
      %v2444 = vpop.permute.xlu0 %2443
      %2445 = vrot.lane.b32.xlu0 %v1813, 64
      %v2446 = vpop.permute.xlu0 %2445
      %2447 = vrot.lane.b32.xlu0 %v1814, 64
      %v2448 = vpop.permute.xlu0 %2447
      %2449 = vrot.lane.b32.xlu0 %v1815, 64
      %v2450 = vpop.permute.xlu0 %2449
      %2451 = vrot.lane.b32.xlu0 %v1816, 64
      %v2452 = vpop.permute.xlu0 %2451
      %2453 = vrot.lane.b32.xlu0 %v1817, 64
      %v2454 = vpop.permute.xlu0 %2453
      %2455 = vrot.lane.b32.xlu0 %v1818, 64
      %v2456 = vpop.permute.xlu0 %2455
      %2457 = vrot.lane.b32.xlu0 %v1819, 64
      %v2458 = vpop.permute.xlu0 %2457
      %2459 = vrot.lane.b32.xlu0 %v1820, 64
      %v2460 = vpop.permute.xlu0 %2459
      %2461 = vrot.lane.b32.xlu0 %v1821, 64
      %v2462 = vpop.permute.xlu0 %2461
      %2591 = vrot.lane.b32.xlu0 %v1822, 96
      %v2592 = vpop.permute.xlu0 %2591
      %2593 = vrot.lane.b32.xlu0 %v1823, 96
      %v2594 = vpop.permute.xlu0 %2593
      %2595 = vrot.lane.b32.xlu0 %v1824, 96
      %v2596 = vpop.permute.xlu0 %2595
      %2597 = vrot.lane.b32.xlu0 %v1825, 96
      %v2598 = vpop.permute.xlu0 %2597
      %2599 = vrot.lane.b32.xlu0 %v1826, 96
      %v2600 = vpop.permute.xlu0 %2599
      %2601 = vrot.lane.b32.xlu0 %v1827, 96
      %v2602 = vpop.permute.xlu0 %2601
      %2603 = vrot.lane.b32.xlu0 %v1828, 96
      %v2604 = vpop.permute.xlu0 %2603
      %2605 = vrot.lane.b32.xlu0 %v1829, 96
      %v2606 = vpop.permute.xlu0 %2605
      %2607 = vrot.lane.b32.xlu0 %v1830, 96
      %v2608 = vpop.permute.xlu0 %2607
      %2609 = vrot.lane.b32.xlu0 %v1831, 96
      %v2610 = vpop.permute.xlu0 %2609
      %2611 = vrot.lane.b32.xlu0 %v1832, 96
      %v2612 = vpop.permute.xlu0 %2611
      %2613 = vrot.lane.b32.xlu0 %v1833, 96
      %v2614 = vpop.permute.xlu0 %2613
      %2615 = vrot.lane.b32.xlu0 %v1834, 96
      %v2616 = vpop.permute.xlu0 %2615
      %2617 = vrot.lane.b32.xlu0 %v1835, 96
      %v2618 = vpop.permute.xlu0 %2617
      %2619 = vrot.lane.b32.xlu0 %v1836, 96
      %v2620 = vpop.permute.xlu0 %2619
      %2621 = vrot.lane.b32.xlu0 %v1837, 96
      %v2622 = vpop.permute.xlu0 %2621
      %2623 = vrot.lane.b32.xlu0 %v1838, 96
      %v2624 = vpop.permute.xlu0 %2623
      %2625 = vrot.lane.b32.xlu0 %v1839, 96
      %v2626 = vpop.permute.xlu0 %2625
      %2627 = vrot.lane.b32.xlu0 %v1840, 96
      %v2628 = vpop.permute.xlu0 %2627
      %2629 = vrot.lane.b32.xlu0 %v1841, 96
      %v2630 = vpop.permute.xlu0 %2629
      %2631 = vrot.lane.b32.xlu0 %v1842, 96
      %v2632 = vpop.permute.xlu0 %2631
      %2633 = vrot.lane.b32.xlu0 %v1843, 96
      %v2634 = vpop.permute.xlu0 %2633
      %2635 = vrot.lane.b32.xlu0 %v1844, 96
      %v2636 = vpop.permute.xlu0 %2635
      %2637 = vrot.lane.b32.xlu0 %v1845, 96
      %v2638 = vpop.permute.xlu0 %2637
      %2639 = vrot.lane.b32.xlu0 %v1846, 96
      %v2640 = vpop.permute.xlu0 %2639
      %2641 = vrot.lane.b32.xlu0 %v1847, 96
      %v2642 = vpop.permute.xlu0 %2641
      %2643 = vrot.lane.b32.xlu0 %v1848, 96
      %v2644 = vpop.permute.xlu0 %2643
      %2645 = vrot.lane.b32.xlu0 %v1849, 96
      %v2646 = vpop.permute.xlu0 %2645
      %2647 = vrot.lane.b32.xlu0 %v1850, 96
      %v2648 = vpop.permute.xlu0 %2647
      %2649 = vrot.lane.b32.xlu0 %v1851, 96
      %v2650 = vpop.permute.xlu0 %2649
      %2651 = vrot.lane.b32.xlu0 %v1852, 96
      %v2652 = vpop.permute.xlu0 %2651
      %2653 = vrot.lane.b32.xlu0 %v1853, 96
      %v2654 = vpop.permute.xlu0 %2653
      %2655 = vrot.lane.b32.xlu0 %v1854, 96
      %v2656 = vpop.permute.xlu0 %2655
      %2657 = vrot.lane.b32.xlu0 %v1855, 96
      %v2658 = vpop.permute.xlu0 %2657
      %2659 = vrot.lane.b32.xlu0 %v1856, 96
      %v2660 = vpop.permute.xlu0 %2659
      %2661 = vrot.lane.b32.xlu0 %v1857, 96
      %v2662 = vpop.permute.xlu0 %2661
      %2663 = vrot.lane.b32.xlu0 %v1858, 96
      %v2664 = vpop.permute.xlu0 %2663
      %2665 = vrot.lane.b32.xlu0 %v1859, 96
      %v2666 = vpop.permute.xlu0 %2665
      %2667 = vrot.lane.b32.xlu0 %v1860, 96
      %v2668 = vpop.permute.xlu0 %2667
      %2669 = vrot.lane.b32.xlu0 %v1861, 96
      %v2670 = vpop.permute.xlu0 %2669
      %2671 = vrot.lane.b32.xlu0 %v1862, 96
      %v2672 = vpop.permute.xlu0 %2671
      %2673 = vrot.lane.b32.xlu0 %v1863, 96
      %v2674 = vpop.permute.xlu0 %2673
      %2675 = vrot.lane.b32.xlu0 %v1864, 96
      %v2676 = vpop.permute.xlu0 %2675
      %2677 = vrot.lane.b32.xlu0 %v1865, 96
      %v2678 = vpop.permute.xlu0 %2677
      %2679 = vrot.lane.b32.xlu0 %v1866, 96
      %v2680 = vpop.permute.xlu0 %2679
      %2681 = vrot.lane.b32.xlu0 %v1867, 96
      %v2682 = vpop.permute.xlu0 %2681
      %2683 = vrot.lane.b32.xlu0 %v1868, 96
      %v2684 = vpop.permute.xlu0 %2683
      %2685 = vrot.lane.b32.xlu0 %v1869, 96
      %v2686 = vpop.permute.xlu0 %2685
      %2687 = vrot.lane.b32.xlu0 %v1870, 96
      %v2688 = vpop.permute.xlu0 %2687
      %2689 = vrot.lane.b32.xlu0 %v1871, 96
      %v2690 = vpop.permute.xlu0 %2689
      %2691 = vrot.lane.b32.xlu0 %v1872, 96
      %v2692 = vpop.permute.xlu0 %2691
      %2693 = vrot.lane.b32.xlu0 %v1873, 96
      %v2694 = vpop.permute.xlu0 %2693
      %2695 = vrot.lane.b32.xlu0 %v1874, 96
      %v2696 = vpop.permute.xlu0 %2695
      %2697 = vrot.lane.b32.xlu0 %v1875, 96
      %v2698 = vpop.permute.xlu0 %2697
      %2699 = vrot.lane.b32.xlu0 %v1876, 96
      %v2700 = vpop.permute.xlu0 %2699
      %2701 = vrot.lane.b32.xlu0 %v1877, 96
      %v2702 = vpop.permute.xlu0 %2701
      %2703 = vrot.lane.b32.xlu0 %v1878, 96
      %v2704 = vpop.permute.xlu0 %2703
      %2705 = vrot.lane.b32.xlu0 %v1879, 96
      %v2706 = vpop.permute.xlu0 %2705
      %2707 = vrot.lane.b32.xlu0 %v1880, 96
      %v2708 = vpop.permute.xlu0 %2707
      %2709 = vrot.lane.b32.xlu0 %v1881, 96
      %v2710 = vpop.permute.xlu0 %2709
      %2711 = vrot.lane.b32.xlu0 %v1882, 96
      %v2712 = vpop.permute.xlu0 %2711
      %2713 = vrot.lane.b32.xlu0 %v1883, 96
      %v2714 = vpop.permute.xlu0 %2713
      %2715 = vrot.lane.b32.xlu0 %v1884, 96
      %v2716 = vpop.permute.xlu0 %2715
      %2717 = vrot.lane.b32.xlu0 %v1885, 96
      %v2718 = vpop.permute.xlu0 %2717
      %2847 = vrot.lane.b32.xlu0 %v1951, 32
      %v2848 = vpop.permute.xlu0 %2847
      %2849 = vrot.lane.b32.xlu0 %v1952, 32
      %v2850 = vpop.permute.xlu0 %2849
      %2851 = vrot.lane.b32.xlu0 %v1953, 32
      %v2852 = vpop.permute.xlu0 %2851
      %2853 = vrot.lane.b32.xlu0 %v1954, 32
      %v2854 = vpop.permute.xlu0 %2853
      %2855 = vrot.lane.b32.xlu0 %v1955, 32
      %v2856 = vpop.permute.xlu0 %2855
      %2857 = vrot.lane.b32.xlu0 %v1956, 32
      %v2858 = vpop.permute.xlu0 %2857
      %2859 = vrot.lane.b32.xlu0 %v1957, 32
      %v2860 = vpop.permute.xlu0 %2859
      %2861 = vrot.lane.b32.xlu0 %v1958, 32
      %v2862 = vpop.permute.xlu0 %2861
      %2863 = vrot.lane.b32.xlu0 %v1959, 32
      %v2864 = vpop.permute.xlu0 %2863
      %2865 = vrot.lane.b32.xlu0 %v1960, 32
      %v2866 = vpop.permute.xlu0 %2865
      %2867 = vrot.lane.b32.xlu0 %v1961, 32
      %v2868 = vpop.permute.xlu0 %2867
      %2869 = vrot.lane.b32.xlu0 %v1962, 32
      %v2870 = vpop.permute.xlu0 %2869
      %2871 = vrot.lane.b32.xlu0 %v1963, 32
      %v2872 = vpop.permute.xlu0 %2871
      %2873 = vrot.lane.b32.xlu0 %v1964, 32
      %v2874 = vpop.permute.xlu0 %2873
      %2875 = vrot.lane.b32.xlu0 %v1965, 32
      %v2876 = vpop.permute.xlu0 %2875
      %2877 = vrot.lane.b32.xlu0 %v1966, 32
      %v2878 = vpop.permute.xlu0 %2877
      %2879 = vrot.lane.b32.xlu0 %v1967, 32
      %v2880 = vpop.permute.xlu0 %2879
      %2881 = vrot.lane.b32.xlu0 %v1968, 32
      %v2882 = vpop.permute.xlu0 %2881
      %2883 = vrot.lane.b32.xlu0 %v1969, 32
      %v2884 = vpop.permute.xlu0 %2883
      %2885 = vrot.lane.b32.xlu0 %v1970, 32
      %v2886 = vpop.permute.xlu0 %2885
      %2887 = vrot.lane.b32.xlu0 %v1971, 32
      %v2888 = vpop.permute.xlu0 %2887
      %2889 = vrot.lane.b32.xlu0 %v1972, 32
      %v2890 = vpop.permute.xlu0 %2889
      %2891 = vrot.lane.b32.xlu0 %v1973, 32
      %v2892 = vpop.permute.xlu0 %2891
      %2893 = vrot.lane.b32.xlu0 %v1974, 32
      %v2894 = vpop.permute.xlu0 %2893
      %2895 = vrot.lane.b32.xlu0 %v1975, 32
      %v2896 = vpop.permute.xlu0 %2895
      %2897 = vrot.lane.b32.xlu0 %v1976, 32
      %v2898 = vpop.permute.xlu0 %2897
      %2899 = vrot.lane.b32.xlu0 %v1977, 32
      %v2900 = vpop.permute.xlu0 %2899
      %2901 = vrot.lane.b32.xlu0 %v1978, 32
      %v2902 = vpop.permute.xlu0 %2901
      %2903 = vrot.lane.b32.xlu0 %v1979, 32
      %v2904 = vpop.permute.xlu0 %2903
      %2905 = vrot.lane.b32.xlu0 %v1980, 32
      %v2906 = vpop.permute.xlu0 %2905
      %2907 = vrot.lane.b32.xlu0 %v1981, 32
      %v2908 = vpop.permute.xlu0 %2907
      %2909 = vrot.lane.b32.xlu0 %v1982, 32
      %v2910 = vpop.permute.xlu0 %2909
      %2911 = vrot.lane.b32.xlu0 %v1983, 32
      %v2912 = vpop.permute.xlu0 %2911
      %2913 = vrot.lane.b32.xlu0 %v1984, 32
      %v2914 = vpop.permute.xlu0 %2913
      %2915 = vrot.lane.b32.xlu0 %v1985, 32
      %v2916 = vpop.permute.xlu0 %2915
      %2917 = vrot.lane.b32.xlu0 %v1986, 32
      %v2918 = vpop.permute.xlu0 %2917
      %2919 = vrot.lane.b32.xlu0 %v1987, 32
      %v2920 = vpop.permute.xlu0 %2919
      %2921 = vrot.lane.b32.xlu0 %v1988, 32
      %v2922 = vpop.permute.xlu0 %2921
      %2923 = vrot.lane.b32.xlu0 %v1989, 32
      %v2924 = vpop.permute.xlu0 %2923
      %2925 = vrot.lane.b32.xlu0 %v1990, 32
      %v2926 = vpop.permute.xlu0 %2925
      %2927 = vrot.lane.b32.xlu0 %v1991, 32
      %v2928 = vpop.permute.xlu0 %2927
      %2929 = vrot.lane.b32.xlu0 %v1992, 32
      %v2930 = vpop.permute.xlu0 %2929
      %2931 = vrot.lane.b32.xlu0 %v1993, 32
      %v2932 = vpop.permute.xlu0 %2931
      %2933 = vrot.lane.b32.xlu0 %v1994, 32
      %v2934 = vpop.permute.xlu0 %2933
      %2935 = vrot.lane.b32.xlu0 %v1995, 32
      %v2936 = vpop.permute.xlu0 %2935
      %2937 = vrot.lane.b32.xlu0 %v1996, 32
      %v2938 = vpop.permute.xlu0 %2937
      %2939 = vrot.lane.b32.xlu0 %v1997, 32
      %v2940 = vpop.permute.xlu0 %2939
      %2941 = vrot.lane.b32.xlu0 %v1998, 32
      %v2942 = vpop.permute.xlu0 %2941
      %2943 = vrot.lane.b32.xlu0 %v1999, 32
      %v2944 = vpop.permute.xlu0 %2943
      %2945 = vrot.lane.b32.xlu0 %v2000, 32
      %v2946 = vpop.permute.xlu0 %2945
      %2947 = vrot.lane.b32.xlu0 %v2001, 32
      %v2948 = vpop.permute.xlu0 %2947
      %2949 = vrot.lane.b32.xlu0 %v2002, 32
      %v2950 = vpop.permute.xlu0 %2949
      %2951 = vrot.lane.b32.xlu0 %v2003, 32
      %v2952 = vpop.permute.xlu0 %2951
      %2953 = vrot.lane.b32.xlu0 %v2004, 32
      %v2954 = vpop.permute.xlu0 %2953
      %2955 = vrot.lane.b32.xlu0 %v2005, 32
      %v2956 = vpop.permute.xlu0 %2955
      %2957 = vrot.lane.b32.xlu0 %v2006, 32
      %v2958 = vpop.permute.xlu0 %2957
      %2959 = vrot.lane.b32.xlu0 %v2007, 32
      %v2960 = vpop.permute.xlu0 %2959
      %2961 = vrot.lane.b32.xlu0 %v2008, 32
      %v2962 = vpop.permute.xlu0 %2961
      %2963 = vrot.lane.b32.xlu0 %v2009, 32
      %v2964 = vpop.permute.xlu0 %2963
      %2965 = vrot.lane.b32.xlu0 %v2010, 32
      %v2966 = vpop.permute.xlu0 %2965
      %2967 = vrot.lane.b32.xlu0 %v2011, 32
      %v2968 = vpop.permute.xlu0 %2967
      %2969 = vrot.lane.b32.xlu0 %v2012, 32
      %v2970 = vpop.permute.xlu0 %2969
      %2971 = vrot.lane.b32.xlu0 %v2013, 32
      %v2972 = vpop.permute.xlu0 %2971
      %2973 = vrot.lane.b32.xlu0 %v2014, 32
      %v2974 = vpop.permute.xlu0 %2973
      %v3039 = vsel %vm947, %v1630, %v2080
      %v3040 = vsel %vm947, %v1631, %v2082
      %v3041 = vsel %vm947, %v1632, %v2084
      %v3042 = vsel %vm947, %v1633, %v2086
      %v3043 = vsel %vm947, %v1634, %v2088
      %v3044 = vsel %vm947, %v1635, %v2090
      %v3045 = vsel %vm947, %v1636, %v2092
      %v3046 = vsel %vm947, %v1637, %v2094
      %v3047 = vsel %vm947, %v1638, %v2096
      %v3048 = vsel %vm947, %v1639, %v2098
      %v3049 = vsel %vm947, %v1640, %v2100
      %v3050 = vsel %vm947, %v1641, %v2102
      %v3051 = vsel %vm947, %v1642, %v2104
      %v3052 = vsel %vm947, %v1643, %v2106
      %v3053 = vsel %vm947, %v1644, %v2108
      %v3054 = vsel %vm947, %v1645, %v2110
      %v3055 = vsel %vm947, %v1646, %v2112
      %v3056 = vsel %vm947, %v1647, %v2114
      %v3057 = vsel %vm947, %v1648, %v2116
      %v3058 = vsel %vm947, %v1649, %v2118
      %v3059 = vsel %vm947, %v1650, %v2120
      %v3060 = vsel %vm947, %v1651, %v2122
      %v3061 = vsel %vm947, %v1652, %v2124
      %v3062 = vsel %vm947, %v1653, %v2126
      %v3063 = vsel %vm947, %v1654, %v2128
      %v3064 = vsel %vm947, %v1655, %v2130
      %v3065 = vsel %vm947, %v1656, %v2132
      %v3066 = vsel %vm947, %v1657, %v2134
      %v3067 = vsel %vm947, %v1658, %v2136
      %v3068 = vsel %vm947, %v1659, %v2138
      %v3069 = vsel %vm947, %v1660, %v2140
      %v3070 = vsel %vm947, %v1661, %v2142
      %v3071 = vsel %vm947, %v1662, %v2144
      %v3072 = vsel %vm947, %v1663, %v2146
      %v3073 = vsel %vm947, %v1664, %v2148
      %v3074 = vsel %vm947, %v1665, %v2150
      %v3075 = vsel %vm947, %v1666, %v2152
      %v3076 = vsel %vm947, %v1667, %v2154
      %v3077 = vsel %vm947, %v1668, %v2156
      %v3078 = vsel %vm947, %v1669, %v2158
      %v3079 = vsel %vm947, %v1670, %v2160
      %v3080 = vsel %vm947, %v1671, %v2162
      %v3081 = vsel %vm947, %v1672, %v2164
      %v3082 = vsel %vm947, %v1673, %v2166
      %v3083 = vsel %vm947, %v1674, %v2168
      %v3084 = vsel %vm947, %v1675, %v2170
      %v3085 = vsel %vm947, %v1676, %v2172
      %v3086 = vsel %vm947, %v1677, %v2174
      %v3087 = vsel %vm947, %v1678, %v2176
      %v3088 = vsel %vm947, %v1679, %v2178
      %v3089 = vsel %vm947, %v1680, %v2180
      %v3090 = vsel %vm947, %v1681, %v2182
      %v3091 = vsel %vm947, %v1682, %v2184
      %v3092 = vsel %vm947, %v1683, %v2186
      %v3093 = vsel %vm947, %v1684, %v2188
      %v3094 = vsel %vm947, %v1685, %v2190
      %v3095 = vsel %vm947, %v1686, %v2192
      %v3096 = vsel %vm947, %v1687, %v2194
      %v3097 = vsel %vm947, %v1688, %v2196
      %v3098 = vsel %vm947, %v1689, %v2198
      %v3099 = vsel %vm947, %v1690, %v2200
      %v3100 = vsel %vm947, %v1691, %v2202
      %v3101 = vsel %vm947, %v1692, %v2204
      %v3102 = vsel %vm947, %v1693, %v2206
      %vm3103 = vcmask 392192
      %v3104 = vsel %vm3103, %v3039, %v2080
      %v3105 = vsel %vm3103, %v3040, %v2082
      %v3106 = vsel %vm3103, %v3041, %v2084
      %v3107 = vsel %vm3103, %v3042, %v2086
      %v3108 = vsel %vm3103, %v3043, %v2088
      %v3109 = vsel %vm3103, %v3044, %v2090
      %v3110 = vsel %vm3103, %v3045, %v2092
      %v3111 = vsel %vm3103, %v3046, %v2094
      %v3112 = vsel %vm3103, %v3047, %v2096
      %v3113 = vsel %vm3103, %v3048, %v2098
      %v3114 = vsel %vm3103, %v3049, %v2100
      %v3115 = vsel %vm3103, %v3050, %v2102
      %v3116 = vsel %vm3103, %v3051, %v2104
      %v3117 = vsel %vm3103, %v3052, %v2106
      %v3118 = vsel %vm3103, %v3053, %v2108
      %v3119 = vsel %vm3103, %v3054, %v2110
      %v3120 = vsel %vm3103, %v3055, %v2112
      %v3121 = vsel %vm3103, %v3056, %v2114
      %v3122 = vsel %vm3103, %v3057, %v2116
      %v3123 = vsel %vm3103, %v3058, %v2118
      %v3124 = vsel %vm3103, %v3059, %v2120
      %v3125 = vsel %vm3103, %v3060, %v2122
      %v3126 = vsel %vm3103, %v3061, %v2124
      %v3127 = vsel %vm3103, %v3062, %v2126
      %v3128 = vsel %vm3103, %v3063, %v2128
      %v3129 = vsel %vm3103, %v3064, %v2130
      %v3130 = vsel %vm3103, %v3065, %v2132
      %v3131 = vsel %vm3103, %v3066, %v2134
      %v3132 = vsel %vm3103, %v3067, %v2136
      %v3133 = vsel %vm3103, %v3068, %v2138
      %v3134 = vsel %vm3103, %v3069, %v2140
      %v3135 = vsel %vm3103, %v3070, %v2142
      %v3136 = vsel %vm3103, %v3071, %v2144
      %v3137 = vsel %vm3103, %v3072, %v2146
      %v3138 = vsel %vm3103, %v3073, %v2148
      %v3139 = vsel %vm3103, %v3074, %v2150
      %v3140 = vsel %vm3103, %v3075, %v2152
      %v3141 = vsel %vm3103, %v3076, %v2154
      %v3142 = vsel %vm3103, %v3077, %v2156
      %v3143 = vsel %vm3103, %v3078, %v2158
      %v3144 = vsel %vm3103, %v3079, %v2160
      %v3145 = vsel %vm3103, %v3080, %v2162
      %v3146 = vsel %vm3103, %v3081, %v2164
      %v3147 = vsel %vm3103, %v3082, %v2166
      %v3148 = vsel %vm3103, %v3083, %v2168
      %v3149 = vsel %vm3103, %v3084, %v2170
      %v3150 = vsel %vm3103, %v3085, %v2172
      %v3151 = vsel %vm3103, %v3086, %v2174
      %v3152 = vsel %vm3103, %v3087, %v2176
      %v3153 = vsel %vm3103, %v3088, %v2178
      %v3154 = vsel %vm3103, %v3089, %v2180
      %v3155 = vsel %vm3103, %v3090, %v2182
      %v3156 = vsel %vm3103, %v3091, %v2184
      %v3157 = vsel %vm3103, %v3092, %v2186
      %v3158 = vsel %vm3103, %v3093, %v2188
      %v3159 = vsel %vm3103, %v3094, %v2190
      %v3160 = vsel %vm3103, %v3095, %v2192
      %v3161 = vsel %vm3103, %v3096, %v2194
      %v3162 = vsel %vm3103, %v3097, %v2196
      %v3163 = vsel %vm3103, %v3098, %v2198
      %v3164 = vsel %vm3103, %v3099, %v2200
      %v3165 = vsel %vm3103, %v3100, %v2202
      %v3166 = vsel %vm3103, %v3101, %v2204
      %v3167 = vsel %vm3103, %v3102, %v2206
      %vm3168 = vcmask 523264
      %v3169 = vsel %vm3168, %v3104, %v2336
      %v3170 = vsel %vm3168, %v3105, %v2338
      %v3171 = vsel %vm3168, %v3106, %v2340
      %v3172 = vsel %vm3168, %v3107, %v2342
      %v3173 = vsel %vm3168, %v3108, %v2344
      %v3174 = vsel %vm3168, %v3109, %v2346
      %v3175 = vsel %vm3168, %v3110, %v2348
      %v3176 = vsel %vm3168, %v3111, %v2350
      %v3177 = vsel %vm3168, %v3112, %v2352
      %v3178 = vsel %vm3168, %v3113, %v2354
      %v3179 = vsel %vm3168, %v3114, %v2356
      %v3180 = vsel %vm3168, %v3115, %v2358
      %v3181 = vsel %vm3168, %v3116, %v2360
      %v3182 = vsel %vm3168, %v3117, %v2362
      %v3183 = vsel %vm3168, %v3118, %v2364
      %v3184 = vsel %vm3168, %v3119, %v2366
      %v3185 = vsel %vm3168, %v3120, %v2368
      %v3186 = vsel %vm3168, %v3121, %v2370
      %v3187 = vsel %vm3168, %v3122, %v2372
      %v3188 = vsel %vm3168, %v3123, %v2374
      %v3189 = vsel %vm3168, %v3124, %v2376
      %v3190 = vsel %vm3168, %v3125, %v2378
      %v3191 = vsel %vm3168, %v3126, %v2380
      %v3192 = vsel %vm3168, %v3127, %v2382
      %v3193 = vsel %vm3168, %v3128, %v2384
      %v3194 = vsel %vm3168, %v3129, %v2386
      %v3195 = vsel %vm3168, %v3130, %v2388
      %v3196 = vsel %vm3168, %v3131, %v2390
      %v3197 = vsel %vm3168, %v3132, %v2392
      %v3198 = vsel %vm3168, %v3133, %v2394
      %v3199 = vsel %vm3168, %v3134, %v2396
      %v3200 = vsel %vm3168, %v3135, %v2398
      %v3201 = vsel %vm3168, %v3136, %v2400
      %v3202 = vsel %vm3168, %v3137, %v2402
      %v3203 = vsel %vm3168, %v3138, %v2404
      %v3204 = vsel %vm3168, %v3139, %v2406
      %v3205 = vsel %vm3168, %v3140, %v2408
      %v3206 = vsel %vm3168, %v3141, %v2410
      %v3207 = vsel %vm3168, %v3142, %v2412
      %v3208 = vsel %vm3168, %v3143, %v2414
      %v3209 = vsel %vm3168, %v3144, %v2416
      %v3210 = vsel %vm3168, %v3145, %v2418
      %v3211 = vsel %vm3168, %v3146, %v2420
      %v3212 = vsel %vm3168, %v3147, %v2422
      %v3213 = vsel %vm3168, %v3148, %v2424
      %v3214 = vsel %vm3168, %v3149, %v2426
      %v3215 = vsel %vm3168, %v3150, %v2428
      %v3216 = vsel %vm3168, %v3151, %v2430
      %v3217 = vsel %vm3168, %v3152, %v2432
      %v3218 = vsel %vm3168, %v3153, %v2434
      %v3219 = vsel %vm3168, %v3154, %v2436
      %v3220 = vsel %vm3168, %v3155, %v2438
      %v3221 = vsel %vm3168, %v3156, %v2440
      %v3222 = vsel %vm3168, %v3157, %v2442
      %v3223 = vsel %vm3168, %v3158, %v2444
      %v3224 = vsel %vm3168, %v3159, %v2446
      %v3225 = vsel %vm3168, %v3160, %v2448
      %v3226 = vsel %vm3168, %v3161, %v2450
      %v3227 = vsel %vm3168, %v3162, %v2452
      %v3228 = vsel %vm3168, %v3163, %v2454
      %v3229 = vsel %vm3168, %v3164, %v2456
      %v3230 = vsel %vm3168, %v3165, %v2458
      %v3231 = vsel %vm3168, %v3166, %v2460
      %v3232 = vsel %vm3168, %v3167, %v2462
      %vm3233 = vcmask 654336
      %v3234 = vsel %vm3233, %v3169, %v2336
      %v3235 = vsel %vm3233, %v3170, %v2338
      %v3236 = vsel %vm3233, %v3171, %v2340
      %v3237 = vsel %vm3233, %v3172, %v2342
      %v3238 = vsel %vm3233, %v3173, %v2344
      %v3239 = vsel %vm3233, %v3174, %v2346
      %v3240 = vsel %vm3233, %v3175, %v2348
      %v3241 = vsel %vm3233, %v3176, %v2350
      %v3242 = vsel %vm3233, %v3177, %v2352
      %v3243 = vsel %vm3233, %v3178, %v2354
      %v3244 = vsel %vm3233, %v3179, %v2356
      %v3245 = vsel %vm3233, %v3180, %v2358
      %v3246 = vsel %vm3233, %v3181, %v2360
      %v3247 = vsel %vm3233, %v3182, %v2362
      %v3248 = vsel %vm3233, %v3183, %v2364
      %v3249 = vsel %vm3233, %v3184, %v2366
      %v3250 = vsel %vm3233, %v3185, %v2368
      %v3251 = vsel %vm3233, %v3186, %v2370
      %v3252 = vsel %vm3233, %v3187, %v2372
      %v3253 = vsel %vm3233, %v3188, %v2374
      %v3254 = vsel %vm3233, %v3189, %v2376
      %v3255 = vsel %vm3233, %v3190, %v2378
      %v3256 = vsel %vm3233, %v3191, %v2380
      %v3257 = vsel %vm3233, %v3192, %v2382
      %v3258 = vsel %vm3233, %v3193, %v2384
      %v3259 = vsel %vm3233, %v3194, %v2386
      %v3260 = vsel %vm3233, %v3195, %v2388
      %v3261 = vsel %vm3233, %v3196, %v2390
      %v3262 = vsel %vm3233, %v3197, %v2392
      %v3263 = vsel %vm3233, %v3198, %v2394
      %v3264 = vsel %vm3233, %v3199, %v2396
      %v3265 = vsel %vm3233, %v3200, %v2398
      %v3266 = vsel %vm3233, %v3201, %v2400
      %v3267 = vsel %vm3233, %v3202, %v2402
      %v3268 = vsel %vm3233, %v3203, %v2404
      %v3269 = vsel %vm3233, %v3204, %v2406
      %v3270 = vsel %vm3233, %v3205, %v2408
      %v3271 = vsel %vm3233, %v3206, %v2410
      %v3272 = vsel %vm3233, %v3207, %v2412
      %v3273 = vsel %vm3233, %v3208, %v2414
      %v3274 = vsel %vm3233, %v3209, %v2416
      %v3275 = vsel %vm3233, %v3210, %v2418
      %v3276 = vsel %vm3233, %v3211, %v2420
      %v3277 = vsel %vm3233, %v3212, %v2422
      %v3278 = vsel %vm3233, %v3213, %v2424
      %v3279 = vsel %vm3233, %v3214, %v2426
      %v3280 = vsel %vm3233, %v3215, %v2428
      %v3281 = vsel %vm3233, %v3216, %v2430
      %v3282 = vsel %vm3233, %v3217, %v2432
      %v3283 = vsel %vm3233, %v3218, %v2434
      %v3284 = vsel %vm3233, %v3219, %v2436
      %v3285 = vsel %vm3233, %v3220, %v2438
      %v3286 = vsel %vm3233, %v3221, %v2440
      %v3287 = vsel %vm3233, %v3222, %v2442
      %v3288 = vsel %vm3233, %v3223, %v2444
      %v3289 = vsel %vm3233, %v3224, %v2446
      %v3290 = vsel %vm3233, %v3225, %v2448
      %v3291 = vsel %vm3233, %v3226, %v2450
      %v3292 = vsel %vm3233, %v3227, %v2452
      %v3293 = vsel %vm3233, %v3228, %v2454
      %v3294 = vsel %vm3233, %v3229, %v2456
      %v3295 = vsel %vm3233, %v3230, %v2458
      %v3296 = vsel %vm3233, %v3231, %v2460
      %v3297 = vsel %vm3233, %v3232, %v2462
      %vm3298 = vcmask 785408
      %v3299 = vsel %vm3298, %v3234, %v2592
      %v3300 = vsel %vm3298, %v3235, %v2594
      %v3301 = vsel %vm3298, %v3236, %v2596
      %v3302 = vsel %vm3298, %v3237, %v2598
      %v3303 = vsel %vm3298, %v3238, %v2600
      %v3304 = vsel %vm3298, %v3239, %v2602
      %v3305 = vsel %vm3298, %v3240, %v2604
      %v3306 = vsel %vm3298, %v3241, %v2606
      %v3307 = vsel %vm3298, %v3242, %v2608
      %v3308 = vsel %vm3298, %v3243, %v2610
      %v3309 = vsel %vm3298, %v3244, %v2612
      %v3310 = vsel %vm3298, %v3245, %v2614
      %v3311 = vsel %vm3298, %v3246, %v2616
      %v3312 = vsel %vm3298, %v3247, %v2618
      %v3313 = vsel %vm3298, %v3248, %v2620
      %v3314 = vsel %vm3298, %v3249, %v2622
      %v3315 = vsel %vm3298, %v3250, %v2624
      %v3316 = vsel %vm3298, %v3251, %v2626
      %v3317 = vsel %vm3298, %v3252, %v2628
      %v3318 = vsel %vm3298, %v3253, %v2630
      %v3319 = vsel %vm3298, %v3254, %v2632
      %v3320 = vsel %vm3298, %v3255, %v2634
      %v3321 = vsel %vm3298, %v3256, %v2636
      %v3322 = vsel %vm3298, %v3257, %v2638
      %v3323 = vsel %vm3298, %v3258, %v2640
      %v3324 = vsel %vm3298, %v3259, %v2642
      %v3325 = vsel %vm3298, %v3260, %v2644
      %v3326 = vsel %vm3298, %v3261, %v2646
      %v3327 = vsel %vm3298, %v3262, %v2648
      %v3328 = vsel %vm3298, %v3263, %v2650
      %v3329 = vsel %vm3298, %v3264, %v2652
      %v3330 = vsel %vm3298, %v3265, %v2654
      %v3331 = vsel %vm3298, %v3266, %v2656
      %v3332 = vsel %vm3298, %v3267, %v2658
      %v3333 = vsel %vm3298, %v3268, %v2660
      %v3334 = vsel %vm3298, %v3269, %v2662
      %v3335 = vsel %vm3298, %v3270, %v2664
      %v3336 = vsel %vm3298, %v3271, %v2666
      %v3337 = vsel %vm3298, %v3272, %v2668
      %v3338 = vsel %vm3298, %v3273, %v2670
      %v3339 = vsel %vm3298, %v3274, %v2672
      %v3340 = vsel %vm3298, %v3275, %v2674
      %v3341 = vsel %vm3298, %v3276, %v2676
      %v3342 = vsel %vm3298, %v3277, %v2678
      %v3343 = vsel %vm3298, %v3278, %v2680
      %v3344 = vsel %vm3298, %v3279, %v2682
      %v3345 = vsel %vm3298, %v3280, %v2684
      %v3346 = vsel %vm3298, %v3281, %v2686
      %v3347 = vsel %vm3298, %v3282, %v2688
      %v3348 = vsel %vm3298, %v3283, %v2690
      %v3349 = vsel %vm3298, %v3284, %v2692
      %v3350 = vsel %vm3298, %v3285, %v2694
      %v3351 = vsel %vm3298, %v3286, %v2696
      %v3352 = vsel %vm3298, %v3287, %v2698
      %v3353 = vsel %vm3298, %v3288, %v2700
      %v3354 = vsel %vm3298, %v3289, %v2702
      %v3355 = vsel %vm3298, %v3290, %v2704
      %v3356 = vsel %vm3298, %v3291, %v2706
      %v3357 = vsel %vm3298, %v3292, %v2708
      %v3358 = vsel %vm3298, %v3293, %v2710
      %v3359 = vsel %vm3298, %v3294, %v2712
      %v3360 = vsel %vm3298, %v3295, %v2714
      %v3361 = vsel %vm3298, %v3296, %v2716
      %v3362 = vsel %vm3298, %v3297, %v2718
      %vm3363 = vcmask 916480
      %v3364 = vsel %vm3363, %v3299, %v2592
      %v3365 = vsel %vm3363, %v3300, %v2594
      %v3366 = vsel %vm3363, %v3301, %v2596
      %v3367 = vsel %vm3363, %v3302, %v2598
      %v3368 = vsel %vm3363, %v3303, %v2600
      %v3369 = vsel %vm3363, %v3304, %v2602
      %v3370 = vsel %vm3363, %v3305, %v2604
      %v3371 = vsel %vm3363, %v3306, %v2606
      %v3372 = vsel %vm3363, %v3307, %v2608
      %v3373 = vsel %vm3363, %v3308, %v2610
      %v3374 = vsel %vm3363, %v3309, %v2612
      %v3375 = vsel %vm3363, %v3310, %v2614
      %v3376 = vsel %vm3363, %v3311, %v2616
      %v3377 = vsel %vm3363, %v3312, %v2618
      %v3378 = vsel %vm3363, %v3313, %v2620
      %v3379 = vsel %vm3363, %v3314, %v2622
      %v3380 = vsel %vm3363, %v3315, %v2624
      %v3381 = vsel %vm3363, %v3316, %v2626
      %v3382 = vsel %vm3363, %v3317, %v2628
      %v3383 = vsel %vm3363, %v3318, %v2630
      %v3384 = vsel %vm3363, %v3319, %v2632
      %v3385 = vsel %vm3363, %v3320, %v2634
      %v3386 = vsel %vm3363, %v3321, %v2636
      %v3387 = vsel %vm3363, %v3322, %v2638
      %v3388 = vsel %vm3363, %v3323, %v2640
      %v3389 = vsel %vm3363, %v3324, %v2642
      %v3390 = vsel %vm3363, %v3325, %v2644
      %v3391 = vsel %vm3363, %v3326, %v2646
      %v3392 = vsel %vm3363, %v3327, %v2648
      %v3393 = vsel %vm3363, %v3328, %v2650
      %v3394 = vsel %vm3363, %v3329, %v2652
      %v3395 = vsel %vm3363, %v3330, %v2654
      %v3396 = vsel %vm3363, %v3331, %v2656
      %v3397 = vsel %vm3363, %v3332, %v2658
      %v3398 = vsel %vm3363, %v3333, %v2660
      %v3399 = vsel %vm3363, %v3334, %v2662
      %v3400 = vsel %vm3363, %v3335, %v2664
      %v3401 = vsel %vm3363, %v3336, %v2666
      %v3402 = vsel %vm3363, %v3337, %v2668
      %v3403 = vsel %vm3363, %v3338, %v2670
      %v3404 = vsel %vm3363, %v3339, %v2672
      %v3405 = vsel %vm3363, %v3340, %v2674
      %v3406 = vsel %vm3363, %v3341, %v2676
      %v3407 = vsel %vm3363, %v3342, %v2678
      %v3408 = vsel %vm3363, %v3343, %v2680
      %v3409 = vsel %vm3363, %v3344, %v2682
      %v3410 = vsel %vm3363, %v3345, %v2684
      %v3411 = vsel %vm3363, %v3346, %v2686
      %v3412 = vsel %vm3363, %v3347, %v2688
      %v3413 = vsel %vm3363, %v3348, %v2690
      %v3414 = vsel %vm3363, %v3349, %v2692
      %v3415 = vsel %vm3363, %v3350, %v2694
      %v3416 = vsel %vm3363, %v3351, %v2696
      %v3417 = vsel %vm3363, %v3352, %v2698
      %v3418 = vsel %vm3363, %v3353, %v2700
      %v3419 = vsel %vm3363, %v3354, %v2702
      %v3420 = vsel %vm3363, %v3355, %v2704
      %v3421 = vsel %vm3363, %v3356, %v2706
      %v3422 = vsel %vm3363, %v3357, %v2708
      %v3423 = vsel %vm3363, %v3358, %v2710
      %v3424 = vsel %vm3363, %v3359, %v2712
      %v3425 = vsel %vm3363, %v3360, %v2714
      %v3426 = vsel %vm3363, %v3361, %v2716
      %v3427 = vsel %vm3363, %v3362, %v2718
      %v3428 = vsel %vm947, %v1887, %v2848
      %v3429 = vsel %vm947, %v1888, %v2850
      %v3430 = vsel %vm947, %v1889, %v2852
      %v3431 = vsel %vm947, %v1890, %v2854
      %v3432 = vsel %vm947, %v1891, %v2856
      %v3433 = vsel %vm947, %v1892, %v2858
      %v3434 = vsel %vm947, %v1893, %v2860
      %v3435 = vsel %vm947, %v1894, %v2862
      %v3436 = vsel %vm947, %v1895, %v2864
      %v3437 = vsel %vm947, %v1896, %v2866
      %v3438 = vsel %vm947, %v1897, %v2868
      %v3439 = vsel %vm947, %v1898, %v2870
      %v3440 = vsel %vm947, %v1899, %v2872
      %v3441 = vsel %vm947, %v1900, %v2874
      %v3442 = vsel %vm947, %v1901, %v2876
      %v3443 = vsel %vm947, %v1902, %v2878
      %v3444 = vsel %vm947, %v1903, %v2880
      %v3445 = vsel %vm947, %v1904, %v2882
      %v3446 = vsel %vm947, %v1905, %v2884
      %v3447 = vsel %vm947, %v1906, %v2886
      %v3448 = vsel %vm947, %v1907, %v2888
      %v3449 = vsel %vm947, %v1908, %v2890
      %v3450 = vsel %vm947, %v1909, %v2892
      %v3451 = vsel %vm947, %v1910, %v2894
      %v3452 = vsel %vm947, %v1911, %v2896
      %v3453 = vsel %vm947, %v1912, %v2898
      %v3454 = vsel %vm947, %v1913, %v2900
      %v3455 = vsel %vm947, %v1914, %v2902
      %v3456 = vsel %vm947, %v1915, %v2904
      %v3457 = vsel %vm947, %v1916, %v2906
      %v3458 = vsel %vm947, %v1917, %v2908
      %v3459 = vsel %vm947, %v1918, %v2910
      %v3460 = vsel %vm947, %v1919, %v2912
      %v3461 = vsel %vm947, %v1920, %v2914
      %v3462 = vsel %vm947, %v1921, %v2916
      %v3463 = vsel %vm947, %v1922, %v2918
      %v3464 = vsel %vm947, %v1923, %v2920
      %v3465 = vsel %vm947, %v1924, %v2922
      %v3466 = vsel %vm947, %v1925, %v2924
      %v3467 = vsel %vm947, %v1926, %v2926
      %v3468 = vsel %vm947, %v1927, %v2928
      %v3469 = vsel %vm947, %v1928, %v2930
      %v3470 = vsel %vm947, %v1929, %v2932
      %v3471 = vsel %vm947, %v1930, %v2934
      %v3472 = vsel %vm947, %v1931, %v2936
      %v3473 = vsel %vm947, %v1932, %v2938
      %v3474 = vsel %vm947, %v1933, %v2940
      %v3475 = vsel %vm947, %v1934, %v2942
      %v3476 = vsel %vm947, %v1935, %v2944
      %v3477 = vsel %vm947, %v1936, %v2946
      %v3478 = vsel %vm947, %v1937, %v2948
      %v3479 = vsel %vm947, %v1938, %v2950
      %v3480 = vsel %vm947, %v1939, %v2952
      %v3481 = vsel %vm947, %v1940, %v2954
      %v3482 = vsel %vm947, %v1941, %v2956
      %v3483 = vsel %vm947, %v1942, %v2958
      %v3484 = vsel %vm947, %v1943, %v2960
      %v3485 = vsel %vm947, %v1944, %v2962
      %v3486 = vsel %vm947, %v1945, %v2964
      %v3487 = vsel %vm947, %v1946, %v2966
      %v3488 = vsel %vm947, %v1947, %v2968
      %v3489 = vsel %vm947, %v1948, %v2970
      %v3490 = vsel %vm947, %v1949, %v2972
      %v3491 = vsel %vm947, %v1950, %v2974
      %v3492 = vsel %vm3103, %v3428, %v2848
      %v3493 = vsel %vm3103, %v3429, %v2850
      %v3494 = vsel %vm3103, %v3430, %v2852
      %v3495 = vsel %vm3103, %v3431, %v2854
      %v3496 = vsel %vm3103, %v3432, %v2856
      %v3497 = vsel %vm3103, %v3433, %v2858
      %v3498 = vsel %vm3103, %v3434, %v2860
      %v3499 = vsel %vm3103, %v3435, %v2862
      %v3500 = vsel %vm3103, %v3436, %v2864
      %v3501 = vsel %vm3103, %v3437, %v2866
      %v3502 = vsel %vm3103, %v3438, %v2868
      %v3503 = vsel %vm3103, %v3439, %v2870
      %v3504 = vsel %vm3103, %v3440, %v2872
      %v3505 = vsel %vm3103, %v3441, %v2874
      %v3506 = vsel %vm3103, %v3442, %v2876
      %v3507 = vsel %vm3103, %v3443, %v2878
      %v3508 = vsel %vm3103, %v3444, %v2880
      %v3509 = vsel %vm3103, %v3445, %v2882
      %v3510 = vsel %vm3103, %v3446, %v2884
      %v3511 = vsel %vm3103, %v3447, %v2886
      %v3512 = vsel %vm3103, %v3448, %v2888
      %v3513 = vsel %vm3103, %v3449, %v2890
      %v3514 = vsel %vm3103, %v3450, %v2892
      %v3515 = vsel %vm3103, %v3451, %v2894
      %v3516 = vsel %vm3103, %v3452, %v2896
      %v3517 = vsel %vm3103, %v3453, %v2898
      %v3518 = vsel %vm3103, %v3454, %v2900
      %v3519 = vsel %vm3103, %v3455, %v2902
      %v3520 = vsel %vm3103, %v3456, %v2904
      %v3521 = vsel %vm3103, %v3457, %v2906
      %v3522 = vsel %vm3103, %v3458, %v2908
      %v3523 = vsel %vm3103, %v3459, %v2910
      %v3524 = vsel %vm3103, %v3460, %v2912
      %v3525 = vsel %vm3103, %v3461, %v2914
      %v3526 = vsel %vm3103, %v3462, %v2916
      %v3527 = vsel %vm3103, %v3463, %v2918
      %v3528 = vsel %vm3103, %v3464, %v2920
      %v3529 = vsel %vm3103, %v3465, %v2922
      %v3530 = vsel %vm3103, %v3466, %v2924
      %v3531 = vsel %vm3103, %v3467, %v2926
      %v3532 = vsel %vm3103, %v3468, %v2928
      %v3533 = vsel %vm3103, %v3469, %v2930
      %v3534 = vsel %vm3103, %v3470, %v2932
      %v3535 = vsel %vm3103, %v3471, %v2934
      %v3536 = vsel %vm3103, %v3472, %v2936
      %v3537 = vsel %vm3103, %v3473, %v2938
      %v3538 = vsel %vm3103, %v3474, %v2940
      %v3539 = vsel %vm3103, %v3475, %v2942
      %v3540 = vsel %vm3103, %v3476, %v2944
      %v3541 = vsel %vm3103, %v3477, %v2946
      %v3542 = vsel %vm3103, %v3478, %v2948
      %v3543 = vsel %vm3103, %v3479, %v2950
      %v3544 = vsel %vm3103, %v3480, %v2952
      %v3545 = vsel %vm3103, %v3481, %v2954
      %v3546 = vsel %vm3103, %v3482, %v2956
      %v3547 = vsel %vm3103, %v3483, %v2958
      %v3548 = vsel %vm3103, %v3484, %v2960
      %v3549 = vsel %vm3103, %v3485, %v2962
      %v3550 = vsel %vm3103, %v3486, %v2964
      %v3551 = vsel %vm3103, %v3487, %v2966
      %v3552 = vsel %vm3103, %v3488, %v2968
      %v3553 = vsel %vm3103, %v3489, %v2970
      %v3554 = vsel %vm3103, %v3490, %v2972
      %v3555 = vsel %vm3103, %v3491, %v2974
      %v3556 = vld [vmem:[%s3] sm:$0xff]
      %v3557 = vld [vmem:[%s3 + $0x8] sm:$0xff]
      %v3558 = vld [vmem:[%s3 + $0x10] sm:$0xff]
      %v3559 = vld [vmem:[%s3 + $0x18] sm:$0xff]
      %v3560 = vld [vmem:[%s3 + $0x20] sm:$0xff]
      %v3561 = vld [vmem:[%s3 + $0x28] sm:$0xff]
      %v3562 = vld [vmem:[%s3 + $0x30] sm:$0xff]
      %v3563 = vld [vmem:[%s3 + $0x38] sm:$0xff]
      %v3564 = vld [vmem:[%s3 + $0x40] sm:$0xff]
      %v3565 = vld [vmem:[%s3 + $0x48] sm:$0xff]
      %v3566 = vld [vmem:[%s3 + $0x50] sm:$0xff]
      %v3567 = vld [vmem:[%s3 + $0x58] sm:$0xff]
      %v3568 = vld [vmem:[%s3 + $0x60] sm:$0xff]
      %v3569 = vld [vmem:[%s3 + $0x68] sm:$0xff]
      %v3570 = vld [vmem:[%s3 + $0x70] sm:$0xff]
      %v3571 = vld [vmem:[%s3 + $0x78] sm:$0xff]
      %v3572 = vld [vmem:[%s3 + $0x80] sm:$0xff]
      %v3573 = vld [vmem:[%s3 + $0x88] sm:$0xff]
      %v3574 = vld [vmem:[%s3 + $0x90] sm:$0xff]
      %v3575 = vld [vmem:[%s3 + $0x98] sm:$0xff]
      %v3576 = vld [vmem:[%s3 + $0xa0] sm:$0xff]
      %v3577 = vld [vmem:[%s3 + $0xa8] sm:$0xff]
      %v3578 = vld [vmem:[%s3 + $0xb0] sm:$0xff]
      %v3579 = vld [vmem:[%s3 + $0xb8] sm:$0xff]
      %v3580 = vld [vmem:[%s4] sm:$0x1]
      %v3582 = vlaneseq
      %v3583 = vshrl.u32 %v3582, 7
      %v3584 = vsub.s32 0, %v3583
      %v3585 = vrot.slane %v3580, %v3584
      %v3588 = vsel %vm3168, %v3492, 0
      %v3591 = vsel %vm3168, %v3493, 0
      %v3594 = vsel %vm3168, %v3494, 0
      %v3597 = vsel %vm3168, %v3495, 0
      %v3600 = vsel %vm3168, %v3496, 0
      %v3603 = vsel %vm3168, %v3497, 0
      %v3606 = vsel %vm3168, %v3498, 0
      %v3609 = vsel %vm3168, %v3499, 0
      %v3612 = vsel %vm3168, %v3500, 0
      %v3615 = vsel %vm3168, %v3501, 0
      %v3618 = vsel %vm3168, %v3502, 0
      %v3621 = vsel %vm3168, %v3503, 0
      %v3624 = vsel %vm3168, %v3504, 0
      %v3627 = vsel %vm3168, %v3505, 0
      %v3630 = vsel %vm3168, %v3506, 0
      %v3633 = vsel %vm3168, %v3507, 0
      %v3636 = vsel %vm3168, %v3508, 0
      %v3639 = vsel %vm3168, %v3509, 0
      %v3642 = vsel %vm3168, %v3510, 0
      %v3645 = vsel %vm3168, %v3511, 0
      %v3648 = vsel %vm3168, %v3512, 0
      %v3651 = vsel %vm3168, %v3513, 0
      %v3654 = vsel %vm3168, %v3514, 0
      %v3657 = vsel %vm3168, %v3515, 0
      %v3660 = vsel %vm3168, %v3516, 0
      %v3663 = vsel %vm3168, %v3517, 0
      %v3666 = vsel %vm3168, %v3518, 0
      %v3669 = vsel %vm3168, %v3519, 0
      %v3672 = vsel %vm3168, %v3520, 0
      %v3675 = vsel %vm3168, %v3521, 0
      %v3678 = vsel %vm3168, %v3522, 0
      %v3681 = vsel %vm3168, %v3523, 0
      %v3684 = vsel %vm3168, %v3524, 0
      %v3687 = vsel %vm3168, %v3525, 0
      %v3690 = vsel %vm3168, %v3526, 0
      %v3693 = vsel %vm3168, %v3527, 0
      %v3696 = vsel %vm3168, %v3528, 0
      %v3699 = vsel %vm3168, %v3529, 0
      %v3702 = vsel %vm3168, %v3530, 0
      %v3705 = vsel %vm3168, %v3531, 0
      %v3708 = vsel %vm3168, %v3532, 0
      %v3711 = vsel %vm3168, %v3533, 0
      %v3714 = vsel %vm3168, %v3534, 0
      %v3717 = vsel %vm3168, %v3535, 0
      %v3720 = vsel %vm3168, %v3536, 0
      %v3723 = vsel %vm3168, %v3537, 0
      %v3726 = vsel %vm3168, %v3538, 0
      %v3729 = vsel %vm3168, %v3539, 0
      %v3732 = vsel %vm3168, %v3540, 0
      %v3735 = vsel %vm3168, %v3541, 0
      %v3738 = vsel %vm3168, %v3542, 0
      %v3741 = vsel %vm3168, %v3543, 0
      %v3744 = vsel %vm3168, %v3544, 0
      %v3747 = vsel %vm3168, %v3545, 0
      %v3750 = vsel %vm3168, %v3546, 0
      %v3753 = vsel %vm3168, %v3547, 0
      %v3756 = vsel %vm3168, %v3548, 0
      %v3759 = vsel %vm3168, %v3549, 0
      %v3762 = vsel %vm3168, %v3550, 0
      %v3765 = vsel %vm3168, %v3551, 0
      %v3768 = vsel %vm3168, %v3552, 0
      %v3771 = vsel %vm3168, %v3553, 0
      %v3774 = vsel %vm3168, %v3554, 0
      %v3777 = vsel %vm3168, %v3555, 0
      %3779 = vmatprep.subr.mxu0 0.0
      %3780 = vmatpush1.msra.mxu0 %v3571
      %3781 = vmatprep.subr.mxu0 0.0
      %3782 = vmatpush1.msra.mxu0 %v3570
      %3783 = vmatprep.subr.mxu0 0.0
      %3784 = vmatpush1.msra.mxu0 %v3569
      %3785 = vmatprep.subr.mxu0 0.0
      %3786 = vmatpush1.msra.mxu0 %v3568
      %3787 = vmatprep.subr.mxu0 0.0
      %3788 = vmatpush1.msra.mxu0 %v3567
      %3789 = vmatprep.subr.mxu0 0.0
      %3790 = vmatpush1.msra.mxu0 %v3566
      %3791 = vmatprep.subr.mxu0 0.0
      %3792 = vmatpush1.msra.mxu0 %v3565
      %3793 = vmatprep.subr.mxu0 0.0
      %3794 = vmatpush1.msra.mxu0 %v3564
      %3795 = vmatprep.subr.mxu0 0.0
      %3796 = vmatpush1.msra.mxu0 %v3563
      %3797 = vmatprep.subr.mxu0 0.0
      %3798 = vmatpush1.msra.mxu0 %v3562
      %3799 = vmatprep.subr.mxu0 0.0
      %3800 = vmatpush1.msra.mxu0 %v3561
      %3801 = vmatprep.subr.mxu0 0.0
      %3802 = vmatpush1.msra.mxu0 %v3560
      %3803 = vmatprep.subr.mxu0 0.0
      %3804 = vmatpush1.msra.mxu0 %v3559
      %3805 = vmatprep.subr.mxu0 0.0
      %3806 = vmatpush1.msra.mxu0 %v3558
      %3807 = vmatprep.subr.mxu0 0.0
      %3808 = vmatpush1.msra.mxu0 %v3557
      %3809 = vmatprep.subr.mxu0 0.0
      %3810 = vmatpush1.msra.mxu0 %v3556
      %3811 = vmatprep.subr.mxu0 0.0
      %3812 = vmatpush2.msra.mxu0 0.0
      %3813 = vmatprep.subr.mxu0 0.0
      %3814 = vmatpush2.msra.mxu0 0.0
      %3815 = vmatprep.subr.mxu0 0.0
      %3816 = vmatpush2.msra.mxu0 0.0
      %3817 = vmatprep.subr.mxu0 0.0
      %3818 = vmatpush2.msra.mxu0 0.0
      %3819 = vmatprep.subr.mxu0 0.0
      %3820 = vmatpush2.msra.mxu0 0.0
      %3821 = vmatprep.subr.mxu0 0.0
      %3822 = vmatpush2.msra.mxu0 0.0
      %3823 = vmatprep.subr.mxu0 0.0
      %3824 = vmatpush2.msra.mxu0 0.0
      %3825 = vmatprep.subr.mxu0 0.0
      %3826 = vmatpush2.msra.mxu0 0.0
      %3827 = vmatprep.subr.mxu0 0.0
      %3828 = vmatpush2.msra.mxu0 %v3579
      %3829 = vmatprep.subr.mxu0 0.0
      %3830 = vmatpush2.msra.mxu0 %v3578
      %3831 = vmatprep.subr.mxu0 0.0
      %3832 = vmatpush2.msra.mxu0 %v3577
      %3833 = vmatprep.subr.mxu0 0.0
      %3834 = vmatpush2.msra.mxu0 %v3576
      %3835 = vmatprep.subr.mxu0 0.0
      %3836 = vmatpush2.msra.mxu0 %v3575
      %3837 = vmatprep.subr.mxu0 0.0
      %3838 = vmatpush2.msra.mxu0 %v3574
      %3839 = vmatprep.subr.mxu0 0.0
      %3840 = vmatpush2.msra.mxu0 %v3573
      %3841 = vmatprep.subr.mxu0 0.0
      %3842 = vmatpush2.msra.mxu0 %v3572
      %3843 = vmatprep.mubr.f32.mxu0 %v3588
      %3844 = vmatmul.mubr.f32.gmra.mxu0 %v3364
      %v3845 = vpop.f32.mrf.mxu0
      %v3846 = vadd.f32 %v3585, %v3845
      %v3847 = vpop.f32.mrf.mxu0
      %3848 = vmatprep.mubr.f32.mxu0 %v3591
      %3849 = vmatmul.mubr.f32.gmra.mxu0 %v3365
      %v3850 = vpop.f32.mrf.mxu0
      %v3851 = vadd.f32 %v3585, %v3850
      %v3852 = vpop.f32.mrf.mxu0
      %3853 = vmatprep.mubr.f32.mxu0 %v3594
      %3854 = vmatmul.mubr.f32.gmra.mxu0 %v3366
      %v3855 = vpop.f32.mrf.mxu0
      %v3856 = vadd.f32 %v3585, %v3855
      %v3857 = vpop.f32.mrf.mxu0
      %3858 = vmatprep.mubr.f32.mxu0 %v3597
      %3859 = vmatmul.mubr.f32.gmra.mxu0 %v3367
      %v3860 = vpop.f32.mrf.mxu0
      %v3861 = vadd.f32 %v3585, %v3860
      %v3862 = vpop.f32.mrf.mxu0
      %3863 = vmatprep.mubr.f32.mxu0 %v3600
      %3864 = vmatmul.mubr.f32.gmra.mxu0 %v3368
      %v3865 = vpop.f32.mrf.mxu0
      %v3866 = vadd.f32 %v3585, %v3865
      %v3867 = vpop.f32.mrf.mxu0
      %3868 = vmatprep.mubr.f32.mxu0 %v3603
      %3869 = vmatmul.mubr.f32.gmra.mxu0 %v3369
      %v3870 = vpop.f32.mrf.mxu0
      %v3871 = vadd.f32 %v3585, %v3870
      %v3872 = vpop.f32.mrf.mxu0
      %3873 = vmatprep.mubr.f32.mxu0 %v3606
      %3874 = vmatmul.mubr.f32.gmra.mxu0 %v3370
      %v3875 = vpop.f32.mrf.mxu0
      %v3876 = vadd.f32 %v3585, %v3875
      %v3877 = vpop.f32.mrf.mxu0
      %3878 = vmatprep.mubr.f32.mxu0 %v3609
      %3879 = vmatmul.mubr.f32.gmra.mxu0 %v3371
      %v3880 = vpop.f32.mrf.mxu0
      %v3881 = vadd.f32 %v3585, %v3880
      %v3882 = vpop.f32.mrf.mxu0
      %3883 = vmatprep.mubr.f32.mxu0 %v3612
      %3884 = vmatmul.mubr.f32.gmra.mxu0 %v3372
      %v3885 = vpop.f32.mrf.mxu0
      %v3886 = vadd.f32 %v3585, %v3885
      %v3887 = vpop.f32.mrf.mxu0
      %3888 = vmatprep.mubr.f32.mxu0 %v3615
      %3889 = vmatmul.mubr.f32.gmra.mxu0 %v3373
      %v3890 = vpop.f32.mrf.mxu0
      %v3891 = vadd.f32 %v3585, %v3890
      %v3892 = vpop.f32.mrf.mxu0
      %3893 = vmatprep.mubr.f32.mxu0 %v3618
      %3894 = vmatmul.mubr.f32.gmra.mxu0 %v3374
      %v3895 = vpop.f32.mrf.mxu0
      %v3896 = vadd.f32 %v3585, %v3895
      %v3897 = vpop.f32.mrf.mxu0
      %3898 = vmatprep.mubr.f32.mxu0 %v3621
      %3899 = vmatmul.mubr.f32.gmra.mxu0 %v3375
      %v3900 = vpop.f32.mrf.mxu0
      %v3901 = vadd.f32 %v3585, %v3900
      %v3902 = vpop.f32.mrf.mxu0
      %3903 = vmatprep.mubr.f32.mxu0 %v3624
      %3904 = vmatmul.mubr.f32.gmra.mxu0 %v3376
      %v3905 = vpop.f32.mrf.mxu0
      %v3906 = vadd.f32 %v3585, %v3905
      %v3907 = vpop.f32.mrf.mxu0
      %3908 = vmatprep.mubr.f32.mxu0 %v3627
      %3909 = vmatmul.mubr.f32.gmra.mxu0 %v3377
      %v3910 = vpop.f32.mrf.mxu0
      %v3911 = vadd.f32 %v3585, %v3910
      %v3912 = vpop.f32.mrf.mxu0
      %3913 = vmatprep.mubr.f32.mxu0 %v3630
      %3914 = vmatmul.mubr.f32.gmra.mxu0 %v3378
      %v3915 = vpop.f32.mrf.mxu0
      %v3916 = vadd.f32 %v3585, %v3915
      %v3917 = vpop.f32.mrf.mxu0
      %3918 = vmatprep.mubr.f32.mxu0 %v3633
      %3919 = vmatmul.mubr.f32.gmra.mxu0 %v3379
      %v3920 = vpop.f32.mrf.mxu0
      %v3921 = vadd.f32 %v3585, %v3920
      %v3922 = vpop.f32.mrf.mxu0
      %3923 = vmatprep.mubr.f32.mxu0 %v3636
      %3924 = vmatmul.mubr.f32.gmra.mxu0 %v3380
      %v3925 = vpop.f32.mrf.mxu0
      %v3926 = vadd.f32 %v3585, %v3925
      %v3927 = vpop.f32.mrf.mxu0
      %3928 = vmatprep.mubr.f32.mxu0 %v3639
      %3929 = vmatmul.mubr.f32.gmra.mxu0 %v3381
      %v3930 = vpop.f32.mrf.mxu0
      %v3931 = vadd.f32 %v3585, %v3930
      %v3932 = vpop.f32.mrf.mxu0
      %3933 = vmatprep.mubr.f32.mxu0 %v3642
      %3934 = vmatmul.mubr.f32.gmra.mxu0 %v3382
      %v3935 = vpop.f32.mrf.mxu0
      %v3936 = vadd.f32 %v3585, %v3935
      %v3937 = vpop.f32.mrf.mxu0
      %3938 = vmatprep.mubr.f32.mxu0 %v3645
      %3939 = vmatmul.mubr.f32.gmra.mxu0 %v3383
      %v3940 = vpop.f32.mrf.mxu0
      %v3941 = vadd.f32 %v3585, %v3940
      %v3942 = vpop.f32.mrf.mxu0
      %3943 = vmatprep.mubr.f32.mxu0 %v3648
      %3944 = vmatmul.mubr.f32.gmra.mxu0 %v3384
      %v3945 = vpop.f32.mrf.mxu0
      %v3946 = vadd.f32 %v3585, %v3945
      %v3947 = vpop.f32.mrf.mxu0
      %3948 = vmatprep.mubr.f32.mxu0 %v3651
      %3949 = vmatmul.mubr.f32.gmra.mxu0 %v3385
      %v3950 = vpop.f32.mrf.mxu0
      %v3951 = vadd.f32 %v3585, %v3950
      %v3952 = vpop.f32.mrf.mxu0
      %3953 = vmatprep.mubr.f32.mxu0 %v3654
      %3954 = vmatmul.mubr.f32.gmra.mxu0 %v3386
      %v3955 = vpop.f32.mrf.mxu0
      %v3956 = vadd.f32 %v3585, %v3955
      %v3957 = vpop.f32.mrf.mxu0
      %3958 = vmatprep.mubr.f32.mxu0 %v3657
      %3959 = vmatmul.mubr.f32.gmra.mxu0 %v3387
      %v3960 = vpop.f32.mrf.mxu0
      %v3961 = vadd.f32 %v3585, %v3960
      %v3962 = vpop.f32.mrf.mxu0
      %3963 = vmatprep.mubr.f32.mxu0 %v3660
      %3964 = vmatmul.mubr.f32.gmra.mxu0 %v3388
      %v3965 = vpop.f32.mrf.mxu0
      %v3966 = vadd.f32 %v3585, %v3965
      %v3967 = vpop.f32.mrf.mxu0
      %3968 = vmatprep.mubr.f32.mxu0 %v3663
      %3969 = vmatmul.mubr.f32.gmra.mxu0 %v3389
      %v3970 = vpop.f32.mrf.mxu0
      %v3971 = vadd.f32 %v3585, %v3970
      %v3972 = vpop.f32.mrf.mxu0
      %3973 = vmatprep.mubr.f32.mxu0 %v3666
      %3974 = vmatmul.mubr.f32.gmra.mxu0 %v3390
      %v3975 = vpop.f32.mrf.mxu0
      %v3976 = vadd.f32 %v3585, %v3975
      %v3977 = vpop.f32.mrf.mxu0
      %3978 = vmatprep.mubr.f32.mxu0 %v3669
      %3979 = vmatmul.mubr.f32.gmra.mxu0 %v3391
      %v3980 = vpop.f32.mrf.mxu0
      %v3981 = vadd.f32 %v3585, %v3980
      %v3982 = vpop.f32.mrf.mxu0
      %3983 = vmatprep.mubr.f32.mxu0 %v3672
      %3984 = vmatmul.mubr.f32.gmra.mxu0 %v3392
      %v3985 = vpop.f32.mrf.mxu0
      %v3986 = vadd.f32 %v3585, %v3985
      %v3987 = vpop.f32.mrf.mxu0
      %3988 = vmatprep.mubr.f32.mxu0 %v3675
      %3989 = vmatmul.mubr.f32.gmra.mxu0 %v3393
      %v3990 = vpop.f32.mrf.mxu0
      %v3991 = vadd.f32 %v3585, %v3990
      %v3992 = vpop.f32.mrf.mxu0
      %3993 = vmatprep.mubr.f32.mxu0 %v3678
      %3994 = vmatmul.mubr.f32.gmra.mxu0 %v3394
      %v3995 = vpop.f32.mrf.mxu0
      %v3996 = vadd.f32 %v3585, %v3995
      %v3997 = vpop.f32.mrf.mxu0
      %3998 = vmatprep.mubr.f32.mxu0 %v3681
      %3999 = vmatmul.mubr.f32.gmra.mxu0 %v3395
      %v4000 = vpop.f32.mrf.mxu0
      %v4001 = vadd.f32 %v3585, %v4000
      %v4002 = vpop.f32.mrf.mxu0
      %4003 = vmatprep.mubr.f32.mxu0 %v3684
      %4004 = vmatmul.mubr.f32.gmra.mxu0 %v3396
      %v4005 = vpop.f32.mrf.mxu0
      %v4006 = vadd.f32 %v3585, %v4005
      %v4007 = vpop.f32.mrf.mxu0
      %4008 = vmatprep.mubr.f32.mxu0 %v3687
      %4009 = vmatmul.mubr.f32.gmra.mxu0 %v3397
      %v4010 = vpop.f32.mrf.mxu0
      %v4011 = vadd.f32 %v3585, %v4010
      %v4012 = vpop.f32.mrf.mxu0
      %4013 = vmatprep.mubr.f32.mxu0 %v3690
      %4014 = vmatmul.mubr.f32.gmra.mxu0 %v3398
      %v4015 = vpop.f32.mrf.mxu0
      %v4016 = vadd.f32 %v3585, %v4015
      %v4017 = vpop.f32.mrf.mxu0
      %4018 = vmatprep.mubr.f32.mxu0 %v3693
      %4019 = vmatmul.mubr.f32.gmra.mxu0 %v3399
      %v4020 = vpop.f32.mrf.mxu0
      %v4021 = vadd.f32 %v3585, %v4020
      %v4022 = vpop.f32.mrf.mxu0
      %4023 = vmatprep.mubr.f32.mxu0 %v3696
      %4024 = vmatmul.mubr.f32.gmra.mxu0 %v3400
      %v4025 = vpop.f32.mrf.mxu0
      %v4026 = vadd.f32 %v3585, %v4025
      %v4027 = vpop.f32.mrf.mxu0
      %4028 = vmatprep.mubr.f32.mxu0 %v3699
      %4029 = vmatmul.mubr.f32.gmra.mxu0 %v3401
      %v4030 = vpop.f32.mrf.mxu0
      %v4031 = vadd.f32 %v3585, %v4030
      %v4032 = vpop.f32.mrf.mxu0
      %4033 = vmatprep.mubr.f32.mxu0 %v3702
      %4034 = vmatmul.mubr.f32.gmra.mxu0 %v3402
      %v4035 = vpop.f32.mrf.mxu0
      %v4036 = vadd.f32 %v3585, %v4035
      %v4037 = vpop.f32.mrf.mxu0
      %4038 = vmatprep.mubr.f32.mxu0 %v3705
      %4039 = vmatmul.mubr.f32.gmra.mxu0 %v3403
      %v4040 = vpop.f32.mrf.mxu0
      %v4041 = vadd.f32 %v3585, %v4040
      %v4042 = vpop.f32.mrf.mxu0
      %4043 = vmatprep.mubr.f32.mxu0 %v3708
      %4044 = vmatmul.mubr.f32.gmra.mxu0 %v3404
      %v4045 = vpop.f32.mrf.mxu0
      %v4046 = vadd.f32 %v3585, %v4045
      %v4047 = vpop.f32.mrf.mxu0
      %4048 = vmatprep.mubr.f32.mxu0 %v3711
      %4049 = vmatmul.mubr.f32.gmra.mxu0 %v3405
      %v4050 = vpop.f32.mrf.mxu0
      %v4051 = vadd.f32 %v3585, %v4050
      %v4052 = vpop.f32.mrf.mxu0
      %4053 = vmatprep.mubr.f32.mxu0 %v3714
      %4054 = vmatmul.mubr.f32.gmra.mxu0 %v3406
      %v4055 = vpop.f32.mrf.mxu0
      %v4056 = vadd.f32 %v3585, %v4055
      %v4057 = vpop.f32.mrf.mxu0
      %4058 = vmatprep.mubr.f32.mxu0 %v3717
      %4059 = vmatmul.mubr.f32.gmra.mxu0 %v3407
      %v4060 = vpop.f32.mrf.mxu0
      %v4061 = vadd.f32 %v3585, %v4060
      %v4062 = vpop.f32.mrf.mxu0
      %4063 = vmatprep.mubr.f32.mxu0 %v3720
      %4064 = vmatmul.mubr.f32.gmra.mxu0 %v3408
      %v4065 = vpop.f32.mrf.mxu0
      %v4066 = vadd.f32 %v3585, %v4065
      %v4067 = vpop.f32.mrf.mxu0
      %4068 = vmatprep.mubr.f32.mxu0 %v3723
      %4069 = vmatmul.mubr.f32.gmra.mxu0 %v3409
      %v4070 = vpop.f32.mrf.mxu0
      %v4071 = vadd.f32 %v3585, %v4070
      %v4072 = vpop.f32.mrf.mxu0
      %4073 = vmatprep.mubr.f32.mxu0 %v3726
      %4074 = vmatmul.mubr.f32.gmra.mxu0 %v3410
      %v4075 = vpop.f32.mrf.mxu0
      %v4076 = vadd.f32 %v3585, %v4075
      %v4077 = vpop.f32.mrf.mxu0
      %4078 = vmatprep.mubr.f32.mxu0 %v3729
      %4079 = vmatmul.mubr.f32.gmra.mxu0 %v3411
      %v4080 = vpop.f32.mrf.mxu0
      %v4081 = vadd.f32 %v3585, %v4080
      %v4082 = vpop.f32.mrf.mxu0
      %4083 = vmatprep.mubr.f32.mxu0 %v3732
      %4084 = vmatmul.mubr.f32.gmra.mxu0 %v3412
      %v4085 = vpop.f32.mrf.mxu0
      %v4086 = vadd.f32 %v3585, %v4085
      %v4087 = vpop.f32.mrf.mxu0
      %4088 = vmatprep.mubr.f32.mxu0 %v3735
      %4089 = vmatmul.mubr.f32.gmra.mxu0 %v3413
      %v4090 = vpop.f32.mrf.mxu0
      %v4091 = vadd.f32 %v3585, %v4090
      %v4092 = vpop.f32.mrf.mxu0
      %4093 = vmatprep.mubr.f32.mxu0 %v3738
      %4094 = vmatmul.mubr.f32.gmra.mxu0 %v3414
      %v4095 = vpop.f32.mrf.mxu0
      %v4096 = vadd.f32 %v3585, %v4095
      %v4097 = vpop.f32.mrf.mxu0
      %4098 = vmatprep.mubr.f32.mxu0 %v3741
      %4099 = vmatmul.mubr.f32.gmra.mxu0 %v3415
      %v4100 = vpop.f32.mrf.mxu0
      %v4101 = vadd.f32 %v3585, %v4100
      %v4102 = vpop.f32.mrf.mxu0
      %4103 = vmatprep.mubr.f32.mxu0 %v3744
      %4104 = vmatmul.mubr.f32.gmra.mxu0 %v3416
      %v4105 = vpop.f32.mrf.mxu0
      %v4106 = vadd.f32 %v3585, %v4105
      %v4107 = vpop.f32.mrf.mxu0
      %4108 = vmatprep.mubr.f32.mxu0 %v3747
      %4109 = vmatmul.mubr.f32.gmra.mxu0 %v3417
      %v4110 = vpop.f32.mrf.mxu0
      %v4111 = vadd.f32 %v3585, %v4110
      %v4112 = vpop.f32.mrf.mxu0
      %4113 = vmatprep.mubr.f32.mxu0 %v3750
      %4114 = vmatmul.mubr.f32.gmra.mxu0 %v3418
      %v4115 = vpop.f32.mrf.mxu0
      %v4116 = vadd.f32 %v3585, %v4115
      %v4117 = vpop.f32.mrf.mxu0
      %4118 = vmatprep.mubr.f32.mxu0 %v3753
      %4119 = vmatmul.mubr.f32.gmra.mxu0 %v3419
      %v4120 = vpop.f32.mrf.mxu0
      %v4121 = vadd.f32 %v3585, %v4120
      %v4122 = vpop.f32.mrf.mxu0
      %4123 = vmatprep.mubr.f32.mxu0 %v3756
      %4124 = vmatmul.mubr.f32.gmra.mxu0 %v3420
      %v4125 = vpop.f32.mrf.mxu0
      %v4126 = vadd.f32 %v3585, %v4125
      %v4127 = vpop.f32.mrf.mxu0
      %4128 = vmatprep.mubr.f32.mxu0 %v3759
      %4129 = vmatmul.mubr.f32.gmra.mxu0 %v3421
      %v4130 = vpop.f32.mrf.mxu0
      %v4131 = vadd.f32 %v3585, %v4130
      %v4132 = vpop.f32.mrf.mxu0
      %4133 = vmatprep.mubr.f32.mxu0 %v3762
      %4134 = vmatmul.mubr.f32.gmra.mxu0 %v3422
      %v4135 = vpop.f32.mrf.mxu0
      %v4136 = vadd.f32 %v3585, %v4135
      %v4137 = vpop.f32.mrf.mxu0
      %4138 = vmatprep.mubr.f32.mxu0 %v3765
      %4139 = vmatmul.mubr.f32.gmra.mxu0 %v3423
      %v4140 = vpop.f32.mrf.mxu0
      %v4141 = vadd.f32 %v3585, %v4140
      %v4142 = vpop.f32.mrf.mxu0
      %4143 = vmatprep.mubr.f32.mxu0 %v3768
      %4144 = vmatmul.mubr.f32.gmra.mxu0 %v3424
      %v4145 = vpop.f32.mrf.mxu0
      %v4146 = vadd.f32 %v3585, %v4145
      %v4147 = vpop.f32.mrf.mxu0
      %4148 = vmatprep.mubr.f32.mxu0 %v3771
      %4149 = vmatmul.mubr.f32.gmra.mxu0 %v3425
      %v4150 = vpop.f32.mrf.mxu0
      %v4151 = vadd.f32 %v3585, %v4150
      %v4152 = vpop.f32.mrf.mxu0
      %4153 = vmatprep.mubr.f32.mxu0 %v3774
      %4154 = vmatmul.mubr.f32.gmra.mxu0 %v3426
      %v4155 = vpop.f32.mrf.mxu0
      %v4156 = vadd.f32 %v3585, %v4155
      %v4157 = vpop.f32.mrf.mxu0
      %4158 = vmatprep.mubr.f32.mxu0 %v3777
      %4159 = vmatmul.mubr.f32.gmra.mxu0 %v3427
      %v4160 = vpop.f32.mrf.mxu0
      %v4161 = vadd.f32 %v3585, %v4160
      %v4162 = vpop.f32.mrf.mxu0
      %4163 = vdwg.mxu0
      %v4164 = vmax.f32 %v3846, 0.0
      %v4165 = vmax.f32 %v3851, 0.0
      %v4166 = vmax.f32 %v3856, 0.0
      %v4167 = vmax.f32 %v3861, 0.0
      %v4168 = vmax.f32 %v3866, 0.0
      %v4169 = vmax.f32 %v3871, 0.0
      %v4170 = vmax.f32 %v3876, 0.0
      %v4171 = vmax.f32 %v3881, 0.0
      %v4172 = vmax.f32 %v3886, 0.0
      %v4173 = vmax.f32 %v3891, 0.0
      %v4174 = vmax.f32 %v3896, 0.0
      %v4175 = vmax.f32 %v3901, 0.0
      %v4176 = vmax.f32 %v3906, 0.0
      %v4177 = vmax.f32 %v3911, 0.0
      %v4178 = vmax.f32 %v3916, 0.0
      %v4179 = vmax.f32 %v3921, 0.0
      %v4180 = vmax.f32 %v3926, 0.0
      %v4181 = vmax.f32 %v3931, 0.0
      %v4182 = vmax.f32 %v3936, 0.0
      %v4183 = vmax.f32 %v3941, 0.0
      %v4184 = vmax.f32 %v3946, 0.0
      %v4185 = vmax.f32 %v3951, 0.0
      %v4186 = vmax.f32 %v3956, 0.0
      %v4187 = vmax.f32 %v3961, 0.0
      %v4188 = vmax.f32 %v3966, 0.0
      %v4189 = vmax.f32 %v3971, 0.0
      %v4190 = vmax.f32 %v3976, 0.0
      %v4191 = vmax.f32 %v3981, 0.0
      %v4192 = vmax.f32 %v3986, 0.0
      %v4193 = vmax.f32 %v3991, 0.0
      %v4194 = vmax.f32 %v3996, 0.0
      %v4195 = vmax.f32 %v4001, 0.0
      %v4196 = vmax.f32 %v4006, 0.0
      %v4197 = vmax.f32 %v4011, 0.0
      %v4198 = vmax.f32 %v4016, 0.0
      %v4199 = vmax.f32 %v4021, 0.0
      %v4200 = vmax.f32 %v4026, 0.0
      %v4201 = vmax.f32 %v4031, 0.0
      %v4202 = vmax.f32 %v4036, 0.0
      %v4203 = vmax.f32 %v4041, 0.0
      %v4204 = vmax.f32 %v4046, 0.0
      %v4205 = vmax.f32 %v4051, 0.0
      %v4206 = vmax.f32 %v4056, 0.0
      %v4207 = vmax.f32 %v4061, 0.0
      %v4208 = vmax.f32 %v4066, 0.0
      %v4209 = vmax.f32 %v4071, 0.0
      %v4210 = vmax.f32 %v4076, 0.0
      %v4211 = vmax.f32 %v4081, 0.0
      %v4212 = vmax.f32 %v4086, 0.0
      %v4213 = vmax.f32 %v4091, 0.0
      %v4214 = vmax.f32 %v4096, 0.0
      %v4215 = vmax.f32 %v4101, 0.0
      %v4216 = vmax.f32 %v4106, 0.0
      %v4217 = vmax.f32 %v4111, 0.0
      %v4218 = vmax.f32 %v4116, 0.0
      %v4219 = vmax.f32 %v4121, 0.0
      %v4220 = vmax.f32 %v4126, 0.0
      %v4221 = vmax.f32 %v4131, 0.0
      %v4222 = vmax.f32 %v4136, 0.0
      %v4223 = vmax.f32 %v4141, 0.0
      %v4224 = vmax.f32 %v4146, 0.0
      %v4225 = vmax.f32 %v4151, 0.0
      %v4226 = vmax.f32 %v4156, 0.0
      %v4227 = vmax.f32 %v4161, 0.0
      %4292 = vrot.lane.b32.xlu0 %v4164, 96
      %v4293 = vpop.permute.xlu0 %4292
      %4294 = vrot.lane.b32.xlu0 %v4165, 96
      %v4295 = vpop.permute.xlu0 %4294
      %4296 = vrot.lane.b32.xlu0 %v4166, 96
      %v4297 = vpop.permute.xlu0 %4296
      %4298 = vrot.lane.b32.xlu0 %v4167, 96
      %v4299 = vpop.permute.xlu0 %4298
      %4300 = vrot.lane.b32.xlu0 %v4168, 96
      %v4301 = vpop.permute.xlu0 %4300
      %4302 = vrot.lane.b32.xlu0 %v4169, 96
      %v4303 = vpop.permute.xlu0 %4302
      %4304 = vrot.lane.b32.xlu0 %v4170, 96
      %v4305 = vpop.permute.xlu0 %4304
      %4306 = vrot.lane.b32.xlu0 %v4171, 96
      %v4307 = vpop.permute.xlu0 %4306
      %4308 = vrot.lane.b32.xlu0 %v4172, 96
      %v4309 = vpop.permute.xlu0 %4308
      %4310 = vrot.lane.b32.xlu0 %v4173, 96
      %v4311 = vpop.permute.xlu0 %4310
      %4312 = vrot.lane.b32.xlu0 %v4174, 96
      %v4313 = vpop.permute.xlu0 %4312
      %4314 = vrot.lane.b32.xlu0 %v4175, 96
      %v4315 = vpop.permute.xlu0 %4314
      %4316 = vrot.lane.b32.xlu0 %v4176, 96
      %v4317 = vpop.permute.xlu0 %4316
      %4318 = vrot.lane.b32.xlu0 %v4177, 96
      %v4319 = vpop.permute.xlu0 %4318
      %4320 = vrot.lane.b32.xlu0 %v4178, 96
      %v4321 = vpop.permute.xlu0 %4320
      %4322 = vrot.lane.b32.xlu0 %v4179, 96
      %v4323 = vpop.permute.xlu0 %4322
      %4324 = vrot.lane.b32.xlu0 %v4180, 96
      %v4325 = vpop.permute.xlu0 %4324
      %4326 = vrot.lane.b32.xlu0 %v4181, 96
      %v4327 = vpop.permute.xlu0 %4326
      %4328 = vrot.lane.b32.xlu0 %v4182, 96
      %v4329 = vpop.permute.xlu0 %4328
      %4330 = vrot.lane.b32.xlu0 %v4183, 96
      %v4331 = vpop.permute.xlu0 %4330
      %4332 = vrot.lane.b32.xlu0 %v4184, 96
      %v4333 = vpop.permute.xlu0 %4332
      %4334 = vrot.lane.b32.xlu0 %v4185, 96
      %v4335 = vpop.permute.xlu0 %4334
      %4336 = vrot.lane.b32.xlu0 %v4186, 96
      %v4337 = vpop.permute.xlu0 %4336
      %4338 = vrot.lane.b32.xlu0 %v4187, 96
      %v4339 = vpop.permute.xlu0 %4338
      %4340 = vrot.lane.b32.xlu0 %v4188, 96
      %v4341 = vpop.permute.xlu0 %4340
      %4342 = vrot.lane.b32.xlu0 %v4189, 96
      %v4343 = vpop.permute.xlu0 %4342
      %4344 = vrot.lane.b32.xlu0 %v4190, 96
      %v4345 = vpop.permute.xlu0 %4344
      %4346 = vrot.lane.b32.xlu0 %v4191, 96
      %v4347 = vpop.permute.xlu0 %4346
      %4348 = vrot.lane.b32.xlu0 %v4192, 96
      %v4349 = vpop.permute.xlu0 %4348
      %4350 = vrot.lane.b32.xlu0 %v4193, 96
      %v4351 = vpop.permute.xlu0 %4350
      %4352 = vrot.lane.b32.xlu0 %v4194, 96
      %v4353 = vpop.permute.xlu0 %4352
      %4354 = vrot.lane.b32.xlu0 %v4195, 96
      %v4355 = vpop.permute.xlu0 %4354
      %4356 = vrot.lane.b32.xlu0 %v4196, 96
      %v4357 = vpop.permute.xlu0 %4356
      %4358 = vrot.lane.b32.xlu0 %v4197, 96
      %v4359 = vpop.permute.xlu0 %4358
      %4360 = vrot.lane.b32.xlu0 %v4198, 96
      %v4361 = vpop.permute.xlu0 %4360
      %4362 = vrot.lane.b32.xlu0 %v4199, 96
      %v4363 = vpop.permute.xlu0 %4362
      %4364 = vrot.lane.b32.xlu0 %v4200, 96
      %v4365 = vpop.permute.xlu0 %4364
      %4366 = vrot.lane.b32.xlu0 %v4201, 96
      %v4367 = vpop.permute.xlu0 %4366
      %4368 = vrot.lane.b32.xlu0 %v4202, 96
      %v4369 = vpop.permute.xlu0 %4368
      %4370 = vrot.lane.b32.xlu0 %v4203, 96
      %v4371 = vpop.permute.xlu0 %4370
      %4372 = vrot.lane.b32.xlu0 %v4204, 96
      %v4373 = vpop.permute.xlu0 %4372
      %4374 = vrot.lane.b32.xlu0 %v4205, 96
      %v4375 = vpop.permute.xlu0 %4374
      %4376 = vrot.lane.b32.xlu0 %v4206, 96
      %v4377 = vpop.permute.xlu0 %4376
      %4378 = vrot.lane.b32.xlu0 %v4207, 96
      %v4379 = vpop.permute.xlu0 %4378
      %4380 = vrot.lane.b32.xlu0 %v4208, 96
      %v4381 = vpop.permute.xlu0 %4380
      %4382 = vrot.lane.b32.xlu0 %v4209, 96
      %v4383 = vpop.permute.xlu0 %4382
      %4384 = vrot.lane.b32.xlu0 %v4210, 96
      %v4385 = vpop.permute.xlu0 %4384
      %4386 = vrot.lane.b32.xlu0 %v4211, 96
      %v4387 = vpop.permute.xlu0 %4386
      %4388 = vrot.lane.b32.xlu0 %v4212, 96
      %v4389 = vpop.permute.xlu0 %4388
      %4390 = vrot.lane.b32.xlu0 %v4213, 96
      %v4391 = vpop.permute.xlu0 %4390
      %4392 = vrot.lane.b32.xlu0 %v4214, 96
      %v4393 = vpop.permute.xlu0 %4392
      %4394 = vrot.lane.b32.xlu0 %v4215, 96
      %v4395 = vpop.permute.xlu0 %4394
      %4396 = vrot.lane.b32.xlu0 %v4216, 96
      %v4397 = vpop.permute.xlu0 %4396
      %4398 = vrot.lane.b32.xlu0 %v4217, 96
      %v4399 = vpop.permute.xlu0 %4398
      %4400 = vrot.lane.b32.xlu0 %v4218, 96
      %v4401 = vpop.permute.xlu0 %4400
      %4402 = vrot.lane.b32.xlu0 %v4219, 96
      %v4403 = vpop.permute.xlu0 %4402
      %4404 = vrot.lane.b32.xlu0 %v4220, 96
      %v4405 = vpop.permute.xlu0 %4404
      %4406 = vrot.lane.b32.xlu0 %v4221, 96
      %v4407 = vpop.permute.xlu0 %4406
      %4408 = vrot.lane.b32.xlu0 %v4222, 96
      %v4409 = vpop.permute.xlu0 %4408
      %4410 = vrot.lane.b32.xlu0 %v4223, 96
      %v4411 = vpop.permute.xlu0 %4410
      %4412 = vrot.lane.b32.xlu0 %v4224, 96
      %v4413 = vpop.permute.xlu0 %4412
      %4414 = vrot.lane.b32.xlu0 %v4225, 96
      %v4415 = vpop.permute.xlu0 %4414
      %4416 = vrot.lane.b32.xlu0 %v4226, 96
      %v4417 = vpop.permute.xlu0 %4416
      %4418 = vrot.lane.b32.xlu0 %v4227, 96
      %v4419 = vpop.permute.xlu0 %4418
      %v4484 = vmax.f32 %v4164, %v4293
      %v4485 = vmax.f32 %v4165, %v4295
      %v4486 = vmax.f32 %v4166, %v4297
      %v4487 = vmax.f32 %v4167, %v4299
      %v4488 = vmax.f32 %v4168, %v4301
      %v4489 = vmax.f32 %v4169, %v4303
      %v4490 = vmax.f32 %v4170, %v4305
      %v4491 = vmax.f32 %v4171, %v4307
      %v4492 = vmax.f32 %v4172, %v4309
      %v4493 = vmax.f32 %v4173, %v4311
      %v4494 = vmax.f32 %v4174, %v4313
      %v4495 = vmax.f32 %v4175, %v4315
      %v4496 = vmax.f32 %v4176, %v4317
      %v4497 = vmax.f32 %v4177, %v4319
      %v4498 = vmax.f32 %v4178, %v4321
      %v4499 = vmax.f32 %v4179, %v4323
      %v4500 = vmax.f32 %v4180, %v4325
      %v4501 = vmax.f32 %v4181, %v4327
      %v4502 = vmax.f32 %v4182, %v4329
      %v4503 = vmax.f32 %v4183, %v4331
      %v4504 = vmax.f32 %v4184, %v4333
      %v4505 = vmax.f32 %v4185, %v4335
      %v4506 = vmax.f32 %v4186, %v4337
      %v4507 = vmax.f32 %v4187, %v4339
      %v4508 = vmax.f32 %v4188, %v4341
      %v4509 = vmax.f32 %v4189, %v4343
      %v4510 = vmax.f32 %v4190, %v4345
      %v4511 = vmax.f32 %v4191, %v4347
      %v4512 = vmax.f32 %v4192, %v4349
      %v4513 = vmax.f32 %v4193, %v4351
      %v4514 = vmax.f32 %v4194, %v4353
      %v4515 = vmax.f32 %v4195, %v4355
      %v4516 = vmax.f32 %v4196, %v4357
      %v4517 = vmax.f32 %v4197, %v4359
      %v4518 = vmax.f32 %v4198, %v4361
      %v4519 = vmax.f32 %v4199, %v4363
      %v4520 = vmax.f32 %v4200, %v4365
      %v4521 = vmax.f32 %v4201, %v4367
      %v4522 = vmax.f32 %v4202, %v4369
      %v4523 = vmax.f32 %v4203, %v4371
      %v4524 = vmax.f32 %v4204, %v4373
      %v4525 = vmax.f32 %v4205, %v4375
      %v4526 = vmax.f32 %v4206, %v4377
      %v4527 = vmax.f32 %v4207, %v4379
      %v4528 = vmax.f32 %v4208, %v4381
      %v4529 = vmax.f32 %v4209, %v4383
      %v4530 = vmax.f32 %v4210, %v4385
      %v4531 = vmax.f32 %v4211, %v4387
      %v4532 = vmax.f32 %v4212, %v4389
      %v4533 = vmax.f32 %v4213, %v4391
      %v4534 = vmax.f32 %v4214, %v4393
      %v4535 = vmax.f32 %v4215, %v4395
      %v4536 = vmax.f32 %v4216, %v4397
      %v4537 = vmax.f32 %v4217, %v4399
      %v4538 = vmax.f32 %v4218, %v4401
      %v4539 = vmax.f32 %v4219, %v4403
      %v4540 = vmax.f32 %v4220, %v4405
      %v4541 = vmax.f32 %v4221, %v4407
      %v4542 = vmax.f32 %v4222, %v4409
      %v4543 = vmax.f32 %v4223, %v4411
      %v4544 = vmax.f32 %v4224, %v4413
      %v4545 = vmax.f32 %v4225, %v4415
      %v4546 = vmax.f32 %v4226, %v4417
      %v4547 = vmax.f32 %v4227, %v4419
      %v4548 = vmax.f32 %v4484, %v4486
      %v4549 = vmax.f32 %v4485, %v4487
      %v4550 = vmax.f32 %v4488, %v4490
      %v4551 = vmax.f32 %v4489, %v4491
      %v4552 = vmax.f32 %v4492, %v4494
      %v4553 = vmax.f32 %v4493, %v4495
      %v4554 = vmax.f32 %v4496, %v4498
      %v4555 = vmax.f32 %v4497, %v4499
      %v4556 = vmax.f32 %v4500, %v4502
      %v4557 = vmax.f32 %v4501, %v4503
      %v4558 = vmax.f32 %v4504, %v4506
      %v4559 = vmax.f32 %v4505, %v4507
      %v4560 = vmax.f32 %v4508, %v4510
      %v4561 = vmax.f32 %v4509, %v4511
      %v4562 = vmax.f32 %v4512, %v4514
      %v4563 = vmax.f32 %v4513, %v4515
      %v4564 = vmax.f32 %v4516, %v4518
      %v4565 = vmax.f32 %v4517, %v4519
      %v4566 = vmax.f32 %v4520, %v4522
      %v4567 = vmax.f32 %v4521, %v4523
      %v4568 = vmax.f32 %v4524, %v4526
      %v4569 = vmax.f32 %v4525, %v4527
      %v4570 = vmax.f32 %v4528, %v4530
      %v4571 = vmax.f32 %v4529, %v4531
      %v4572 = vmax.f32 %v4532, %v4534
      %v4573 = vmax.f32 %v4533, %v4535
      %v4574 = vmax.f32 %v4536, %v4538
      %v4575 = vmax.f32 %v4537, %v4539
      %v4576 = vmax.f32 %v4540, %v4542
      %v4577 = vmax.f32 %v4541, %v4543
      %v4578 = vmax.f32 %v4544, %v4546
      %v4579 = vmax.f32 %v4545, %v4547
      %4580 = vst.msk [vmem:[%s224] sm:$0xff] %vm947, %v4548
      %4581 = vst.msk [vmem:[%s224 + $0x8] sm:$0xff] %vm947, %v4549
      %4582 = vst.msk [vmem:[%s224 + $0x10] sm:$0xff] %vm947, %v4550
      %4583 = vst.msk [vmem:[%s224 + $0x18] sm:$0xff] %vm947, %v4551
      %4584 = vst.msk [vmem:[%s224 + $0x20] sm:$0xff] %vm947, %v4552
      %4585 = vst.msk [vmem:[%s224 + $0x28] sm:$0xff] %vm947, %v4553
      %4586 = vst.msk [vmem:[%s224 + $0x30] sm:$0xff] %vm947, %v4554
      %4587 = vst.msk [vmem:[%s224 + $0x38] sm:$0xff] %vm947, %v4555
      %4588 = vst.msk [vmem:[%s224 + $0x40] sm:$0xff] %vm947, %v4556
      %4589 = vst.msk [vmem:[%s224 + $0x48] sm:$0xff] %vm947, %v4557
      %4590 = vst.msk [vmem:[%s224 + $0x50] sm:$0xff] %vm947, %v4558
      %4591 = vst.msk [vmem:[%s224 + $0x58] sm:$0xff] %vm947, %v4559
      %4592 = vst.msk [vmem:[%s224 + $0x60] sm:$0xff] %vm947, %v4560
      %4593 = vst.msk [vmem:[%s224 + $0x68] sm:$0xff] %vm947, %v4561
      %4594 = vst.msk [vmem:[%s224 + $0x70] sm:$0xff] %vm947, %v4562
      %4595 = vst.msk [vmem:[%s224 + $0x78] sm:$0xff] %vm947, %v4563
      %4596 = vst.msk [vmem:[%s224 + $0x80] sm:$0xff] %vm947, %v4564
      %4597 = vst.msk [vmem:[%s224 + $0x88] sm:$0xff] %vm947, %v4565
      %4598 = vst.msk [vmem:[%s224 + $0x90] sm:$0xff] %vm947, %v4566
      %4599 = vst.msk [vmem:[%s224 + $0x98] sm:$0xff] %vm947, %v4567
      %4600 = vst.msk [vmem:[%s224 + $0xa0] sm:$0xff] %vm947, %v4568
      %4601 = vst.msk [vmem:[%s224 + $0xa8] sm:$0xff] %vm947, %v4569
      %4602 = vst.msk [vmem:[%s224 + $0xb0] sm:$0xff] %vm947, %v4570
      %4603 = vst.msk [vmem:[%s224 + $0xb8] sm:$0xff] %vm947, %v4571
      %4604 = vst.msk [vmem:[%s224 + $0xc0] sm:$0xff] %vm947, %v4572
      %4605 = vst.msk [vmem:[%s224 + $0xc8] sm:$0xff] %vm947, %v4573
      %4606 = vst.msk [vmem:[%s224 + $0xd0] sm:$0xff] %vm947, %v4574
      %4607 = vst.msk [vmem:[%s224 + $0xd8] sm:$0xff] %vm947, %v4575
      %4608 = vst.msk [vmem:[%s224 + $0xe0] sm:$0xff] %vm947, %v4576
      %4609 = vst.msk [vmem:[%s224 + $0xe8] sm:$0xff] %vm947, %v4577
      %4610 = vst.msk [vmem:[%s224 + $0xf0] sm:$0xff] %vm947, %v4578
      %4611 = vst.msk [vmem:[%s224 + $0xf8] sm:$0xff] %vm947, %v4579
      %p4612 = scmp.lt.s32.totalorder %s16, 1
      %s4613 = scalar_select %p4612, %s16, 1
      %s4614 = smul.addr %s4613, 32
      %s4615 = smul.addr %s4614, 8
      %s4616 = scalar_lea.vmem %s5, %s4615
      // Predicated region
      $region41: #{smallnet_forward.2} parent=39 // pred_check
        %p4617 = pneg %p144
      $region42: #{smallnet_forward.2} parent=39 // pred_check_branch
        %4619 = sbr.rel (%p4617) target = $region44
      $region43: #{smallnet_forward.2} parent=39 // pred_region
        _
      $region44: #{smallnet_forward.2} parent=39 // pred_fallthru
        _
    $region40: #{smallnet_forward.2} parent=5 // pred_fallthru
      _
    %p4620 = scmp.le.s32.totalorder 2, %s11
    // Predicated region
    $region45: #{smallnet_forward.2} parent=5 // pred_check
      %p4621 = pneg %p4620
    $region46: #{smallnet_forward.2} parent=5 // pred_check_branch
      %4623 = sbr.rel (%p4621) target = $region48
    $region47: #{smallnet_forward.2} parent=5 // pred_region
      %s4624 = ssub.s32 %s11, 2
      // Predicated region
      $region49: #{smallnet_forward.2} parent=47 // pred_check
        %p4625 = pneg %p150
      $region50: #{smallnet_forward.2} parent=47 // pred_check_branch
        %4627 = sbr.rel (%p4625) target = $region52
      $region51: #{smallnet_forward.2} parent=47 // pred_region
        %p4628 = scmp.lt.s32.totalorder %s17, 1
        %s4629 = scalar_select %p4628, %s17, 1
        %s4630 = smul.addr %s4629, 32
        %s4631 = smul.addr %s4630, 8
        %s4632 = scalar_lea.vmem %s5, %s4631
      $region52: #{smallnet_forward.2} parent=47 // pred_fallthru
        _
    $region48: #{smallnet_forward.2} parent=5 // pred_fallthru
      _
  $region6: #{smallnet_forward.2} parent=0 // loop_footer
    %s15 = sadd.s32 1, %s11
  $region7: #{smallnet_forward.2} parent=0 // loop_footer_branch
    %10 = sbr.rel target = $region3
  $region8: #{smallnet_forward.2} parent=0 // loop_exit
    _

// kernel: smallnet_forward.3
$region0: #{smallnet_forward.3}
  #allocation0 [shape = 'u32[]', space=smem, size = 0x4, offset = 0x4, fixed_abs, tag = 'smem constant byte address 0x4 - core index']
  #allocation1 [shape = 'u32[144,128]{1,0:T(1,128)}', space=vmem, size = 0x12000, scoped, tag = 'internal scratch']
  %s0 = inlined_call_operand.vmem [shape: f32[2,8192], index: 0, kind: input, shape index: {}]
  %s1 = inlined_call_operand.vmem [shape: f32[8192,64], index: 1, kind: input, shape index: {}]
  %s2 = inlined_call_operand.vmem [shape: f32[1,64], index: 2, kind: input, shape index: {}]
  %s3 = inlined_call_operand.vmem [shape: f32[64,10], index: 3, kind: input, shape index: {}]
  %s4 = inlined_call_operand.vmem [shape: f32[1,10], index: 4, kind: input, shape index: {}]
  %s5 = inlined_call_operand.hbm [shape: f32[2,10], index: 5, kind: output, shape index: {}]
  %s6 = sld [smem:[#allocation0]]
  $region30: #{smallnet_forward.3} parent=0
    _
  %s8 = ssub.s32 1, %s6
  %s9 = scalar_select 0, %s8, %s6
  $region1: #{smallnet_forward.3} parent=0
    #allocation2 [shape = 'u8[1024]{0}', space=vmem, size = 0x400, scoped, tag = 'output window, operand 0, single buffered']
    #allocation3 [shape = 's32[1]{0}', space=sflag, size = 0x4, scoped, tag = 'scoped memory for smallnet_forward.3']
    %10 = vsyncpa [#allocation3], 0
    // Predicated region
    $region2: #{smallnet_forward.3} parent=1 // pred_check
      _
    $region3: #{smallnet_forward.3} parent=1 // pred_check_branch
      %12 = sbr.rel (0) target = $region5
    $region4: #{smallnet_forward.3} parent=1 // pred_region
      _
    $region5: #{smallnet_forward.3} parent=1 // pred_fallthru
      _
    // Predicated region
    $region6: #{smallnet_forward.3} parent=1 // pred_check
      _
    $region7: #{smallnet_forward.3} parent=1 // pred_check_branch
      %14 = sbr.rel (0) target = $region9
    $region8: #{smallnet_forward.3} parent=1 // pred_region
      _
    $region9: #{smallnet_forward.3} parent=1 // pred_fallthru
      _
    // Predicated region
    $region10: #{smallnet_forward.3} parent=1 // pred_check
      _
    $region11: #{smallnet_forward.3} parent=1 // pred_check_branch
      %16 = sbr.rel (0) target = $region13
    $region12: #{smallnet_forward.3} parent=1 // pred_region
      _
    $region13: #{smallnet_forward.3} parent=1 // pred_fallthru
      _
    // Predicated region
    $region14: #{smallnet_forward.3} parent=1 // pred_check
      _
    $region15: #{smallnet_forward.3} parent=1 // pred_check_branch
      %18 = sbr.rel (0) target = $region17
    $region16: #{smallnet_forward.3} parent=1 // pred_region
      _
    $region17: #{smallnet_forward.3} parent=1 // pred_fallthru
      _
    // Predicated region
    $region18: #{smallnet_forward.3} parent=1 // pred_check
      _
    $region19: #{smallnet_forward.3} parent=1 // pred_check_branch
      %20 = sbr.rel (0) target = $region21
    $region20: #{smallnet_forward.3} parent=1 // pred_region
      _
    $region21: #{smallnet_forward.3} parent=1 // pred_fallthru
      _
    %v21 = vld [vmem:[%s0] sm:$0xff]
    %v22 = vld [vmem:[%s0 + $0x8] sm:$0xff]
    %v23 = vld [vmem:[%s0 + $0x10] sm:$0xff]
    %v24 = vld [vmem:[%s0 + $0x18] sm:$0xff]
    %v25 = vld [vmem:[%s0 + $0x20] sm:$0xff]
    %v26 = vld [vmem:[%s0 + $0x28] sm:$0xff]
    %v27 = vld [vmem:[%s0 + $0x30] sm:$0xff]
    %v28 = vld [vmem:[%s0 + $0x38] sm:$0xff]
    %v29 = vld [vmem:[%s0 + $0x40] sm:$0xff]
    %v30 = vld [vmem:[%s0 + $0x48] sm:$0xff]
    %v31 = vld [vmem:[%s0 + $0x50] sm:$0xff]
    %v32 = vld [vmem:[%s0 + $0x58] sm:$0xff]
    %v33 = vld [vmem:[%s0 + $0x60] sm:$0xff]
    %v34 = vld [vmem:[%s0 + $0x68] sm:$0xff]
    %v35 = vld [vmem:[%s0 + $0x70] sm:$0xff]
    %v36 = vld [vmem:[%s0 + $0x78] sm:$0xff]
    %v37 = vld [vmem:[%s1] sm:$0xff]
    %v38 = vld [vmem:[%s1 + $0x8] sm:$0xff]
    %v39 = vld [vmem:[%s1 + $0x10] sm:$0xff]
    %v40 = vld [vmem:[%s1 + $0x18] sm:$0xff]
    %v41 = vld [vmem:[%s1 + $0x20] sm:$0xff]
    %v42 = vld [vmem:[%s1 + $0x28] sm:$0xff]
    %v43 = vld [vmem:[%s1 + $0x30] sm:$0xff]
    %v44 = vld [vmem:[%s1 + $0x38] sm:$0xff]
    %v45 = vld [vmem:[%s1 + $0x40] sm:$0xff]
    %v46 = vld [vmem:[%s1 + $0x48] sm:$0xff]
    %v47 = vld [vmem:[%s1 + $0x50] sm:$0xff]
    %v48 = vld [vmem:[%s1 + $0x58] sm:$0xff]
    %v49 = vld [vmem:[%s1 + $0x60] sm:$0xff]
    %v50 = vld [vmem:[%s1 + $0x68] sm:$0xff]
    %v51 = vld [vmem:[%s1 + $0x70] sm:$0xff]
    %v52 = vld [vmem:[%s1 + $0x78] sm:$0xff]
    %v53 = vld [vmem:[%s1 + $0x80] sm:$0xff]
    %v54 = vld [vmem:[%s1 + $0x88] sm:$0xff]
    %v55 = vld [vmem:[%s1 + $0x90] sm:$0xff]
    %v56 = vld [vmem:[%s1 + $0x98] sm:$0xff]
    %v57 = vld [vmem:[%s1 + $0xa0] sm:$0xff]
    %v58 = vld [vmem:[%s1 + $0xa8] sm:$0xff]
    %v59 = vld [vmem:[%s1 + $0xb0] sm:$0xff]
    %v60 = vld [vmem:[%s1 + $0xb8] sm:$0xff]
    %v61 = vld [vmem:[%s1 + $0xc0] sm:$0xff]
    %v62 = vld [vmem:[%s1 + $0xc8] sm:$0xff]
    %v63 = vld [vmem:[%s1 + $0xd0] sm:$0xff]
    %v64 = vld [vmem:[%s1 + $0xd8] sm:$0xff]
    %v65 = vld [vmem:[%s1 + $0xe0] sm:$0xff]
    %v66 = vld [vmem:[%s1 + $0xe8] sm:$0xff]
    %v67 = vld [vmem:[%s1 + $0xf0] sm:$0xff]
    %v68 = vld [vmem:[%s1 + $0xf8] sm:$0xff]
    %v69 = vld [vmem:[%s1 + $0x100] sm:$0xff]
    %v70 = vld [vmem:[%s1 + $0x108] sm:$0xff]
    %v71 = vld [vmem:[%s1 + $0x110] sm:$0xff]
    %v72 = vld [vmem:[%s1 + $0x118] sm:$0xff]
    %v73 = vld [vmem:[%s1 + $0x120] sm:$0xff]
    %v74 = vld [vmem:[%s1 + $0x128] sm:$0xff]
    %v75 = vld [vmem:[%s1 + $0x130] sm:$0xff]
    %v76 = vld [vmem:[%s1 + $0x138] sm:$0xff]
    %v77 = vld [vmem:[%s1 + $0x140] sm:$0xff]
    %v78 = vld [vmem:[%s1 + $0x148] sm:$0xff]
    %v79 = vld [vmem:[%s1 + $0x150] sm:$0xff]
    %v80 = vld [vmem:[%s1 + $0x158] sm:$0xff]
    %v81 = vld [vmem:[%s1 + $0x160] sm:$0xff]
    %v82 = vld [vmem:[%s1 + $0x168] sm:$0xff]
    %v83 = vld [vmem:[%s1 + $0x170] sm:$0xff]
    %v84 = vld [vmem:[%s1 + $0x178] sm:$0xff]
    %v85 = vld [vmem:[%s1 + $0x180] sm:$0xff]
    %v86 = vld [vmem:[%s1 + $0x188] sm:$0xff]
    %v87 = vld [vmem:[%s1 + $0x190] sm:$0xff]
    %v88 = vld [vmem:[%s1 + $0x198] sm:$0xff]
    %v89 = vld [vmem:[%s1 + $0x1a0] sm:$0xff]
    %v90 = vld [vmem:[%s1 + $0x1a8] sm:$0xff]
    %v91 = vld [vmem:[%s1 + $0x1b0] sm:$0xff]
    %v92 = vld [vmem:[%s1 + $0x1b8] sm:$0xff]
    %v93 = vld [vmem:[%s1 + $0x1c0] sm:$0xff]
    %v94 = vld [vmem:[%s1 + $0x1c8] sm:$0xff]
    %v95 = vld [vmem:[%s1 + $0x1d0] sm:$0xff]
    %v96 = vld [vmem:[%s1 + $0x1d8] sm:$0xff]
    %v97 = vld [vmem:[%s1 + $0x1e0] sm:$0xff]
    %v98 = vld [vmem:[%s1 + $0x1e8] sm:$0xff]
    %v99 = vld [vmem:[%s1 + $0x1f0] sm:$0xff]
    %v100 = vld [vmem:[%s1 + $0x1f8] sm:$0xff]
    %v101 = vld [vmem:[%s1 + $0x200] sm:$0xff]
    %v102 = vld [vmem:[%s1 + $0x208] sm:$0xff]
    %v103 = vld [vmem:[%s1 + $0x210] sm:$0xff]
    %v104 = vld [vmem:[%s1 + $0x218] sm:$0xff]
    %v105 = vld [vmem:[%s1 + $0x220] sm:$0xff]
    %v106 = vld [vmem:[%s1 + $0x228] sm:$0xff]
    %v107 = vld [vmem:[%s1 + $0x230] sm:$0xff]
    %v108 = vld [vmem:[%s1 + $0x238] sm:$0xff]
    %v109 = vld [vmem:[%s1 + $0x240] sm:$0xff]
    %v110 = vld [vmem:[%s1 + $0x248] sm:$0xff]
    %v111 = vld [vmem:[%s1 + $0x250] sm:$0xff]
    %v112 = vld [vmem:[%s1 + $0x258] sm:$0xff]
    %v113 = vld [vmem:[%s1 + $0x260] sm:$0xff]
    %v114 = vld [vmem:[%s1 + $0x268] sm:$0xff]
    %v115 = vld [vmem:[%s1 + $0x270] sm:$0xff]
    %v116 = vld [vmem:[%s1 + $0x278] sm:$0xff]
    %v117 = vld [vmem:[%s1 + $0x280] sm:$0xff]
    %v118 = vld [vmem:[%s1 + $0x288] sm:$0xff]
    %v119 = vld [vmem:[%s1 + $0x290] sm:$0xff]
    %v120 = vld [vmem:[%s1 + $0x298] sm:$0xff]
    %v121 = vld [vmem:[%s1 + $0x2a0] sm:$0xff]
    %v122 = vld [vmem:[%s1 + $0x2a8] sm:$0xff]
    %v123 = vld [vmem:[%s1 + $0x2b0] sm:$0xff]
    %v124 = vld [vmem:[%s1 + $0x2b8] sm:$0xff]
    %v125 = vld [vmem:[%s1 + $0x2c0] sm:$0xff]
    %v126 = vld [vmem:[%s1 + $0x2c8] sm:$0xff]
    %v127 = vld [vmem:[%s1 + $0x2d0] sm:$0xff]
    %v128 = vld [vmem:[%s1 + $0x2d8] sm:$0xff]
    %v129 = vld [vmem:[%s1 + $0x2e0] sm:$0xff]
    %v130 = vld [vmem:[%s1 + $0x2e8] sm:$0xff]
    %v131 = vld [vmem:[%s1 + $0x2f0] sm:$0xff]
    %v132 = vld [vmem:[%s1 + $0x2f8] sm:$0xff]
    %v133 = vld [vmem:[%s1 + $0x300] sm:$0xff]
    %v134 = vld [vmem:[%s1 + $0x308] sm:$0xff]
    %v135 = vld [vmem:[%s1 + $0x310] sm:$0xff]
    %v136 = vld [vmem:[%s1 + $0x318] sm:$0xff]
    %v137 = vld [vmem:[%s1 + $0x320] sm:$0xff]
    %v138 = vld [vmem:[%s1 + $0x328] sm:$0xff]
    %v139 = vld [vmem:[%s1 + $0x330] sm:$0xff]
    %v140 = vld [vmem:[%s1 + $0x338] sm:$0xff]
    %v141 = vld [vmem:[%s1 + $0x340] sm:$0xff]
    %v142 = vld [vmem:[%s1 + $0x348] sm:$0xff]
    %v143 = vld [vmem:[%s1 + $0x350] sm:$0xff]
    %v144 = vld [vmem:[%s1 + $0x358] sm:$0xff]
    %v145 = vld [vmem:[%s1 + $0x360] sm:$0xff]
    %v146 = vld [vmem:[%s1 + $0x368] sm:$0xff]
    %v147 = vld [vmem:[%s1 + $0x370] sm:$0xff]
    %v148 = vld [vmem:[%s1 + $0x378] sm:$0xff]
    %v149 = vld [vmem:[%s1 + $0x380] sm:$0xff]
    %v150 = vld [vmem:[%s1 + $0x388] sm:$0xff]
    %v151 = vld [vmem:[%s1 + $0x390] sm:$0xff]
    %v152 = vld [vmem:[%s1 + $0x398] sm:$0xff]
    %v153 = vld [vmem:[%s1 + $0x3a0] sm:$0xff]
    %v154 = vld [vmem:[%s1 + $0x3a8] sm:$0xff]
    %v155 = vld [vmem:[%s1 + $0x3b0] sm:$0xff]
    %v156 = vld [vmem:[%s1 + $0x3b8] sm:$0xff]
    %v157 = vld [vmem:[%s1 + $0x3c0] sm:$0xff]
    %v158 = vld [vmem:[%s1 + $0x3c8] sm:$0xff]
    %v159 = vld [vmem:[%s1 + $0x3d0] sm:$0xff]
    %v160 = vld [vmem:[%s1 + $0x3d8] sm:$0xff]
    %v161 = vld [vmem:[%s1 + $0x3e0] sm:$0xff]
    %v162 = vld [vmem:[%s1 + $0x3e8] sm:$0xff]
    %v163 = vld [vmem:[%s1 + $0x3f0] sm:$0xff]
    %v164 = vld [vmem:[%s1 + $0x3f8] sm:$0xff]
    %v165 = vld [vmem:[%s1 + $0x400] sm:$0xff]
    %v166 = vld [vmem:[%s1 + $0x408] sm:$0xff]
    %v167 = vld [vmem:[%s1 + $0x410] sm:$0xff]
    %v168 = vld [vmem:[%s1 + $0x418] sm:$0xff]
    %v169 = vld [vmem:[%s1 + $0x420] sm:$0xff]
    %v170 = vld [vmem:[%s1 + $0x428] sm:$0xff]
    %v171 = vld [vmem:[%s1 + $0x430] sm:$0xff]
    %v172 = vld [vmem:[%s1 + $0x438] sm:$0xff]
    %v173 = vld [vmem:[%s1 + $0x440] sm:$0xff]
    %v174 = vld [vmem:[%s1 + $0x448] sm:$0xff]
    %v175 = vld [vmem:[%s1 + $0x450] sm:$0xff]
    %v176 = vld [vmem:[%s1 + $0x458] sm:$0xff]
    %v177 = vld [vmem:[%s1 + $0x460] sm:$0xff]
    %v178 = vld [vmem:[%s1 + $0x468] sm:$0xff]
    %v179 = vld [vmem:[%s1 + $0x470] sm:$0xff]
    %v180 = vld [vmem:[%s1 + $0x478] sm:$0xff]
    %v181 = vld [vmem:[%s1 + $0x480] sm:$0xff]
    %v182 = vld [vmem:[%s1 + $0x488] sm:$0xff]
    %v183 = vld [vmem:[%s1 + $0x490] sm:$0xff]
    %v184 = vld [vmem:[%s1 + $0x498] sm:$0xff]
    %v185 = vld [vmem:[%s1 + $0x4a0] sm:$0xff]
    %v186 = vld [vmem:[%s1 + $0x4a8] sm:$0xff]
    %v187 = vld [vmem:[%s1 + $0x4b0] sm:$0xff]
    %v188 = vld [vmem:[%s1 + $0x4b8] sm:$0xff]
    %v189 = vld [vmem:[%s1 + $0x4c0] sm:$0xff]
    %v190 = vld [vmem:[%s1 + $0x4c8] sm:$0xff]
    %v191 = vld [vmem:[%s1 + $0x4d0] sm:$0xff]
    %v192 = vld [vmem:[%s1 + $0x4d8] sm:$0xff]
    %v193 = vld [vmem:[%s1 + $0x4e0] sm:$0xff]
    %v194 = vld [vmem:[%s1 + $0x4e8] sm:$0xff]
    %v195 = vld [vmem:[%s1 + $0x4f0] sm:$0xff]
    %v196 = vld [vmem:[%s1 + $0x4f8] sm:$0xff]
    %v197 = vld [vmem:[%s1 + $0x500] sm:$0xff]
    %v198 = vld [vmem:[%s1 + $0x508] sm:$0xff]
    %v199 = vld [vmem:[%s1 + $0x510] sm:$0xff]
    %v200 = vld [vmem:[%s1 + $0x518] sm:$0xff]
    %v201 = vld [vmem:[%s1 + $0x520] sm:$0xff]
    %v202 = vld [vmem:[%s1 + $0x528] sm:$0xff]
    %v203 = vld [vmem:[%s1 + $0x530] sm:$0xff]
    %v204 = vld [vmem:[%s1 + $0x538] sm:$0xff]
    %v205 = vld [vmem:[%s1 + $0x540] sm:$0xff]
    %v206 = vld [vmem:[%s1 + $0x548] sm:$0xff]
    %v207 = vld [vmem:[%s1 + $0x550] sm:$0xff]
    %v208 = vld [vmem:[%s1 + $0x558] sm:$0xff]
    %v209 = vld [vmem:[%s1 + $0x560] sm:$0xff]
    %v210 = vld [vmem:[%s1 + $0x568] sm:$0xff]
    %v211 = vld [vmem:[%s1 + $0x570] sm:$0xff]
    %v212 = vld [vmem:[%s1 + $0x578] sm:$0xff]
    %v213 = vld [vmem:[%s1 + $0x580] sm:$0xff]
    %v214 = vld [vmem:[%s1 + $0x588] sm:$0xff]
    %v215 = vld [vmem:[%s1 + $0x590] sm:$0xff]
    %v216 = vld [vmem:[%s1 + $0x598] sm:$0xff]
    %v217 = vld [vmem:[%s1 + $0x5a0] sm:$0xff]
    %v218 = vld [vmem:[%s1 + $0x5a8] sm:$0xff]
    %v219 = vld [vmem:[%s1 + $0x5b0] sm:$0xff]
    %v220 = vld [vmem:[%s1 + $0x5b8] sm:$0xff]
    %v221 = vld [vmem:[%s1 + $0x5c0] sm:$0xff]
    %v222 = vld [vmem:[%s1 + $0x5c8] sm:$0xff]
    %v223 = vld [vmem:[%s1 + $0x5d0] sm:$0xff]
    %v224 = vld [vmem:[%s1 + $0x5d8] sm:$0xff]
    %v225 = vld [vmem:[%s1 + $0x5e0] sm:$0xff]
    %v226 = vld [vmem:[%s1 + $0x5e8] sm:$0xff]
    %v227 = vld [vmem:[%s1 + $0x5f0] sm:$0xff]
    %v228 = vld [vmem:[%s1 + $0x5f8] sm:$0xff]
    %v229 = vld [vmem:[%s1 + $0x600] sm:$0xff]
    %v230 = vld [vmem:[%s1 + $0x608] sm:$0xff]
    %v231 = vld [vmem:[%s1 + $0x610] sm:$0xff]
    %v232 = vld [vmem:[%s1 + $0x618] sm:$0xff]
    %v233 = vld [vmem:[%s1 + $0x620] sm:$0xff]
    %v234 = vld [vmem:[%s1 + $0x628] sm:$0xff]
    %v235 = vld [vmem:[%s1 + $0x630] sm:$0xff]
    %v236 = vld [vmem:[%s1 + $0x638] sm:$0xff]
    %v237 = vld [vmem:[%s1 + $0x640] sm:$0xff]
    %v238 = vld [vmem:[%s1 + $0x648] sm:$0xff]
    %v239 = vld [vmem:[%s1 + $0x650] sm:$0xff]
    %v240 = vld [vmem:[%s1 + $0x658] sm:$0xff]
    %v241 = vld [vmem:[%s1 + $0x660] sm:$0xff]
    %v242 = vld [vmem:[%s1 + $0x668] sm:$0xff]
    %v243 = vld [vmem:[%s1 + $0x670] sm:$0xff]
    %v244 = vld [vmem:[%s1 + $0x678] sm:$0xff]
    %v245 = vld [vmem:[%s1 + $0x680] sm:$0xff]
    %v246 = vld [vmem:[%s1 + $0x688] sm:$0xff]
    %v247 = vld [vmem:[%s1 + $0x690] sm:$0xff]
    %v248 = vld [vmem:[%s1 + $0x698] sm:$0xff]
    %v249 = vld [vmem:[%s1 + $0x6a0] sm:$0xff]
    %v250 = vld [vmem:[%s1 + $0x6a8] sm:$0xff]
    %v251 = vld [vmem:[%s1 + $0x6b0] sm:$0xff]
    %v252 = vld [vmem:[%s1 + $0x6b8] sm:$0xff]
    %v253 = vld [vmem:[%s1 + $0x6c0] sm:$0xff]
    %v254 = vld [vmem:[%s1 + $0x6c8] sm:$0xff]
    %v255 = vld [vmem:[%s1 + $0x6d0] sm:$0xff]
    %v256 = vld [vmem:[%s1 + $0x6d8] sm:$0xff]
    %v257 = vld [vmem:[%s1 + $0x6e0] sm:$0xff]
    %v258 = vld [vmem:[%s1 + $0x6e8] sm:$0xff]
    %v259 = vld [vmem:[%s1 + $0x6f0] sm:$0xff]
    %v260 = vld [vmem:[%s1 + $0x6f8] sm:$0xff]
    %v261 = vld [vmem:[%s1 + $0x700] sm:$0xff]
    %v262 = vld [vmem:[%s1 + $0x708] sm:$0xff]
    %v263 = vld [vmem:[%s1 + $0x710] sm:$0xff]
    %v264 = vld [vmem:[%s1 + $0x718] sm:$0xff]
    %v265 = vld [vmem:[%s1 + $0x720] sm:$0xff]
    %v266 = vld [vmem:[%s1 + $0x728] sm:$0xff]
    %v267 = vld [vmem:[%s1 + $0x730] sm:$0xff]
    %v268 = vld [vmem:[%s1 + $0x738] sm:$0xff]
    %v269 = vld [vmem:[%s1 + $0x740] sm:$0xff]
    %v270 = vld [vmem:[%s1 + $0x748] sm:$0xff]
    %v271 = vld [vmem:[%s1 + $0x750] sm:$0xff]
    %v272 = vld [vmem:[%s1 + $0x758] sm:$0xff]
    %v273 = vld [vmem:[%s1 + $0x760] sm:$0xff]
    %v274 = vld [vmem:[%s1 + $0x768] sm:$0xff]
    %v275 = vld [vmem:[%s1 + $0x770] sm:$0xff]
    %v276 = vld [vmem:[%s1 + $0x778] sm:$0xff]
    %v277 = vld [vmem:[%s1 + $0x780] sm:$0xff]
    %v278 = vld [vmem:[%s1 + $0x788] sm:$0xff]
    %v279 = vld [vmem:[%s1 + $0x790] sm:$0xff]
    %v280 = vld [vmem:[%s1 + $0x798] sm:$0xff]
    %v281 = vld [vmem:[%s1 + $0x7a0] sm:$0xff]
    %v282 = vld [vmem:[%s1 + $0x7a8] sm:$0xff]
    %v283 = vld [vmem:[%s1 + $0x7b0] sm:$0xff]
    %v284 = vld [vmem:[%s1 + $0x7b8] sm:$0xff]
    %v285 = vld [vmem:[%s1 + $0x7c0] sm:$0xff]
    %v286 = vld [vmem:[%s1 + $0x7c8] sm:$0xff]
    %v287 = vld [vmem:[%s1 + $0x7d0] sm:$0xff]
    %v288 = vld [vmem:[%s1 + $0x7d8] sm:$0xff]
    %v289 = vld [vmem:[%s1 + $0x7e0] sm:$0xff]
    %v290 = vld [vmem:[%s1 + $0x7e8] sm:$0xff]
    %v291 = vld [vmem:[%s1 + $0x7f0] sm:$0xff]
    %v292 = vld [vmem:[%s1 + $0x7f8] sm:$0xff]
    %v293 = vld [vmem:[%s1 + $0x800] sm:$0xff]
    %v294 = vld [vmem:[%s1 + $0x808] sm:$0xff]
    %v295 = vld [vmem:[%s1 + $0x810] sm:$0xff]
    %v296 = vld [vmem:[%s1 + $0x818] sm:$0xff]
    %v297 = vld [vmem:[%s1 + $0x820] sm:$0xff]
    %v298 = vld [vmem:[%s1 + $0x828] sm:$0xff]
    %v299 = vld [vmem:[%s1 + $0x830] sm:$0xff]
    %v300 = vld [vmem:[%s1 + $0x838] sm:$0xff]
    %v301 = vld [vmem:[%s1 + $0x840] sm:$0xff]
    %v302 = vld [vmem:[%s1 + $0x848] sm:$0xff]
    %v303 = vld [vmem:[%s1 + $0x850] sm:$0xff]
    %v304 = vld [vmem:[%s1 + $0x858] sm:$0xff]
    %v305 = vld [vmem:[%s1 + $0x860] sm:$0xff]
    %v306 = vld [vmem:[%s1 + $0x868] sm:$0xff]
    %v307 = vld [vmem:[%s1 + $0x870] sm:$0xff]
    %v308 = vld [vmem:[%s1 + $0x878] sm:$0xff]
    %v309 = vld [vmem:[%s1 + $0x880] sm:$0xff]
    %v310 = vld [vmem:[%s1 + $0x888] sm:$0xff]
    %v311 = vld [vmem:[%s1 + $0x890] sm:$0xff]
    %v312 = vld [vmem:[%s1 + $0x898] sm:$0xff]
    %v313 = vld [vmem:[%s1 + $0x8a0] sm:$0xff]
    %v314 = vld [vmem:[%s1 + $0x8a8] sm:$0xff]
    %v315 = vld [vmem:[%s1 + $0x8b0] sm:$0xff]
    %v316 = vld [vmem:[%s1 + $0x8b8] sm:$0xff]
    %v317 = vld [vmem:[%s1 + $0x8c0] sm:$0xff]
    %v318 = vld [vmem:[%s1 + $0x8c8] sm:$0xff]
    %v319 = vld [vmem:[%s1 + $0x8d0] sm:$0xff]
    %v320 = vld [vmem:[%s1 + $0x8d8] sm:$0xff]
    %v321 = vld [vmem:[%s1 + $0x8e0] sm:$0xff]
    %v322 = vld [vmem:[%s1 + $0x8e8] sm:$0xff]
    %v323 = vld [vmem:[%s1 + $0x8f0] sm:$0xff]
    %v324 = vld [vmem:[%s1 + $0x8f8] sm:$0xff]
    %v325 = vld [vmem:[%s1 + $0x900] sm:$0xff]
    %v326 = vld [vmem:[%s1 + $0x908] sm:$0xff]
    %v327 = vld [vmem:[%s1 + $0x910] sm:$0xff]
    %v328 = vld [vmem:[%s1 + $0x918] sm:$0xff]
    %v329 = vld [vmem:[%s1 + $0x920] sm:$0xff]
    %v330 = vld [vmem:[%s1 + $0x928] sm:$0xff]
    %v331 = vld [vmem:[%s1 + $0x930] sm:$0xff]
    %v332 = vld [vmem:[%s1 + $0x938] sm:$0xff]
    %v333 = vld [vmem:[%s1 + $0x940] sm:$0xff]
    %v334 = vld [vmem:[%s1 + $0x948] sm:$0xff]
    %v335 = vld [vmem:[%s1 + $0x950] sm:$0xff]
    %v336 = vld [vmem:[%s1 + $0x958] sm:$0xff]
    %v337 = vld [vmem:[%s1 + $0x960] sm:$0xff]
    %v338 = vld [vmem:[%s1 + $0x968] sm:$0xff]
    %v339 = vld [vmem:[%s1 + $0x970] sm:$0xff]
    %v340 = vld [vmem:[%s1 + $0x978] sm:$0xff]
    %v341 = vld [vmem:[%s1 + $0x980] sm:$0xff]
    %v342 = vld [vmem:[%s1 + $0x988] sm:$0xff]
    %v343 = vld [vmem:[%s1 + $0x990] sm:$0xff]
    %v344 = vld [vmem:[%s1 + $0x998] sm:$0xff]
    %v345 = vld [vmem:[%s1 + $0x9a0] sm:$0xff]
    %v346 = vld [vmem:[%s1 + $0x9a8] sm:$0xff]
    %v347 = vld [vmem:[%s1 + $0x9b0] sm:$0xff]
    %v348 = vld [vmem:[%s1 + $0x9b8] sm:$0xff]
    %v349 = vld [vmem:[%s1 + $0x9c0] sm:$0xff]
    %v350 = vld [vmem:[%s1 + $0x9c8] sm:$0xff]
    %v351 = vld [vmem:[%s1 + $0x9d0] sm:$0xff]
    %v352 = vld [vmem:[%s1 + $0x9d8] sm:$0xff]
    %v353 = vld [vmem:[%s1 + $0x9e0] sm:$0xff]
    %v354 = vld [vmem:[%s1 + $0x9e8] sm:$0xff]
    %v355 = vld [vmem:[%s1 + $0x9f0] sm:$0xff]
    %v356 = vld [vmem:[%s1 + $0x9f8] sm:$0xff]
    %v357 = vld [vmem:[%s1 + $0xa00] sm:$0xff]
    %v358 = vld [vmem:[%s1 + $0xa08] sm:$0xff]
    %v359 = vld [vmem:[%s1 + $0xa10] sm:$0xff]
    %v360 = vld [vmem:[%s1 + $0xa18] sm:$0xff]
    %v361 = vld [vmem:[%s1 + $0xa20] sm:$0xff]
    %v362 = vld [vmem:[%s1 + $0xa28] sm:$0xff]
    %v363 = vld [vmem:[%s1 + $0xa30] sm:$0xff]
    %v364 = vld [vmem:[%s1 + $0xa38] sm:$0xff]
    %v365 = vld [vmem:[%s1 + $0xa40] sm:$0xff]
    %v366 = vld [vmem:[%s1 + $0xa48] sm:$0xff]
    %v367 = vld [vmem:[%s1 + $0xa50] sm:$0xff]
    %v368 = vld [vmem:[%s1 + $0xa58] sm:$0xff]
    %v369 = vld [vmem:[%s1 + $0xa60] sm:$0xff]
    %v370 = vld [vmem:[%s1 + $0xa68] sm:$0xff]
    %v371 = vld [vmem:[%s1 + $0xa70] sm:$0xff]
    %v372 = vld [vmem:[%s1 + $0xa78] sm:$0xff]
    %v373 = vld [vmem:[%s1 + $0xa80] sm:$0xff]
    %v374 = vld [vmem:[%s1 + $0xa88] sm:$0xff]
    %v375 = vld [vmem:[%s1 + $0xa90] sm:$0xff]
    %v376 = vld [vmem:[%s1 + $0xa98] sm:$0xff]
    %v377 = vld [vmem:[%s1 + $0xaa0] sm:$0xff]
    %v378 = vld [vmem:[%s1 + $0xaa8] sm:$0xff]
    %v379 = vld [vmem:[%s1 + $0xab0] sm:$0xff]
    %v380 = vld [vmem:[%s1 + $0xab8] sm:$0xff]
    %v381 = vld [vmem:[%s1 + $0xac0] sm:$0xff]
    %v382 = vld [vmem:[%s1 + $0xac8] sm:$0xff]
    %v383 = vld [vmem:[%s1 + $0xad0] sm:$0xff]
    %v384 = vld [vmem:[%s1 + $0xad8] sm:$0xff]
    %v385 = vld [vmem:[%s1 + $0xae0] sm:$0xff]
    %v386 = vld [vmem:[%s1 + $0xae8] sm:$0xff]
    %v387 = vld [vmem:[%s1 + $0xaf0] sm:$0xff]
    %v388 = vld [vmem:[%s1 + $0xaf8] sm:$0xff]
    %v389 = vld [vmem:[%s1 + $0xb00] sm:$0xff]
    %v390 = vld [vmem:[%s1 + $0xb08] sm:$0xff]
    %v391 = vld [vmem:[%s1 + $0xb10] sm:$0xff]
    %v392 = vld [vmem:[%s1 + $0xb18] sm:$0xff]
    %v393 = vld [vmem:[%s1 + $0xb20] sm:$0xff]
    %v394 = vld [vmem:[%s1 + $0xb28] sm:$0xff]
    %v395 = vld [vmem:[%s1 + $0xb30] sm:$0xff]
    %v396 = vld [vmem:[%s1 + $0xb38] sm:$0xff]
    %v397 = vld [vmem:[%s1 + $0xb40] sm:$0xff]
    %v398 = vld [vmem:[%s1 + $0xb48] sm:$0xff]
    %v399 = vld [vmem:[%s1 + $0xb50] sm:$0xff]
    %v400 = vld [vmem:[%s1 + $0xb58] sm:$0xff]
    %v401 = vld [vmem:[%s1 + $0xb60] sm:$0xff]
    %v402 = vld [vmem:[%s1 + $0xb68] sm:$0xff]
    %v403 = vld [vmem:[%s1 + $0xb70] sm:$0xff]
    %v404 = vld [vmem:[%s1 + $0xb78] sm:$0xff]
    %v405 = vld [vmem:[%s1 + $0xb80] sm:$0xff]
    %v406 = vld [vmem:[%s1 + $0xb88] sm:$0xff]
    %v407 = vld [vmem:[%s1 + $0xb90] sm:$0xff]
    %v408 = vld [vmem:[%s1 + $0xb98] sm:$0xff]
    %v409 = vld [vmem:[%s1 + $0xba0] sm:$0xff]
    %v410 = vld [vmem:[%s1 + $0xba8] sm:$0xff]
    %v411 = vld [vmem:[%s1 + $0xbb0] sm:$0xff]
    %v412 = vld [vmem:[%s1 + $0xbb8] sm:$0xff]
    %v413 = vld [vmem:[%s1 + $0xbc0] sm:$0xff]
    %v414 = vld [vmem:[%s1 + $0xbc8] sm:$0xff]
    %v415 = vld [vmem:[%s1 + $0xbd0] sm:$0xff]
    %v416 = vld [vmem:[%s1 + $0xbd8] sm:$0xff]
    %v417 = vld [vmem:[%s1 + $0xbe0] sm:$0xff]
    %v418 = vld [vmem:[%s1 + $0xbe8] sm:$0xff]
    %v419 = vld [vmem:[%s1 + $0xbf0] sm:$0xff]
    %v420 = vld [vmem:[%s1 + $0xbf8] sm:$0xff]
    %v421 = vld [vmem:[%s1 + $0xc00] sm:$0xff]
    %v422 = vld [vmem:[%s1 + $0xc08] sm:$0xff]
    %v423 = vld [vmem:[%s1 + $0xc10] sm:$0xff]
    %v424 = vld [vmem:[%s1 + $0xc18] sm:$0xff]
    %v425 = vld [vmem:[%s1 + $0xc20] sm:$0xff]
    %v426 = vld [vmem:[%s1 + $0xc28] sm:$0xff]
    %v427 = vld [vmem:[%s1 + $0xc30] sm:$0xff]
    %v428 = vld [vmem:[%s1 + $0xc38] sm:$0xff]
    %v429 = vld [vmem:[%s1 + $0xc40] sm:$0xff]
    %v430 = vld [vmem:[%s1 + $0xc48] sm:$0xff]
    %v431 = vld [vmem:[%s1 + $0xc50] sm:$0xff]
    %v432 = vld [vmem:[%s1 + $0xc58] sm:$0xff]
    %v433 = vld [vmem:[%s1 + $0xc60] sm:$0xff]
    %v434 = vld [vmem:[%s1 + $0xc68] sm:$0xff]
    %v435 = vld [vmem:[%s1 + $0xc70] sm:$0xff]
    %v436 = vld [vmem:[%s1 + $0xc78] sm:$0xff]
    %v437 = vld [vmem:[%s1 + $0xc80] sm:$0xff]
    %v438 = vld [vmem:[%s1 + $0xc88] sm:$0xff]
    %v439 = vld [vmem:[%s1 + $0xc90] sm:$0xff]
    %v440 = vld [vmem:[%s1 + $0xc98] sm:$0xff]
    %v441 = vld [vmem:[%s1 + $0xca0] sm:$0xff]
    %v442 = vld [vmem:[%s1 + $0xca8] sm:$0xff]
    %v443 = vld [vmem:[%s1 + $0xcb0] sm:$0xff]
    %v444 = vld [vmem:[%s1 + $0xcb8] sm:$0xff]
    %v445 = vld [vmem:[%s1 + $0xcc0] sm:$0xff]
    %v446 = vld [vmem:[%s1 + $0xcc8] sm:$0xff]
    %v447 = vld [vmem:[%s1 + $0xcd0] sm:$0xff]
    %v448 = vld [vmem:[%s1 + $0xcd8] sm:$0xff]
    %v449 = vld [vmem:[%s1 + $0xce0] sm:$0xff]
    %v450 = vld [vmem:[%s1 + $0xce8] sm:$0xff]
    %v451 = vld [vmem:[%s1 + $0xcf0] sm:$0xff]
    %v452 = vld [vmem:[%s1 + $0xcf8] sm:$0xff]
    %v453 = vld [vmem:[%s1 + $0xd00] sm:$0xff]
    %v454 = vld [vmem:[%s1 + $0xd08] sm:$0xff]
    %v455 = vld [vmem:[%s1 + $0xd10] sm:$0xff]
    %v456 = vld [vmem:[%s1 + $0xd18] sm:$0xff]
    %v457 = vld [vmem:[%s1 + $0xd20] sm:$0xff]
    %v458 = vld [vmem:[%s1 + $0xd28] sm:$0xff]
    %v459 = vld [vmem:[%s1 + $0xd30] sm:$0xff]
    %v460 = vld [vmem:[%s1 + $0xd38] sm:$0xff]
    %v461 = vld [vmem:[%s1 + $0xd40] sm:$0xff]
    %v462 = vld [vmem:[%s1 + $0xd48] sm:$0xff]
    %v463 = vld [vmem:[%s1 + $0xd50] sm:$0xff]
    %v464 = vld [vmem:[%s1 + $0xd58] sm:$0xff]
    %v465 = vld [vmem:[%s1 + $0xd60] sm:$0xff]
    %v466 = vld [vmem:[%s1 + $0xd68] sm:$0xff]
    %v467 = vld [vmem:[%s1 + $0xd70] sm:$0xff]
    %v468 = vld [vmem:[%s1 + $0xd78] sm:$0xff]
    %v469 = vld [vmem:[%s1 + $0xd80] sm:$0xff]
    %v470 = vld [vmem:[%s1 + $0xd88] sm:$0xff]
    %v471 = vld [vmem:[%s1 + $0xd90] sm:$0xff]
    %v472 = vld [vmem:[%s1 + $0xd98] sm:$0xff]
    %v473 = vld [vmem:[%s1 + $0xda0] sm:$0xff]
    %v474 = vld [vmem:[%s1 + $0xda8] sm:$0xff]
    %v475 = vld [vmem:[%s1 + $0xdb0] sm:$0xff]
    %v476 = vld [vmem:[%s1 + $0xdb8] sm:$0xff]
    %v477 = vld [vmem:[%s1 + $0xdc0] sm:$0xff]
    %v478 = vld [vmem:[%s1 + $0xdc8] sm:$0xff]
    %v479 = vld [vmem:[%s1 + $0xdd0] sm:$0xff]
    %v480 = vld [vmem:[%s1 + $0xdd8] sm:$0xff]
    %v481 = vld [vmem:[%s1 + $0xde0] sm:$0xff]
    %v482 = vld [vmem:[%s1 + $0xde8] sm:$0xff]
    %v483 = vld [vmem:[%s1 + $0xdf0] sm:$0xff]
    %v484 = vld [vmem:[%s1 + $0xdf8] sm:$0xff]
    %v485 = vld [vmem:[%s1 + $0xe00] sm:$0xff]
    %v486 = vld [vmem:[%s1 + $0xe08] sm:$0xff]
    %v487 = vld [vmem:[%s1 + $0xe10] sm:$0xff]
    %v488 = vld [vmem:[%s1 + $0xe18] sm:$0xff]
    %v489 = vld [vmem:[%s1 + $0xe20] sm:$0xff]
    %v490 = vld [vmem:[%s1 + $0xe28] sm:$0xff]
    %v491 = vld [vmem:[%s1 + $0xe30] sm:$0xff]
    %v492 = vld [vmem:[%s1 + $0xe38] sm:$0xff]
    %v493 = vld [vmem:[%s1 + $0xe40] sm:$0xff]
    %v494 = vld [vmem:[%s1 + $0xe48] sm:$0xff]
    %v495 = vld [vmem:[%s1 + $0xe50] sm:$0xff]
    %v496 = vld [vmem:[%s1 + $0xe58] sm:$0xff]
    %v497 = vld [vmem:[%s1 + $0xe60] sm:$0xff]
    %v498 = vld [vmem:[%s1 + $0xe68] sm:$0xff]
    %v499 = vld [vmem:[%s1 + $0xe70] sm:$0xff]
    %v500 = vld [vmem:[%s1 + $0xe78] sm:$0xff]
    %v501 = vld [vmem:[%s1 + $0xe80] sm:$0xff]
    %v502 = vld [vmem:[%s1 + $0xe88] sm:$0xff]
    %v503 = vld [vmem:[%s1 + $0xe90] sm:$0xff]
    %v504 = vld [vmem:[%s1 + $0xe98] sm:$0xff]
    %v505 = vld [vmem:[%s1 + $0xea0] sm:$0xff]
    %v506 = vld [vmem:[%s1 + $0xea8] sm:$0xff]
    %v507 = vld [vmem:[%s1 + $0xeb0] sm:$0xff]
    %v508 = vld [vmem:[%s1 + $0xeb8] sm:$0xff]
    %v509 = vld [vmem:[%s1 + $0xec0] sm:$0xff]
    %v510 = vld [vmem:[%s1 + $0xec8] sm:$0xff]
    %v511 = vld [vmem:[%s1 + $0xed0] sm:$0xff]
    %v512 = vld [vmem:[%s1 + $0xed8] sm:$0xff]
    %v513 = vld [vmem:[%s1 + $0xee0] sm:$0xff]
    %v514 = vld [vmem:[%s1 + $0xee8] sm:$0xff]
    %v515 = vld [vmem:[%s1 + $0xef0] sm:$0xff]
    %v516 = vld [vmem:[%s1 + $0xef8] sm:$0xff]
    %v517 = vld [vmem:[%s1 + $0xf00] sm:$0xff]
    %v518 = vld [vmem:[%s1 + $0xf08] sm:$0xff]
    %v519 = vld [vmem:[%s1 + $0xf10] sm:$0xff]
    %v520 = vld [vmem:[%s1 + $0xf18] sm:$0xff]
    %v521 = vld [vmem:[%s1 + $0xf20] sm:$0xff]
    %v522 = vld [vmem:[%s1 + $0xf28] sm:$0xff]
    %v523 = vld [vmem:[%s1 + $0xf30] sm:$0xff]
    %v524 = vld [vmem:[%s1 + $0xf38] sm:$0xff]
    %v525 = vld [vmem:[%s1 + $0xf40] sm:$0xff]
    %v526 = vld [vmem:[%s1 + $0xf48] sm:$0xff]
    %v527 = vld [vmem:[%s1 + $0xf50] sm:$0xff]
    %v528 = vld [vmem:[%s1 + $0xf58] sm:$0xff]
    %v529 = vld [vmem:[%s1 + $0xf60] sm:$0xff]
    %v530 = vld [vmem:[%s1 + $0xf68] sm:$0xff]
    %v531 = vld [vmem:[%s1 + $0xf70] sm:$0xff]
    %v532 = vld [vmem:[%s1 + $0xf78] sm:$0xff]
    %v533 = vld [vmem:[%s1 + $0xf80] sm:$0xff]
    %v534 = vld [vmem:[%s1 + $0xf88] sm:$0xff]
    %v535 = vld [vmem:[%s1 + $0xf90] sm:$0xff]
    %v536 = vld [vmem:[%s1 + $0xf98] sm:$0xff]
    %v537 = vld [vmem:[%s1 + $0xfa0] sm:$0xff]
    %v538 = vld [vmem:[%s1 + $0xfa8] sm:$0xff]
    %v539 = vld [vmem:[%s1 + $0xfb0] sm:$0xff]
    %v540 = vld [vmem:[%s1 + $0xfb8] sm:$0xff]
    %v541 = vld [vmem:[%s1 + $0xfc0] sm:$0xff]
    %v542 = vld [vmem:[%s1 + $0xfc8] sm:$0xff]
    %v543 = vld [vmem:[%s1 + $0xfd0] sm:$0xff]
    %v544 = vld [vmem:[%s1 + $0xfd8] sm:$0xff]
    %v545 = vld [vmem:[%s1 + $0xfe0] sm:$0xff]
    %v546 = vld [vmem:[%s1 + $0xfe8] sm:$0xff]
    %v547 = vld [vmem:[%s1 + $0xff0] sm:$0xff]
    %v548 = vld [vmem:[%s1 + $0xff8] sm:$0xff]
    %v549 = vld [vmem:[%s1 + $0x1000] sm:$0xff]
    %v550 = vld [vmem:[%s1 + $0x1008] sm:$0xff]
    %v551 = vld [vmem:[%s1 + $0x1010] sm:$0xff]
    %v552 = vld [vmem:[%s1 + $0x1018] sm:$0xff]
    %v553 = vld [vmem:[%s1 + $0x1020] sm:$0xff]
    %v554 = vld [vmem:[%s1 + $0x1028] sm:$0xff]
    %v555 = vld [vmem:[%s1 + $0x1030] sm:$0xff]
    %v556 = vld [vmem:[%s1 + $0x1038] sm:$0xff]
    %v557 = vld [vmem:[%s1 + $0x1040] sm:$0xff]
    %v558 = vld [vmem:[%s1 + $0x1048] sm:$0xff]
    %v559 = vld [vmem:[%s1 + $0x1050] sm:$0xff]
    %v560 = vld [vmem:[%s1 + $0x1058] sm:$0xff]
    %v561 = vld [vmem:[%s1 + $0x1060] sm:$0xff]
    %v562 = vld [vmem:[%s1 + $0x1068] sm:$0xff]
    %v563 = vld [vmem:[%s1 + $0x1070] sm:$0xff]
    %v564 = vld [vmem:[%s1 + $0x1078] sm:$0xff]
    %v565 = vld [vmem:[%s1 + $0x1080] sm:$0xff]
    %v566 = vld [vmem:[%s1 + $0x1088] sm:$0xff]
    %v567 = vld [vmem:[%s1 + $0x1090] sm:$0xff]
    %v568 = vld [vmem:[%s1 + $0x1098] sm:$0xff]
    %v569 = vld [vmem:[%s1 + $0x10a0] sm:$0xff]
    %v570 = vld [vmem:[%s1 + $0x10a8] sm:$0xff]
    %v571 = vld [vmem:[%s1 + $0x10b0] sm:$0xff]
    %v572 = vld [vmem:[%s1 + $0x10b8] sm:$0xff]
    %v573 = vld [vmem:[%s1 + $0x10c0] sm:$0xff]
    %v574 = vld [vmem:[%s1 + $0x10c8] sm:$0xff]
    %v575 = vld [vmem:[%s1 + $0x10d0] sm:$0xff]
    %v576 = vld [vmem:[%s1 + $0x10d8] sm:$0xff]
    %v577 = vld [vmem:[%s1 + $0x10e0] sm:$0xff]
    %v578 = vld [vmem:[%s1 + $0x10e8] sm:$0xff]
    %v579 = vld [vmem:[%s1 + $0x10f0] sm:$0xff]
    %v580 = vld [vmem:[%s1 + $0x10f8] sm:$0xff]
    %v581 = vld [vmem:[%s1 + $0x1100] sm:$0xff]
    %v582 = vld [vmem:[%s1 + $0x1108] sm:$0xff]
    %v583 = vld [vmem:[%s1 + $0x1110] sm:$0xff]
    %v584 = vld [vmem:[%s1 + $0x1118] sm:$0xff]
    %v585 = vld [vmem:[%s1 + $0x1120] sm:$0xff]
    %v586 = vld [vmem:[%s1 + $0x1128] sm:$0xff]
    %v587 = vld [vmem:[%s1 + $0x1130] sm:$0xff]
    %v588 = vld [vmem:[%s1 + $0x1138] sm:$0xff]
    %v589 = vld [vmem:[%s1 + $0x1140] sm:$0xff]
    %v590 = vld [vmem:[%s1 + $0x1148] sm:$0xff]
    %v591 = vld [vmem:[%s1 + $0x1150] sm:$0xff]
    %v592 = vld [vmem:[%s1 + $0x1158] sm:$0xff]
    %v593 = vld [vmem:[%s1 + $0x1160] sm:$0xff]
    %v594 = vld [vmem:[%s1 + $0x1168] sm:$0xff]
    %v595 = vld [vmem:[%s1 + $0x1170] sm:$0xff]
    %v596 = vld [vmem:[%s1 + $0x1178] sm:$0xff]
    %v597 = vld [vmem:[%s1 + $0x1180] sm:$0xff]
    %v598 = vld [vmem:[%s1 + $0x1188] sm:$0xff]
    %v599 = vld [vmem:[%s1 + $0x1190] sm:$0xff]
    %v600 = vld [vmem:[%s1 + $0x1198] sm:$0xff]
    %v601 = vld [vmem:[%s1 + $0x11a0] sm:$0xff]
    %v602 = vld [vmem:[%s1 + $0x11a8] sm:$0xff]
    %v603 = vld [vmem:[%s1 + $0x11b0] sm:$0xff]
    %v604 = vld [vmem:[%s1 + $0x11b8] sm:$0xff]
    %v605 = vld [vmem:[%s1 + $0x11c0] sm:$0xff]
    %v606 = vld [vmem:[%s1 + $0x11c8] sm:$0xff]
    %v607 = vld [vmem:[%s1 + $0x11d0] sm:$0xff]
    %v608 = vld [vmem:[%s1 + $0x11d8] sm:$0xff]
    %v609 = vld [vmem:[%s1 + $0x11e0] sm:$0xff]
    %v610 = vld [vmem:[%s1 + $0x11e8] sm:$0xff]
    %v611 = vld [vmem:[%s1 + $0x11f0] sm:$0xff]
    %v612 = vld [vmem:[%s1 + $0x11f8] sm:$0xff]
    %v613 = vld [vmem:[%s1 + $0x1200] sm:$0xff]
    %v614 = vld [vmem:[%s1 + $0x1208] sm:$0xff]
    %v615 = vld [vmem:[%s1 + $0x1210] sm:$0xff]
    %v616 = vld [vmem:[%s1 + $0x1218] sm:$0xff]
    %v617 = vld [vmem:[%s1 + $0x1220] sm:$0xff]
    %v618 = vld [vmem:[%s1 + $0x1228] sm:$0xff]
    %v619 = vld [vmem:[%s1 + $0x1230] sm:$0xff]
    %v620 = vld [vmem:[%s1 + $0x1238] sm:$0xff]
    %v621 = vld [vmem:[%s1 + $0x1240] sm:$0xff]
    %v622 = vld [vmem:[%s1 + $0x1248] sm:$0xff]
    %v623 = vld [vmem:[%s1 + $0x1250] sm:$0xff]
    %v624 = vld [vmem:[%s1 + $0x1258] sm:$0xff]
    %v625 = vld [vmem:[%s1 + $0x1260] sm:$0xff]
    %v626 = vld [vmem:[%s1 + $0x1268] sm:$0xff]
    %v627 = vld [vmem:[%s1 + $0x1270] sm:$0xff]
    %v628 = vld [vmem:[%s1 + $0x1278] sm:$0xff]
    %v629 = vld [vmem:[%s1 + $0x1280] sm:$0xff]
    %v630 = vld [vmem:[%s1 + $0x1288] sm:$0xff]
    %v631 = vld [vmem:[%s1 + $0x1290] sm:$0xff]
    %v632 = vld [vmem:[%s1 + $0x1298] sm:$0xff]
    %v633 = vld [vmem:[%s1 + $0x12a0] sm:$0xff]
    %v634 = vld [vmem:[%s1 + $0x12a8] sm:$0xff]
    %v635 = vld [vmem:[%s1 + $0x12b0] sm:$0xff]
    %v636 = vld [vmem:[%s1 + $0x12b8] sm:$0xff]
    %v637 = vld [vmem:[%s1 + $0x12c0] sm:$0xff]
    %v638 = vld [vmem:[%s1 + $0x12c8] sm:$0xff]
    %v639 = vld [vmem:[%s1 + $0x12d0] sm:$0xff]
    %v640 = vld [vmem:[%s1 + $0x12d8] sm:$0xff]
    %v641 = vld [vmem:[%s1 + $0x12e0] sm:$0xff]
    %v642 = vld [vmem:[%s1 + $0x12e8] sm:$0xff]
    %v643 = vld [vmem:[%s1 + $0x12f0] sm:$0xff]
    %v644 = vld [vmem:[%s1 + $0x12f8] sm:$0xff]
    %v645 = vld [vmem:[%s1 + $0x1300] sm:$0xff]
    %v646 = vld [vmem:[%s1 + $0x1308] sm:$0xff]
    %v647 = vld [vmem:[%s1 + $0x1310] sm:$0xff]
    %v648 = vld [vmem:[%s1 + $0x1318] sm:$0xff]
    %v649 = vld [vmem:[%s1 + $0x1320] sm:$0xff]
    %v650 = vld [vmem:[%s1 + $0x1328] sm:$0xff]
    %v651 = vld [vmem:[%s1 + $0x1330] sm:$0xff]
    %v652 = vld [vmem:[%s1 + $0x1338] sm:$0xff]
    %v653 = vld [vmem:[%s1 + $0x1340] sm:$0xff]
    %v654 = vld [vmem:[%s1 + $0x1348] sm:$0xff]
    %v655 = vld [vmem:[%s1 + $0x1350] sm:$0xff]
    %v656 = vld [vmem:[%s1 + $0x1358] sm:$0xff]
    %v657 = vld [vmem:[%s1 + $0x1360] sm:$0xff]
    %v658 = vld [vmem:[%s1 + $0x1368] sm:$0xff]
    %v659 = vld [vmem:[%s1 + $0x1370] sm:$0xff]
    %v660 = vld [vmem:[%s1 + $0x1378] sm:$0xff]
    %v661 = vld [vmem:[%s1 + $0x1380] sm:$0xff]
    %v662 = vld [vmem:[%s1 + $0x1388] sm:$0xff]
    %v663 = vld [vmem:[%s1 + $0x1390] sm:$0xff]
    %v664 = vld [vmem:[%s1 + $0x1398] sm:$0xff]
    %v665 = vld [vmem:[%s1 + $0x13a0] sm:$0xff]
    %v666 = vld [vmem:[%s1 + $0x13a8] sm:$0xff]
    %v667 = vld [vmem:[%s1 + $0x13b0] sm:$0xff]
    %v668 = vld [vmem:[%s1 + $0x13b8] sm:$0xff]
    %v669 = vld [vmem:[%s1 + $0x13c0] sm:$0xff]
    %v670 = vld [vmem:[%s1 + $0x13c8] sm:$0xff]
    %v671 = vld [vmem:[%s1 + $0x13d0] sm:$0xff]
    %v672 = vld [vmem:[%s1 + $0x13d8] sm:$0xff]
    %v673 = vld [vmem:[%s1 + $0x13e0] sm:$0xff]
    %v674 = vld [vmem:[%s1 + $0x13e8] sm:$0xff]
    %v675 = vld [vmem:[%s1 + $0x13f0] sm:$0xff]
    %v676 = vld [vmem:[%s1 + $0x13f8] sm:$0xff]
    %v677 = vld [vmem:[%s1 + $0x1400] sm:$0xff]
    %v678 = vld [vmem:[%s1 + $0x1408] sm:$0xff]
    %v679 = vld [vmem:[%s1 + $0x1410] sm:$0xff]
    %v680 = vld [vmem:[%s1 + $0x1418] sm:$0xff]
    %v681 = vld [vmem:[%s1 + $0x1420] sm:$0xff]
    %v682 = vld [vmem:[%s1 + $0x1428] sm:$0xff]
    %v683 = vld [vmem:[%s1 + $0x1430] sm:$0xff]
    %v684 = vld [vmem:[%s1 + $0x1438] sm:$0xff]
    %v685 = vld [vmem:[%s1 + $0x1440] sm:$0xff]
    %v686 = vld [vmem:[%s1 + $0x1448] sm:$0xff]
    %v687 = vld [vmem:[%s1 + $0x1450] sm:$0xff]
    %v688 = vld [vmem:[%s1 + $0x1458] sm:$0xff]
    %v689 = vld [vmem:[%s1 + $0x1460] sm:$0xff]
    %v690 = vld [vmem:[%s1 + $0x1468] sm:$0xff]
    %v691 = vld [vmem:[%s1 + $0x1470] sm:$0xff]
    %v692 = vld [vmem:[%s1 + $0x1478] sm:$0xff]
    %v693 = vld [vmem:[%s1 + $0x1480] sm:$0xff]
    %v694 = vld [vmem:[%s1 + $0x1488] sm:$0xff]
    %v695 = vld [vmem:[%s1 + $0x1490] sm:$0xff]
    %v696 = vld [vmem:[%s1 + $0x1498] sm:$0xff]
    %v697 = vld [vmem:[%s1 + $0x14a0] sm:$0xff]
    %v698 = vld [vmem:[%s1 + $0x14a8] sm:$0xff]
    %v699 = vld [vmem:[%s1 + $0x14b0] sm:$0xff]
    %v700 = vld [vmem:[%s1 + $0x14b8] sm:$0xff]
    %v701 = vld [vmem:[%s1 + $0x14c0] sm:$0xff]
    %v702 = vld [vmem:[%s1 + $0x14c8] sm:$0xff]
    %v703 = vld [vmem:[%s1 + $0x14d0] sm:$0xff]
    %v704 = vld [vmem:[%s1 + $0x14d8] sm:$0xff]
    %v705 = vld [vmem:[%s1 + $0x14e0] sm:$0xff]
    %v706 = vld [vmem:[%s1 + $0x14e8] sm:$0xff]
    %v707 = vld [vmem:[%s1 + $0x14f0] sm:$0xff]
    %v708 = vld [vmem:[%s1 + $0x14f8] sm:$0xff]
    %v709 = vld [vmem:[%s1 + $0x1500] sm:$0xff]
    %v710 = vld [vmem:[%s1 + $0x1508] sm:$0xff]
    %v711 = vld [vmem:[%s1 + $0x1510] sm:$0xff]
    %v712 = vld [vmem:[%s1 + $0x1518] sm:$0xff]
    %v713 = vld [vmem:[%s1 + $0x1520] sm:$0xff]
    %v714 = vld [vmem:[%s1 + $0x1528] sm:$0xff]
    %v715 = vld [vmem:[%s1 + $0x1530] sm:$0xff]
    %v716 = vld [vmem:[%s1 + $0x1538] sm:$0xff]
    %v717 = vld [vmem:[%s1 + $0x1540] sm:$0xff]
    %v718 = vld [vmem:[%s1 + $0x1548] sm:$0xff]
    %v719 = vld [vmem:[%s1 + $0x1550] sm:$0xff]
    %v720 = vld [vmem:[%s1 + $0x1558] sm:$0xff]
    %v721 = vld [vmem:[%s1 + $0x1560] sm:$0xff]
    %v722 = vld [vmem:[%s1 + $0x1568] sm:$0xff]
    %v723 = vld [vmem:[%s1 + $0x1570] sm:$0xff]
    %v724 = vld [vmem:[%s1 + $0x1578] sm:$0xff]
    %v725 = vld [vmem:[%s1 + $0x1580] sm:$0xff]
    %v726 = vld [vmem:[%s1 + $0x1588] sm:$0xff]
    %v727 = vld [vmem:[%s1 + $0x1590] sm:$0xff]
    %v728 = vld [vmem:[%s1 + $0x1598] sm:$0xff]
    %v729 = vld [vmem:[%s1 + $0x15a0] sm:$0xff]
    %v730 = vld [vmem:[%s1 + $0x15a8] sm:$0xff]
    %v731 = vld [vmem:[%s1 + $0x15b0] sm:$0xff]
    %v732 = vld [vmem:[%s1 + $0x15b8] sm:$0xff]
    %v733 = vld [vmem:[%s1 + $0x15c0] sm:$0xff]
    %v734 = vld [vmem:[%s1 + $0x15c8] sm:$0xff]
    %v735 = vld [vmem:[%s1 + $0x15d0] sm:$0xff]
    %v736 = vld [vmem:[%s1 + $0x15d8] sm:$0xff]
    %v737 = vld [vmem:[%s1 + $0x15e0] sm:$0xff]
    %v738 = vld [vmem:[%s1 + $0x15e8] sm:$0xff]
    %v739 = vld [vmem:[%s1 + $0x15f0] sm:$0xff]
    %v740 = vld [vmem:[%s1 + $0x15f8] sm:$0xff]
    %v741 = vld [vmem:[%s1 + $0x1600] sm:$0xff]
    %v742 = vld [vmem:[%s1 + $0x1608] sm:$0xff]
    %v743 = vld [vmem:[%s1 + $0x1610] sm:$0xff]
    %v744 = vld [vmem:[%s1 + $0x1618] sm:$0xff]
    %v745 = vld [vmem:[%s1 + $0x1620] sm:$0xff]
    %v746 = vld [vmem:[%s1 + $0x1628] sm:$0xff]
    %v747 = vld [vmem:[%s1 + $0x1630] sm:$0xff]
    %v748 = vld [vmem:[%s1 + $0x1638] sm:$0xff]
    %v749 = vld [vmem:[%s1 + $0x1640] sm:$0xff]
    %v750 = vld [vmem:[%s1 + $0x1648] sm:$0xff]
    %v751 = vld [vmem:[%s1 + $0x1650] sm:$0xff]
    %v752 = vld [vmem:[%s1 + $0x1658] sm:$0xff]
    %v753 = vld [vmem:[%s1 + $0x1660] sm:$0xff]
    %v754 = vld [vmem:[%s1 + $0x1668] sm:$0xff]
    %v755 = vld [vmem:[%s1 + $0x1670] sm:$0xff]
    %v756 = vld [vmem:[%s1 + $0x1678] sm:$0xff]
    %v757 = vld [vmem:[%s1 + $0x1680] sm:$0xff]
    %v758 = vld [vmem:[%s1 + $0x1688] sm:$0xff]
    %v759 = vld [vmem:[%s1 + $0x1690] sm:$0xff]
    %v760 = vld [vmem:[%s1 + $0x1698] sm:$0xff]
    %v761 = vld [vmem:[%s1 + $0x16a0] sm:$0xff]
    %v762 = vld [vmem:[%s1 + $0x16a8] sm:$0xff]
    %v763 = vld [vmem:[%s1 + $0x16b0] sm:$0xff]
    %v764 = vld [vmem:[%s1 + $0x16b8] sm:$0xff]
    %v765 = vld [vmem:[%s1 + $0x16c0] sm:$0xff]
    %v766 = vld [vmem:[%s1 + $0x16c8] sm:$0xff]
    %v767 = vld [vmem:[%s1 + $0x16d0] sm:$0xff]
    %v768 = vld [vmem:[%s1 + $0x16d8] sm:$0xff]
    %v769 = vld [vmem:[%s1 + $0x16e0] sm:$0xff]
    %v770 = vld [vmem:[%s1 + $0x16e8] sm:$0xff]
    %v771 = vld [vmem:[%s1 + $0x16f0] sm:$0xff]
    %v772 = vld [vmem:[%s1 + $0x16f8] sm:$0xff]
    %v773 = vld [vmem:[%s1 + $0x1700] sm:$0xff]
    %v774 = vld [vmem:[%s1 + $0x1708] sm:$0xff]
    %v775 = vld [vmem:[%s1 + $0x1710] sm:$0xff]
    %v776 = vld [vmem:[%s1 + $0x1718] sm:$0xff]
    %v777 = vld [vmem:[%s1 + $0x1720] sm:$0xff]
    %v778 = vld [vmem:[%s1 + $0x1728] sm:$0xff]
    %v779 = vld [vmem:[%s1 + $0x1730] sm:$0xff]
    %v780 = vld [vmem:[%s1 + $0x1738] sm:$0xff]
    %v781 = vld [vmem:[%s1 + $0x1740] sm:$0xff]
    %v782 = vld [vmem:[%s1 + $0x1748] sm:$0xff]
    %v783 = vld [vmem:[%s1 + $0x1750] sm:$0xff]
    %v784 = vld [vmem:[%s1 + $0x1758] sm:$0xff]
    %v785 = vld [vmem:[%s1 + $0x1760] sm:$0xff]
    %v786 = vld [vmem:[%s1 + $0x1768] sm:$0xff]
    %v787 = vld [vmem:[%s1 + $0x1770] sm:$0xff]
    %v788 = vld [vmem:[%s1 + $0x1778] sm:$0xff]
    %v789 = vld [vmem:[%s1 + $0x1780] sm:$0xff]
    %v790 = vld [vmem:[%s1 + $0x1788] sm:$0xff]
    %v791 = vld [vmem:[%s1 + $0x1790] sm:$0xff]
    %v792 = vld [vmem:[%s1 + $0x1798] sm:$0xff]
    %v793 = vld [vmem:[%s1 + $0x17a0] sm:$0xff]
    %v794 = vld [vmem:[%s1 + $0x17a8] sm:$0xff]
    %v795 = vld [vmem:[%s1 + $0x17b0] sm:$0xff]
    %v796 = vld [vmem:[%s1 + $0x17b8] sm:$0xff]
    %v797 = vld [vmem:[%s1 + $0x17c0] sm:$0xff]
    %v798 = vld [vmem:[%s1 + $0x17c8] sm:$0xff]
    %v799 = vld [vmem:[%s1 + $0x17d0] sm:$0xff]
    %v800 = vld [vmem:[%s1 + $0x17d8] sm:$0xff]
    %v801 = vld [vmem:[%s1 + $0x17e0] sm:$0xff]
    %v802 = vld [vmem:[%s1 + $0x17e8] sm:$0xff]
    %v803 = vld [vmem:[%s1 + $0x17f0] sm:$0xff]
    %v804 = vld [vmem:[%s1 + $0x17f8] sm:$0xff]
    %v805 = vld [vmem:[%s1 + $0x1800] sm:$0xff]
    %v806 = vld [vmem:[%s1 + $0x1808] sm:$0xff]
    %v807 = vld [vmem:[%s1 + $0x1810] sm:$0xff]
    %v808 = vld [vmem:[%s1 + $0x1818] sm:$0xff]
    %v809 = vld [vmem:[%s1 + $0x1820] sm:$0xff]
    %v810 = vld [vmem:[%s1 + $0x1828] sm:$0xff]
    %v811 = vld [vmem:[%s1 + $0x1830] sm:$0xff]
    %v812 = vld [vmem:[%s1 + $0x1838] sm:$0xff]
    %v813 = vld [vmem:[%s1 + $0x1840] sm:$0xff]
    %v814 = vld [vmem:[%s1 + $0x1848] sm:$0xff]
    %v815 = vld [vmem:[%s1 + $0x1850] sm:$0xff]
    %v816 = vld [vmem:[%s1 + $0x1858] sm:$0xff]
    %v817 = vld [vmem:[%s1 + $0x1860] sm:$0xff]
    %v818 = vld [vmem:[%s1 + $0x1868] sm:$0xff]
    %v819 = vld [vmem:[%s1 + $0x1870] sm:$0xff]
    %v820 = vld [vmem:[%s1 + $0x1878] sm:$0xff]
    %v821 = vld [vmem:[%s1 + $0x1880] sm:$0xff]
    %v822 = vld [vmem:[%s1 + $0x1888] sm:$0xff]
    %v823 = vld [vmem:[%s1 + $0x1890] sm:$0xff]
    %v824 = vld [vmem:[%s1 + $0x1898] sm:$0xff]
    %v825 = vld [vmem:[%s1 + $0x18a0] sm:$0xff]
    %v826 = vld [vmem:[%s1 + $0x18a8] sm:$0xff]
    %v827 = vld [vmem:[%s1 + $0x18b0] sm:$0xff]
    %v828 = vld [vmem:[%s1 + $0x18b8] sm:$0xff]
    %v829 = vld [vmem:[%s1 + $0x18c0] sm:$0xff]
    %v830 = vld [vmem:[%s1 + $0x18c8] sm:$0xff]
    %v831 = vld [vmem:[%s1 + $0x18d0] sm:$0xff]
    %v832 = vld [vmem:[%s1 + $0x18d8] sm:$0xff]
    %v833 = vld [vmem:[%s1 + $0x18e0] sm:$0xff]
    %v834 = vld [vmem:[%s1 + $0x18e8] sm:$0xff]
    %v835 = vld [vmem:[%s1 + $0x18f0] sm:$0xff]
    %v836 = vld [vmem:[%s1 + $0x18f8] sm:$0xff]
    %v837 = vld [vmem:[%s1 + $0x1900] sm:$0xff]
    %v838 = vld [vmem:[%s1 + $0x1908] sm:$0xff]
    %v839 = vld [vmem:[%s1 + $0x1910] sm:$0xff]
    %v840 = vld [vmem:[%s1 + $0x1918] sm:$0xff]
    %v841 = vld [vmem:[%s1 + $0x1920] sm:$0xff]
    %v842 = vld [vmem:[%s1 + $0x1928] sm:$0xff]
    %v843 = vld [vmem:[%s1 + $0x1930] sm:$0xff]
    %v844 = vld [vmem:[%s1 + $0x1938] sm:$0xff]
    %v845 = vld [vmem:[%s1 + $0x1940] sm:$0xff]
    %v846 = vld [vmem:[%s1 + $0x1948] sm:$0xff]
    %v847 = vld [vmem:[%s1 + $0x1950] sm:$0xff]
    %v848 = vld [vmem:[%s1 + $0x1958] sm:$0xff]
    %v849 = vld [vmem:[%s1 + $0x1960] sm:$0xff]
    %v850 = vld [vmem:[%s1 + $0x1968] sm:$0xff]
    %v851 = vld [vmem:[%s1 + $0x1970] sm:$0xff]
    %v852 = vld [vmem:[%s1 + $0x1978] sm:$0xff]
    %v853 = vld [vmem:[%s1 + $0x1980] sm:$0xff]
    %v854 = vld [vmem:[%s1 + $0x1988] sm:$0xff]
    %v855 = vld [vmem:[%s1 + $0x1990] sm:$0xff]
    %v856 = vld [vmem:[%s1 + $0x1998] sm:$0xff]
    %v857 = vld [vmem:[%s1 + $0x19a0] sm:$0xff]
    %v858 = vld [vmem:[%s1 + $0x19a8] sm:$0xff]
    %v859 = vld [vmem:[%s1 + $0x19b0] sm:$0xff]
    %v860 = vld [vmem:[%s1 + $0x19b8] sm:$0xff]
    %v861 = vld [vmem:[%s1 + $0x19c0] sm:$0xff]
    %v862 = vld [vmem:[%s1 + $0x19c8] sm:$0xff]
    %v863 = vld [vmem:[%s1 + $0x19d0] sm:$0xff]
    %v864 = vld [vmem:[%s1 + $0x19d8] sm:$0xff]
    %v865 = vld [vmem:[%s1 + $0x19e0] sm:$0xff]
    %v866 = vld [vmem:[%s1 + $0x19e8] sm:$0xff]
    %v867 = vld [vmem:[%s1 + $0x19f0] sm:$0xff]
    %v868 = vld [vmem:[%s1 + $0x19f8] sm:$0xff]
    %v869 = vld [vmem:[%s1 + $0x1a00] sm:$0xff]
    %v870 = vld [vmem:[%s1 + $0x1a08] sm:$0xff]
    %v871 = vld [vmem:[%s1 + $0x1a10] sm:$0xff]
    %v872 = vld [vmem:[%s1 + $0x1a18] sm:$0xff]
    %v873 = vld [vmem:[%s1 + $0x1a20] sm:$0xff]
    %v874 = vld [vmem:[%s1 + $0x1a28] sm:$0xff]
    %v875 = vld [vmem:[%s1 + $0x1a30] sm:$0xff]
    %v876 = vld [vmem:[%s1 + $0x1a38] sm:$0xff]
    %v877 = vld [vmem:[%s1 + $0x1a40] sm:$0xff]
    %v878 = vld [vmem:[%s1 + $0x1a48] sm:$0xff]
    %v879 = vld [vmem:[%s1 + $0x1a50] sm:$0xff]
    %v880 = vld [vmem:[%s1 + $0x1a58] sm:$0xff]
    %v881 = vld [vmem:[%s1 + $0x1a60] sm:$0xff]
    %v882 = vld [vmem:[%s1 + $0x1a68] sm:$0xff]
    %v883 = vld [vmem:[%s1 + $0x1a70] sm:$0xff]
    %v884 = vld [vmem:[%s1 + $0x1a78] sm:$0xff]
    %v885 = vld [vmem:[%s1 + $0x1a80] sm:$0xff]
    %v886 = vld [vmem:[%s1 + $0x1a88] sm:$0xff]
    %v887 = vld [vmem:[%s1 + $0x1a90] sm:$0xff]
    %v888 = vld [vmem:[%s1 + $0x1a98] sm:$0xff]
    %v889 = vld [vmem:[%s1 + $0x1aa0] sm:$0xff]
    %v890 = vld [vmem:[%s1 + $0x1aa8] sm:$0xff]
    %v891 = vld [vmem:[%s1 + $0x1ab0] sm:$0xff]
    %v892 = vld [vmem:[%s1 + $0x1ab8] sm:$0xff]
    %v893 = vld [vmem:[%s1 + $0x1ac0] sm:$0xff]
    %v894 = vld [vmem:[%s1 + $0x1ac8] sm:$0xff]
    %v895 = vld [vmem:[%s1 + $0x1ad0] sm:$0xff]
    %v896 = vld [vmem:[%s1 + $0x1ad8] sm:$0xff]
    %v897 = vld [vmem:[%s1 + $0x1ae0] sm:$0xff]
    %v898 = vld [vmem:[%s1 + $0x1ae8] sm:$0xff]
    %v899 = vld [vmem:[%s1 + $0x1af0] sm:$0xff]
    %v900 = vld [vmem:[%s1 + $0x1af8] sm:$0xff]
    %v901 = vld [vmem:[%s1 + $0x1b00] sm:$0xff]
    %v902 = vld [vmem:[%s1 + $0x1b08] sm:$0xff]
    %v903 = vld [vmem:[%s1 + $0x1b10] sm:$0xff]
    %v904 = vld [vmem:[%s1 + $0x1b18] sm:$0xff]
    %v905 = vld [vmem:[%s1 + $0x1b20] sm:$0xff]
    %v906 = vld [vmem:[%s1 + $0x1b28] sm:$0xff]
    %v907 = vld [vmem:[%s1 + $0x1b30] sm:$0xff]
    %v908 = vld [vmem:[%s1 + $0x1b38] sm:$0xff]
    %v909 = vld [vmem:[%s1 + $0x1b40] sm:$0xff]
    %v910 = vld [vmem:[%s1 + $0x1b48] sm:$0xff]
    %v911 = vld [vmem:[%s1 + $0x1b50] sm:$0xff]
    %v912 = vld [vmem:[%s1 + $0x1b58] sm:$0xff]
    %v913 = vld [vmem:[%s1 + $0x1b60] sm:$0xff]
    %v914 = vld [vmem:[%s1 + $0x1b68] sm:$0xff]
    %v915 = vld [vmem:[%s1 + $0x1b70] sm:$0xff]
    %v916 = vld [vmem:[%s1 + $0x1b78] sm:$0xff]
    %v917 = vld [vmem:[%s1 + $0x1b80] sm:$0xff]
    %v918 = vld [vmem:[%s1 + $0x1b88] sm:$0xff]
    %v919 = vld [vmem:[%s1 + $0x1b90] sm:$0xff]
    %v920 = vld [vmem:[%s1 + $0x1b98] sm:$0xff]
    %v921 = vld [vmem:[%s1 + $0x1ba0] sm:$0xff]
    %v922 = vld [vmem:[%s1 + $0x1ba8] sm:$0xff]
    %v923 = vld [vmem:[%s1 + $0x1bb0] sm:$0xff]
    %v924 = vld [vmem:[%s1 + $0x1bb8] sm:$0xff]
    %v925 = vld [vmem:[%s1 + $0x1bc0] sm:$0xff]
    %v926 = vld [vmem:[%s1 + $0x1bc8] sm:$0xff]
    %v927 = vld [vmem:[%s1 + $0x1bd0] sm:$0xff]
    %v928 = vld [vmem:[%s1 + $0x1bd8] sm:$0xff]
    %v929 = vld [vmem:[%s1 + $0x1be0] sm:$0xff]
    %v930 = vld [vmem:[%s1 + $0x1be8] sm:$0xff]
    %v931 = vld [vmem:[%s1 + $0x1bf0] sm:$0xff]
    %v932 = vld [vmem:[%s1 + $0x1bf8] sm:$0xff]
    %v933 = vld [vmem:[%s1 + $0x1c00] sm:$0xff]
    %v934 = vld [vmem:[%s1 + $0x1c08] sm:$0xff]
    %v935 = vld [vmem:[%s1 + $0x1c10] sm:$0xff]
    %v936 = vld [vmem:[%s1 + $0x1c18] sm:$0xff]
    %v937 = vld [vmem:[%s1 + $0x1c20] sm:$0xff]
    %v938 = vld [vmem:[%s1 + $0x1c28] sm:$0xff]
    %v939 = vld [vmem:[%s1 + $0x1c30] sm:$0xff]
    %v940 = vld [vmem:[%s1 + $0x1c38] sm:$0xff]
    %v941 = vld [vmem:[%s1 + $0x1c40] sm:$0xff]
    %v942 = vld [vmem:[%s1 + $0x1c48] sm:$0xff]
    %v943 = vld [vmem:[%s1 + $0x1c50] sm:$0xff]
    %v944 = vld [vmem:[%s1 + $0x1c58] sm:$0xff]
    %v945 = vld [vmem:[%s1 + $0x1c60] sm:$0xff]
    %v946 = vld [vmem:[%s1 + $0x1c68] sm:$0xff]
    %v947 = vld [vmem:[%s1 + $0x1c70] sm:$0xff]
    %v948 = vld [vmem:[%s1 + $0x1c78] sm:$0xff]
    %v949 = vld [vmem:[%s1 + $0x1c80] sm:$0xff]
    %v950 = vld [vmem:[%s1 + $0x1c88] sm:$0xff]
    %v951 = vld [vmem:[%s1 + $0x1c90] sm:$0xff]
    %v952 = vld [vmem:[%s1 + $0x1c98] sm:$0xff]
    %v953 = vld [vmem:[%s1 + $0x1ca0] sm:$0xff]
    %v954 = vld [vmem:[%s1 + $0x1ca8] sm:$0xff]
    %v955 = vld [vmem:[%s1 + $0x1cb0] sm:$0xff]
    %v956 = vld [vmem:[%s1 + $0x1cb8] sm:$0xff]
    %v957 = vld [vmem:[%s1 + $0x1cc0] sm:$0xff]
    %v958 = vld [vmem:[%s1 + $0x1cc8] sm:$0xff]
    %v959 = vld [vmem:[%s1 + $0x1cd0] sm:$0xff]
    %v960 = vld [vmem:[%s1 + $0x1cd8] sm:$0xff]
    %v961 = vld [vmem:[%s1 + $0x1ce0] sm:$0xff]
    %v962 = vld [vmem:[%s1 + $0x1ce8] sm:$0xff]
    %v963 = vld [vmem:[%s1 + $0x1cf0] sm:$0xff]
    %v964 = vld [vmem:[%s1 + $0x1cf8] sm:$0xff]
    %v965 = vld [vmem:[%s1 + $0x1d00] sm:$0xff]
    %v966 = vld [vmem:[%s1 + $0x1d08] sm:$0xff]
    %v967 = vld [vmem:[%s1 + $0x1d10] sm:$0xff]
    %v968 = vld [vmem:[%s1 + $0x1d18] sm:$0xff]
    %v969 = vld [vmem:[%s1 + $0x1d20] sm:$0xff]
    %v970 = vld [vmem:[%s1 + $0x1d28] sm:$0xff]
    %v971 = vld [vmem:[%s1 + $0x1d30] sm:$0xff]
    %v972 = vld [vmem:[%s1 + $0x1d38] sm:$0xff]
    %v973 = vld [vmem:[%s1 + $0x1d40] sm:$0xff]
    %v974 = vld [vmem:[%s1 + $0x1d48] sm:$0xff]
    %v975 = vld [vmem:[%s1 + $0x1d50] sm:$0xff]
    %v976 = vld [vmem:[%s1 + $0x1d58] sm:$0xff]
    %v977 = vld [vmem:[%s1 + $0x1d60] sm:$0xff]
    %v978 = vld [vmem:[%s1 + $0x1d68] sm:$0xff]
    %v979 = vld [vmem:[%s1 + $0x1d70] sm:$0xff]
    %v980 = vld [vmem:[%s1 + $0x1d78] sm:$0xff]
    %v981 = vld [vmem:[%s1 + $0x1d80] sm:$0xff]
    %v982 = vld [vmem:[%s1 + $0x1d88] sm:$0xff]
    %v983 = vld [vmem:[%s1 + $0x1d90] sm:$0xff]
    %v984 = vld [vmem:[%s1 + $0x1d98] sm:$0xff]
    %v985 = vld [vmem:[%s1 + $0x1da0] sm:$0xff]
    %v986 = vld [vmem:[%s1 + $0x1da8] sm:$0xff]
    %v987 = vld [vmem:[%s1 + $0x1db0] sm:$0xff]
    %v988 = vld [vmem:[%s1 + $0x1db8] sm:$0xff]
    %v989 = vld [vmem:[%s1 + $0x1dc0] sm:$0xff]
    %v990 = vld [vmem:[%s1 + $0x1dc8] sm:$0xff]
    %v991 = vld [vmem:[%s1 + $0x1dd0] sm:$0xff]
    %v992 = vld [vmem:[%s1 + $0x1dd8] sm:$0xff]
    %v993 = vld [vmem:[%s1 + $0x1de0] sm:$0xff]
    %v994 = vld [vmem:[%s1 + $0x1de8] sm:$0xff]
    %v995 = vld [vmem:[%s1 + $0x1df0] sm:$0xff]
    %v996 = vld [vmem:[%s1 + $0x1df8] sm:$0xff]
    %v997 = vld [vmem:[%s1 + $0x1e00] sm:$0xff]
    %v998 = vld [vmem:[%s1 + $0x1e08] sm:$0xff]
    %v999 = vld [vmem:[%s1 + $0x1e10] sm:$0xff]
    %v1000 = vld [vmem:[%s1 + $0x1e18] sm:$0xff]
    %v1001 = vld [vmem:[%s1 + $0x1e20] sm:$0xff]
    %v1002 = vld [vmem:[%s1 + $0x1e28] sm:$0xff]
    %v1003 = vld [vmem:[%s1 + $0x1e30] sm:$0xff]
    %v1004 = vld [vmem:[%s1 + $0x1e38] sm:$0xff]
    %v1005 = vld [vmem:[%s1 + $0x1e40] sm:$0xff]
    %v1006 = vld [vmem:[%s1 + $0x1e48] sm:$0xff]
    %v1007 = vld [vmem:[%s1 + $0x1e50] sm:$0xff]
    %v1008 = vld [vmem:[%s1 + $0x1e58] sm:$0xff]
    %v1009 = vld [vmem:[%s1 + $0x1e60] sm:$0xff]
    %v1010 = vld [vmem:[%s1 + $0x1e68] sm:$0xff]
    %v1011 = vld [vmem:[%s1 + $0x1e70] sm:$0xff]
    %v1012 = vld [vmem:[%s1 + $0x1e78] sm:$0xff]
    %v1013 = vld [vmem:[%s1 + $0x1e80] sm:$0xff]
    %v1014 = vld [vmem:[%s1 + $0x1e88] sm:$0xff]
    %v1015 = vld [vmem:[%s1 + $0x1e90] sm:$0xff]
    %v1016 = vld [vmem:[%s1 + $0x1e98] sm:$0xff]
    %v1017 = vld [vmem:[%s1 + $0x1ea0] sm:$0xff]
    %v1018 = vld [vmem:[%s1 + $0x1ea8] sm:$0xff]
    %v1019 = vld [vmem:[%s1 + $0x1eb0] sm:$0xff]
    %v1020 = vld [vmem:[%s1 + $0x1eb8] sm:$0xff]
    %v1021 = vld [vmem:[%s1 + $0x1ec0] sm:$0xff]
    %v1022 = vld [vmem:[%s1 + $0x1ec8] sm:$0xff]
    %v1023 = vld [vmem:[%s1 + $0x1ed0] sm:$0xff]
    %v1024 = vld [vmem:[%s1 + $0x1ed8] sm:$0xff]
    %v1025 = vld [vmem:[%s1 + $0x1ee0] sm:$0xff]
    %v1026 = vld [vmem:[%s1 + $0x1ee8] sm:$0xff]
    %v1027 = vld [vmem:[%s1 + $0x1ef0] sm:$0xff]
    %v1028 = vld [vmem:[%s1 + $0x1ef8] sm:$0xff]
    %v1029 = vld [vmem:[%s1 + $0x1f00] sm:$0xff]
    %v1030 = vld [vmem:[%s1 + $0x1f08] sm:$0xff]
    %v1031 = vld [vmem:[%s1 + $0x1f10] sm:$0xff]
    %v1032 = vld [vmem:[%s1 + $0x1f18] sm:$0xff]
    %v1033 = vld [vmem:[%s1 + $0x1f20] sm:$0xff]
    %v1034 = vld [vmem:[%s1 + $0x1f28] sm:$0xff]
    %v1035 = vld [vmem:[%s1 + $0x1f30] sm:$0xff]
    %v1036 = vld [vmem:[%s1 + $0x1f38] sm:$0xff]
    %v1037 = vld [vmem:[%s1 + $0x1f40] sm:$0xff]
    %v1038 = vld [vmem:[%s1 + $0x1f48] sm:$0xff]
    %v1039 = vld [vmem:[%s1 + $0x1f50] sm:$0xff]
    %v1040 = vld [vmem:[%s1 + $0x1f58] sm:$0xff]
    %v1041 = vld [vmem:[%s1 + $0x1f60] sm:$0xff]
    %v1042 = vld [vmem:[%s1 + $0x1f68] sm:$0xff]
    %v1043 = vld [vmem:[%s1 + $0x1f70] sm:$0xff]
    %v1044 = vld [vmem:[%s1 + $0x1f78] sm:$0xff]
    %v1045 = vld [vmem:[%s1 + $0x1f80] sm:$0xff]
    %v1046 = vld [vmem:[%s1 + $0x1f88] sm:$0xff]
    %v1047 = vld [vmem:[%s1 + $0x1f90] sm:$0xff]
    %v1048 = vld [vmem:[%s1 + $0x1f98] sm:$0xff]
    %v1049 = vld [vmem:[%s1 + $0x1fa0] sm:$0xff]
    %v1050 = vld [vmem:[%s1 + $0x1fa8] sm:$0xff]
    %v1051 = vld [vmem:[%s1 + $0x1fb0] sm:$0xff]
    %v1052 = vld [vmem:[%s1 + $0x1fb8] sm:$0xff]
    %v1053 = vld [vmem:[%s1 + $0x1fc0] sm:$0xff]
    %v1054 = vld [vmem:[%s1 + $0x1fc8] sm:$0xff]
    %v1055 = vld [vmem:[%s1 + $0x1fd0] sm:$0xff]
    %v1056 = vld [vmem:[%s1 + $0x1fd8] sm:$0xff]
    %v1057 = vld [vmem:[%s1 + $0x1fe0] sm:$0xff]
    %v1058 = vld [vmem:[%s1 + $0x1fe8] sm:$0xff]
    %v1059 = vld [vmem:[%s1 + $0x1ff0] sm:$0xff]
    %v1060 = vld [vmem:[%s1 + $0x1ff8] sm:$0xff]
    %v1061 = vld [vmem:[%s2] sm:$0x1]
    %v1063 = vlaneseq
    %v1064 = vshrl.u32 %v1063, 7
    %v1065 = vsub.s32 0, %v1064
    %v1066 = vrot.slane %v1061, %v1065
    %v1084 = vcombine.high %v21, %v21
    %v1086 = vunpack.c.l.s4 1983009808
    %v1087 = vunpack.c.0.s8 %v1086
    %v1088 = vlaneseq
    %v1089 = vshrl.u32 %v1088, 7
    %v1090 = vsub.s32 %v1087, %v1089
    %v1091 = vrot.slane %v21, %v1090
    %v1093 = vunpack.c.l.s4 1983009808
    %v1094 = vunpack.c.0.s8 %v1093
    %v1095 = vlaneseq
    %v1096 = vshrl.u32 %v1095, 7
    %v1097 = vsub.s32 %v1094, %v1096
    %v1098 = vrot.slane %v1084, %v1097
    %v1099 = vcombine.high %v1091, %v1091
    %v1100 = vcombine.high %v1098, %v1098
    %v1101 = vcombine.high %v22, %v22
    %v1103 = vunpack.c.l.s4 1983009808
    %v1104 = vunpack.c.0.s8 %v1103
    %v1105 = vlaneseq
    %v1106 = vshrl.u32 %v1105, 7
    %v1107 = vsub.s32 %v1104, %v1106
    %v1108 = vrot.slane %v22, %v1107
    %v1110 = vunpack.c.l.s4 1983009808
    %v1111 = vunpack.c.0.s8 %v1110
    %v1112 = vlaneseq
    %v1113 = vshrl.u32 %v1112, 7
    %v1114 = vsub.s32 %v1111, %v1113
    %v1115 = vrot.slane %v1101, %v1114
    %v1116 = vcombine.high %v1108, %v1108
    %v1117 = vcombine.high %v1115, %v1115
    %v1118 = vcombine.high %v23, %v23
    %v1120 = vunpack.c.l.s4 1983009808
    %v1121 = vunpack.c.0.s8 %v1120
    %v1122 = vlaneseq
    %v1123 = vshrl.u32 %v1122, 7
    %v1124 = vsub.s32 %v1121, %v1123
    %v1125 = vrot.slane %v23, %v1124
    %v1127 = vunpack.c.l.s4 1983009808
    %v1128 = vunpack.c.0.s8 %v1127
    %v1129 = vlaneseq
    %v1130 = vshrl.u32 %v1129, 7
    %v1131 = vsub.s32 %v1128, %v1130
    %v1132 = vrot.slane %v1118, %v1131
    %v1133 = vcombine.high %v1125, %v1125
    %v1134 = vcombine.high %v1132, %v1132
    %v1135 = vcombine.high %v24, %v24
    %v1137 = vunpack.c.l.s4 1983009808
    %v1138 = vunpack.c.0.s8 %v1137
    %v1139 = vlaneseq
    %v1140 = vshrl.u32 %v1139, 7
    %v1141 = vsub.s32 %v1138, %v1140
    %v1142 = vrot.slane %v24, %v1141
    %v1144 = vunpack.c.l.s4 1983009808
    %v1145 = vunpack.c.0.s8 %v1144
    %v1146 = vlaneseq
    %v1147 = vshrl.u32 %v1146, 7
    %v1148 = vsub.s32 %v1145, %v1147
    %v1149 = vrot.slane %v1135, %v1148
    %v1150 = vcombine.high %v1142, %v1142
    %v1151 = vcombine.high %v1149, %v1149
    %v1152 = vcombine.high %v25, %v25
    %v1154 = vunpack.c.l.s4 1983009808
    %v1155 = vunpack.c.0.s8 %v1154
    %v1156 = vlaneseq
    %v1157 = vshrl.u32 %v1156, 7
    %v1158 = vsub.s32 %v1155, %v1157
    %v1159 = vrot.slane %v25, %v1158
    %v1161 = vunpack.c.l.s4 1983009808
    %v1162 = vunpack.c.0.s8 %v1161
    %v1163 = vlaneseq
    %v1164 = vshrl.u32 %v1163, 7
    %v1165 = vsub.s32 %v1162, %v1164
    %v1166 = vrot.slane %v1152, %v1165
    %v1167 = vcombine.high %v1159, %v1159
    %v1168 = vcombine.high %v1166, %v1166
    %v1169 = vcombine.high %v26, %v26
    %v1171 = vunpack.c.l.s4 1983009808
    %v1172 = vunpack.c.0.s8 %v1171
    %v1173 = vlaneseq
    %v1174 = vshrl.u32 %v1173, 7
    %v1175 = vsub.s32 %v1172, %v1174
    %v1176 = vrot.slane %v26, %v1175
    %v1178 = vunpack.c.l.s4 1983009808
    %v1179 = vunpack.c.0.s8 %v1178
    %v1180 = vlaneseq
    %v1181 = vshrl.u32 %v1180, 7
    %v1182 = vsub.s32 %v1179, %v1181
    %v1183 = vrot.slane %v1169, %v1182
    %v1184 = vcombine.high %v1176, %v1176
    %v1185 = vcombine.high %v1183, %v1183
    %v1186 = vcombine.high %v27, %v27
    %v1188 = vunpack.c.l.s4 1983009808
    %v1189 = vunpack.c.0.s8 %v1188
    %v1190 = vlaneseq
    %v1191 = vshrl.u32 %v1190, 7
    %v1192 = vsub.s32 %v1189, %v1191
    %v1193 = vrot.slane %v27, %v1192
    %v1195 = vunpack.c.l.s4 1983009808
    %v1196 = vunpack.c.0.s8 %v1195
    %v1197 = vlaneseq
    %v1198 = vshrl.u32 %v1197, 7
    %v1199 = vsub.s32 %v1196, %v1198
    %v1200 = vrot.slane %v1186, %v1199
    %v1201 = vcombine.high %v1193, %v1193
    %v1202 = vcombine.high %v1200, %v1200
    %v1203 = vcombine.high %v28, %v28
    %v1205 = vunpack.c.l.s4 1983009808
    %v1206 = vunpack.c.0.s8 %v1205
    %v1207 = vlaneseq
    %v1208 = vshrl.u32 %v1207, 7
    %v1209 = vsub.s32 %v1206, %v1208
    %v1210 = vrot.slane %v28, %v1209
    %v1212 = vunpack.c.l.s4 1983009808
    %v1213 = vunpack.c.0.s8 %v1212
    %v1214 = vlaneseq
    %v1215 = vshrl.u32 %v1214, 7
    %v1216 = vsub.s32 %v1213, %v1215
    %v1217 = vrot.slane %v1203, %v1216
    %v1218 = vcombine.high %v1210, %v1210
    %v1219 = vcombine.high %v1217, %v1217
    %v1220 = vcombine.high %v29, %v29
    %v1222 = vunpack.c.l.s4 1983009808
    %v1223 = vunpack.c.0.s8 %v1222
    %v1224 = vlaneseq
    %v1225 = vshrl.u32 %v1224, 7
    %v1226 = vsub.s32 %v1223, %v1225
    %v1227 = vrot.slane %v29, %v1226
    %v1229 = vunpack.c.l.s4 1983009808
    %v1230 = vunpack.c.0.s8 %v1229
    %v1231 = vlaneseq
    %v1232 = vshrl.u32 %v1231, 7
    %v1233 = vsub.s32 %v1230, %v1232
    %v1234 = vrot.slane %v1220, %v1233
    %v1235 = vcombine.high %v1227, %v1227
    %v1236 = vcombine.high %v1234, %v1234
    %v1237 = vcombine.high %v30, %v30
    %v1239 = vunpack.c.l.s4 1983009808
    %v1240 = vunpack.c.0.s8 %v1239
    %v1241 = vlaneseq
    %v1242 = vshrl.u32 %v1241, 7
    %v1243 = vsub.s32 %v1240, %v1242
    %v1244 = vrot.slane %v30, %v1243
    %v1246 = vunpack.c.l.s4 1983009808
    %v1247 = vunpack.c.0.s8 %v1246
    %v1248 = vlaneseq
    %v1249 = vshrl.u32 %v1248, 7
    %v1250 = vsub.s32 %v1247, %v1249
    %v1251 = vrot.slane %v1237, %v1250
    %v1252 = vcombine.high %v1244, %v1244
    %v1253 = vcombine.high %v1251, %v1251
    %v1254 = vcombine.high %v31, %v31
    %v1256 = vunpack.c.l.s4 1983009808
    %v1257 = vunpack.c.0.s8 %v1256
    %v1258 = vlaneseq
    %v1259 = vshrl.u32 %v1258, 7
    %v1260 = vsub.s32 %v1257, %v1259
    %v1261 = vrot.slane %v31, %v1260
    %v1263 = vunpack.c.l.s4 1983009808
    %v1264 = vunpack.c.0.s8 %v1263
    %v1265 = vlaneseq
    %v1266 = vshrl.u32 %v1265, 7
    %v1267 = vsub.s32 %v1264, %v1266
    %v1268 = vrot.slane %v1254, %v1267
    %v1269 = vcombine.high %v1261, %v1261
    %v1270 = vcombine.high %v1268, %v1268
    %v1271 = vcombine.high %v32, %v32
    %v1273 = vunpack.c.l.s4 1983009808
    %v1274 = vunpack.c.0.s8 %v1273
    %v1275 = vlaneseq
    %v1276 = vshrl.u32 %v1275, 7
    %v1277 = vsub.s32 %v1274, %v1276
    %v1278 = vrot.slane %v32, %v1277
    %v1280 = vunpack.c.l.s4 1983009808
    %v1281 = vunpack.c.0.s8 %v1280
    %v1282 = vlaneseq
    %v1283 = vshrl.u32 %v1282, 7
    %v1284 = vsub.s32 %v1281, %v1283
    %v1285 = vrot.slane %v1271, %v1284
    %v1286 = vcombine.high %v1278, %v1278
    %v1287 = vcombine.high %v1285, %v1285
    %v1288 = vcombine.high %v33, %v33
    %v1290 = vunpack.c.l.s4 1983009808
    %v1291 = vunpack.c.0.s8 %v1290
    %v1292 = vlaneseq
    %v1293 = vshrl.u32 %v1292, 7
    %v1294 = vsub.s32 %v1291, %v1293
    %v1295 = vrot.slane %v33, %v1294
    %v1297 = vunpack.c.l.s4 1983009808
    %v1298 = vunpack.c.0.s8 %v1297
    %v1299 = vlaneseq
    %v1300 = vshrl.u32 %v1299, 7
    %v1301 = vsub.s32 %v1298, %v1300
    %v1302 = vrot.slane %v1288, %v1301
    %v1303 = vcombine.high %v1295, %v1295
    %v1304 = vcombine.high %v1302, %v1302
    %v1305 = vcombine.high %v34, %v34
    %v1307 = vunpack.c.l.s4 1983009808
    %v1308 = vunpack.c.0.s8 %v1307
    %v1309 = vlaneseq
    %v1310 = vshrl.u32 %v1309, 7
    %v1311 = vsub.s32 %v1308, %v1310
    %v1312 = vrot.slane %v34, %v1311
    %v1314 = vunpack.c.l.s4 1983009808
    %v1315 = vunpack.c.0.s8 %v1314
    %v1316 = vlaneseq
    %v1317 = vshrl.u32 %v1316, 7
    %v1318 = vsub.s32 %v1315, %v1317
    %v1319 = vrot.slane %v1305, %v1318
    %v1320 = vcombine.high %v1312, %v1312
    %v1321 = vcombine.high %v1319, %v1319
    %v1322 = vcombine.high %v35, %v35
    %v1324 = vunpack.c.l.s4 1983009808
    %v1325 = vunpack.c.0.s8 %v1324
    %v1326 = vlaneseq
    %v1327 = vshrl.u32 %v1326, 7
    %v1328 = vsub.s32 %v1325, %v1327
    %v1329 = vrot.slane %v35, %v1328
    %v1331 = vunpack.c.l.s4 1983009808
    %v1332 = vunpack.c.0.s8 %v1331
    %v1333 = vlaneseq
    %v1334 = vshrl.u32 %v1333, 7
    %v1335 = vsub.s32 %v1332, %v1334
    %v1336 = vrot.slane %v1322, %v1335
    %v1337 = vcombine.high %v1329, %v1329
    %v1338 = vcombine.high %v1336, %v1336
    %v1339 = vcombine.high %v36, %v36
    %v1341 = vunpack.c.l.s4 1983009808
    %v1342 = vunpack.c.0.s8 %v1341
    %v1343 = vlaneseq
    %v1344 = vshrl.u32 %v1343, 7
    %v1345 = vsub.s32 %v1342, %v1344
    %v1346 = vrot.slane %v36, %v1345
    %v1348 = vunpack.c.l.s4 1983009808
    %v1349 = vunpack.c.0.s8 %v1348
    %v1350 = vlaneseq
    %v1351 = vshrl.u32 %v1350, 7
    %v1352 = vsub.s32 %v1349, %v1351
    %v1353 = vrot.slane %v1339, %v1352
    %v1354 = vcombine.high %v1346, %v1346
    %v1355 = vcombine.high %v1353, %v1353
    %1420 = vmatprep.subr.mxu0 0.0
    %1421 = vmatpush1.msra.mxu0 %v52
    %1422 = vmatprep.subr.mxu0 0.0
    %1423 = vmatpush1.msra.mxu0 %v51
    %1424 = vmatprep.subr.mxu0 0.0
    %1425 = vmatpush1.msra.mxu0 %v50
    %1426 = vmatprep.subr.mxu0 0.0
    %1427 = vmatpush1.msra.mxu0 %v49
    %1428 = vmatprep.subr.mxu0 0.0
    %1429 = vmatpush1.msra.mxu0 %v48
    %1430 = vmatprep.subr.mxu0 0.0
    %1431 = vmatpush1.msra.mxu0 %v47
    %1432 = vmatprep.subr.mxu0 0.0
    %1433 = vmatpush1.msra.mxu0 %v46
    %1434 = vmatprep.subr.mxu0 0.0
    %1435 = vmatpush1.msra.mxu0 %v45
    %1436 = vmatprep.subr.mxu0 0.0
    %1437 = vmatpush1.msra.mxu0 %v44
    %1438 = vmatprep.subr.mxu0 0.0
    %1439 = vmatpush1.msra.mxu0 %v43
    %1440 = vmatprep.subr.mxu0 0.0
    %1441 = vmatpush1.msra.mxu0 %v42
    %1442 = vmatprep.subr.mxu0 0.0
    %1443 = vmatpush1.msra.mxu0 %v41
    %1444 = vmatprep.subr.mxu0 0.0
    %1445 = vmatpush1.msra.mxu0 %v40
    %1446 = vmatprep.subr.mxu0 0.0
    %1447 = vmatpush1.msra.mxu0 %v39
    %1448 = vmatprep.subr.mxu0 0.0
    %1449 = vmatpush1.msra.mxu0 %v38
    %1450 = vmatprep.subr.mxu0 0.0
    %1451 = vmatpush1.msra.mxu0 %v37
    %1452 = vmatprep.subr.mxu0 0.0
    %1453 = vmatpush2.msra.mxu0 %v68
    %1454 = vmatprep.subr.mxu0 0.0
    %1455 = vmatpush2.msra.mxu0 %v67
    %1456 = vmatprep.subr.mxu0 0.0
    %1457 = vmatpush2.msra.mxu0 %v66
    %1458 = vmatprep.subr.mxu0 0.0
    %1459 = vmatpush2.msra.mxu0 %v65
    %1460 = vmatprep.subr.mxu0 0.0
    %1461 = vmatpush2.msra.mxu0 %v64
    %1462 = vmatprep.subr.mxu0 0.0
    %1463 = vmatpush2.msra.mxu0 %v63
    %1464 = vmatprep.subr.mxu0 0.0
    %1465 = vmatpush2.msra.mxu0 %v62
    %1466 = vmatprep.subr.mxu0 0.0
    %1467 = vmatpush2.msra.mxu0 %v61
    %1468 = vmatprep.subr.mxu0 0.0
    %1469 = vmatpush2.msra.mxu0 %v60
    %1470 = vmatprep.subr.mxu0 0.0
    %1471 = vmatpush2.msra.mxu0 %v59
    %1472 = vmatprep.subr.mxu0 0.0
    %1473 = vmatpush2.msra.mxu0 %v58
    %1474 = vmatprep.subr.mxu0 0.0
    %1475 = vmatpush2.msra.mxu0 %v57
    %1476 = vmatprep.subr.mxu0 0.0
    %1477 = vmatpush2.msra.mxu0 %v56
    %1478 = vmatprep.subr.mxu0 0.0
    %1479 = vmatpush2.msra.mxu0 %v55
    %1480 = vmatprep.subr.mxu0 0.0
    %1481 = vmatpush2.msra.mxu0 %v54
    %1482 = vmatprep.subr.mxu0 0.0
    %1483 = vmatpush2.msra.mxu0 %v53
    %1484 = vmatprep.mubr.f32.mxu0 %v1099
    %1485 = vmatmul.mubr.f32.gmra.mxu0 %v1091
    %v1486 = vpop.f32.mrf.mxu0
    %v1487 = vadd.f32 %v1066, %v1486
    %v1488 = vpop.f32.mrf.mxu0
    %1489 = vdwg.mxu0
    %1490 = vmatprep.subr.mxu0 0.0
    %1491 = vmatpush1.msra.mxu0 %v84
    %1492 = vmatprep.subr.mxu0 0.0
    %1493 = vmatpush1.msra.mxu0 %v83
    %1494 = vmatprep.subr.mxu0 0.0
    %1495 = vmatpush1.msra.mxu0 %v82
    %1496 = vmatprep.subr.mxu0 0.0
    %1497 = vmatpush1.msra.mxu0 %v81
    %1498 = vmatprep.subr.mxu0 0.0
    %1499 = vmatpush1.msra.mxu0 %v80
    %1500 = vmatprep.subr.mxu0 0.0
    %1501 = vmatpush1.msra.mxu0 %v79
    %1502 = vmatprep.subr.mxu0 0.0
    %1503 = vmatpush1.msra.mxu0 %v78
    %1504 = vmatprep.subr.mxu0 0.0
    %1505 = vmatpush1.msra.mxu0 %v77
    %1506 = vmatprep.subr.mxu0 0.0
    %1507 = vmatpush1.msra.mxu0 %v76
    %1508 = vmatprep.subr.mxu0 0.0
    %1509 = vmatpush1.msra.mxu0 %v75
    %1510 = vmatprep.subr.mxu0 0.0
    %1511 = vmatpush1.msra.mxu0 %v74
    %1512 = vmatprep.subr.mxu0 0.0
    %1513 = vmatpush1.msra.mxu0 %v73
    %1514 = vmatprep.subr.mxu0 0.0
    %1515 = vmatpush1.msra.mxu0 %v72
    %1516 = vmatprep.subr.mxu0 0.0
    %1517 = vmatpush1.msra.mxu0 %v71
    %1518 = vmatprep.subr.mxu0 0.0
    %1519 = vmatpush1.msra.mxu0 %v70
    %1520 = vmatprep.subr.mxu0 0.0
    %1521 = vmatpush1.msra.mxu0 %v69
    %1522 = vmatprep.subr.mxu0 0.0
    %1523 = vmatpush2.msra.mxu0 %v100
    %1524 = vmatprep.subr.mxu0 0.0
    %1525 = vmatpush2.msra.mxu0 %v99
    %1526 = vmatprep.subr.mxu0 0.0
    %1527 = vmatpush2.msra.mxu0 %v98
    %1528 = vmatprep.subr.mxu0 0.0
    %1529 = vmatpush2.msra.mxu0 %v97
    %1530 = vmatprep.subr.mxu0 0.0
    %1531 = vmatpush2.msra.mxu0 %v96
    %1532 = vmatprep.subr.mxu0 0.0
    %1533 = vmatpush2.msra.mxu0 %v95
    %1534 = vmatprep.subr.mxu0 0.0
    %1535 = vmatpush2.msra.mxu0 %v94
    %1536 = vmatprep.subr.mxu0 0.0
    %1537 = vmatpush2.msra.mxu0 %v93
    %1538 = vmatprep.subr.mxu0 0.0
    %1539 = vmatpush2.msra.mxu0 %v92
    %1540 = vmatprep.subr.mxu0 0.0
    %1541 = vmatpush2.msra.mxu0 %v91
    %1542 = vmatprep.subr.mxu0 0.0
    %1543 = vmatpush2.msra.mxu0 %v90
    %1544 = vmatprep.subr.mxu0 0.0
    %1545 = vmatpush2.msra.mxu0 %v89
    %1546 = vmatprep.subr.mxu0 0.0
    %1547 = vmatpush2.msra.mxu0 %v88
    %1548 = vmatprep.subr.mxu0 0.0
    %1549 = vmatpush2.msra.mxu0 %v87
    %1550 = vmatprep.subr.mxu0 0.0
    %1551 = vmatpush2.msra.mxu0 %v86
    %1552 = vmatprep.subr.mxu0 0.0
    %1553 = vmatpush2.msra.mxu0 %v85
    %1554 = vmatprep.mubr.f32.mxu0 %v1100
    %1555 = vmatmul.mubr.f32.gmra.mxu0 %v1098
    %v1556 = vpop.f32.mrf.mxu0
    %v1557 = vadd.f32 %v1487, %v1556
    %v1558 = vpop.f32.mrf.mxu0
    %1559 = vdwg.mxu0
    %1560 = vmatprep.subr.mxu0 0.0
    %1561 = vmatpush1.msra.mxu0 %v116
    %1562 = vmatprep.subr.mxu0 0.0
    %1563 = vmatpush1.msra.mxu0 %v115
    %1564 = vmatprep.subr.mxu0 0.0
    %1565 = vmatpush1.msra.mxu0 %v114
    %1566 = vmatprep.subr.mxu0 0.0
    %1567 = vmatpush1.msra.mxu0 %v113
    %1568 = vmatprep.subr.mxu0 0.0
    %1569 = vmatpush1.msra.mxu0 %v112
    %1570 = vmatprep.subr.mxu0 0.0
    %1571 = vmatpush1.msra.mxu0 %v111
    %1572 = vmatprep.subr.mxu0 0.0
    %1573 = vmatpush1.msra.mxu0 %v110
    %1574 = vmatprep.subr.mxu0 0.0
    %1575 = vmatpush1.msra.mxu0 %v109
    %1576 = vmatprep.subr.mxu0 0.0
    %1577 = vmatpush1.msra.mxu0 %v108
    %1578 = vmatprep.subr.mxu0 0.0
    %1579 = vmatpush1.msra.mxu0 %v107
    %1580 = vmatprep.subr.mxu0 0.0
    %1581 = vmatpush1.msra.mxu0 %v106
    %1582 = vmatprep.subr.mxu0 0.0
    %1583 = vmatpush1.msra.mxu0 %v105
    %1584 = vmatprep.subr.mxu0 0.0
    %1585 = vmatpush1.msra.mxu0 %v104
    %1586 = vmatprep.subr.mxu0 0.0
    %1587 = vmatpush1.msra.mxu0 %v103
    %1588 = vmatprep.subr.mxu0 0.0
    %1589 = vmatpush1.msra.mxu0 %v102
    %1590 = vmatprep.subr.mxu0 0.0
    %1591 = vmatpush1.msra.mxu0 %v101
    %1592 = vmatprep.subr.mxu0 0.0
    %1593 = vmatpush2.msra.mxu0 %v132
    %1594 = vmatprep.subr.mxu0 0.0
    %1595 = vmatpush2.msra.mxu0 %v131
    %1596 = vmatprep.subr.mxu0 0.0
    %1597 = vmatpush2.msra.mxu0 %v130
    %1598 = vmatprep.subr.mxu0 0.0
    %1599 = vmatpush2.msra.mxu0 %v129
    %1600 = vmatprep.subr.mxu0 0.0
    %1601 = vmatpush2.msra.mxu0 %v128
    %1602 = vmatprep.subr.mxu0 0.0
    %1603 = vmatpush2.msra.mxu0 %v127
    %1604 = vmatprep.subr.mxu0 0.0
    %1605 = vmatpush2.msra.mxu0 %v126
    %1606 = vmatprep.subr.mxu0 0.0
    %1607 = vmatpush2.msra.mxu0 %v125
    %1608 = vmatprep.subr.mxu0 0.0
    %1609 = vmatpush2.msra.mxu0 %v124
    %1610 = vmatprep.subr.mxu0 0.0
    %1611 = vmatpush2.msra.mxu0 %v123
    %1612 = vmatprep.subr.mxu0 0.0
    %1613 = vmatpush2.msra.mxu0 %v122
    %1614 = vmatprep.subr.mxu0 0.0
    %1615 = vmatpush2.msra.mxu0 %v121
    %1616 = vmatprep.subr.mxu0 0.0
    %1617 = vmatpush2.msra.mxu0 %v120
    %1618 = vmatprep.subr.mxu0 0.0
    %1619 = vmatpush2.msra.mxu0 %v119
    %1620 = vmatprep.subr.mxu0 0.0
    %1621 = vmatpush2.msra.mxu0 %v118
    %1622 = vmatprep.subr.mxu0 0.0
    %1623 = vmatpush2.msra.mxu0 %v117
    %1624 = vmatprep.mubr.f32.mxu0 %v1116
    %1625 = vmatmul.mubr.f32.gmra.mxu0 %v1108
    %v1626 = vpop.f32.mrf.mxu0
    %v1627 = vadd.f32 %v1557, %v1626
    %v1628 = vpop.f32.mrf.mxu0
    %1629 = vdwg.mxu0
    %1630 = vmatprep.subr.mxu0 0.0
    %1631 = vmatpush1.msra.mxu0 %v148
    %1632 = vmatprep.subr.mxu0 0.0
    %1633 = vmatpush1.msra.mxu0 %v147
    %1634 = vmatprep.subr.mxu0 0.0
    %1635 = vmatpush1.msra.mxu0 %v146
    %1636 = vmatprep.subr.mxu0 0.0
    %1637 = vmatpush1.msra.mxu0 %v145
    %1638 = vmatprep.subr.mxu0 0.0
    %1639 = vmatpush1.msra.mxu0 %v144
    %1640 = vmatprep.subr.mxu0 0.0
    %1641 = vmatpush1.msra.mxu0 %v143
    %1642 = vmatprep.subr.mxu0 0.0
    %1643 = vmatpush1.msra.mxu0 %v142
    %1644 = vmatprep.subr.mxu0 0.0
    %1645 = vmatpush1.msra.mxu0 %v141
    %1646 = vmatprep.subr.mxu0 0.0
    %1647 = vmatpush1.msra.mxu0 %v140
    %1648 = vmatprep.subr.mxu0 0.0
    %1649 = vmatpush1.msra.mxu0 %v139
    %1650 = vmatprep.subr.mxu0 0.0
    %1651 = vmatpush1.msra.mxu0 %v138
    %1652 = vmatprep.subr.mxu0 0.0
    %1653 = vmatpush1.msra.mxu0 %v137
    %1654 = vmatprep.subr.mxu0 0.0
    %1655 = vmatpush1.msra.mxu0 %v136
    %1656 = vmatprep.subr.mxu0 0.0
    %1657 = vmatpush1.msra.mxu0 %v135
    %1658 = vmatprep.subr.mxu0 0.0
    %1659 = vmatpush1.msra.mxu0 %v134
    %1660 = vmatprep.subr.mxu0 0.0
    %1661 = vmatpush1.msra.mxu0 %v133
    %1662 = vmatprep.subr.mxu0 0.0
    %1663 = vmatpush2.msra.mxu0 %v164
    %1664 = vmatprep.subr.mxu0 0.0
    %1665 = vmatpush2.msra.mxu0 %v163
    %1666 = vmatprep.subr.mxu0 0.0
    %1667 = vmatpush2.msra.mxu0 %v162
    %1668 = vmatprep.subr.mxu0 0.0
    %1669 = vmatpush2.msra.mxu0 %v161
    %1670 = vmatprep.subr.mxu0 0.0
    %1671 = vmatpush2.msra.mxu0 %v160
    %1672 = vmatprep.subr.mxu0 0.0
    %1673 = vmatpush2.msra.mxu0 %v159
    %1674 = vmatprep.subr.mxu0 0.0
    %1675 = vmatpush2.msra.mxu0 %v158
    %1676 = vmatprep.subr.mxu0 0.0
    %1677 = vmatpush2.msra.mxu0 %v157
    %1678 = vmatprep.subr.mxu0 0.0
    %1679 = vmatpush2.msra.mxu0 %v156
    %1680 = vmatprep.subr.mxu0 0.0
    %1681 = vmatpush2.msra.mxu0 %v155
    %1682 = vmatprep.subr.mxu0 0.0
    %1683 = vmatpush2.msra.mxu0 %v154
    %1684 = vmatprep.subr.mxu0 0.0
    %1685 = vmatpush2.msra.mxu0 %v153
    %1686 = vmatprep.subr.mxu0 0.0
    %1687 = vmatpush2.msra.mxu0 %v152
    %1688 = vmatprep.subr.mxu0 0.0
    %1689 = vmatpush2.msra.mxu0 %v151
    %1690 = vmatprep.subr.mxu0 0.0
    %1691 = vmatpush2.msra.mxu0 %v150
    %1692 = vmatprep.subr.mxu0 0.0
    %1693 = vmatpush2.msra.mxu0 %v149
    %1694 = vmatprep.mubr.f32.mxu0 %v1117
    %1695 = vmatmul.mubr.f32.gmra.mxu0 %v1115
    %v1696 = vpop.f32.mrf.mxu0
    %v1697 = vadd.f32 %v1627, %v1696
    %v1698 = vpop.f32.mrf.mxu0
    %1699 = vdwg.mxu0
    %1700 = vmatprep.subr.mxu0 0.0
    %1701 = vmatpush1.msra.mxu0 %v180
    %1702 = vmatprep.subr.mxu0 0.0
    %1703 = vmatpush1.msra.mxu0 %v179
    %1704 = vmatprep.subr.mxu0 0.0
    %1705 = vmatpush1.msra.mxu0 %v178
    %1706 = vmatprep.subr.mxu0 0.0
    %1707 = vmatpush1.msra.mxu0 %v177
    %1708 = vmatprep.subr.mxu0 0.0
    %1709 = vmatpush1.msra.mxu0 %v176
    %1710 = vmatprep.subr.mxu0 0.0
    %1711 = vmatpush1.msra.mxu0 %v175
    %1712 = vmatprep.subr.mxu0 0.0
    %1713 = vmatpush1.msra.mxu0 %v174
    %1714 = vmatprep.subr.mxu0 0.0
    %1715 = vmatpush1.msra.mxu0 %v173
    %1716 = vmatprep.subr.mxu0 0.0
    %1717 = vmatpush1.msra.mxu0 %v172
    %1718 = vmatprep.subr.mxu0 0.0
    %1719 = vmatpush1.msra.mxu0 %v171
    %1720 = vmatprep.subr.mxu0 0.0
    %1721 = vmatpush1.msra.mxu0 %v170
    %1722 = vmatprep.subr.mxu0 0.0
    %1723 = vmatpush1.msra.mxu0 %v169
    %1724 = vmatprep.subr.mxu0 0.0
    %1725 = vmatpush1.msra.mxu0 %v168
    %1726 = vmatprep.subr.mxu0 0.0
    %1727 = vmatpush1.msra.mxu0 %v167
    %1728 = vmatprep.subr.mxu0 0.0
    %1729 = vmatpush1.msra.mxu0 %v166
    %1730 = vmatprep.subr.mxu0 0.0
    %1731 = vmatpush1.msra.mxu0 %v165
    %1732 = vmatprep.subr.mxu0 0.0
    %1733 = vmatpush2.msra.mxu0 %v196
    %1734 = vmatprep.subr.mxu0 0.0
    %1735 = vmatpush2.msra.mxu0 %v195
    %1736 = vmatprep.subr.mxu0 0.0
    %1737 = vmatpush2.msra.mxu0 %v194
    %1738 = vmatprep.subr.mxu0 0.0
    %1739 = vmatpush2.msra.mxu0 %v193
    %1740 = vmatprep.subr.mxu0 0.0
    %1741 = vmatpush2.msra.mxu0 %v192
    %1742 = vmatprep.subr.mxu0 0.0
    %1743 = vmatpush2.msra.mxu0 %v191
    %1744 = vmatprep.subr.mxu0 0.0
    %1745 = vmatpush2.msra.mxu0 %v190
    %1746 = vmatprep.subr.mxu0 0.0
    %1747 = vmatpush2.msra.mxu0 %v189
    %1748 = vmatprep.subr.mxu0 0.0
    %1749 = vmatpush2.msra.mxu0 %v188
    %1750 = vmatprep.subr.mxu0 0.0
    %1751 = vmatpush2.msra.mxu0 %v187
    %1752 = vmatprep.subr.mxu0 0.0
    %1753 = vmatpush2.msra.mxu0 %v186
    %1754 = vmatprep.subr.mxu0 0.0
    %1755 = vmatpush2.msra.mxu0 %v185
    %1756 = vmatprep.subr.mxu0 0.0
    %1757 = vmatpush2.msra.mxu0 %v184
    %1758 = vmatprep.subr.mxu0 0.0
    %1759 = vmatpush2.msra.mxu0 %v183
    %1760 = vmatprep.subr.mxu0 0.0
    %1761 = vmatpush2.msra.mxu0 %v182
    %1762 = vmatprep.subr.mxu0 0.0
    %1763 = vmatpush2.msra.mxu0 %v181
    %1764 = vmatprep.mubr.f32.mxu0 %v1133
    %1765 = vmatmul.mubr.f32.gmra.mxu0 %v1125
    %v1766 = vpop.f32.mrf.mxu0
    %v1767 = vadd.f32 %v1697, %v1766
    %v1768 = vpop.f32.mrf.mxu0
    %1769 = vdwg.mxu0
    %1770 = vmatprep.subr.mxu0 0.0
    %1771 = vmatpush1.msra.mxu0 %v212
    %1772 = vmatprep.subr.mxu0 0.0
    %1773 = vmatpush1.msra.mxu0 %v211
    %1774 = vmatprep.subr.mxu0 0.0
    %1775 = vmatpush1.msra.mxu0 %v210
    %1776 = vmatprep.subr.mxu0 0.0
    %1777 = vmatpush1.msra.mxu0 %v209
    %1778 = vmatprep.subr.mxu0 0.0
    %1779 = vmatpush1.msra.mxu0 %v208
    %1780 = vmatprep.subr.mxu0 0.0
    %1781 = vmatpush1.msra.mxu0 %v207
    %1782 = vmatprep.subr.mxu0 0.0
    %1783 = vmatpush1.msra.mxu0 %v206
    %1784 = vmatprep.subr.mxu0 0.0
    %1785 = vmatpush1.msra.mxu0 %v205
    %1786 = vmatprep.subr.mxu0 0.0
    %1787 = vmatpush1.msra.mxu0 %v204
    %1788 = vmatprep.subr.mxu0 0.0
    %1789 = vmatpush1.msra.mxu0 %v203
    %1790 = vmatprep.subr.mxu0 0.0
    %1791 = vmatpush1.msra.mxu0 %v202
    %1792 = vmatprep.subr.mxu0 0.0
    %1793 = vmatpush1.msra.mxu0 %v201
    %1794 = vmatprep.subr.mxu0 0.0
    %1795 = vmatpush1.msra.mxu0 %v200
    %1796 = vmatprep.subr.mxu0 0.0
    %1797 = vmatpush1.msra.mxu0 %v199
    %1798 = vmatprep.subr.mxu0 0.0
    %1799 = vmatpush1.msra.mxu0 %v198
    %1800 = vmatprep.subr.mxu0 0.0
    %1801 = vmatpush1.msra.mxu0 %v197
    %1802 = vmatprep.subr.mxu0 0.0
    %1803 = vmatpush2.msra.mxu0 %v228
    %1804 = vmatprep.subr.mxu0 0.0
    %1805 = vmatpush2.msra.mxu0 %v227
    %1806 = vmatprep.subr.mxu0 0.0
    %1807 = vmatpush2.msra.mxu0 %v226
    %1808 = vmatprep.subr.mxu0 0.0
    %1809 = vmatpush2.msra.mxu0 %v225
    %1810 = vmatprep.subr.mxu0 0.0
    %1811 = vmatpush2.msra.mxu0 %v224
    %1812 = vmatprep.subr.mxu0 0.0
    %1813 = vmatpush2.msra.mxu0 %v223
    %1814 = vmatprep.subr.mxu0 0.0
    %1815 = vmatpush2.msra.mxu0 %v222
    %1816 = vmatprep.subr.mxu0 0.0
    %1817 = vmatpush2.msra.mxu0 %v221
    %1818 = vmatprep.subr.mxu0 0.0
    %1819 = vmatpush2.msra.mxu0 %v220
    %1820 = vmatprep.subr.mxu0 0.0
    %1821 = vmatpush2.msra.mxu0 %v219
    %1822 = vmatprep.subr.mxu0 0.0
    %1823 = vmatpush2.msra.mxu0 %v218
    %1824 = vmatprep.subr.mxu0 0.0
    %1825 = vmatpush2.msra.mxu0 %v217
    %1826 = vmatprep.subr.mxu0 0.0
    %1827 = vmatpush2.msra.mxu0 %v216
    %1828 = vmatprep.subr.mxu0 0.0
    %1829 = vmatpush2.msra.mxu0 %v215
    %1830 = vmatprep.subr.mxu0 0.0
    %1831 = vmatpush2.msra.mxu0 %v214
    %1832 = vmatprep.subr.mxu0 0.0
    %1833 = vmatpush2.msra.mxu0 %v213
    %1834 = vmatprep.mubr.f32.mxu0 %v1134
    %1835 = vmatmul.mubr.f32.gmra.mxu0 %v1132
    %v1836 = vpop.f32.mrf.mxu0
    %v1837 = vadd.f32 %v1767, %v1836
    %v1838 = vpop.f32.mrf.mxu0
    %1839 = vdwg.mxu0
    %1840 = vmatprep.subr.mxu0 0.0
    %1841 = vmatpush1.msra.mxu0 %v244
    %1842 = vmatprep.subr.mxu0 0.0
    %1843 = vmatpush1.msra.mxu0 %v243
    %1844 = vmatprep.subr.mxu0 0.0
    %1845 = vmatpush1.msra.mxu0 %v242
    %1846 = vmatprep.subr.mxu0 0.0
    %1847 = vmatpush1.msra.mxu0 %v241
    %1848 = vmatprep.subr.mxu0 0.0
    %1849 = vmatpush1.msra.mxu0 %v240
    %1850 = vmatprep.subr.mxu0 0.0
    %1851 = vmatpush1.msra.mxu0 %v239
    %1852 = vmatprep.subr.mxu0 0.0
    %1853 = vmatpush1.msra.mxu0 %v238
    %1854 = vmatprep.subr.mxu0 0.0
    %1855 = vmatpush1.msra.mxu0 %v237
    %1856 = vmatprep.subr.mxu0 0.0
    %1857 = vmatpush1.msra.mxu0 %v236
    %1858 = vmatprep.subr.mxu0 0.0
    %1859 = vmatpush1.msra.mxu0 %v235
    %1860 = vmatprep.subr.mxu0 0.0
    %1861 = vmatpush1.msra.mxu0 %v234
    %1862 = vmatprep.subr.mxu0 0.0
    %1863 = vmatpush1.msra.mxu0 %v233
    %1864 = vmatprep.subr.mxu0 0.0
    %1865 = vmatpush1.msra.mxu0 %v232
    %1866 = vmatprep.subr.mxu0 0.0
    %1867 = vmatpush1.msra.mxu0 %v231
    %1868 = vmatprep.subr.mxu0 0.0
    %1869 = vmatpush1.msra.mxu0 %v230
    %1870 = vmatprep.subr.mxu0 0.0
    %1871 = vmatpush1.msra.mxu0 %v229
    %1872 = vmatprep.subr.mxu0 0.0
    %1873 = vmatpush2.msra.mxu0 %v260
    %1874 = vmatprep.subr.mxu0 0.0
    %1875 = vmatpush2.msra.mxu0 %v259
    %1876 = vmatprep.subr.mxu0 0.0
    %1877 = vmatpush2.msra.mxu0 %v258
    %1878 = vmatprep.subr.mxu0 0.0
    %1879 = vmatpush2.msra.mxu0 %v257
    %1880 = vmatprep.subr.mxu0 0.0
    %1881 = vmatpush2.msra.mxu0 %v256
    %1882 = vmatprep.subr.mxu0 0.0
    %1883 = vmatpush2.msra.mxu0 %v255
    %1884 = vmatprep.subr.mxu0 0.0
    %1885 = vmatpush2.msra.mxu0 %v254
    %1886 = vmatprep.subr.mxu0 0.0
    %1887 = vmatpush2.msra.mxu0 %v253
    %1888 = vmatprep.subr.mxu0 0.0
    %1889 = vmatpush2.msra.mxu0 %v252
    %1890 = vmatprep.subr.mxu0 0.0
    %1891 = vmatpush2.msra.mxu0 %v251
    %1892 = vmatprep.subr.mxu0 0.0
    %1893 = vmatpush2.msra.mxu0 %v250
    %1894 = vmatprep.subr.mxu0 0.0
    %1895 = vmatpush2.msra.mxu0 %v249
    %1896 = vmatprep.subr.mxu0 0.0
    %1897 = vmatpush2.msra.mxu0 %v248
    %1898 = vmatprep.subr.mxu0 0.0
    %1899 = vmatpush2.msra.mxu0 %v247
    %1900 = vmatprep.subr.mxu0 0.0
    %1901 = vmatpush2.msra.mxu0 %v246
    %1902 = vmatprep.subr.mxu0 0.0
    %1903 = vmatpush2.msra.mxu0 %v245
    %1904 = vmatprep.mubr.f32.mxu0 %v1150
    %1905 = vmatmul.mubr.f32.gmra.mxu0 %v1142
    %v1906 = vpop.f32.mrf.mxu0
    %v1907 = vadd.f32 %v1837, %v1906
    %v1908 = vpop.f32.mrf.mxu0
    %1909 = vdwg.mxu0
    %1910 = vmatprep.subr.mxu0 0.0
    %1911 = vmatpush1.msra.mxu0 %v276
    %1912 = vmatprep.subr.mxu0 0.0
    %1913 = vmatpush1.msra.mxu0 %v275
    %1914 = vmatprep.subr.mxu0 0.0
    %1915 = vmatpush1.msra.mxu0 %v274
    %1916 = vmatprep.subr.mxu0 0.0
    %1917 = vmatpush1.msra.mxu0 %v273
    %1918 = vmatprep.subr.mxu0 0.0
    %1919 = vmatpush1.msra.mxu0 %v272
    %1920 = vmatprep.subr.mxu0 0.0
    %1921 = vmatpush1.msra.mxu0 %v271
    %1922 = vmatprep.subr.mxu0 0.0
    %1923 = vmatpush1.msra.mxu0 %v270
    %1924 = vmatprep.subr.mxu0 0.0
    %1925 = vmatpush1.msra.mxu0 %v269
    %1926 = vmatprep.subr.mxu0 0.0
    %1927 = vmatpush1.msra.mxu0 %v268
    %1928 = vmatprep.subr.mxu0 0.0
    %1929 = vmatpush1.msra.mxu0 %v267
    %1930 = vmatprep.subr.mxu0 0.0
    %1931 = vmatpush1.msra.mxu0 %v266
    %1932 = vmatprep.subr.mxu0 0.0
    %1933 = vmatpush1.msra.mxu0 %v265
    %1934 = vmatprep.subr.mxu0 0.0
    %1935 = vmatpush1.msra.mxu0 %v264
    %1936 = vmatprep.subr.mxu0 0.0
    %1937 = vmatpush1.msra.mxu0 %v263
    %1938 = vmatprep.subr.mxu0 0.0
    %1939 = vmatpush1.msra.mxu0 %v262
    %1940 = vmatprep.subr.mxu0 0.0
    %1941 = vmatpush1.msra.mxu0 %v261
    %1942 = vmatprep.subr.mxu0 0.0
    %1943 = vmatpush2.msra.mxu0 %v292
    %1944 = vmatprep.subr.mxu0 0.0
    %1945 = vmatpush2.msra.mxu0 %v291
    %1946 = vmatprep.subr.mxu0 0.0
    %1947 = vmatpush2.msra.mxu0 %v290
    %1948 = vmatprep.subr.mxu0 0.0
    %1949 = vmatpush2.msra.mxu0 %v289
    %1950 = vmatprep.subr.mxu0 0.0
    %1951 = vmatpush2.msra.mxu0 %v288
    %1952 = vmatprep.subr.mxu0 0.0
    %1953 = vmatpush2.msra.mxu0 %v287
    %1954 = vmatprep.subr.mxu0 0.0
    %1955 = vmatpush2.msra.mxu0 %v286
    %1956 = vmatprep.subr.mxu0 0.0
    %1957 = vmatpush2.msra.mxu0 %v285
    %1958 = vmatprep.subr.mxu0 0.0
    %1959 = vmatpush2.msra.mxu0 %v284
    %1960 = vmatprep.subr.mxu0 0.0
    %1961 = vmatpush2.msra.mxu0 %v283
    %1962 = vmatprep.subr.mxu0 0.0
    %1963 = vmatpush2.msra.mxu0 %v282
    %1964 = vmatprep.subr.mxu0 0.0
    %1965 = vmatpush2.msra.mxu0 %v281
    %1966 = vmatprep.subr.mxu0 0.0
    %1967 = vmatpush2.msra.mxu0 %v280
    %1968 = vmatprep.subr.mxu0 0.0
    %1969 = vmatpush2.msra.mxu0 %v279
    %1970 = vmatprep.subr.mxu0 0.0
    %1971 = vmatpush2.msra.mxu0 %v278
    %1972 = vmatprep.subr.mxu0 0.0
    %1973 = vmatpush2.msra.mxu0 %v277
    %1974 = vmatprep.mubr.f32.mxu0 %v1151
    %1975 = vmatmul.mubr.f32.gmra.mxu0 %v1149
    %v1976 = vpop.f32.mrf.mxu0
    %v1977 = vadd.f32 %v1907, %v1976
    %v1978 = vpop.f32.mrf.mxu0
    %1979 = vdwg.mxu0
    %1980 = vmatprep.subr.mxu0 0.0
    %1981 = vmatpush1.msra.mxu0 %v308
    %1982 = vmatprep.subr.mxu0 0.0
    %1983 = vmatpush1.msra.mxu0 %v307
    %1984 = vmatprep.subr.mxu0 0.0
    %1985 = vmatpush1.msra.mxu0 %v306
    %1986 = vmatprep.subr.mxu0 0.0
    %1987 = vmatpush1.msra.mxu0 %v305
    %1988 = vmatprep.subr.mxu0 0.0
    %1989 = vmatpush1.msra.mxu0 %v304
    %1990 = vmatprep.subr.mxu0 0.0
    %1991 = vmatpush1.msra.mxu0 %v303
    %1992 = vmatprep.subr.mxu0 0.0
    %1993 = vmatpush1.msra.mxu0 %v302
    %1994 = vmatprep.subr.mxu0 0.0
    %1995 = vmatpush1.msra.mxu0 %v301
    %1996 = vmatprep.subr.mxu0 0.0
    %1997 = vmatpush1.msra.mxu0 %v300
    %1998 = vmatprep.subr.mxu0 0.0
    %1999 = vmatpush1.msra.mxu0 %v299
    %2000 = vmatprep.subr.mxu0 0.0
    %2001 = vmatpush1.msra.mxu0 %v298
    %2002 = vmatprep.subr.mxu0 0.0
    %2003 = vmatpush1.msra.mxu0 %v297
    %2004 = vmatprep.subr.mxu0 0.0
    %2005 = vmatpush1.msra.mxu0 %v296
    %2006 = vmatprep.subr.mxu0 0.0
    %2007 = vmatpush1.msra.mxu0 %v295
    %2008 = vmatprep.subr.mxu0 0.0
    %2009 = vmatpush1.msra.mxu0 %v294
    %2010 = vmatprep.subr.mxu0 0.0
    %2011 = vmatpush1.msra.mxu0 %v293
    %2012 = vmatprep.subr.mxu0 0.0
    %2013 = vmatpush2.msra.mxu0 %v324
    %2014 = vmatprep.subr.mxu0 0.0
    %2015 = vmatpush2.msra.mxu0 %v323
    %2016 = vmatprep.subr.mxu0 0.0
    %2017 = vmatpush2.msra.mxu0 %v322
    %2018 = vmatprep.subr.mxu0 0.0
    %2019 = vmatpush2.msra.mxu0 %v321
    %2020 = vmatprep.subr.mxu0 0.0
    %2021 = vmatpush2.msra.mxu0 %v320
    %2022 = vmatprep.subr.mxu0 0.0
    %2023 = vmatpush2.msra.mxu0 %v319
    %2024 = vmatprep.subr.mxu0 0.0
    %2025 = vmatpush2.msra.mxu0 %v318
    %2026 = vmatprep.subr.mxu0 0.0
    %2027 = vmatpush2.msra.mxu0 %v317
    %2028 = vmatprep.subr.mxu0 0.0
    %2029 = vmatpush2.msra.mxu0 %v316
    %2030 = vmatprep.subr.mxu0 0.0
    %2031 = vmatpush2.msra.mxu0 %v315
    %2032 = vmatprep.subr.mxu0 0.0
    %2033 = vmatpush2.msra.mxu0 %v314
    %2034 = vmatprep.subr.mxu0 0.0
    %2035 = vmatpush2.msra.mxu0 %v313
    %2036 = vmatprep.subr.mxu0 0.0
    %2037 = vmatpush2.msra.mxu0 %v312
    %2038 = vmatprep.subr.mxu0 0.0
    %2039 = vmatpush2.msra.mxu0 %v311
    %2040 = vmatprep.subr.mxu0 0.0
    %2041 = vmatpush2.msra.mxu0 %v310
    %2042 = vmatprep.subr.mxu0 0.0
    %2043 = vmatpush2.msra.mxu0 %v309
    %2044 = vmatprep.mubr.f32.mxu0 %v1167
    %2045 = vmatmul.mubr.f32.gmra.mxu0 %v1159
    %v2046 = vpop.f32.mrf.mxu0
    %v2047 = vadd.f32 %v1977, %v2046
    %v2048 = vpop.f32.mrf.mxu0
    %2049 = vdwg.mxu0
    %2050 = vmatprep.subr.mxu0 0.0
    %2051 = vmatpush1.msra.mxu0 %v340
    %2052 = vmatprep.subr.mxu0 0.0
    %2053 = vmatpush1.msra.mxu0 %v339
    %2054 = vmatprep.subr.mxu0 0.0
    %2055 = vmatpush1.msra.mxu0 %v338
    %2056 = vmatprep.subr.mxu0 0.0
    %2057 = vmatpush1.msra.mxu0 %v337
    %2058 = vmatprep.subr.mxu0 0.0
    %2059 = vmatpush1.msra.mxu0 %v336
    %2060 = vmatprep.subr.mxu0 0.0
    %2061 = vmatpush1.msra.mxu0 %v335
    %2062 = vmatprep.subr.mxu0 0.0
    %2063 = vmatpush1.msra.mxu0 %v334
    %2064 = vmatprep.subr.mxu0 0.0
    %2065 = vmatpush1.msra.mxu0 %v333
    %2066 = vmatprep.subr.mxu0 0.0
    %2067 = vmatpush1.msra.mxu0 %v332
    %2068 = vmatprep.subr.mxu0 0.0
    %2069 = vmatpush1.msra.mxu0 %v331
    %2070 = vmatprep.subr.mxu0 0.0
    %2071 = vmatpush1.msra.mxu0 %v330
    %2072 = vmatprep.subr.mxu0 0.0
    %2073 = vmatpush1.msra.mxu0 %v329
    %2074 = vmatprep.subr.mxu0 0.0
    %2075 = vmatpush1.msra.mxu0 %v328
    %2076 = vmatprep.subr.mxu0 0.0
    %2077 = vmatpush1.msra.mxu0 %v327
    %2078 = vmatprep.subr.mxu0 0.0
    %2079 = vmatpush1.msra.mxu0 %v326
    %2080 = vmatprep.subr.mxu0 0.0
    %2081 = vmatpush1.msra.mxu0 %v325
    %2082 = vmatprep.subr.mxu0 0.0
    %2083 = vmatpush2.msra.mxu0 %v356
    %2084 = vmatprep.subr.mxu0 0.0
    %2085 = vmatpush2.msra.mxu0 %v355
    %2086 = vmatprep.subr.mxu0 0.0
    %2087 = vmatpush2.msra.mxu0 %v354
    %2088 = vmatprep.subr.mxu0 0.0
    %2089 = vmatpush2.msra.mxu0 %v353
    %2090 = vmatprep.subr.mxu0 0.0
    %2091 = vmatpush2.msra.mxu0 %v352
    %2092 = vmatprep.subr.mxu0 0.0
    %2093 = vmatpush2.msra.mxu0 %v351
    %2094 = vmatprep.subr.mxu0 0.0
    %2095 = vmatpush2.msra.mxu0 %v350
    %2096 = vmatprep.subr.mxu0 0.0
    %2097 = vmatpush2.msra.mxu0 %v349
    %2098 = vmatprep.subr.mxu0 0.0
    %2099 = vmatpush2.msra.mxu0 %v348
    %2100 = vmatprep.subr.mxu0 0.0
    %2101 = vmatpush2.msra.mxu0 %v347
    %2102 = vmatprep.subr.mxu0 0.0
    %2103 = vmatpush2.msra.mxu0 %v346
    %2104 = vmatprep.subr.mxu0 0.0
    %2105 = vmatpush2.msra.mxu0 %v345
    %2106 = vmatprep.subr.mxu0 0.0
    %2107 = vmatpush2.msra.mxu0 %v344
    %2108 = vmatprep.subr.mxu0 0.0
    %2109 = vmatpush2.msra.mxu0 %v343
    %2110 = vmatprep.subr.mxu0 0.0
    %2111 = vmatpush2.msra.mxu0 %v342
    %2112 = vmatprep.subr.mxu0 0.0
    %2113 = vmatpush2.msra.mxu0 %v341
    %2114 = vmatprep.mubr.f32.mxu0 %v1168
    %2115 = vmatmul.mubr.f32.gmra.mxu0 %v1166
    %v2116 = vpop.f32.mrf.mxu0
    %v2117 = vadd.f32 %v2047, %v2116
    %v2118 = vpop.f32.mrf.mxu0
    %2119 = vdwg.mxu0
    %2120 = vmatprep.subr.mxu0 0.0
    %2121 = vmatpush1.msra.mxu0 %v372
    %2122 = vmatprep.subr.mxu0 0.0
    %2123 = vmatpush1.msra.mxu0 %v371
    %2124 = vmatprep.subr.mxu0 0.0
    %2125 = vmatpush1.msra.mxu0 %v370
    %2126 = vmatprep.subr.mxu0 0.0
    %2127 = vmatpush1.msra.mxu0 %v369
    %2128 = vmatprep.subr.mxu0 0.0
    %2129 = vmatpush1.msra.mxu0 %v368
    %2130 = vmatprep.subr.mxu0 0.0
    %2131 = vmatpush1.msra.mxu0 %v367
    %2132 = vmatprep.subr.mxu0 0.0
    %2133 = vmatpush1.msra.mxu0 %v366
    %2134 = vmatprep.subr.mxu0 0.0
    %2135 = vmatpush1.msra.mxu0 %v365
    %2136 = vmatprep.subr.mxu0 0.0
    %2137 = vmatpush1.msra.mxu0 %v364
    %2138 = vmatprep.subr.mxu0 0.0
    %2139 = vmatpush1.msra.mxu0 %v363
    %2140 = vmatprep.subr.mxu0 0.0
    %2141 = vmatpush1.msra.mxu0 %v362
    %2142 = vmatprep.subr.mxu0 0.0
    %2143 = vmatpush1.msra.mxu0 %v361
    %2144 = vmatprep.subr.mxu0 0.0
    %2145 = vmatpush1.msra.mxu0 %v360
    %2146 = vmatprep.subr.mxu0 0.0
    %2147 = vmatpush1.msra.mxu0 %v359
    %2148 = vmatprep.subr.mxu0 0.0
    %2149 = vmatpush1.msra.mxu0 %v358
    %2150 = vmatprep.subr.mxu0 0.0
    %2151 = vmatpush1.msra.mxu0 %v357
    %2152 = vmatprep.subr.mxu0 0.0
    %2153 = vmatpush2.msra.mxu0 %v388
    %2154 = vmatprep.subr.mxu0 0.0
    %2155 = vmatpush2.msra.mxu0 %v387
    %2156 = vmatprep.subr.mxu0 0.0
    %2157 = vmatpush2.msra.mxu0 %v386
    %2158 = vmatprep.subr.mxu0 0.0
    %2159 = vmatpush2.msra.mxu0 %v385
    %2160 = vmatprep.subr.mxu0 0.0
    %2161 = vmatpush2.msra.mxu0 %v384
    %2162 = vmatprep.subr.mxu0 0.0
    %2163 = vmatpush2.msra.mxu0 %v383
    %2164 = vmatprep.subr.mxu0 0.0
    %2165 = vmatpush2.msra.mxu0 %v382
    %2166 = vmatprep.subr.mxu0 0.0
    %2167 = vmatpush2.msra.mxu0 %v381
    %2168 = vmatprep.subr.mxu0 0.0
    %2169 = vmatpush2.msra.mxu0 %v380
    %2170 = vmatprep.subr.mxu0 0.0
    %2171 = vmatpush2.msra.mxu0 %v379
    %2172 = vmatprep.subr.mxu0 0.0
    %2173 = vmatpush2.msra.mxu0 %v378
    %2174 = vmatprep.subr.mxu0 0.0
    %2175 = vmatpush2.msra.mxu0 %v377
    %2176 = vmatprep.subr.mxu0 0.0
    %2177 = vmatpush2.msra.mxu0 %v376
    %2178 = vmatprep.subr.mxu0 0.0
    %2179 = vmatpush2.msra.mxu0 %v375
    %2180 = vmatprep.subr.mxu0 0.0
    %2181 = vmatpush2.msra.mxu0 %v374
    %2182 = vmatprep.subr.mxu0 0.0
    %2183 = vmatpush2.msra.mxu0 %v373
    %2184 = vmatprep.mubr.f32.mxu0 %v1184
    %2185 = vmatmul.mubr.f32.gmra.mxu0 %v1176
    %v2186 = vpop.f32.mrf.mxu0
    %v2187 = vadd.f32 %v2117, %v2186
    %v2188 = vpop.f32.mrf.mxu0
    %2189 = vdwg.mxu0
    %2190 = vmatprep.subr.mxu0 0.0
    %2191 = vmatpush1.msra.mxu0 %v404
    %2192 = vmatprep.subr.mxu0 0.0
    %2193 = vmatpush1.msra.mxu0 %v403
    %2194 = vmatprep.subr.mxu0 0.0
    %2195 = vmatpush1.msra.mxu0 %v402
    %2196 = vmatprep.subr.mxu0 0.0
    %2197 = vmatpush1.msra.mxu0 %v401
    %2198 = vmatprep.subr.mxu0 0.0
    %2199 = vmatpush1.msra.mxu0 %v400
    %2200 = vmatprep.subr.mxu0 0.0
    %2201 = vmatpush1.msra.mxu0 %v399
    %2202 = vmatprep.subr.mxu0 0.0
    %2203 = vmatpush1.msra.mxu0 %v398
    %2204 = vmatprep.subr.mxu0 0.0
    %2205 = vmatpush1.msra.mxu0 %v397
    %2206 = vmatprep.subr.mxu0 0.0
    %2207 = vmatpush1.msra.mxu0 %v396
    %2208 = vmatprep.subr.mxu0 0.0
    %2209 = vmatpush1.msra.mxu0 %v395
    %2210 = vmatprep.subr.mxu0 0.0
    %2211 = vmatpush1.msra.mxu0 %v394
    %2212 = vmatprep.subr.mxu0 0.0
    %2213 = vmatpush1.msra.mxu0 %v393
    %2214 = vmatprep.subr.mxu0 0.0
    %2215 = vmatpush1.msra.mxu0 %v392
    %2216 = vmatprep.subr.mxu0 0.0
    %2217 = vmatpush1.msra.mxu0 %v391
    %2218 = vmatprep.subr.mxu0 0.0
    %2219 = vmatpush1.msra.mxu0 %v390
    %2220 = vmatprep.subr.mxu0 0.0
    %2221 = vmatpush1.msra.mxu0 %v389
    %2222 = vmatprep.subr.mxu0 0.0
    %2223 = vmatpush2.msra.mxu0 %v420
    %2224 = vmatprep.subr.mxu0 0.0
    %2225 = vmatpush2.msra.mxu0 %v419
    %2226 = vmatprep.subr.mxu0 0.0
    %2227 = vmatpush2.msra.mxu0 %v418
    %2228 = vmatprep.subr.mxu0 0.0
    %2229 = vmatpush2.msra.mxu0 %v417
    %2230 = vmatprep.subr.mxu0 0.0
    %2231 = vmatpush2.msra.mxu0 %v416
    %2232 = vmatprep.subr.mxu0 0.0
    %2233 = vmatpush2.msra.mxu0 %v415
    %2234 = vmatprep.subr.mxu0 0.0
    %2235 = vmatpush2.msra.mxu0 %v414
    %2236 = vmatprep.subr.mxu0 0.0
    %2237 = vmatpush2.msra.mxu0 %v413
    %2238 = vmatprep.subr.mxu0 0.0
    %2239 = vmatpush2.msra.mxu0 %v412
    %2240 = vmatprep.subr.mxu0 0.0
    %2241 = vmatpush2.msra.mxu0 %v411
    %2242 = vmatprep.subr.mxu0 0.0
    %2243 = vmatpush2.msra.mxu0 %v410
    %2244 = vmatprep.subr.mxu0 0.0
    %2245 = vmatpush2.msra.mxu0 %v409
    %2246 = vmatprep.subr.mxu0 0.0
    %2247 = vmatpush2.msra.mxu0 %v408
    %2248 = vmatprep.subr.mxu0 0.0
    %2249 = vmatpush2.msra.mxu0 %v407
    %2250 = vmatprep.subr.mxu0 0.0
    %2251 = vmatpush2.msra.mxu0 %v406
    %2252 = vmatprep.subr.mxu0 0.0
    %2253 = vmatpush2.msra.mxu0 %v405
    %2254 = vmatprep.mubr.f32.mxu0 %v1185
    %2255 = vmatmul.mubr.f32.gmra.mxu0 %v1183
    %v2256 = vpop.f32.mrf.mxu0
    %v2257 = vadd.f32 %v2187, %v2256
    %v2258 = vpop.f32.mrf.mxu0
    %2259 = vdwg.mxu0
    %2260 = vmatprep.subr.mxu0 0.0
    %2261 = vmatpush1.msra.mxu0 %v436
    %2262 = vmatprep.subr.mxu0 0.0
    %2263 = vmatpush1.msra.mxu0 %v435
    %2264 = vmatprep.subr.mxu0 0.0
    %2265 = vmatpush1.msra.mxu0 %v434
    %2266 = vmatprep.subr.mxu0 0.0
    %2267 = vmatpush1.msra.mxu0 %v433
    %2268 = vmatprep.subr.mxu0 0.0
    %2269 = vmatpush1.msra.mxu0 %v432
    %2270 = vmatprep.subr.mxu0 0.0
    %2271 = vmatpush1.msra.mxu0 %v431
    %2272 = vmatprep.subr.mxu0 0.0
    %2273 = vmatpush1.msra.mxu0 %v430
    %2274 = vmatprep.subr.mxu0 0.0
    %2275 = vmatpush1.msra.mxu0 %v429
    %2276 = vmatprep.subr.mxu0 0.0
    %2277 = vmatpush1.msra.mxu0 %v428
    %2278 = vmatprep.subr.mxu0 0.0
    %2279 = vmatpush1.msra.mxu0 %v427
    %2280 = vmatprep.subr.mxu0 0.0
    %2281 = vmatpush1.msra.mxu0 %v426
    %2282 = vmatprep.subr.mxu0 0.0
    %2283 = vmatpush1.msra.mxu0 %v425
    %2284 = vmatprep.subr.mxu0 0.0
    %2285 = vmatpush1.msra.mxu0 %v424
    %2286 = vmatprep.subr.mxu0 0.0
    %2287 = vmatpush1.msra.mxu0 %v423
    %2288 = vmatprep.subr.mxu0 0.0
    %2289 = vmatpush1.msra.mxu0 %v422
    %2290 = vmatprep.subr.mxu0 0.0
    %2291 = vmatpush1.msra.mxu0 %v421
    %2292 = vmatprep.subr.mxu0 0.0
    %2293 = vmatpush2.msra.mxu0 %v452
    %2294 = vmatprep.subr.mxu0 0.0
    %2295 = vmatpush2.msra.mxu0 %v451
    %2296 = vmatprep.subr.mxu0 0.0
    %2297 = vmatpush2.msra.mxu0 %v450
    %2298 = vmatprep.subr.mxu0 0.0
    %2299 = vmatpush2.msra.mxu0 %v449
    %2300 = vmatprep.subr.mxu0 0.0
    %2301 = vmatpush2.msra.mxu0 %v448
    %2302 = vmatprep.subr.mxu0 0.0
    %2303 = vmatpush2.msra.mxu0 %v447
    %2304 = vmatprep.subr.mxu0 0.0
    %2305 = vmatpush2.msra.mxu0 %v446
    %2306 = vmatprep.subr.mxu0 0.0
    %2307 = vmatpush2.msra.mxu0 %v445
    %2308 = vmatprep.subr.mxu0 0.0
    %2309 = vmatpush2.msra.mxu0 %v444
    %2310 = vmatprep.subr.mxu0 0.0
    %2311 = vmatpush2.msra.mxu0 %v443
    %2312 = vmatprep.subr.mxu0 0.0
    %2313 = vmatpush2.msra.mxu0 %v442
    %2314 = vmatprep.subr.mxu0 0.0
    %2315 = vmatpush2.msra.mxu0 %v441
    %2316 = vmatprep.subr.mxu0 0.0
    %2317 = vmatpush2.msra.mxu0 %v440
    %2318 = vmatprep.subr.mxu0 0.0
    %2319 = vmatpush2.msra.mxu0 %v439
    %2320 = vmatprep.subr.mxu0 0.0
    %2321 = vmatpush2.msra.mxu0 %v438
    %2322 = vmatprep.subr.mxu0 0.0
    %2323 = vmatpush2.msra.mxu0 %v437
    %2324 = vmatprep.mubr.f32.mxu0 %v1201
    %2325 = vmatmul.mubr.f32.gmra.mxu0 %v1193
    %v2326 = vpop.f32.mrf.mxu0
    %v2327 = vadd.f32 %v2257, %v2326
    %v2328 = vpop.f32.mrf.mxu0
    %2329 = vdwg.mxu0
    %2330 = vmatprep.subr.mxu0 0.0
    %2331 = vmatpush1.msra.mxu0 %v468
    %2332 = vmatprep.subr.mxu0 0.0
    %2333 = vmatpush1.msra.mxu0 %v467
    %2334 = vmatprep.subr.mxu0 0.0
    %2335 = vmatpush1.msra.mxu0 %v466
    %2336 = vmatprep.subr.mxu0 0.0
    %2337 = vmatpush1.msra.mxu0 %v465
    %2338 = vmatprep.subr.mxu0 0.0
    %2339 = vmatpush1.msra.mxu0 %v464
    %2340 = vmatprep.subr.mxu0 0.0
    %2341 = vmatpush1.msra.mxu0 %v463
    %2342 = vmatprep.subr.mxu0 0.0
    %2343 = vmatpush1.msra.mxu0 %v462
    %2344 = vmatprep.subr.mxu0 0.0
    %2345 = vmatpush1.msra.mxu0 %v461
    %2346 = vmatprep.subr.mxu0 0.0
    %2347 = vmatpush1.msra.mxu0 %v460
    %2348 = vmatprep.subr.mxu0 0.0
    %2349 = vmatpush1.msra.mxu0 %v459
    %2350 = vmatprep.subr.mxu0 0.0
    %2351 = vmatpush1.msra.mxu0 %v458
    %2352 = vmatprep.subr.mxu0 0.0
    %2353 = vmatpush1.msra.mxu0 %v457
    %2354 = vmatprep.subr.mxu0 0.0
    %2355 = vmatpush1.msra.mxu0 %v456
    %2356 = vmatprep.subr.mxu0 0.0
    %2357 = vmatpush1.msra.mxu0 %v455
    %2358 = vmatprep.subr.mxu0 0.0
    %2359 = vmatpush1.msra.mxu0 %v454
    %2360 = vmatprep.subr.mxu0 0.0
    %2361 = vmatpush1.msra.mxu0 %v453
    %2362 = vmatprep.subr.mxu0 0.0
    %2363 = vmatpush2.msra.mxu0 %v484
    %2364 = vmatprep.subr.mxu0 0.0
    %2365 = vmatpush2.msra.mxu0 %v483
    %2366 = vmatprep.subr.mxu0 0.0
    %2367 = vmatpush2.msra.mxu0 %v482
    %2368 = vmatprep.subr.mxu0 0.0
    %2369 = vmatpush2.msra.mxu0 %v481
    %2370 = vmatprep.subr.mxu0 0.0
    %2371 = vmatpush2.msra.mxu0 %v480
    %2372 = vmatprep.subr.mxu0 0.0
    %2373 = vmatpush2.msra.mxu0 %v479
    %2374 = vmatprep.subr.mxu0 0.0
    %2375 = vmatpush2.msra.mxu0 %v478
    %2376 = vmatprep.subr.mxu0 0.0
    %2377 = vmatpush2.msra.mxu0 %v477
    %2378 = vmatprep.subr.mxu0 0.0
    %2379 = vmatpush2.msra.mxu0 %v476
    %2380 = vmatprep.subr.mxu0 0.0
    %2381 = vmatpush2.msra.mxu0 %v475
    %2382 = vmatprep.subr.mxu0 0.0
    %2383 = vmatpush2.msra.mxu0 %v474
    %2384 = vmatprep.subr.mxu0 0.0
    %2385 = vmatpush2.msra.mxu0 %v473
    %2386 = vmatprep.subr.mxu0 0.0
    %2387 = vmatpush2.msra.mxu0 %v472
    %2388 = vmatprep.subr.mxu0 0.0
    %2389 = vmatpush2.msra.mxu0 %v471
    %2390 = vmatprep.subr.mxu0 0.0
    %2391 = vmatpush2.msra.mxu0 %v470
    %2392 = vmatprep.subr.mxu0 0.0
    %2393 = vmatpush2.msra.mxu0 %v469
    %2394 = vmatprep.mubr.f32.mxu0 %v1202
    %2395 = vmatmul.mubr.f32.gmra.mxu0 %v1200
    %v2396 = vpop.f32.mrf.mxu0
    %v2397 = vadd.f32 %v2327, %v2396
    %v2398 = vpop.f32.mrf.mxu0
    %2399 = vdwg.mxu0
    %2400 = vmatprep.subr.mxu0 0.0
    %2401 = vmatpush1.msra.mxu0 %v500
    %2402 = vmatprep.subr.mxu0 0.0
    %2403 = vmatpush1.msra.mxu0 %v499
    %2404 = vmatprep.subr.mxu0 0.0
    %2405 = vmatpush1.msra.mxu0 %v498
    %2406 = vmatprep.subr.mxu0 0.0
    %2407 = vmatpush1.msra.mxu0 %v497
    %2408 = vmatprep.subr.mxu0 0.0
    %2409 = vmatpush1.msra.mxu0 %v496
    %2410 = vmatprep.subr.mxu0 0.0
    %2411 = vmatpush1.msra.mxu0 %v495
    %2412 = vmatprep.subr.mxu0 0.0
    %2413 = vmatpush1.msra.mxu0 %v494
    %2414 = vmatprep.subr.mxu0 0.0
    %2415 = vmatpush1.msra.mxu0 %v493
    %2416 = vmatprep.subr.mxu0 0.0
    %2417 = vmatpush1.msra.mxu0 %v492
    %2418 = vmatprep.subr.mxu0 0.0
    %2419 = vmatpush1.msra.mxu0 %v491
    %2420 = vmatprep.subr.mxu0 0.0
    %2421 = vmatpush1.msra.mxu0 %v490
    %2422 = vmatprep.subr.mxu0 0.0
    %2423 = vmatpush1.msra.mxu0 %v489
    %2424 = vmatprep.subr.mxu0 0.0
    %2425 = vmatpush1.msra.mxu0 %v488
    %2426 = vmatprep.subr.mxu0 0.0
    %2427 = vmatpush1.msra.mxu0 %v487
    %2428 = vmatprep.subr.mxu0 0.0
    %2429 = vmatpush1.msra.mxu0 %v486
    %2430 = vmatprep.subr.mxu0 0.0
    %2431 = vmatpush1.msra.mxu0 %v485
    %2432 = vmatprep.subr.mxu0 0.0
    %2433 = vmatpush2.msra.mxu0 %v516
    %2434 = vmatprep.subr.mxu0 0.0
    %2435 = vmatpush2.msra.mxu0 %v515
    %2436 = vmatprep.subr.mxu0 0.0
    %2437 = vmatpush2.msra.mxu0 %v514
    %2438 = vmatprep.subr.mxu0 0.0
    %2439 = vmatpush2.msra.mxu0 %v513
    %2440 = vmatprep.subr.mxu0 0.0
    %2441 = vmatpush2.msra.mxu0 %v512
    %2442 = vmatprep.subr.mxu0 0.0
    %2443 = vmatpush2.msra.mxu0 %v511
    %2444 = vmatprep.subr.mxu0 0.0
    %2445 = vmatpush2.msra.mxu0 %v510
    %2446 = vmatprep.subr.mxu0 0.0
    %2447 = vmatpush2.msra.mxu0 %v509
    %2448 = vmatprep.subr.mxu0 0.0
    %2449 = vmatpush2.msra.mxu0 %v508
    %2450 = vmatprep.subr.mxu0 0.0
    %2451 = vmatpush2.msra.mxu0 %v507
    %2452 = vmatprep.subr.mxu0 0.0
    %2453 = vmatpush2.msra.mxu0 %v506
    %2454 = vmatprep.subr.mxu0 0.0
    %2455 = vmatpush2.msra.mxu0 %v505
    %2456 = vmatprep.subr.mxu0 0.0
    %2457 = vmatpush2.msra.mxu0 %v504
    %2458 = vmatprep.subr.mxu0 0.0
    %2459 = vmatpush2.msra.mxu0 %v503
    %2460 = vmatprep.subr.mxu0 0.0
    %2461 = vmatpush2.msra.mxu0 %v502
    %2462 = vmatprep.subr.mxu0 0.0
    %2463 = vmatpush2.msra.mxu0 %v501
    %2464 = vmatprep.mubr.f32.mxu0 %v1218
    %2465 = vmatmul.mubr.f32.gmra.mxu0 %v1210
    %v2466 = vpop.f32.mrf.mxu0
    %v2467 = vadd.f32 %v2397, %v2466
    %v2468 = vpop.f32.mrf.mxu0
    %2469 = vdwg.mxu0
    %2470 = vmatprep.subr.mxu0 0.0
    %2471 = vmatpush1.msra.mxu0 %v532
    %2472 = vmatprep.subr.mxu0 0.0
    %2473 = vmatpush1.msra.mxu0 %v531
    %2474 = vmatprep.subr.mxu0 0.0
    %2475 = vmatpush1.msra.mxu0 %v530
    %2476 = vmatprep.subr.mxu0 0.0
    %2477 = vmatpush1.msra.mxu0 %v529
    %2478 = vmatprep.subr.mxu0 0.0
    %2479 = vmatpush1.msra.mxu0 %v528
    %2480 = vmatprep.subr.mxu0 0.0
    %2481 = vmatpush1.msra.mxu0 %v527
    %2482 = vmatprep.subr.mxu0 0.0
    %2483 = vmatpush1.msra.mxu0 %v526
    %2484 = vmatprep.subr.mxu0 0.0
    %2485 = vmatpush1.msra.mxu0 %v525
    %2486 = vmatprep.subr.mxu0 0.0
    %2487 = vmatpush1.msra.mxu0 %v524
    %2488 = vmatprep.subr.mxu0 0.0
    %2489 = vmatpush1.msra.mxu0 %v523
    %2490 = vmatprep.subr.mxu0 0.0
    %2491 = vmatpush1.msra.mxu0 %v522
    %2492 = vmatprep.subr.mxu0 0.0
    %2493 = vmatpush1.msra.mxu0 %v521
    %2494 = vmatprep.subr.mxu0 0.0
    %2495 = vmatpush1.msra.mxu0 %v520
    %2496 = vmatprep.subr.mxu0 0.0
    %2497 = vmatpush1.msra.mxu0 %v519
    %2498 = vmatprep.subr.mxu0 0.0
    %2499 = vmatpush1.msra.mxu0 %v518
    %2500 = vmatprep.subr.mxu0 0.0
    %2501 = vmatpush1.msra.mxu0 %v517
    %2502 = vmatprep.subr.mxu0 0.0
    %2503 = vmatpush2.msra.mxu0 %v548
    %2504 = vmatprep.subr.mxu0 0.0
    %2505 = vmatpush2.msra.mxu0 %v547
    %2506 = vmatprep.subr.mxu0 0.0
    %2507 = vmatpush2.msra.mxu0 %v546
    %2508 = vmatprep.subr.mxu0 0.0
    %2509 = vmatpush2.msra.mxu0 %v545
    %2510 = vmatprep.subr.mxu0 0.0
    %2511 = vmatpush2.msra.mxu0 %v544
    %2512 = vmatprep.subr.mxu0 0.0
    %2513 = vmatpush2.msra.mxu0 %v543
    %2514 = vmatprep.subr.mxu0 0.0
    %2515 = vmatpush2.msra.mxu0 %v542
    %2516 = vmatprep.subr.mxu0 0.0
    %2517 = vmatpush2.msra.mxu0 %v541
    %2518 = vmatprep.subr.mxu0 0.0
    %2519 = vmatpush2.msra.mxu0 %v540
    %2520 = vmatprep.subr.mxu0 0.0
    %2521 = vmatpush2.msra.mxu0 %v539
    %2522 = vmatprep.subr.mxu0 0.0
    %2523 = vmatpush2.msra.mxu0 %v538
    %2524 = vmatprep.subr.mxu0 0.0
    %2525 = vmatpush2.msra.mxu0 %v537
    %2526 = vmatprep.subr.mxu0 0.0
    %2527 = vmatpush2.msra.mxu0 %v536
    %2528 = vmatprep.subr.mxu0 0.0
    %2529 = vmatpush2.msra.mxu0 %v535
    %2530 = vmatprep.subr.mxu0 0.0
    %2531 = vmatpush2.msra.mxu0 %v534
    %2532 = vmatprep.subr.mxu0 0.0
    %2533 = vmatpush2.msra.mxu0 %v533
    %2534 = vmatprep.mubr.f32.mxu0 %v1219
    %2535 = vmatmul.mubr.f32.gmra.mxu0 %v1217
    %v2536 = vpop.f32.mrf.mxu0
    %v2537 = vadd.f32 %v2467, %v2536
    %v2538 = vpop.f32.mrf.mxu0
    %2539 = vdwg.mxu0
    %2540 = vmatprep.subr.mxu0 0.0
    %2541 = vmatpush1.msra.mxu0 %v564
    %2542 = vmatprep.subr.mxu0 0.0
    %2543 = vmatpush1.msra.mxu0 %v563
    %2544 = vmatprep.subr.mxu0 0.0
    %2545 = vmatpush1.msra.mxu0 %v562
    %2546 = vmatprep.subr.mxu0 0.0
    %2547 = vmatpush1.msra.mxu0 %v561
    %2548 = vmatprep.subr.mxu0 0.0
    %2549 = vmatpush1.msra.mxu0 %v560
    %2550 = vmatprep.subr.mxu0 0.0
    %2551 = vmatpush1.msra.mxu0 %v559
    %2552 = vmatprep.subr.mxu0 0.0
    %2553 = vmatpush1.msra.mxu0 %v558
    %2554 = vmatprep.subr.mxu0 0.0
    %2555 = vmatpush1.msra.mxu0 %v557
    %2556 = vmatprep.subr.mxu0 0.0
    %2557 = vmatpush1.msra.mxu0 %v556
    %2558 = vmatprep.subr.mxu0 0.0
    %2559 = vmatpush1.msra.mxu0 %v555
    %2560 = vmatprep.subr.mxu0 0.0
    %2561 = vmatpush1.msra.mxu0 %v554
    %2562 = vmatprep.subr.mxu0 0.0
    %2563 = vmatpush1.msra.mxu0 %v553
    %2564 = vmatprep.subr.mxu0 0.0
    %2565 = vmatpush1.msra.mxu0 %v552
    %2566 = vmatprep.subr.mxu0 0.0
    %2567 = vmatpush1.msra.mxu0 %v551
    %2568 = vmatprep.subr.mxu0 0.0
    %2569 = vmatpush1.msra.mxu0 %v550
    %2570 = vmatprep.subr.mxu0 0.0
    %2571 = vmatpush1.msra.mxu0 %v549
    %2572 = vmatprep.subr.mxu0 0.0
    %2573 = vmatpush2.msra.mxu0 %v580
    %2574 = vmatprep.subr.mxu0 0.0
    %2575 = vmatpush2.msra.mxu0 %v579
    %2576 = vmatprep.subr.mxu0 0.0
    %2577 = vmatpush2.msra.mxu0 %v578
    %2578 = vmatprep.subr.mxu0 0.0
    %2579 = vmatpush2.msra.mxu0 %v577
    %2580 = vmatprep.subr.mxu0 0.0
    %2581 = vmatpush2.msra.mxu0 %v576
    %2582 = vmatprep.subr.mxu0 0.0
    %2583 = vmatpush2.msra.mxu0 %v575
    %2584 = vmatprep.subr.mxu0 0.0
    %2585 = vmatpush2.msra.mxu0 %v574
    %2586 = vmatprep.subr.mxu0 0.0
    %2587 = vmatpush2.msra.mxu0 %v573
    %2588 = vmatprep.subr.mxu0 0.0
    %2589 = vmatpush2.msra.mxu0 %v572
    %2590 = vmatprep.subr.mxu0 0.0
    %2591 = vmatpush2.msra.mxu0 %v571
    %2592 = vmatprep.subr.mxu0 0.0
    %2593 = vmatpush2.msra.mxu0 %v570
    %2594 = vmatprep.subr.mxu0 0.0
    %2595 = vmatpush2.msra.mxu0 %v569
    %2596 = vmatprep.subr.mxu0 0.0
    %2597 = vmatpush2.msra.mxu0 %v568
    %2598 = vmatprep.subr.mxu0 0.0
    %2599 = vmatpush2.msra.mxu0 %v567
    %2600 = vmatprep.subr.mxu0 0.0
    %2601 = vmatpush2.msra.mxu0 %v566
    %2602 = vmatprep.subr.mxu0 0.0
    %2603 = vmatpush2.msra.mxu0 %v565
    %2604 = vmatprep.mubr.f32.mxu0 %v1235
    %2605 = vmatmul.mubr.f32.gmra.mxu0 %v1227
    %v2606 = vpop.f32.mrf.mxu0
    %v2607 = vadd.f32 %v2537, %v2606
    %v2608 = vpop.f32.mrf.mxu0
    %2609 = vdwg.mxu0
    %2610 = vmatprep.subr.mxu0 0.0
    %2611 = vmatpush1.msra.mxu0 %v596
    %2612 = vmatprep.subr.mxu0 0.0
    %2613 = vmatpush1.msra.mxu0 %v595
    %2614 = vmatprep.subr.mxu0 0.0
    %2615 = vmatpush1.msra.mxu0 %v594
    %2616 = vmatprep.subr.mxu0 0.0
    %2617 = vmatpush1.msra.mxu0 %v593
    %2618 = vmatprep.subr.mxu0 0.0
    %2619 = vmatpush1.msra.mxu0 %v592
    %2620 = vmatprep.subr.mxu0 0.0
    %2621 = vmatpush1.msra.mxu0 %v591
    %2622 = vmatprep.subr.mxu0 0.0
    %2623 = vmatpush1.msra.mxu0 %v590
    %2624 = vmatprep.subr.mxu0 0.0
    %2625 = vmatpush1.msra.mxu0 %v589
    %2626 = vmatprep.subr.mxu0 0.0
    %2627 = vmatpush1.msra.mxu0 %v588
    %2628 = vmatprep.subr.mxu0 0.0
    %2629 = vmatpush1.msra.mxu0 %v587
    %2630 = vmatprep.subr.mxu0 0.0
    %2631 = vmatpush1.msra.mxu0 %v586
    %2632 = vmatprep.subr.mxu0 0.0
    %2633 = vmatpush1.msra.mxu0 %v585
    %2634 = vmatprep.subr.mxu0 0.0
    %2635 = vmatpush1.msra.mxu0 %v584
    %2636 = vmatprep.subr.mxu0 0.0
    %2637 = vmatpush1.msra.mxu0 %v583
    %2638 = vmatprep.subr.mxu0 0.0
    %2639 = vmatpush1.msra.mxu0 %v582
    %2640 = vmatprep.subr.mxu0 0.0
    %2641 = vmatpush1.msra.mxu0 %v581
    %2642 = vmatprep.subr.mxu0 0.0
    %2643 = vmatpush2.msra.mxu0 %v612
    %2644 = vmatprep.subr.mxu0 0.0
    %2645 = vmatpush2.msra.mxu0 %v611
    %2646 = vmatprep.subr.mxu0 0.0
    %2647 = vmatpush2.msra.mxu0 %v610
    %2648 = vmatprep.subr.mxu0 0.0
    %2649 = vmatpush2.msra.mxu0 %v609
    %2650 = vmatprep.subr.mxu0 0.0
    %2651 = vmatpush2.msra.mxu0 %v608
    %2652 = vmatprep.subr.mxu0 0.0
    %2653 = vmatpush2.msra.mxu0 %v607
    %2654 = vmatprep.subr.mxu0 0.0
    %2655 = vmatpush2.msra.mxu0 %v606
    %2656 = vmatprep.subr.mxu0 0.0
    %2657 = vmatpush2.msra.mxu0 %v605
    %2658 = vmatprep.subr.mxu0 0.0
    %2659 = vmatpush2.msra.mxu0 %v604
    %2660 = vmatprep.subr.mxu0 0.0
    %2661 = vmatpush2.msra.mxu0 %v603
    %2662 = vmatprep.subr.mxu0 0.0
    %2663 = vmatpush2.msra.mxu0 %v602
    %2664 = vmatprep.subr.mxu0 0.0
    %2665 = vmatpush2.msra.mxu0 %v601
    %2666 = vmatprep.subr.mxu0 0.0
    %2667 = vmatpush2.msra.mxu0 %v600
    %2668 = vmatprep.subr.mxu0 0.0
    %2669 = vmatpush2.msra.mxu0 %v599
    %2670 = vmatprep.subr.mxu0 0.0
    %2671 = vmatpush2.msra.mxu0 %v598
    %2672 = vmatprep.subr.mxu0 0.0
    %2673 = vmatpush2.msra.mxu0 %v597
    %2674 = vmatprep.mubr.f32.mxu0 %v1236
    %2675 = vmatmul.mubr.f32.gmra.mxu0 %v1234
    %v2676 = vpop.f32.mrf.mxu0
    %v2677 = vadd.f32 %v2607, %v2676
    %v2678 = vpop.f32.mrf.mxu0
    %2679 = vdwg.mxu0
    %2680 = vmatprep.subr.mxu0 0.0
    %2681 = vmatpush1.msra.mxu0 %v628
    %2682 = vmatprep.subr.mxu0 0.0
    %2683 = vmatpush1.msra.mxu0 %v627
    %2684 = vmatprep.subr.mxu0 0.0
    %2685 = vmatpush1.msra.mxu0 %v626
    %2686 = vmatprep.subr.mxu0 0.0
    %2687 = vmatpush1.msra.mxu0 %v625
    %2688 = vmatprep.subr.mxu0 0.0
    %2689 = vmatpush1.msra.mxu0 %v624
    %2690 = vmatprep.subr.mxu0 0.0
    %2691 = vmatpush1.msra.mxu0 %v623
    %2692 = vmatprep.subr.mxu0 0.0
    %2693 = vmatpush1.msra.mxu0 %v622
    %2694 = vmatprep.subr.mxu0 0.0
    %2695 = vmatpush1.msra.mxu0 %v621
    %2696 = vmatprep.subr.mxu0 0.0
    %2697 = vmatpush1.msra.mxu0 %v620
    %2698 = vmatprep.subr.mxu0 0.0
    %2699 = vmatpush1.msra.mxu0 %v619
    %2700 = vmatprep.subr.mxu0 0.0
    %2701 = vmatpush1.msra.mxu0 %v618
    %2702 = vmatprep.subr.mxu0 0.0
    %2703 = vmatpush1.msra.mxu0 %v617
    %2704 = vmatprep.subr.mxu0 0.0
    %2705 = vmatpush1.msra.mxu0 %v616
    %2706 = vmatprep.subr.mxu0 0.0
    %2707 = vmatpush1.msra.mxu0 %v615
    %2708 = vmatprep.subr.mxu0 0.0
    %2709 = vmatpush1.msra.mxu0 %v614
    %2710 = vmatprep.subr.mxu0 0.0
    %2711 = vmatpush1.msra.mxu0 %v613
    %2712 = vmatprep.subr.mxu0 0.0
    %2713 = vmatpush2.msra.mxu0 %v644
    %2714 = vmatprep.subr.mxu0 0.0
    %2715 = vmatpush2.msra.mxu0 %v643
    %2716 = vmatprep.subr.mxu0 0.0
    %2717 = vmatpush2.msra.mxu0 %v642
    %2718 = vmatprep.subr.mxu0 0.0
    %2719 = vmatpush2.msra.mxu0 %v641
    %2720 = vmatprep.subr.mxu0 0.0
    %2721 = vmatpush2.msra.mxu0 %v640
    %2722 = vmatprep.subr.mxu0 0.0
    %2723 = vmatpush2.msra.mxu0 %v639
    %2724 = vmatprep.subr.mxu0 0.0
    %2725 = vmatpush2.msra.mxu0 %v638
    %2726 = vmatprep.subr.mxu0 0.0
    %2727 = vmatpush2.msra.mxu0 %v637
    %2728 = vmatprep.subr.mxu0 0.0
    %2729 = vmatpush2.msra.mxu0 %v636
    %2730 = vmatprep.subr.mxu0 0.0
    %2731 = vmatpush2.msra.mxu0 %v635
    %2732 = vmatprep.subr.mxu0 0.0
    %2733 = vmatpush2.msra.mxu0 %v634
    %2734 = vmatprep.subr.mxu0 0.0
    %2735 = vmatpush2.msra.mxu0 %v633
    %2736 = vmatprep.subr.mxu0 0.0
    %2737 = vmatpush2.msra.mxu0 %v632
    %2738 = vmatprep.subr.mxu0 0.0
    %2739 = vmatpush2.msra.mxu0 %v631
    %2740 = vmatprep.subr.mxu0 0.0
    %2741 = vmatpush2.msra.mxu0 %v630
    %2742 = vmatprep.subr.mxu0 0.0
    %2743 = vmatpush2.msra.mxu0 %v629
    %2744 = vmatprep.mubr.f32.mxu0 %v1252
    %2745 = vmatmul.mubr.f32.gmra.mxu0 %v1244
    %v2746 = vpop.f32.mrf.mxu0
    %v2747 = vadd.f32 %v2677, %v2746
    %v2748 = vpop.f32.mrf.mxu0
    %2749 = vdwg.mxu0
    %2750 = vmatprep.subr.mxu0 0.0
    %2751 = vmatpush1.msra.mxu0 %v660
    %2752 = vmatprep.subr.mxu0 0.0
    %2753 = vmatpush1.msra.mxu0 %v659
    %2754 = vmatprep.subr.mxu0 0.0
    %2755 = vmatpush1.msra.mxu0 %v658
    %2756 = vmatprep.subr.mxu0 0.0
    %2757 = vmatpush1.msra.mxu0 %v657
    %2758 = vmatprep.subr.mxu0 0.0
    %2759 = vmatpush1.msra.mxu0 %v656
    %2760 = vmatprep.subr.mxu0 0.0
    %2761 = vmatpush1.msra.mxu0 %v655
    %2762 = vmatprep.subr.mxu0 0.0
    %2763 = vmatpush1.msra.mxu0 %v654
    %2764 = vmatprep.subr.mxu0 0.0
    %2765 = vmatpush1.msra.mxu0 %v653
    %2766 = vmatprep.subr.mxu0 0.0
    %2767 = vmatpush1.msra.mxu0 %v652
    %2768 = vmatprep.subr.mxu0 0.0
    %2769 = vmatpush1.msra.mxu0 %v651
    %2770 = vmatprep.subr.mxu0 0.0
    %2771 = vmatpush1.msra.mxu0 %v650
    %2772 = vmatprep.subr.mxu0 0.0
    %2773 = vmatpush1.msra.mxu0 %v649
    %2774 = vmatprep.subr.mxu0 0.0
    %2775 = vmatpush1.msra.mxu0 %v648
    %2776 = vmatprep.subr.mxu0 0.0
    %2777 = vmatpush1.msra.mxu0 %v647
    %2778 = vmatprep.subr.mxu0 0.0
    %2779 = vmatpush1.msra.mxu0 %v646
    %2780 = vmatprep.subr.mxu0 0.0
    %2781 = vmatpush1.msra.mxu0 %v645
    %2782 = vmatprep.subr.mxu0 0.0
    %2783 = vmatpush2.msra.mxu0 %v676
    %2784 = vmatprep.subr.mxu0 0.0
    %2785 = vmatpush2.msra.mxu0 %v675
    %2786 = vmatprep.subr.mxu0 0.0
    %2787 = vmatpush2.msra.mxu0 %v674
    %2788 = vmatprep.subr.mxu0 0.0
    %2789 = vmatpush2.msra.mxu0 %v673
    %2790 = vmatprep.subr.mxu0 0.0
    %2791 = vmatpush2.msra.mxu0 %v672
    %2792 = vmatprep.subr.mxu0 0.0
    %2793 = vmatpush2.msra.mxu0 %v671
    %2794 = vmatprep.subr.mxu0 0.0
    %2795 = vmatpush2.msra.mxu0 %v670
    %2796 = vmatprep.subr.mxu0 0.0
    %2797 = vmatpush2.msra.mxu0 %v669
    %2798 = vmatprep.subr.mxu0 0.0
    %2799 = vmatpush2.msra.mxu0 %v668
    %2800 = vmatprep.subr.mxu0 0.0
    %2801 = vmatpush2.msra.mxu0 %v667
    %2802 = vmatprep.subr.mxu0 0.0
    %2803 = vmatpush2.msra.mxu0 %v666
    %2804 = vmatprep.subr.mxu0 0.0
    %2805 = vmatpush2.msra.mxu0 %v665
    %2806 = vmatprep.subr.mxu0 0.0
    %2807 = vmatpush2.msra.mxu0 %v664
    %2808 = vmatprep.subr.mxu0 0.0
    %2809 = vmatpush2.msra.mxu0 %v663
    %2810 = vmatprep.subr.mxu0 0.0
    %2811 = vmatpush2.msra.mxu0 %v662
    %2812 = vmatprep.subr.mxu0 0.0
    %2813 = vmatpush2.msra.mxu0 %v661
    %2814 = vmatprep.mubr.f32.mxu0 %v1253
    %2815 = vmatmul.mubr.f32.gmra.mxu0 %v1251
    %v2816 = vpop.f32.mrf.mxu0
    %v2817 = vadd.f32 %v2747, %v2816
    %v2818 = vpop.f32.mrf.mxu0
    %2819 = vdwg.mxu0
    %2820 = vmatprep.subr.mxu0 0.0
    %2821 = vmatpush1.msra.mxu0 %v692
    %2822 = vmatprep.subr.mxu0 0.0
    %2823 = vmatpush1.msra.mxu0 %v691
    %2824 = vmatprep.subr.mxu0 0.0
    %2825 = vmatpush1.msra.mxu0 %v690
    %2826 = vmatprep.subr.mxu0 0.0
    %2827 = vmatpush1.msra.mxu0 %v689
    %2828 = vmatprep.subr.mxu0 0.0
    %2829 = vmatpush1.msra.mxu0 %v688
    %2830 = vmatprep.subr.mxu0 0.0
    %2831 = vmatpush1.msra.mxu0 %v687
    %2832 = vmatprep.subr.mxu0 0.0
    %2833 = vmatpush1.msra.mxu0 %v686
    %2834 = vmatprep.subr.mxu0 0.0
    %2835 = vmatpush1.msra.mxu0 %v685
    %2836 = vmatprep.subr.mxu0 0.0
    %2837 = vmatpush1.msra.mxu0 %v684
    %2838 = vmatprep.subr.mxu0 0.0
    %2839 = vmatpush1.msra.mxu0 %v683
    %2840 = vmatprep.subr.mxu0 0.0
    %2841 = vmatpush1.msra.mxu0 %v682
    %2842 = vmatprep.subr.mxu0 0.0
    %2843 = vmatpush1.msra.mxu0 %v681
    %2844 = vmatprep.subr.mxu0 0.0
    %2845 = vmatpush1.msra.mxu0 %v680
    %2846 = vmatprep.subr.mxu0 0.0
    %2847 = vmatpush1.msra.mxu0 %v679
    %2848 = vmatprep.subr.mxu0 0.0
    %2849 = vmatpush1.msra.mxu0 %v678
    %2850 = vmatprep.subr.mxu0 0.0
    %2851 = vmatpush1.msra.mxu0 %v677
    %2852 = vmatprep.subr.mxu0 0.0
    %2853 = vmatpush2.msra.mxu0 %v708
    %2854 = vmatprep.subr.mxu0 0.0
    %2855 = vmatpush2.msra.mxu0 %v707
    %2856 = vmatprep.subr.mxu0 0.0
    %2857 = vmatpush2.msra.mxu0 %v706
    %2858 = vmatprep.subr.mxu0 0.0
    %2859 = vmatpush2.msra.mxu0 %v705
    %2860 = vmatprep.subr.mxu0 0.0
    %2861 = vmatpush2.msra.mxu0 %v704
    %2862 = vmatprep.subr.mxu0 0.0
    %2863 = vmatpush2.msra.mxu0 %v703
    %2864 = vmatprep.subr.mxu0 0.0
    %2865 = vmatpush2.msra.mxu0 %v702
    %2866 = vmatprep.subr.mxu0 0.0
    %2867 = vmatpush2.msra.mxu0 %v701
    %2868 = vmatprep.subr.mxu0 0.0
    %2869 = vmatpush2.msra.mxu0 %v700
    %2870 = vmatprep.subr.mxu0 0.0
    %2871 = vmatpush2.msra.mxu0 %v699
    %2872 = vmatprep.subr.mxu0 0.0
    %2873 = vmatpush2.msra.mxu0 %v698
    %2874 = vmatprep.subr.mxu0 0.0
    %2875 = vmatpush2.msra.mxu0 %v697
    %2876 = vmatprep.subr.mxu0 0.0
    %2877 = vmatpush2.msra.mxu0 %v696
    %2878 = vmatprep.subr.mxu0 0.0
    %2879 = vmatpush2.msra.mxu0 %v695
    %2880 = vmatprep.subr.mxu0 0.0
    %2881 = vmatpush2.msra.mxu0 %v694
    %2882 = vmatprep.subr.mxu0 0.0
    %2883 = vmatpush2.msra.mxu0 %v693
    %2884 = vmatprep.mubr.f32.mxu0 %v1269
    %2885 = vmatmul.mubr.f32.gmra.mxu0 %v1261
    %v2886 = vpop.f32.mrf.mxu0
    %v2887 = vadd.f32 %v2817, %v2886
    %v2888 = vpop.f32.mrf.mxu0
    %2889 = vdwg.mxu0
    %2890 = vmatprep.subr.mxu0 0.0
    %2891 = vmatpush1.msra.mxu0 %v724
    %2892 = vmatprep.subr.mxu0 0.0
    %2893 = vmatpush1.msra.mxu0 %v723
    %2894 = vmatprep.subr.mxu0 0.0
    %2895 = vmatpush1.msra.mxu0 %v722
    %2896 = vmatprep.subr.mxu0 0.0
    %2897 = vmatpush1.msra.mxu0 %v721
    %2898 = vmatprep.subr.mxu0 0.0
    %2899 = vmatpush1.msra.mxu0 %v720
    %2900 = vmatprep.subr.mxu0 0.0
    %2901 = vmatpush1.msra.mxu0 %v719
    %2902 = vmatprep.subr.mxu0 0.0
    %2903 = vmatpush1.msra.mxu0 %v718
    %2904 = vmatprep.subr.mxu0 0.0
    %2905 = vmatpush1.msra.mxu0 %v717
    %2906 = vmatprep.subr.mxu0 0.0
    %2907 = vmatpush1.msra.mxu0 %v716
    %2908 = vmatprep.subr.mxu0 0.0
    %2909 = vmatpush1.msra.mxu0 %v715
    %2910 = vmatprep.subr.mxu0 0.0
    %2911 = vmatpush1.msra.mxu0 %v714
    %2912 = vmatprep.subr.mxu0 0.0
    %2913 = vmatpush1.msra.mxu0 %v713
    %2914 = vmatprep.subr.mxu0 0.0
    %2915 = vmatpush1.msra.mxu0 %v712
    %2916 = vmatprep.subr.mxu0 0.0
    %2917 = vmatpush1.msra.mxu0 %v711
    %2918 = vmatprep.subr.mxu0 0.0
    %2919 = vmatpush1.msra.mxu0 %v710
    %2920 = vmatprep.subr.mxu0 0.0
    %2921 = vmatpush1.msra.mxu0 %v709
    %2922 = vmatprep.subr.mxu0 0.0
    %2923 = vmatpush2.msra.mxu0 %v740
    %2924 = vmatprep.subr.mxu0 0.0
    %2925 = vmatpush2.msra.mxu0 %v739
    %2926 = vmatprep.subr.mxu0 0.0
    %2927 = vmatpush2.msra.mxu0 %v738
    %2928 = vmatprep.subr.mxu0 0.0
    %2929 = vmatpush2.msra.mxu0 %v737
    %2930 = vmatprep.subr.mxu0 0.0
    %2931 = vmatpush2.msra.mxu0 %v736
    %2932 = vmatprep.subr.mxu0 0.0
    %2933 = vmatpush2.msra.mxu0 %v735
    %2934 = vmatprep.subr.mxu0 0.0
    %2935 = vmatpush2.msra.mxu0 %v734
    %2936 = vmatprep.subr.mxu0 0.0
    %2937 = vmatpush2.msra.mxu0 %v733
    %2938 = vmatprep.subr.mxu0 0.0
    %2939 = vmatpush2.msra.mxu0 %v732
    %2940 = vmatprep.subr.mxu0 0.0
    %2941 = vmatpush2.msra.mxu0 %v731
    %2942 = vmatprep.subr.mxu0 0.0
    %2943 = vmatpush2.msra.mxu0 %v730
    %2944 = vmatprep.subr.mxu0 0.0
    %2945 = vmatpush2.msra.mxu0 %v729
    %2946 = vmatprep.subr.mxu0 0.0
    %2947 = vmatpush2.msra.mxu0 %v728
    %2948 = vmatprep.subr.mxu0 0.0
    %2949 = vmatpush2.msra.mxu0 %v727
    %2950 = vmatprep.subr.mxu0 0.0
    %2951 = vmatpush2.msra.mxu0 %v726
    %2952 = vmatprep.subr.mxu0 0.0
    %2953 = vmatpush2.msra.mxu0 %v725
    %2954 = vmatprep.mubr.f32.mxu0 %v1270
    %2955 = vmatmul.mubr.f32.gmra.mxu0 %v1268
    %v2956 = vpop.f32.mrf.mxu0
    %v2957 = vadd.f32 %v2887, %v2956
    %v2958 = vpop.f32.mrf.mxu0
    %2959 = vdwg.mxu0
    %2960 = vmatprep.subr.mxu0 0.0
    %2961 = vmatpush1.msra.mxu0 %v756
    %2962 = vmatprep.subr.mxu0 0.0
    %2963 = vmatpush1.msra.mxu0 %v755
    %2964 = vmatprep.subr.mxu0 0.0
    %2965 = vmatpush1.msra.mxu0 %v754
    %2966 = vmatprep.subr.mxu0 0.0
    %2967 = vmatpush1.msra.mxu0 %v753
    %2968 = vmatprep.subr.mxu0 0.0
    %2969 = vmatpush1.msra.mxu0 %v752
    %2970 = vmatprep.subr.mxu0 0.0
    %2971 = vmatpush1.msra.mxu0 %v751
    %2972 = vmatprep.subr.mxu0 0.0
    %2973 = vmatpush1.msra.mxu0 %v750
    %2974 = vmatprep.subr.mxu0 0.0
    %2975 = vmatpush1.msra.mxu0 %v749
    %2976 = vmatprep.subr.mxu0 0.0
    %2977 = vmatpush1.msra.mxu0 %v748
    %2978 = vmatprep.subr.mxu0 0.0
    %2979 = vmatpush1.msra.mxu0 %v747
    %2980 = vmatprep.subr.mxu0 0.0
    %2981 = vmatpush1.msra.mxu0 %v746
    %2982 = vmatprep.subr.mxu0 0.0
    %2983 = vmatpush1.msra.mxu0 %v745
    %2984 = vmatprep.subr.mxu0 0.0
    %2985 = vmatpush1.msra.mxu0 %v744
    %2986 = vmatprep.subr.mxu0 0.0
    %2987 = vmatpush1.msra.mxu0 %v743
    %2988 = vmatprep.subr.mxu0 0.0
    %2989 = vmatpush1.msra.mxu0 %v742
    %2990 = vmatprep.subr.mxu0 0.0
    %2991 = vmatpush1.msra.mxu0 %v741
    %2992 = vmatprep.subr.mxu0 0.0
    %2993 = vmatpush2.msra.mxu0 %v772
    %2994 = vmatprep.subr.mxu0 0.0
    %2995 = vmatpush2.msra.mxu0 %v771
    %2996 = vmatprep.subr.mxu0 0.0
    %2997 = vmatpush2.msra.mxu0 %v770
    %2998 = vmatprep.subr.mxu0 0.0
    %2999 = vmatpush2.msra.mxu0 %v769
    %3000 = vmatprep.subr.mxu0 0.0
    %3001 = vmatpush2.msra.mxu0 %v768
    %3002 = vmatprep.subr.mxu0 0.0
    %3003 = vmatpush2.msra.mxu0 %v767
    %3004 = vmatprep.subr.mxu0 0.0
    %3005 = vmatpush2.msra.mxu0 %v766
    %3006 = vmatprep.subr.mxu0 0.0
    %3007 = vmatpush2.msra.mxu0 %v765
    %3008 = vmatprep.subr.mxu0 0.0
    %3009 = vmatpush2.msra.mxu0 %v764
    %3010 = vmatprep.subr.mxu0 0.0
    %3011 = vmatpush2.msra.mxu0 %v763
    %3012 = vmatprep.subr.mxu0 0.0
    %3013 = vmatpush2.msra.mxu0 %v762
    %3014 = vmatprep.subr.mxu0 0.0
    %3015 = vmatpush2.msra.mxu0 %v761
    %3016 = vmatprep.subr.mxu0 0.0
    %3017 = vmatpush2.msra.mxu0 %v760
    %3018 = vmatprep.subr.mxu0 0.0
    %3019 = vmatpush2.msra.mxu0 %v759
    %3020 = vmatprep.subr.mxu0 0.0
    %3021 = vmatpush2.msra.mxu0 %v758
    %3022 = vmatprep.subr.mxu0 0.0
    %3023 = vmatpush2.msra.mxu0 %v757
    %3024 = vmatprep.mubr.f32.mxu0 %v1286
    %3025 = vmatmul.mubr.f32.gmra.mxu0 %v1278
    %v3026 = vpop.f32.mrf.mxu0
    %v3027 = vadd.f32 %v2957, %v3026
    %v3028 = vpop.f32.mrf.mxu0
    %3029 = vdwg.mxu0
    %3030 = vmatprep.subr.mxu0 0.0
    %3031 = vmatpush1.msra.mxu0 %v788
    %3032 = vmatprep.subr.mxu0 0.0
    %3033 = vmatpush1.msra.mxu0 %v787
    %3034 = vmatprep.subr.mxu0 0.0
    %3035 = vmatpush1.msra.mxu0 %v786
    %3036 = vmatprep.subr.mxu0 0.0
    %3037 = vmatpush1.msra.mxu0 %v785
    %3038 = vmatprep.subr.mxu0 0.0
    %3039 = vmatpush1.msra.mxu0 %v784
    %3040 = vmatprep.subr.mxu0 0.0
    %3041 = vmatpush1.msra.mxu0 %v783
    %3042 = vmatprep.subr.mxu0 0.0
    %3043 = vmatpush1.msra.mxu0 %v782
    %3044 = vmatprep.subr.mxu0 0.0
    %3045 = vmatpush1.msra.mxu0 %v781
    %3046 = vmatprep.subr.mxu0 0.0
    %3047 = vmatpush1.msra.mxu0 %v780
    %3048 = vmatprep.subr.mxu0 0.0
    %3049 = vmatpush1.msra.mxu0 %v779
    %3050 = vmatprep.subr.mxu0 0.0
    %3051 = vmatpush1.msra.mxu0 %v778
    %3052 = vmatprep.subr.mxu0 0.0
    %3053 = vmatpush1.msra.mxu0 %v777
    %3054 = vmatprep.subr.mxu0 0.0
    %3055 = vmatpush1.msra.mxu0 %v776
    %3056 = vmatprep.subr.mxu0 0.0
    %3057 = vmatpush1.msra.mxu0 %v775
    %3058 = vmatprep.subr.mxu0 0.0
    %3059 = vmatpush1.msra.mxu0 %v774
    %3060 = vmatprep.subr.mxu0 0.0
    %3061 = vmatpush1.msra.mxu0 %v773
    %3062 = vmatprep.subr.mxu0 0.0
    %3063 = vmatpush2.msra.mxu0 %v804
    %3064 = vmatprep.subr.mxu0 0.0
    %3065 = vmatpush2.msra.mxu0 %v803
    %3066 = vmatprep.subr.mxu0 0.0
    %3067 = vmatpush2.msra.mxu0 %v802
    %3068 = vmatprep.subr.mxu0 0.0
    %3069 = vmatpush2.msra.mxu0 %v801
    %3070 = vmatprep.subr.mxu0 0.0
    %3071 = vmatpush2.msra.mxu0 %v800
    %3072 = vmatprep.subr.mxu0 0.0
    %3073 = vmatpush2.msra.mxu0 %v799
    %3074 = vmatprep.subr.mxu0 0.0
    %3075 = vmatpush2.msra.mxu0 %v798
    %3076 = vmatprep.subr.mxu0 0.0
    %3077 = vmatpush2.msra.mxu0 %v797
    %3078 = vmatprep.subr.mxu0 0.0
    %3079 = vmatpush2.msra.mxu0 %v796
    %3080 = vmatprep.subr.mxu0 0.0
    %3081 = vmatpush2.msra.mxu0 %v795
    %3082 = vmatprep.subr.mxu0 0.0
    %3083 = vmatpush2.msra.mxu0 %v794
    %3084 = vmatprep.subr.mxu0 0.0
    %3085 = vmatpush2.msra.mxu0 %v793
    %3086 = vmatprep.subr.mxu0 0.0
    %3087 = vmatpush2.msra.mxu0 %v792
    %3088 = vmatprep.subr.mxu0 0.0
    %3089 = vmatpush2.msra.mxu0 %v791
    %3090 = vmatprep.subr.mxu0 0.0
    %3091 = vmatpush2.msra.mxu0 %v790
    %3092 = vmatprep.subr.mxu0 0.0
    %3093 = vmatpush2.msra.mxu0 %v789
    %3094 = vmatprep.mubr.f32.mxu0 %v1287
    %3095 = vmatmul.mubr.f32.gmra.mxu0 %v1285
    %v3096 = vpop.f32.mrf.mxu0
    %v3097 = vadd.f32 %v3027, %v3096
    %v3098 = vpop.f32.mrf.mxu0
    %3099 = vdwg.mxu0
    %3100 = vmatprep.subr.mxu0 0.0
    %3101 = vmatpush1.msra.mxu0 %v820
    %3102 = vmatprep.subr.mxu0 0.0
    %3103 = vmatpush1.msra.mxu0 %v819
    %3104 = vmatprep.subr.mxu0 0.0
    %3105 = vmatpush1.msra.mxu0 %v818
    %3106 = vmatprep.subr.mxu0 0.0
    %3107 = vmatpush1.msra.mxu0 %v817
    %3108 = vmatprep.subr.mxu0 0.0
    %3109 = vmatpush1.msra.mxu0 %v816
    %3110 = vmatprep.subr.mxu0 0.0
    %3111 = vmatpush1.msra.mxu0 %v815
    %3112 = vmatprep.subr.mxu0 0.0
    %3113 = vmatpush1.msra.mxu0 %v814
    %3114 = vmatprep.subr.mxu0 0.0
    %3115 = vmatpush1.msra.mxu0 %v813
    %3116 = vmatprep.subr.mxu0 0.0
    %3117 = vmatpush1.msra.mxu0 %v812
    %3118 = vmatprep.subr.mxu0 0.0
    %3119 = vmatpush1.msra.mxu0 %v811
    %3120 = vmatprep.subr.mxu0 0.0
    %3121 = vmatpush1.msra.mxu0 %v810
    %3122 = vmatprep.subr.mxu0 0.0
    %3123 = vmatpush1.msra.mxu0 %v809
    %3124 = vmatprep.subr.mxu0 0.0
    %3125 = vmatpush1.msra.mxu0 %v808
    %3126 = vmatprep.subr.mxu0 0.0
    %3127 = vmatpush1.msra.mxu0 %v807
    %3128 = vmatprep.subr.mxu0 0.0
    %3129 = vmatpush1.msra.mxu0 %v806
    %3130 = vmatprep.subr.mxu0 0.0
    %3131 = vmatpush1.msra.mxu0 %v805
    %3132 = vmatprep.subr.mxu0 0.0
    %3133 = vmatpush2.msra.mxu0 %v836
    %3134 = vmatprep.subr.mxu0 0.0
    %3135 = vmatpush2.msra.mxu0 %v835
    %3136 = vmatprep.subr.mxu0 0.0
    %3137 = vmatpush2.msra.mxu0 %v834
    %3138 = vmatprep.subr.mxu0 0.0
    %3139 = vmatpush2.msra.mxu0 %v833
    %3140 = vmatprep.subr.mxu0 0.0
    %3141 = vmatpush2.msra.mxu0 %v832
    %3142 = vmatprep.subr.mxu0 0.0
    %3143 = vmatpush2.msra.mxu0 %v831
    %3144 = vmatprep.subr.mxu0 0.0
    %3145 = vmatpush2.msra.mxu0 %v830
    %3146 = vmatprep.subr.mxu0 0.0
    %3147 = vmatpush2.msra.mxu0 %v829
    %3148 = vmatprep.subr.mxu0 0.0
    %3149 = vmatpush2.msra.mxu0 %v828
    %3150 = vmatprep.subr.mxu0 0.0
    %3151 = vmatpush2.msra.mxu0 %v827
    %3152 = vmatprep.subr.mxu0 0.0
    %3153 = vmatpush2.msra.mxu0 %v826
    %3154 = vmatprep.subr.mxu0 0.0
    %3155 = vmatpush2.msra.mxu0 %v825
    %3156 = vmatprep.subr.mxu0 0.0
    %3157 = vmatpush2.msra.mxu0 %v824
    %3158 = vmatprep.subr.mxu0 0.0
    %3159 = vmatpush2.msra.mxu0 %v823
    %3160 = vmatprep.subr.mxu0 0.0
    %3161 = vmatpush2.msra.mxu0 %v822
    %3162 = vmatprep.subr.mxu0 0.0
    %3163 = vmatpush2.msra.mxu0 %v821
    %3164 = vmatprep.mubr.f32.mxu0 %v1303
    %3165 = vmatmul.mubr.f32.gmra.mxu0 %v1295
    %v3166 = vpop.f32.mrf.mxu0
    %v3167 = vadd.f32 %v3097, %v3166
    %v3168 = vpop.f32.mrf.mxu0
    %3169 = vdwg.mxu0
    %3170 = vmatprep.subr.mxu0 0.0
    %3171 = vmatpush1.msra.mxu0 %v852
    %3172 = vmatprep.subr.mxu0 0.0
    %3173 = vmatpush1.msra.mxu0 %v851
    %3174 = vmatprep.subr.mxu0 0.0
    %3175 = vmatpush1.msra.mxu0 %v850
    %3176 = vmatprep.subr.mxu0 0.0
    %3177 = vmatpush1.msra.mxu0 %v849
    %3178 = vmatprep.subr.mxu0 0.0
    %3179 = vmatpush1.msra.mxu0 %v848
    %3180 = vmatprep.subr.mxu0 0.0
    %3181 = vmatpush1.msra.mxu0 %v847
    %3182 = vmatprep.subr.mxu0 0.0
    %3183 = vmatpush1.msra.mxu0 %v846
    %3184 = vmatprep.subr.mxu0 0.0
    %3185 = vmatpush1.msra.mxu0 %v845
    %3186 = vmatprep.subr.mxu0 0.0
    %3187 = vmatpush1.msra.mxu0 %v844
    %3188 = vmatprep.subr.mxu0 0.0
    %3189 = vmatpush1.msra.mxu0 %v843
    %3190 = vmatprep.subr.mxu0 0.0
    %3191 = vmatpush1.msra.mxu0 %v842
    %3192 = vmatprep.subr.mxu0 0.0
    %3193 = vmatpush1.msra.mxu0 %v841
    %3194 = vmatprep.subr.mxu0 0.0
    %3195 = vmatpush1.msra.mxu0 %v840
    %3196 = vmatprep.subr.mxu0 0.0
    %3197 = vmatpush1.msra.mxu0 %v839
    %3198 = vmatprep.subr.mxu0 0.0
    %3199 = vmatpush1.msra.mxu0 %v838
    %3200 = vmatprep.subr.mxu0 0.0
    %3201 = vmatpush1.msra.mxu0 %v837
    %3202 = vmatprep.subr.mxu0 0.0
    %3203 = vmatpush2.msra.mxu0 %v868
    %3204 = vmatprep.subr.mxu0 0.0
    %3205 = vmatpush2.msra.mxu0 %v867
    %3206 = vmatprep.subr.mxu0 0.0
    %3207 = vmatpush2.msra.mxu0 %v866
    %3208 = vmatprep.subr.mxu0 0.0
    %3209 = vmatpush2.msra.mxu0 %v865
    %3210 = vmatprep.subr.mxu0 0.0
    %3211 = vmatpush2.msra.mxu0 %v864
    %3212 = vmatprep.subr.mxu0 0.0
    %3213 = vmatpush2.msra.mxu0 %v863
    %3214 = vmatprep.subr.mxu0 0.0
    %3215 = vmatpush2.msra.mxu0 %v862
    %3216 = vmatprep.subr.mxu0 0.0
    %3217 = vmatpush2.msra.mxu0 %v861
    %3218 = vmatprep.subr.mxu0 0.0
    %3219 = vmatpush2.msra.mxu0 %v860
    %3220 = vmatprep.subr.mxu0 0.0
    %3221 = vmatpush2.msra.mxu0 %v859
    %3222 = vmatprep.subr.mxu0 0.0
    %3223 = vmatpush2.msra.mxu0 %v858
    %3224 = vmatprep.subr.mxu0 0.0
    %3225 = vmatpush2.msra.mxu0 %v857
    %3226 = vmatprep.subr.mxu0 0.0
    %3227 = vmatpush2.msra.mxu0 %v856
    %3228 = vmatprep.subr.mxu0 0.0
    %3229 = vmatpush2.msra.mxu0 %v855
    %3230 = vmatprep.subr.mxu0 0.0
    %3231 = vmatpush2.msra.mxu0 %v854
    %3232 = vmatprep.subr.mxu0 0.0
    %3233 = vmatpush2.msra.mxu0 %v853
    %3234 = vmatprep.mubr.f32.mxu0 %v1304
    %3235 = vmatmul.mubr.f32.gmra.mxu0 %v1302
    %v3236 = vpop.f32.mrf.mxu0
    %v3237 = vadd.f32 %v3167, %v3236
    %v3238 = vpop.f32.mrf.mxu0
    %3239 = vdwg.mxu0
    %3240 = vmatprep.subr.mxu0 0.0
    %3241 = vmatpush1.msra.mxu0 %v884
    %3242 = vmatprep.subr.mxu0 0.0
    %3243 = vmatpush1.msra.mxu0 %v883
    %3244 = vmatprep.subr.mxu0 0.0
    %3245 = vmatpush1.msra.mxu0 %v882
    %3246 = vmatprep.subr.mxu0 0.0
    %3247 = vmatpush1.msra.mxu0 %v881
    %3248 = vmatprep.subr.mxu0 0.0
    %3249 = vmatpush1.msra.mxu0 %v880
    %3250 = vmatprep.subr.mxu0 0.0
    %3251 = vmatpush1.msra.mxu0 %v879
    %3252 = vmatprep.subr.mxu0 0.0
    %3253 = vmatpush1.msra.mxu0 %v878
    %3254 = vmatprep.subr.mxu0 0.0
    %3255 = vmatpush1.msra.mxu0 %v877
    %3256 = vmatprep.subr.mxu0 0.0
    %3257 = vmatpush1.msra.mxu0 %v876
    %3258 = vmatprep.subr.mxu0 0.0
    %3259 = vmatpush1.msra.mxu0 %v875
    %3260 = vmatprep.subr.mxu0 0.0
    %3261 = vmatpush1.msra.mxu0 %v874
    %3262 = vmatprep.subr.mxu0 0.0
    %3263 = vmatpush1.msra.mxu0 %v873
    %3264 = vmatprep.subr.mxu0 0.0
    %3265 = vmatpush1.msra.mxu0 %v872
    %3266 = vmatprep.subr.mxu0 0.0
    %3267 = vmatpush1.msra.mxu0 %v871
    %3268 = vmatprep.subr.mxu0 0.0
    %3269 = vmatpush1.msra.mxu0 %v870
    %3270 = vmatprep.subr.mxu0 0.0
    %3271 = vmatpush1.msra.mxu0 %v869
    %3272 = vmatprep.subr.mxu0 0.0
    %3273 = vmatpush2.msra.mxu0 %v900
    %3274 = vmatprep.subr.mxu0 0.0
    %3275 = vmatpush2.msra.mxu0 %v899
    %3276 = vmatprep.subr.mxu0 0.0
    %3277 = vmatpush2.msra.mxu0 %v898
    %3278 = vmatprep.subr.mxu0 0.0
    %3279 = vmatpush2.msra.mxu0 %v897
    %3280 = vmatprep.subr.mxu0 0.0
    %3281 = vmatpush2.msra.mxu0 %v896
    %3282 = vmatprep.subr.mxu0 0.0
    %3283 = vmatpush2.msra.mxu0 %v895
    %3284 = vmatprep.subr.mxu0 0.0
    %3285 = vmatpush2.msra.mxu0 %v894
    %3286 = vmatprep.subr.mxu0 0.0
    %3287 = vmatpush2.msra.mxu0 %v893
    %3288 = vmatprep.subr.mxu0 0.0
    %3289 = vmatpush2.msra.mxu0 %v892
    %3290 = vmatprep.subr.mxu0 0.0
    %3291 = vmatpush2.msra.mxu0 %v891
    %3292 = vmatprep.subr.mxu0 0.0
    %3293 = vmatpush2.msra.mxu0 %v890
    %3294 = vmatprep.subr.mxu0 0.0
    %3295 = vmatpush2.msra.mxu0 %v889
    %3296 = vmatprep.subr.mxu0 0.0
    %3297 = vmatpush2.msra.mxu0 %v888
    %3298 = vmatprep.subr.mxu0 0.0
    %3299 = vmatpush2.msra.mxu0 %v887
    %3300 = vmatprep.subr.mxu0 0.0
    %3301 = vmatpush2.msra.mxu0 %v886
    %3302 = vmatprep.subr.mxu0 0.0
    %3303 = vmatpush2.msra.mxu0 %v885
    %3304 = vmatprep.mubr.f32.mxu0 %v1320
    %3305 = vmatmul.mubr.f32.gmra.mxu0 %v1312
    %v3306 = vpop.f32.mrf.mxu0
    %v3307 = vadd.f32 %v3237, %v3306
    %v3308 = vpop.f32.mrf.mxu0
    %3309 = vdwg.mxu0
    %3310 = vmatprep.subr.mxu0 0.0
    %3311 = vmatpush1.msra.mxu0 %v916
    %3312 = vmatprep.subr.mxu0 0.0
    %3313 = vmatpush1.msra.mxu0 %v915
    %3314 = vmatprep.subr.mxu0 0.0
    %3315 = vmatpush1.msra.mxu0 %v914
    %3316 = vmatprep.subr.mxu0 0.0
    %3317 = vmatpush1.msra.mxu0 %v913
    %3318 = vmatprep.subr.mxu0 0.0
    %3319 = vmatpush1.msra.mxu0 %v912
    %3320 = vmatprep.subr.mxu0 0.0
    %3321 = vmatpush1.msra.mxu0 %v911
    %3322 = vmatprep.subr.mxu0 0.0
    %3323 = vmatpush1.msra.mxu0 %v910
    %3324 = vmatprep.subr.mxu0 0.0
    %3325 = vmatpush1.msra.mxu0 %v909
    %3326 = vmatprep.subr.mxu0 0.0
    %3327 = vmatpush1.msra.mxu0 %v908
    %3328 = vmatprep.subr.mxu0 0.0
    %3329 = vmatpush1.msra.mxu0 %v907
    %3330 = vmatprep.subr.mxu0 0.0
    %3331 = vmatpush1.msra.mxu0 %v906
    %3332 = vmatprep.subr.mxu0 0.0
    %3333 = vmatpush1.msra.mxu0 %v905
    %3334 = vmatprep.subr.mxu0 0.0
    %3335 = vmatpush1.msra.mxu0 %v904
    %3336 = vmatprep.subr.mxu0 0.0
    %3337 = vmatpush1.msra.mxu0 %v903
    %3338 = vmatprep.subr.mxu0 0.0
    %3339 = vmatpush1.msra.mxu0 %v902
    %3340 = vmatprep.subr.mxu0 0.0
    %3341 = vmatpush1.msra.mxu0 %v901
    %3342 = vmatprep.subr.mxu0 0.0
    %3343 = vmatpush2.msra.mxu0 %v932
    %3344 = vmatprep.subr.mxu0 0.0
    %3345 = vmatpush2.msra.mxu0 %v931
    %3346 = vmatprep.subr.mxu0 0.0
    %3347 = vmatpush2.msra.mxu0 %v930
    %3348 = vmatprep.subr.mxu0 0.0
    %3349 = vmatpush2.msra.mxu0 %v929
    %3350 = vmatprep.subr.mxu0 0.0
    %3351 = vmatpush2.msra.mxu0 %v928
    %3352 = vmatprep.subr.mxu0 0.0
    %3353 = vmatpush2.msra.mxu0 %v927
    %3354 = vmatprep.subr.mxu0 0.0
    %3355 = vmatpush2.msra.mxu0 %v926
    %3356 = vmatprep.subr.mxu0 0.0
    %3357 = vmatpush2.msra.mxu0 %v925
    %3358 = vmatprep.subr.mxu0 0.0
    %3359 = vmatpush2.msra.mxu0 %v924
    %3360 = vmatprep.subr.mxu0 0.0
    %3361 = vmatpush2.msra.mxu0 %v923
    %3362 = vmatprep.subr.mxu0 0.0
    %3363 = vmatpush2.msra.mxu0 %v922
    %3364 = vmatprep.subr.mxu0 0.0
    %3365 = vmatpush2.msra.mxu0 %v921
    %3366 = vmatprep.subr.mxu0 0.0
    %3367 = vmatpush2.msra.mxu0 %v920
    %3368 = vmatprep.subr.mxu0 0.0
    %3369 = vmatpush2.msra.mxu0 %v919
    %3370 = vmatprep.subr.mxu0 0.0
    %3371 = vmatpush2.msra.mxu0 %v918
    %3372 = vmatprep.subr.mxu0 0.0
    %3373 = vmatpush2.msra.mxu0 %v917
    %3374 = vmatprep.mubr.f32.mxu0 %v1321
    %3375 = vmatmul.mubr.f32.gmra.mxu0 %v1319
    %v3376 = vpop.f32.mrf.mxu0
    %v3377 = vadd.f32 %v3307, %v3376
    %v3378 = vpop.f32.mrf.mxu0
    %3379 = vdwg.mxu0
    %3380 = vmatprep.subr.mxu0 0.0
    %3381 = vmatpush1.msra.mxu0 %v948
    %3382 = vmatprep.subr.mxu0 0.0
    %3383 = vmatpush1.msra.mxu0 %v947
    %3384 = vmatprep.subr.mxu0 0.0
    %3385 = vmatpush1.msra.mxu0 %v946
    %3386 = vmatprep.subr.mxu0 0.0
    %3387 = vmatpush1.msra.mxu0 %v945
    %3388 = vmatprep.subr.mxu0 0.0
    %3389 = vmatpush1.msra.mxu0 %v944
    %3390 = vmatprep.subr.mxu0 0.0
    %3391 = vmatpush1.msra.mxu0 %v943
    %3392 = vmatprep.subr.mxu0 0.0
    %3393 = vmatpush1.msra.mxu0 %v942
    %3394 = vmatprep.subr.mxu0 0.0
    %3395 = vmatpush1.msra.mxu0 %v941
    %3396 = vmatprep.subr.mxu0 0.0
    %3397 = vmatpush1.msra.mxu0 %v940
    %3398 = vmatprep.subr.mxu0 0.0
    %3399 = vmatpush1.msra.mxu0 %v939
    %3400 = vmatprep.subr.mxu0 0.0
    %3401 = vmatpush1.msra.mxu0 %v938
    %3402 = vmatprep.subr.mxu0 0.0
    %3403 = vmatpush1.msra.mxu0 %v937
    %3404 = vmatprep.subr.mxu0 0.0
    %3405 = vmatpush1.msra.mxu0 %v936
    %3406 = vmatprep.subr.mxu0 0.0
    %3407 = vmatpush1.msra.mxu0 %v935
    %3408 = vmatprep.subr.mxu0 0.0
    %3409 = vmatpush1.msra.mxu0 %v934
    %3410 = vmatprep.subr.mxu0 0.0
    %3411 = vmatpush1.msra.mxu0 %v933
    %3412 = vmatprep.subr.mxu0 0.0
    %3413 = vmatpush2.msra.mxu0 %v964
    %3414 = vmatprep.subr.mxu0 0.0
    %3415 = vmatpush2.msra.mxu0 %v963
    %3416 = vmatprep.subr.mxu0 0.0
    %3417 = vmatpush2.msra.mxu0 %v962
    %3418 = vmatprep.subr.mxu0 0.0
    %3419 = vmatpush2.msra.mxu0 %v961
    %3420 = vmatprep.subr.mxu0 0.0
    %3421 = vmatpush2.msra.mxu0 %v960
    %3422 = vmatprep.subr.mxu0 0.0
    %3423 = vmatpush2.msra.mxu0 %v959
    %3424 = vmatprep.subr.mxu0 0.0
    %3425 = vmatpush2.msra.mxu0 %v958
    %3426 = vmatprep.subr.mxu0 0.0
    %3427 = vmatpush2.msra.mxu0 %v957
    %3428 = vmatprep.subr.mxu0 0.0
    %3429 = vmatpush2.msra.mxu0 %v956
    %3430 = vmatprep.subr.mxu0 0.0
    %3431 = vmatpush2.msra.mxu0 %v955
    %3432 = vmatprep.subr.mxu0 0.0
    %3433 = vmatpush2.msra.mxu0 %v954
    %3434 = vmatprep.subr.mxu0 0.0
    %3435 = vmatpush2.msra.mxu0 %v953
    %3436 = vmatprep.subr.mxu0 0.0
    %3437 = vmatpush2.msra.mxu0 %v952
    %3438 = vmatprep.subr.mxu0 0.0
    %3439 = vmatpush2.msra.mxu0 %v951
    %3440 = vmatprep.subr.mxu0 0.0
    %3441 = vmatpush2.msra.mxu0 %v950
    %3442 = vmatprep.subr.mxu0 0.0
    %3443 = vmatpush2.msra.mxu0 %v949
    %3444 = vmatprep.mubr.f32.mxu0 %v1337
    %3445 = vmatmul.mubr.f32.gmra.mxu0 %v1329
    %v3446 = vpop.f32.mrf.mxu0
    %v3447 = vadd.f32 %v3377, %v3446
    %v3448 = vpop.f32.mrf.mxu0
    %3449 = vdwg.mxu0
    %3450 = vmatprep.subr.mxu0 0.0
    %3451 = vmatpush1.msra.mxu0 %v980
    %3452 = vmatprep.subr.mxu0 0.0
    %3453 = vmatpush1.msra.mxu0 %v979
    %3454 = vmatprep.subr.mxu0 0.0
    %3455 = vmatpush1.msra.mxu0 %v978
    %3456 = vmatprep.subr.mxu0 0.0
    %3457 = vmatpush1.msra.mxu0 %v977
    %3458 = vmatprep.subr.mxu0 0.0
    %3459 = vmatpush1.msra.mxu0 %v976
    %3460 = vmatprep.subr.mxu0 0.0
    %3461 = vmatpush1.msra.mxu0 %v975
    %3462 = vmatprep.subr.mxu0 0.0
    %3463 = vmatpush1.msra.mxu0 %v974
    %3464 = vmatprep.subr.mxu0 0.0
    %3465 = vmatpush1.msra.mxu0 %v973
    %3466 = vmatprep.subr.mxu0 0.0
    %3467 = vmatpush1.msra.mxu0 %v972
    %3468 = vmatprep.subr.mxu0 0.0
    %3469 = vmatpush1.msra.mxu0 %v971
    %3470 = vmatprep.subr.mxu0 0.0
    %3471 = vmatpush1.msra.mxu0 %v970
    %3472 = vmatprep.subr.mxu0 0.0
    %3473 = vmatpush1.msra.mxu0 %v969
    %3474 = vmatprep.subr.mxu0 0.0
    %3475 = vmatpush1.msra.mxu0 %v968
    %3476 = vmatprep.subr.mxu0 0.0
    %3477 = vmatpush1.msra.mxu0 %v967
    %3478 = vmatprep.subr.mxu0 0.0
    %3479 = vmatpush1.msra.mxu0 %v966
    %3480 = vmatprep.subr.mxu0 0.0
    %3481 = vmatpush1.msra.mxu0 %v965
    %3482 = vmatprep.subr.mxu0 0.0
    %3483 = vmatpush2.msra.mxu0 %v996
    %3484 = vmatprep.subr.mxu0 0.0
    %3485 = vmatpush2.msra.mxu0 %v995
    %3486 = vmatprep.subr.mxu0 0.0
    %3487 = vmatpush2.msra.mxu0 %v994
    %3488 = vmatprep.subr.mxu0 0.0
    %3489 = vmatpush2.msra.mxu0 %v993
    %3490 = vmatprep.subr.mxu0 0.0
    %3491 = vmatpush2.msra.mxu0 %v992
    %3492 = vmatprep.subr.mxu0 0.0
    %3493 = vmatpush2.msra.mxu0 %v991
    %3494 = vmatprep.subr.mxu0 0.0
    %3495 = vmatpush2.msra.mxu0 %v990
    %3496 = vmatprep.subr.mxu0 0.0
    %3497 = vmatpush2.msra.mxu0 %v989
    %3498 = vmatprep.subr.mxu0 0.0
    %3499 = vmatpush2.msra.mxu0 %v988
    %3500 = vmatprep.subr.mxu0 0.0
    %3501 = vmatpush2.msra.mxu0 %v987
    %3502 = vmatprep.subr.mxu0 0.0
    %3503 = vmatpush2.msra.mxu0 %v986
    %3504 = vmatprep.subr.mxu0 0.0
    %3505 = vmatpush2.msra.mxu0 %v985
    %3506 = vmatprep.subr.mxu0 0.0
    %3507 = vmatpush2.msra.mxu0 %v984
    %3508 = vmatprep.subr.mxu0 0.0
    %3509 = vmatpush2.msra.mxu0 %v983
    %3510 = vmatprep.subr.mxu0 0.0
    %3511 = vmatpush2.msra.mxu0 %v982
    %3512 = vmatprep.subr.mxu0 0.0
    %3513 = vmatpush2.msra.mxu0 %v981
    %3514 = vmatprep.mubr.f32.mxu0 %v1338
    %3515 = vmatmul.mubr.f32.gmra.mxu0 %v1336
    %v3516 = vpop.f32.mrf.mxu0
    %v3517 = vadd.f32 %v3447, %v3516
    %v3518 = vpop.f32.mrf.mxu0
    %3519 = vdwg.mxu0
    %3520 = vmatprep.subr.mxu0 0.0
    %3521 = vmatpush1.msra.mxu0 %v1012
    %3522 = vmatprep.subr.mxu0 0.0
    %3523 = vmatpush1.msra.mxu0 %v1011
    %3524 = vmatprep.subr.mxu0 0.0
    %3525 = vmatpush1.msra.mxu0 %v1010
    %3526 = vmatprep.subr.mxu0 0.0
    %3527 = vmatpush1.msra.mxu0 %v1009
    %3528 = vmatprep.subr.mxu0 0.0
    %3529 = vmatpush1.msra.mxu0 %v1008
    %3530 = vmatprep.subr.mxu0 0.0
    %3531 = vmatpush1.msra.mxu0 %v1007
    %3532 = vmatprep.subr.mxu0 0.0
    %3533 = vmatpush1.msra.mxu0 %v1006
    %3534 = vmatprep.subr.mxu0 0.0
    %3535 = vmatpush1.msra.mxu0 %v1005
    %3536 = vmatprep.subr.mxu0 0.0
    %3537 = vmatpush1.msra.mxu0 %v1004
    %3538 = vmatprep.subr.mxu0 0.0
    %3539 = vmatpush1.msra.mxu0 %v1003
    %3540 = vmatprep.subr.mxu0 0.0
    %3541 = vmatpush1.msra.mxu0 %v1002
    %3542 = vmatprep.subr.mxu0 0.0
    %3543 = vmatpush1.msra.mxu0 %v1001
    %3544 = vmatprep.subr.mxu0 0.0
    %3545 = vmatpush1.msra.mxu0 %v1000
    %3546 = vmatprep.subr.mxu0 0.0
    %3547 = vmatpush1.msra.mxu0 %v999
    %3548 = vmatprep.subr.mxu0 0.0
    %3549 = vmatpush1.msra.mxu0 %v998
    %3550 = vmatprep.subr.mxu0 0.0
    %3551 = vmatpush1.msra.mxu0 %v997
    %3552 = vmatprep.subr.mxu0 0.0
    %3553 = vmatpush2.msra.mxu0 %v1028
    %3554 = vmatprep.subr.mxu0 0.0
    %3555 = vmatpush2.msra.mxu0 %v1027
    %3556 = vmatprep.subr.mxu0 0.0
    %3557 = vmatpush2.msra.mxu0 %v1026
    %3558 = vmatprep.subr.mxu0 0.0
    %3559 = vmatpush2.msra.mxu0 %v1025
    %3560 = vmatprep.subr.mxu0 0.0
    %3561 = vmatpush2.msra.mxu0 %v1024
    %3562 = vmatprep.subr.mxu0 0.0
    %3563 = vmatpush2.msra.mxu0 %v1023
    %3564 = vmatprep.subr.mxu0 0.0
    %3565 = vmatpush2.msra.mxu0 %v1022
    %3566 = vmatprep.subr.mxu0 0.0
    %3567 = vmatpush2.msra.mxu0 %v1021
    %3568 = vmatprep.subr.mxu0 0.0
    %3569 = vmatpush2.msra.mxu0 %v1020
    %3570 = vmatprep.subr.mxu0 0.0
    %3571 = vmatpush2.msra.mxu0 %v1019
    %3572 = vmatprep.subr.mxu0 0.0
    %3573 = vmatpush2.msra.mxu0 %v1018
    %3574 = vmatprep.subr.mxu0 0.0
    %3575 = vmatpush2.msra.mxu0 %v1017
    %3576 = vmatprep.subr.mxu0 0.0
    %3577 = vmatpush2.msra.mxu0 %v1016
    %3578 = vmatprep.subr.mxu0 0.0
    %3579 = vmatpush2.msra.mxu0 %v1015
    %3580 = vmatprep.subr.mxu0 0.0
    %3581 = vmatpush2.msra.mxu0 %v1014
    %3582 = vmatprep.subr.mxu0 0.0
    %3583 = vmatpush2.msra.mxu0 %v1013
    %3584 = vmatprep.mubr.f32.mxu0 %v1354
    %3585 = vmatmul.mubr.f32.gmra.mxu0 %v1346
    %v3586 = vpop.f32.mrf.mxu0
    %v3587 = vadd.f32 %v3517, %v3586
    %v3588 = vpop.f32.mrf.mxu0
    %3589 = vdwg.mxu0
    %3590 = vmatprep.subr.mxu0 0.0
    %3591 = vmatpush1.msra.mxu0 %v1044
    %3592 = vmatprep.subr.mxu0 0.0
    %3593 = vmatpush1.msra.mxu0 %v1043
    %3594 = vmatprep.subr.mxu0 0.0
    %3595 = vmatpush1.msra.mxu0 %v1042
    %3596 = vmatprep.subr.mxu0 0.0
    %3597 = vmatpush1.msra.mxu0 %v1041
    %3598 = vmatprep.subr.mxu0 0.0
    %3599 = vmatpush1.msra.mxu0 %v1040
    %3600 = vmatprep.subr.mxu0 0.0
    %3601 = vmatpush1.msra.mxu0 %v1039
    %3602 = vmatprep.subr.mxu0 0.0
    %3603 = vmatpush1.msra.mxu0 %v1038
    %3604 = vmatprep.subr.mxu0 0.0
    %3605 = vmatpush1.msra.mxu0 %v1037
    %3606 = vmatprep.subr.mxu0 0.0
    %3607 = vmatpush1.msra.mxu0 %v1036
    %3608 = vmatprep.subr.mxu0 0.0
    %3609 = vmatpush1.msra.mxu0 %v1035
    %3610 = vmatprep.subr.mxu0 0.0
    %3611 = vmatpush1.msra.mxu0 %v1034
    %3612 = vmatprep.subr.mxu0 0.0
    %3613 = vmatpush1.msra.mxu0 %v1033
    %3614 = vmatprep.subr.mxu0 0.0
    %3615 = vmatpush1.msra.mxu0 %v1032
    %3616 = vmatprep.subr.mxu0 0.0
    %3617 = vmatpush1.msra.mxu0 %v1031
    %3618 = vmatprep.subr.mxu0 0.0
    %3619 = vmatpush1.msra.mxu0 %v1030
    %3620 = vmatprep.subr.mxu0 0.0
    %3621 = vmatpush1.msra.mxu0 %v1029
    %3622 = vmatprep.subr.mxu0 0.0
    %3623 = vmatpush2.msra.mxu0 %v1060
    %3624 = vmatprep.subr.mxu0 0.0
    %3625 = vmatpush2.msra.mxu0 %v1059
    %3626 = vmatprep.subr.mxu0 0.0
    %3627 = vmatpush2.msra.mxu0 %v1058
    %3628 = vmatprep.subr.mxu0 0.0
    %3629 = vmatpush2.msra.mxu0 %v1057
    %3630 = vmatprep.subr.mxu0 0.0
    %3631 = vmatpush2.msra.mxu0 %v1056
    %3632 = vmatprep.subr.mxu0 0.0
    %3633 = vmatpush2.msra.mxu0 %v1055
    %3634 = vmatprep.subr.mxu0 0.0
    %3635 = vmatpush2.msra.mxu0 %v1054
    %3636 = vmatprep.subr.mxu0 0.0
    %3637 = vmatpush2.msra.mxu0 %v1053
    %3638 = vmatprep.subr.mxu0 0.0
    %3639 = vmatpush2.msra.mxu0 %v1052
    %3640 = vmatprep.subr.mxu0 0.0
    %3641 = vmatpush2.msra.mxu0 %v1051
    %3642 = vmatprep.subr.mxu0 0.0
    %3643 = vmatpush2.msra.mxu0 %v1050
    %3644 = vmatprep.subr.mxu0 0.0
    %3645 = vmatpush2.msra.mxu0 %v1049
    %3646 = vmatprep.subr.mxu0 0.0
    %3647 = vmatpush2.msra.mxu0 %v1048
    %3648 = vmatprep.subr.mxu0 0.0
    %3649 = vmatpush2.msra.mxu0 %v1047
    %3650 = vmatprep.subr.mxu0 0.0
    %3651 = vmatpush2.msra.mxu0 %v1046
    %3652 = vmatprep.subr.mxu0 0.0
    %3653 = vmatpush2.msra.mxu0 %v1045
    %3654 = vmatprep.mubr.f32.mxu0 %v1355
    %3655 = vmatmul.mubr.f32.gmra.mxu0 %v1353
    %v3656 = vpop.f32.mrf.mxu0
    %v3657 = vadd.f32 %v3587, %v3656
    %v3658 = vpop.f32.mrf.mxu0
    %3659 = vdwg.mxu0
    %v3660 = vmax.f32 %v3657, 0.0
    %v3661 = vld [vmem:[%s3] sm:$0xff]
    %v3662 = vld [vmem:[%s3 + $0x8] sm:$0xff]
    %v3663 = vld [vmem:[%s3 + $0x10] sm:$0xff]
    %v3664 = vld [vmem:[%s3 + $0x18] sm:$0xff]
    %v3665 = vld [vmem:[%s3 + $0x20] sm:$0xff]
    %v3666 = vld [vmem:[%s3 + $0x28] sm:$0xff]
    %v3667 = vld [vmem:[%s3 + $0x30] sm:$0xff]
    %v3668 = vld [vmem:[%s3 + $0x38] sm:$0xff]
    %v3669 = vld [vmem:[%s4] sm:$0x1]
    %v3671 = vlaneseq
    %v3672 = vshrl.u32 %v3671, 7
    %v3673 = vsub.s32 0, %v3672
    %v3674 = vrot.slane %v3669, %v3673
    %vm3676 = vcmask 523264
    %v3678 = vsel %vm3676, %v3660, 0
    %3680 = vmatprep.subr.mxu0 0.0
    %3681 = vmatpush1.msra.mxu0 0.0
    %3682 = vmatprep.subr.mxu0 0.0
    %3683 = vmatpush1.msra.mxu0 0.0
    %3684 = vmatprep.subr.mxu0 0.0
    %3685 = vmatpush1.msra.mxu0 0.0
    %3686 = vmatprep.subr.mxu0 0.0
    %3687 = vmatpush1.msra.mxu0 0.0
    %3688 = vmatprep.subr.mxu0 0.0
    %3689 = vmatpush1.msra.mxu0 0.0
    %3690 = vmatprep.subr.mxu0 0.0
    %3691 = vmatpush1.msra.mxu0 0.0
    %3692 = vmatprep.subr.mxu0 0.0
    %3693 = vmatpush1.msra.mxu0 0.0
    %3694 = vmatprep.subr.mxu0 0.0
    %3695 = vmatpush1.msra.mxu0 0.0
    %3696 = vmatprep.subr.mxu0 0.0
    %3697 = vmatpush1.msra.mxu0 %v3668
    %3698 = vmatprep.subr.mxu0 0.0
    %3699 = vmatpush1.msra.mxu0 %v3667
    %3700 = vmatprep.subr.mxu0 0.0
    %3701 = vmatpush1.msra.mxu0 %v3666
    %3702 = vmatprep.subr.mxu0 0.0
    %3703 = vmatpush1.msra.mxu0 %v3665
    %3704 = vmatprep.subr.mxu0 0.0
    %3705 = vmatpush1.msra.mxu0 %v3664
    %3706 = vmatprep.subr.mxu0 0.0
    %3707 = vmatpush1.msra.mxu0 %v3663
    %3708 = vmatprep.subr.mxu0 0.0
    %3709 = vmatpush1.msra.mxu0 %v3662
    %3710 = vmatprep.subr.mxu0 0.0
    %3711 = vmatpush1.msra.mxu0 %v3661
    %3712 = vmatprep.subr.mxu0 0.0
    %3713 = vmatpush2.msra.mxu0 0.0
    %3714 = vmatprep.subr.mxu0 0.0
    %3715 = vmatpush2.msra.mxu0 0.0
    %3716 = vmatprep.subr.mxu0 0.0
    %3717 = vmatpush2.msra.mxu0 0.0
    %3718 = vmatprep.subr.mxu0 0.0
    %3719 = vmatpush2.msra.mxu0 0.0
    %3720 = vmatprep.subr.mxu0 0.0
    %3721 = vmatpush2.msra.mxu0 0.0
    %3722 = vmatprep.subr.mxu0 0.0
    %3723 = vmatpush2.msra.mxu0 0.0
    %3724 = vmatprep.subr.mxu0 0.0
    %3725 = vmatpush2.msra.mxu0 0.0
    %3726 = vmatprep.subr.mxu0 0.0
    %3727 = vmatpush2.msra.mxu0 0.0
    %3728 = vmatprep.subr.mxu0 0.0
    %3729 = vmatpush2.msra.mxu0 0.0
    %3730 = vmatprep.subr.mxu0 0.0
    %3731 = vmatpush2.msra.mxu0 0.0
    %3732 = vmatprep.subr.mxu0 0.0
    %3733 = vmatpush2.msra.mxu0 0.0
    %3734 = vmatprep.subr.mxu0 0.0
    %3735 = vmatpush2.msra.mxu0 0.0
    %3736 = vmatprep.subr.mxu0 0.0
    %3737 = vmatpush2.msra.mxu0 0.0
    %3738 = vmatprep.subr.mxu0 0.0
    %3739 = vmatpush2.msra.mxu0 0.0
    %3740 = vmatprep.subr.mxu0 0.0
    %3741 = vmatpush2.msra.mxu0 0.0
    %3742 = vmatprep.subr.mxu0 0.0
    %3743 = vmatpush2.msra.mxu0 0.0
    %3744 = vmatprep.mubr.f32.mxu0 0.0
    %3745 = vmatmul.mubr.f32.gmra.mxu0 %v3678
    %v3746 = vpop.f32.mrf.mxu0
    %v3747 = vadd.f32 %v3674, %v3746
    %v3748 = vpop.f32.mrf.mxu0
    %3749 = vdwg.mxu0
    %vm3750 = vcmask 74752
    %3751 = vst.msk [vmem:[#allocation2] sm:$0x3] %vm3750, %v3747
    // Predicated region
    $region22: #{smallnet_forward.3} parent=1 // pred_check
      _
    $region23: #{smallnet_forward.3} parent=1 // pred_check_branch
      %3753 = sbr.rel (0) target = $region25
    $region24: #{smallnet_forward.3} parent=1 // pred_region
      %s3755 = ssub.s32 32, 32
      %3756 = vsyncadd [#allocation3], %s3755
      %s3758 = sshll.u32 [#allocation2], 4
      %s3759 = int_to_ptr.vmem [resolvable:$true] %s3758
      %3761 = dma.vmem_to_hbm [thread:$0]  %s3759, 32, %s5, [#allocation3]
    $region25: #{smallnet_forward.3} parent=1 // pred_fallthru
      _
    // Predicated region
    $region26: #{smallnet_forward.3} parent=1 // pred_check
      _
    $region27: #{smallnet_forward.3} parent=1 // pred_check_branch
      %3763 = sbr.rel (0) target = $region29
    $region28: #{smallnet_forward.3} parent=1 // pred_region
      %3764 = dma.done [#allocation3], 32
    $region29: #{smallnet_forward.3} parent=1 // pred_fallthru
      _
    %3765 = vsyncpa [#allocation3], 1

</llo_original>
